<compile_context>
chip_gen: v7x
topology: tpu7x:2x2x1
jax: 0.10.0
libtpu: 0.0.40
codegen_flags: <defaults>
</compile_context>

<pallas_src>
import functools
import math

import jax
import jax.numpy as jnp
import numpy as np
from jax.experimental import pallas as pl
from jax.experimental.pallas import tpu as pltpu

_BN_EPS = 1e-5


# ---------------------------------------------------------------------------
# In-kernel building blocks
# ---------------------------------------------------------------------------
def _shift_rows(x, s):
    """y[r] = x[r + s] if 0 <= r + s < R else 0  (s is a static python int)."""
    if s == 0:
        return x
    r, c = x.shape
    z = jnp.zeros((abs(s), c), x.dtype)
    if s > 0:
        return jnp.concatenate([x[s:, :], z], axis=0)
    return jnp.concatenate([z, x[: r + s, :]], axis=0)


def _conv_pool_block(planes, mask_ref, w_ref, b_ref, wh, cdt):
    """Fused Conv3x3(pad=1)(+folded eval-BN) -> ReLU -> MaxPool2x2 on parity planes.

    planes:   list of 4 values (Rp, C) f32; planes[p*2+q] row (bl, i, j) = act[bl, 2i+p, 2j+q]
    mask_ref: (9, Rp, 1) f32 boundary masks, index (g+1)*3 + (h+1), g, h in {-1, 0, 1}
    w_ref:    (9*C, Cout) folded conv(+BN) weight, rows ordered (dy, dx, cin)
    b_ref:    (1, Cout) folded bias
    wh:       plane width (static)
    Returns (Rp, Cout) f32 pooled output, rows ordered (bl, i, j).
    """
    rp, _ = planes[0].shape
    cache = {}

    def tap_slab(p, g, q, h):
        key = (p, g, q, h)
        if key not in cache:
            m = mask_ref[(g + 1) * 3 + (h + 1)]                  # (Rp, 1)
            cache[key] = _shift_rows(planes[p * 2 + q], g * wh + h) * m
        return cache[key]

    quad = []
    for qy in range(2):
        for qx in range(2):
            taps = []
            for dy in range(3):
                ty = qy + dy - 1
                for dx in range(3):
                    tx = qx + dx - 1
                    taps.append(tap_slab(ty % 2, ty // 2, tx % 2, tx // 2))
            quad.append(jnp.concatenate(taps, axis=1))           # (Rp, 9C)
    big = jnp.concatenate(quad, axis=0).astype(cdt)              # (4*Rp, 9C)
    z = jnp.dot(big, w_ref[...].astype(cdt),
                preferred_element_type=jnp.float32)              # (4*Rp, Cout) f32 acc
    # MaxPool(ReLU(conv + b)) == ReLU(max_q(conv_q) + b)  (relu monotone, bias shared).
    z = jnp.maximum(jnp.maximum(z[0:rp], z[rp:2 * rp]),
                    jnp.maximum(z[2 * rp:3 * rp], z[3 * rp:4 * rp]))
    return jnp.maximum(z + b_ref[...], 0.0)                      # (Rp, Cout) f32


def _yearbook_kernel(xs_ref, w1_ref, b1_ref,
                     w2_ref, b2_ref, m2_ref,
                     w3_ref, b3_ref, m3_ref,
                     w4_ref, b4_ref, m4_ref,
                     s2_ref, s3_ref, avg_ref, wc_ref, bc_ref,
                     out_ref, *, r1, hw, cdt):
    """Whole YearbookNetwork forward for one batch chunk, fully VMEM resident."""
    wh2, wh3, wh4 = hw[0][1], hw[1][1], hw[2][1]
    rp2, rp3, rp4 = r1 // 4, r1 // 16, r1 // 64

    # --- block 1: wrapper-prepared quadrant patch rows, one MXU matmul ---------------
    z1 = jnp.dot(xs_ref[...], w1_ref[...],
                 preferred_element_type=jnp.float32)             # (4*r1, 32)
    p1 = jnp.maximum(jnp.maximum(z1[0:r1], z1[r1:2 * r1]),
                     jnp.maximum(z1[2 * r1:3 * r1], z1[3 * r1:4 * r1]))
    p1 = jnp.maximum(p1 + b1_ref[...], 0.0)                      # rows: (a, c, bl, i, j)

    # Rows were pre-ordered so block 2's parity planes are the contiguous quarters.
    planes = [p1[k * rp2:(k + 1) * rp2] for k in range(4)]

    # --- block 2 ----------------------------------------------------------------------
    p2 = _conv_pool_block(planes, m2_ref, w2_ref, b2_ref, wh2, cdt)
    p2 = jnp.dot(s2_ref[...], p2, preferred_element_type=jnp.float32)   # exact 0/1 re-split
    planes = [p2[k * rp3:(k + 1) * rp3] for k in range(4)]

    # --- block 3 ----------------------------------------------------------------------
    p3 = _conv_pool_block(planes, m3_ref, w3_ref, b3_ref, wh3, cdt)
    p3 = jnp.dot(s3_ref[...], p3, preferred_element_type=jnp.float32)
    planes = [p3[k * rp4:(k + 1) * rp4] for k in range(4)]

    # --- block 4 ----------------------------------------------------------------------
    p4 = _conv_pool_block(planes, m4_ref, w4_ref, b4_ref, wh4, cdt)     # (rp4, 32)

    # --- head: global spatial mean + Linear, fused into the same kernel ---------------
    feat = jnp.dot(avg_ref[...], p4, preferred_element_type=jnp.float32)    # (Bc, 32)
    logits = jnp.dot(feat, wc_ref[...], preferred_element_type=jnp.float32)
    logits = logits + bc_ref[...]
    out_ref[...] = logits.reshape(out_ref.shape).astype(out_ref.dtype)


# ---------------------------------------------------------------------------
# Wrapper-side (XLA / numpy) one-time layout prep
# ---------------------------------------------------------------------------
def _fold_conv_bn(w, b, gamma, beta, mean, var, eps=_BN_EPS):
    """Fold eval-mode BatchNorm into the conv weight/bias.  w: (3,3,Cin,Cout) HWIO."""
    scale = gamma / jnp.sqrt(var + eps)                          # (Cout,)
    w_f = (w * scale).reshape(-1, w.shape[-1])                   # (9*Cin, Cout) rows (dy,dx,ci)
    b_f = (b - mean) * scale + beta
    return w_f, b_f


def _block1_patch_rows(x_nhwc, nchunk, k_pad):
    """im2col for block 1 only (tiny raw input).  Rows are ordered
    (chunk, pool-quadrant qy,qx, block-2 parity a,c, image, i2, j2)."""
    b, h, w, cin = x_nhwc.shape
    bsz = b // nchunk
    hp, wp = h // 4, w // 4
    ap = jnp.pad(x_nhwc, ((0, 0), (1, 1), (1, 1), (0, 0)))
    taps = [ap[:, dy:dy + h, dx:dx + w, :] for dy in range(3) for dx in range(3)]
    p = jnp.concatenate(taps, axis=-1)                           # (B, H, W, 9*Cin)
    k9 = 9 * cin
    if k_pad > k9:
        p = jnp.pad(p, ((0, 0), (0, 0), (0, 0), (0, k_pad - k9)))
    # y = 4*i2 + 2*a + qy ; x = 4*j2 + 2*c + qx
    p = p.reshape(nchunk, bsz, hp, 2, 2, wp, 2, 2, k_pad)
    p = p.transpose(0, 4, 7, 3, 6, 1, 2, 5, 8)                   # (nc,qy,qx,a,c,bl,i2,j2,K)
    return p.reshape(nchunk * 4 * (4 * bsz * hp * wp), k_pad)


def _boundary_masks(bsz, hh, wh):
    r = np.arange(bsz * hh * wh)
    i = (r // wh) % hh
    j = r % wh
    m = np.zeros((9, bsz * hh * wh, 1), np.float32)
    for g in (-1, 0, 1):
        for h in (-1, 0, 1):
            ok = (i + g >= 0) & (i + g < hh) & (j + h >= 0) & (j + h < wh)
            m[(g + 1) * 3 + (h + 1), :, 0] = ok
    return jnp.asarray(m)


def _plane_split_perm(bsz, hh, wh):
    """0/1 matrix reordering rows (bl, y, x)@(hh,wh) -> (p, q, bl, i, j)@(hh/2, wh/2)."""
    ho, wo = hh // 2, wh // 2
    src = []
    for p in range(2):
        for q in range(2):
            for bl in range(bsz):
                for i in range(ho):
                    for j in range(wo):
                        src.append(bl * hh * wh + (2 * i + p) * wh + (2 * j + q))
    n = bsz * hh * wh
    s = np.zeros((n, n), np.float32)
    s[np.arange(n), np.asarray(src)] = 1.0
    return jnp.asarray(s)


def _head_mean_matrix(bsz, hh, wh):
    rows = hh * wh
    m = np.zeros((bsz, bsz * rows), np.float32)
    for bl in range(bsz):
        m[bl, bl * rows:(bl + 1) * rows] = 1.0 / rows
    return jnp.asarray(m)


# ---------------------------------------------------------------------------
# Pallas-call wrapper: full network forward
# ---------------------------------------------------------------------------
def yearbook_forward(x_nchw, block_params, wc, bc_cls, *, compute_dtype=jnp.bfloat16):
    """Full YearbookNetwork forward (eval mode).  x_nchw: (B, Cin, H, W) PyTorch layout."""
    b, cin, h, w = x_nchw.shape
    assert h % 16 == 0 and w % 16 == 0, "4 MaxPool2d(2) stages need H, W % 16 == 0"
    assert len(block_params) == 4
    ncls = wc.shape[1]
    cout = block_params[0][0].shape[-1]

    # >= 2 independent grid steps when possible so v7x can shard over its two TensorCores.
    nchunk = 2 if b % 2 == 0 else 1
    bchunk = b // nchunk

    # Fold eval-mode BatchNorm into conv weights/biases; cast MXU operands to bf16.
    # TODO(synk): training-mode BatchNorm (batch statistics + running-stat update) is not
    # implemented; only eval-mode running stats are folded here.
    folded = [_fold_conv_bn(*p) for p in block_params]
    k1 = folded[0][0].shape[0]                                   # 9 * Cin
    k1p = max(32, -(-k1 // 8) * 8)
    w1p = jnp.zeros((k1p, cout), folded[0][0].dtype).at[:k1].set(folded[0][0])
    w1p = w1p.astype(compute_dtype)
    w_rest = [f[0].astype(compute_dtype) for f in folded[1:]]    # 3 x (9*cout, cout)
    b_all = [f[1].reshape(1, cout).astype(jnp.float32) for f in folded]

    x_nhwc = jnp.transpose(x_nchw, (0, 2, 3, 1))
    xs = _block1_patch_rows(x_nhwc, nchunk, k1p).astype(compute_dtype)

    r1 = bchunk * (h // 2) * (w // 2)                            # block-1 pooled rows / chunk
    hw = ((h // 4, w // 4), (h // 8, w // 8), (h // 16, w // 16))
    m2 = _boundary_masks(bchunk, *hw[0])
    m3 = _boundary_masks(bchunk, *hw[1])
    m4 = _boundary_masks(bchunk, *hw[2])
    s2 = _plane_split_perm(bchunk, *hw[0])
    s3 = _plane_split_perm(bchunk, *hw[1])
    avg = _head_mean_matrix(bchunk, *hw[2])
    wc_f = wc.astype(jnp.float32)
    bc_f = bc_cls.reshape(1, ncls).astype(jnp.float32)

    kernel = functools.partial(_yearbook_kernel, r1=r1, hw=hw, cdt=compute_dtype)

    def resident(arr):
        nd = arr.ndim
        return pl.BlockSpec(tuple(arr.shape), lambda i, _nd=nd: (0,) * _nd)

    rp2, rp3, rp4 = r1 // 4, r1 // 16, r1 // 64
    k9 = 9 * cout
    flops = nchunk * (
        2 * 4 * r1 * k1p * cout
        + 2 * 4 * (rp2 + rp3 + rp4) * k9 * cout
        + 2 * (rp2 * rp2 + rp3 * rp3) * cout
        + 2 * bchunk * rp4 * cout + 2 * bchunk * cout * ncls)
    params = (w1p, *w_rest, *b_all, m2, m3, m4, s2, s3, avg, wc_f, bc_f)
    bytes_accessed = int(
        xs.size * xs.dtype.itemsize + b * ncls * 4
        + sum(int(a.size) * a.dtype.itemsize for a in params))

    out = pl.pallas_call(
        kernel,
        out_shape=jax.ShapeDtypeStruct((nchunk, bchunk, ncls), jnp.float32),
        grid_spec=pltpu.PrefetchScalarGridSpec(
            num_scalar_prefetch=0,
            grid=(nchunk,),
            in_specs=[
                pl.BlockSpec((4 * r1, k1p), lambda i: (i, 0)),   # block-1 patch rows (chunked)
                resident(w1p), resident(b_all[0]),
                resident(w_rest[0]), resident(b_all[1]), resident(m2),
                resident(w_rest[1]), resident(b_all[2]), resident(m3),
                resident(w_rest[2]), resident(b_all[3]), resident(m4),
                resident(s2), resident(s3), resident(avg),
                resident(wc_f), resident(bc_f),
            ],
            out_specs=pl.BlockSpec((1, bchunk, ncls), lambda i: (i, 0, 0)),
        ),
        compiler_params=pltpu.CompilerParams(
            dimension_semantics=("parallel",),
            vmem_limit_bytes=32 * 1024 * 1024,
        ),
        cost_estimate=pl.CostEstimate(
            flops=int(flops), transcendentals=0, bytes_accessed=bytes_accessed),
    )(xs, w1p, b_all[0], w_rest[0], b_all[1], m2, w_rest[1], b_all[2], m3,
      w_rest[2], b_all[3], m4, s2, s3, avg, wc_f, bc_f)
    return out.reshape(b, ncls)


# ---------------------------------------------------------------------------
# Pure-JAX reference for correctness checking
# ---------------------------------------------------------------------------
def _reference(x_nchw, block_params, wc, bc_cls):
    a = jnp.transpose(x_nchw, (0, 2, 3, 1))
    for (w, bconv, gamma, beta, mean, var) in block_params:
        a = jax.lax.conv_general_dilated(
            a, w, window_strides=(1, 1), padding="SAME",
            dimension_numbers=("NHWC", "HWIO", "NHWC"),
            precision=jax.lax.Precision.HIGHEST)
        a = a + bconv
        a = gamma * (a - mean) / jnp.sqrt(var + _BN_EPS) + beta
        a = jnp.maximum(a, 0.0)
        a = jax.lax.reduce_window(a, -jnp.inf, jax.lax.max,
                                  (1, 2, 2, 1), (1, 2, 2, 1), "VALID")
    feat = jnp.mean(a, axis=(1, 2))
    return jnp.dot(feat, wc, precision=jax.lax.Precision.HIGHEST) + bc_cls


# ---------------------------------------------------------------------------
if __name__ == "__main__":
    B, C_IN, H, W = 4, 3, 32, 32          # yearbook-style 32x32 images, small batch
    HID, NCLS = 32, 2                     # 32-channel conv blocks, binary classifier

    key = jax.random.PRNGKey(0)
    key, kx = jax.random.split(key)
    x = jax.random.normal(kx, (B, C_IN, H, W), dtype=jnp.float32)   # NCHW like torch

    block_params = []
    cin = C_IN
    for _ in range(4):
        key, kw, kb, kg, kbe, km, kv = jax.random.split(key, 7)
        lim = 1.0 / math.sqrt(cin * 9)
        w = jax.random.uniform(kw, (3, 3, cin, HID), minval=-lim, maxval=lim,
                               dtype=jnp.float32)
        bconv = jax.random.uniform(kb, (HID,), minval=-lim, maxval=lim, dtype=jnp.float32)
        gamma = jax.random.uniform(kg, (HID,), minval=0.5, maxval=1.5, dtype=jnp.float32)
        beta = 0.1 * jax.random.normal(kbe, (HID,), dtype=jnp.float32)
        rmean = 0.1 * jax.random.normal(km, (HID,), dtype=jnp.float32)
        rvar = jax.random.uniform(kv, (HID,), minval=0.5, maxval=1.5, dtype=jnp.float32)
        block_params.append((w, bconv, gamma, beta, rmean, rvar))
        cin = HID
    block_params = tuple(block_params)

    key, kc, kcb = jax.random.split(key, 3)
    limc = 1.0 / math.sqrt(HID)
    wc = jax.random.uniform(kc, (HID, NCLS), minval=-limc, maxval=limc, dtype=jnp.float32)
    bcls = jax.random.uniform(kcb, (NCLS,), minval=-limc, maxval=limc, dtype=jnp.float32)

    y_ref = _reference(x, block_params, wc, bcls)

    fwd = jax.jit(functools.partial(yearbook_forward, compute_dtype=jnp.bfloat16))
    y = jax.block_until_ready(fwd(x, block_params, wc, bcls))

    assert y.shape == (B, NCLS)
    assert jnp.allclose(y, y_ref, atol=5e-2, rtol=5e-2), "mismatch vs reference"

    print("KERNEL_OK")
</pallas_src>

<mosaic_0001>
module attributes {stable_mosaic.version = 11 : i64} {
  func.func @_yearbook_kernel(%arg0: i32, %arg1: memref<2048x32xbf16, #tpu.memory_space<vmem>>, %arg2: memref<32x32xbf16, #tpu.memory_space<vmem>>, %arg3: memref<1x32xf32, #tpu.memory_space<vmem>>, %arg4: memref<288x32xbf16, #tpu.memory_space<vmem>>, %arg5: memref<1x32xf32, #tpu.memory_space<vmem>>, %arg6: memref<9x128x1xf32, #tpu.memory_space<vmem>>, %arg7: memref<288x32xbf16, #tpu.memory_space<vmem>>, %arg8: memref<1x32xf32, #tpu.memory_space<vmem>>, %arg9: memref<9x32x1xf32, #tpu.memory_space<vmem>>, %arg10: memref<288x32xbf16, #tpu.memory_space<vmem>>, %arg11: memref<1x32xf32, #tpu.memory_space<vmem>>, %arg12: memref<9x8x1xf32, #tpu.memory_space<vmem>>, %arg13: memref<128x128xf32, #tpu.memory_space<vmem>>, %arg14: memref<32x32xf32, #tpu.memory_space<vmem>>, %arg15: memref<2x8xf32, #tpu.memory_space<vmem>>, %arg16: memref<32x2xf32, #tpu.memory_space<vmem>>, %arg17: memref<1x2xf32, #tpu.memory_space<vmem>>, %arg18: memref<1x2x2xf32, #tpu.memory_space<vmem>>) attributes {dimension_semantics = [#tpu.dimension_semantics<parallel>], iteration_bounds = array<i64: 2>, scalar_prefetch = 0 : i64, scratch_operands = 0 : i64, tpu.core_type = #tpu.core_type<tc>, window_params = [{transform_indices = @transform_0, window_bounds = array<i64: 2048, 32>}, {pipeline_mode = #tpu.pipeline_mode<synchronous>, transform_indices = @transform_1, window_bounds = array<i64: 32, 32>}, {pipeline_mode = #tpu.pipeline_mode<synchronous>, transform_indices = @transform_2, window_bounds = array<i64: 1, 32>}, {pipeline_mode = #tpu.pipeline_mode<synchronous>, transform_indices = @transform_3, window_bounds = array<i64: 288, 32>}, {pipeline_mode = #tpu.pipeline_mode<synchronous>, transform_indices = @transform_4, window_bounds = array<i64: 1, 32>}, {pipeline_mode = #tpu.pipeline_mode<synchronous>, transform_indices = @transform_5, window_bounds = array<i64: 9, 128, 1>}, {pipeline_mode = #tpu.pipeline_mode<synchronous>, transform_indices = @transform_6, window_bounds = array<i64: 288, 32>}, {pipeline_mode = #tpu.pipeline_mode<synchronous>, transform_indices = @transform_7, window_bounds = array<i64: 1, 32>}, {pipeline_mode = #tpu.pipeline_mode<synchronous>, transform_indices = @transform_8, window_bounds = array<i64: 9, 32, 1>}, {pipeline_mode = #tpu.pipeline_mode<synchronous>, transform_indices = @transform_9, window_bounds = array<i64: 288, 32>}, {pipeline_mode = #tpu.pipeline_mode<synchronous>, transform_indices = @transform_10, window_bounds = array<i64: 1, 32>}, {pipeline_mode = #tpu.pipeline_mode<synchronous>, transform_indices = @transform_11, window_bounds = array<i64: 9, 8, 1>}, {pipeline_mode = #tpu.pipeline_mode<synchronous>, transform_indices = @transform_12, window_bounds = array<i64: 128, 128>}, {pipeline_mode = #tpu.pipeline_mode<synchronous>, transform_indices = @transform_13, window_bounds = array<i64: 32, 32>}, {pipeline_mode = #tpu.pipeline_mode<synchronous>, transform_indices = @transform_14, window_bounds = array<i64: 2, 8>}, {pipeline_mode = #tpu.pipeline_mode<synchronous>, transform_indices = @transform_15, window_bounds = array<i64: 32, 2>}, {pipeline_mode = #tpu.pipeline_mode<synchronous>, transform_indices = @transform_16, window_bounds = array<i64: 1, 2>}, {transform_indices = @transform_17, window_bounds = array<i64: 1, 2, 2>}]} {
    %c0 = arith.constant 0 : index
    %c0_0 = arith.constant 0 : index
    %0 = vector.load %arg1[%c0, %c0_0] : memref<2048x32xbf16, #tpu.memory_space<vmem>>, vector<2048x32xbf16>
    %c0_1 = arith.constant 0 : index
    %c0_2 = arith.constant 0 : index
    %1 = vector.load %arg2[%c0_1, %c0_2] : memref<32x32xbf16, #tpu.memory_space<vmem>>, vector<32x32xbf16>
    %cst = arith.constant dense<0.000000e+00> : vector<2048x32xf32>
    %2 = tpu.matmul %0, %1, %cst {dimension_numbers = #tpu.dot_dimension_numbers<[1], [0], [0], [1], [0, 0, 1, 1], [], []>} : vector<2048x32xbf16>, vector<32x32xbf16>, vector<2048x32xf32> -> vector<2048x32xf32>
    %3 = vector.extract_strided_slice %2 {offsets = [0, 0], sizes = [512, 32], strides = [1, 1]} : vector<2048x32xf32> to vector<512x32xf32>
    %4 = vector.extract_strided_slice %2 {offsets = [512, 0], sizes = [512, 32], strides = [1, 1]} : vector<2048x32xf32> to vector<512x32xf32>
    %5 = arith.maximumf %3, %4 : vector<512x32xf32>
    %6 = vector.extract_strided_slice %2 {offsets = [1024, 0], sizes = [512, 32], strides = [1, 1]} : vector<2048x32xf32> to vector<512x32xf32>
    %7 = vector.extract_strided_slice %2 {offsets = [1536, 0], sizes = [512, 32], strides = [1, 1]} : vector<2048x32xf32> to vector<512x32xf32>
    %8 = arith.maximumf %6, %7 : vector<512x32xf32>
    %9 = arith.maximumf %5, %8 : vector<512x32xf32>
    %c0_3 = arith.constant 0 : index
    %c0_4 = arith.constant 0 : index
    %10 = vector.load %arg3[%c0_3, %c0_4] : memref<1x32xf32, #tpu.memory_space<vmem>>, vector<1x32xf32>
    %11 = vector.broadcast %10 : vector<1x32xf32> to vector<512x32xf32>
    %12 = arith.addf %9, %11 : vector<512x32xf32>
    %cst_5 = arith.constant 0.000000e+00 : f32
    %13 = vector.broadcast %cst_5 : f32 to vector<512x32xf32>
    %14 = arith.maximumf %12, %13 : vector<512x32xf32>
    %15 = vector.extract_strided_slice %14 {offsets = [0, 0], sizes = [128, 32], strides = [1, 1]} : vector<512x32xf32> to vector<128x32xf32>
    %16 = vector.extract_strided_slice %14 {offsets = [128, 0], sizes = [128, 32], strides = [1, 1]} : vector<512x32xf32> to vector<128x32xf32>
    %17 = vector.extract_strided_slice %14 {offsets = [256, 0], sizes = [128, 32], strides = [1, 1]} : vector<512x32xf32> to vector<128x32xf32>
    %18 = vector.extract_strided_slice %14 {offsets = [384, 0], sizes = [128, 32], strides = [1, 1]} : vector<512x32xf32> to vector<128x32xf32>
    %c0_6 = arith.constant 0 : index
    %c0_7 = arith.constant 0 : index
    %c0_8 = arith.constant 0 : index
    %19 = vector.load %arg6[%c0_6, %c0_7, %c0_8] : memref<9x128x1xf32, #tpu.memory_space<vmem>>, vector<1x128x1xf32>
    %20 = vector.shape_cast %19 : vector<1x128x1xf32> to vector<128x1xf32>
    %cst_9 = arith.constant 0.000000e+00 : f32
    %21 = vector.broadcast %cst_9 : f32 to vector<9x32xf32>
    %22 = vector.extract_strided_slice %18 {offsets = [0, 0], sizes = [119, 32], strides = [1, 1]} : vector<128x32xf32> to vector<119x32xf32>
    %23 = tpu.concatenate %21, %22 in 0 : vector<9x32xf32>, vector<119x32xf32> -> vector<128x32xf32>
    %24 = vector.broadcast %20 : vector<128x1xf32> to vector<128x32xf32>
    %25 = arith.mulf %23, %24 : vector<128x32xf32>
    %c1 = arith.constant 1 : index
    %c0_10 = arith.constant 0 : index
    %c0_11 = arith.constant 0 : index
    %26 = vector.load %arg6[%c1, %c0_10, %c0_11] : memref<9x128x1xf32, #tpu.memory_space<vmem>>, vector<1x128x1xf32>
    %27 = vector.shape_cast %26 : vector<1x128x1xf32> to vector<128x1xf32>
    %cst_12 = arith.constant 0.000000e+00 : f32
    %28 = vector.broadcast %cst_12 : f32 to vector<8x32xf32>
    %29 = vector.extract_strided_slice %17 {offsets = [0, 0], sizes = [120, 32], strides = [1, 1]} : vector<128x32xf32> to vector<120x32xf32>
    %30 = tpu.concatenate %28, %29 in 0 : vector<8x32xf32>, vector<120x32xf32> -> vector<128x32xf32>
    %31 = vector.broadcast %27 : vector<128x1xf32> to vector<128x32xf32>
    %32 = arith.mulf %30, %31 : vector<128x32xf32>
    %c1_13 = arith.constant 1 : index
    %c0_14 = arith.constant 0 : index
    %c0_15 = arith.constant 0 : index
    %33 = vector.load %arg6[%c1_13, %c0_14, %c0_15] : memref<9x128x1xf32, #tpu.memory_space<vmem>>, vector<1x128x1xf32>
    %34 = vector.shape_cast %33 : vector<1x128x1xf32> to vector<128x1xf32>
    %cst_16 = arith.constant 0.000000e+00 : f32
    %35 = vector.broadcast %cst_16 : f32 to vector<8x32xf32>
    %36 = vector.extract_strided_slice %18 {offsets = [0, 0], sizes = [120, 32], strides = [1, 1]} : vector<128x32xf32> to vector<120x32xf32>
    %37 = tpu.concatenate %35, %36 in 0 : vector<8x32xf32>, vector<120x32xf32> -> vector<128x32xf32>
    %38 = vector.broadcast %34 : vector<128x1xf32> to vector<128x32xf32>
    %39 = arith.mulf %37, %38 : vector<128x32xf32>
    %c3 = arith.constant 3 : index
    %c0_17 = arith.constant 0 : index
    %c0_18 = arith.constant 0 : index
    %40 = vector.load %arg6[%c3, %c0_17, %c0_18] : memref<9x128x1xf32, #tpu.memory_space<vmem>>, vector<1x128x1xf32>
    %41 = vector.shape_cast %40 : vector<1x128x1xf32> to vector<128x1xf32>
    %cst_19 = arith.constant 0.000000e+00 : f32
    %42 = vector.broadcast %cst_19 : f32 to vector<1x32xf32>
    %43 = vector.extract_strided_slice %16 {offsets = [0, 0], sizes = [127, 32], strides = [1, 1]} : vector<128x32xf32> to vector<127x32xf32>
    %44 = tpu.concatenate %42, %43 in 0 : vector<1x32xf32>, vector<127x32xf32> -> vector<128x32xf32>
    %45 = vector.broadcast %41 : vector<128x1xf32> to vector<128x32xf32>
    %46 = arith.mulf %44, %45 : vector<128x32xf32>
    %c4 = arith.constant 4 : index
    %c0_20 = arith.constant 0 : index
    %c0_21 = arith.constant 0 : index
    %47 = vector.load %arg6[%c4, %c0_20, %c0_21] : memref<9x128x1xf32, #tpu.memory_space<vmem>>, vector<1x128x1xf32>
    %48 = vector.shape_cast %47 : vector<1x128x1xf32> to vector<128x1xf32>
    %49 = vector.broadcast %48 : vector<128x1xf32> to vector<128x32xf32>
    %50 = arith.mulf %15, %49 : vector<128x32xf32>
    %c4_22 = arith.constant 4 : index
    %c0_23 = arith.constant 0 : index
    %c0_24 = arith.constant 0 : index
    %51 = vector.load %arg6[%c4_22, %c0_23, %c0_24] : memref<9x128x1xf32, #tpu.memory_space<vmem>>, vector<1x128x1xf32>
    %52 = vector.shape_cast %51 : vector<1x128x1xf32> to vector<128x1xf32>
    %53 = vector.broadcast %52 : vector<128x1xf32> to vector<128x32xf32>
    %54 = arith.mulf %16, %53 : vector<128x32xf32>
    %c3_25 = arith.constant 3 : index
    %c0_26 = arith.constant 0 : index
    %c0_27 = arith.constant 0 : index
    %55 = vector.load %arg6[%c3_25, %c0_26, %c0_27] : memref<9x128x1xf32, #tpu.memory_space<vmem>>, vector<1x128x1xf32>
    %56 = vector.shape_cast %55 : vector<1x128x1xf32> to vector<128x1xf32>
    %cst_28 = arith.constant 0.000000e+00 : f32
    %57 = vector.broadcast %cst_28 : f32 to vector<1x32xf32>
    %58 = vector.extract_strided_slice %18 {offsets = [0, 0], sizes = [127, 32], strides = [1, 1]} : vector<128x32xf32> to vector<127x32xf32>
    %59 = tpu.concatenate %57, %58 in 0 : vector<1x32xf32>, vector<127x32xf32> -> vector<128x32xf32>
    %60 = vector.broadcast %56 : vector<128x1xf32> to vector<128x32xf32>
    %61 = arith.mulf %59, %60 : vector<128x32xf32>
    %c4_29 = arith.constant 4 : index
    %c0_30 = arith.constant 0 : index
    %c0_31 = arith.constant 0 : index
    %62 = vector.load %arg6[%c4_29, %c0_30, %c0_31] : memref<9x128x1xf32, #tpu.memory_space<vmem>>, vector<1x128x1xf32>
    %63 = vector.shape_cast %62 : vector<1x128x1xf32> to vector<128x1xf32>
    %64 = vector.broadcast %63 : vector<128x1xf32> to vector<128x32xf32>
    %65 = arith.mulf %17, %64 : vector<128x32xf32>
    %c4_32 = arith.constant 4 : index
    %c0_33 = arith.constant 0 : index
    %c0_34 = arith.constant 0 : index
    %66 = vector.load %arg6[%c4_32, %c0_33, %c0_34] : memref<9x128x1xf32, #tpu.memory_space<vmem>>, vector<1x128x1xf32>
    %67 = vector.shape_cast %66 : vector<1x128x1xf32> to vector<128x1xf32>
    %68 = vector.broadcast %67 : vector<128x1xf32> to vector<128x32xf32>
    %69 = arith.mulf %18, %68 : vector<128x32xf32>
    %70 = tpu.concatenate %25, %32, %39, %46, %50, %54, %61, %65, %69 in 1 : vector<128x32xf32>, vector<128x32xf32>, vector<128x32xf32>, vector<128x32xf32>, vector<128x32xf32>, vector<128x32xf32>, vector<128x32xf32>, vector<128x32xf32>, vector<128x32xf32> -> vector<128x288xf32>
    %c2 = arith.constant 2 : index
    %c0_35 = arith.constant 0 : index
    %c0_36 = arith.constant 0 : index
    %71 = vector.load %arg6[%c2, %c0_35, %c0_36] : memref<9x128x1xf32, #tpu.memory_space<vmem>>, vector<1x128x1xf32>
    %72 = vector.shape_cast %71 : vector<1x128x1xf32> to vector<128x1xf32>
    %cst_37 = arith.constant 0.000000e+00 : f32
    %73 = vector.broadcast %cst_37 : f32 to vector<7x32xf32>
    %74 = vector.extract_strided_slice %17 {offsets = [0, 0], sizes = [121, 32], strides = [1, 1]} : vector<128x32xf32> to vector<121x32xf32>
    %75 = tpu.concatenate %73, %74 in 0 : vector<7x32xf32>, vector<121x32xf32> -> vector<128x32xf32>
    %76 = vector.broadcast %72 : vector<128x1xf32> to vector<128x32xf32>
    %77 = arith.mulf %75, %76 : vector<128x32xf32>
    %c5 = arith.constant 5 : index
    %c0_38 = arith.constant 0 : index
    %c0_39 = arith.constant 0 : index
    %78 = vector.load %arg6[%c5, %c0_38, %c0_39] : memref<9x128x1xf32, #tpu.memory_space<vmem>>, vector<1x128x1xf32>
    %79 = vector.shape_cast %78 : vector<1x128x1xf32> to vector<128x1xf32>
    %cst_40 = arith.constant 0.000000e+00 : f32
    %80 = vector.broadcast %cst_40 : f32 to vector<1x32xf32>
    %81 = vector.extract_strided_slice %15 {offsets = [1, 0], sizes = [127, 32], strides = [1, 1]} : vector<128x32xf32> to vector<127x32xf32>
    %82 = tpu.concatenate %81, %80 in 0 : vector<127x32xf32>, vector<1x32xf32> -> vector<128x32xf32>
    %83 = vector.broadcast %79 : vector<128x1xf32> to vector<128x32xf32>
    %84 = arith.mulf %82, %83 : vector<128x32xf32>
    %c5_41 = arith.constant 5 : index
    %c0_42 = arith.constant 0 : index
    %c0_43 = arith.constant 0 : index
    %85 = vector.load %arg6[%c5_41, %c0_42, %c0_43] : memref<9x128x1xf32, #tpu.memory_space<vmem>>, vector<1x128x1xf32>
    %86 = vector.shape_cast %85 : vector<1x128x1xf32> to vector<128x1xf32>
    %cst_44 = arith.constant 0.000000e+00 : f32
    %87 = vector.broadcast %cst_44 : f32 to vector<1x32xf32>
    %88 = vector.extract_strided_slice %17 {offsets = [1, 0], sizes = [127, 32], strides = [1, 1]} : vector<128x32xf32> to vector<127x32xf32>
    %89 = tpu.concatenate %88, %87 in 0 : vector<127x32xf32>, vector<1x32xf32> -> vector<128x32xf32>
    %90 = vector.broadcast %86 : vector<128x1xf32> to vector<128x32xf32>
    %91 = arith.mulf %89, %90 : vector<128x32xf32>
    %92 = tpu.concatenate %32, %39, %77, %50, %54, %84, %65, %69, %91 in 1 : vector<128x32xf32>, vector<128x32xf32>, vector<128x32xf32>, vector<128x32xf32>, vector<128x32xf32>, vector<128x32xf32>, vector<128x32xf32>, vector<128x32xf32>, vector<128x32xf32> -> vector<128x288xf32>
    %c6 = arith.constant 6 : index
    %c0_45 = arith.constant 0 : index
    %c0_46 = arith.constant 0 : index
    %93 = vector.load %arg6[%c6, %c0_45, %c0_46] : memref<9x128x1xf32, #tpu.memory_space<vmem>>, vector<1x128x1xf32>
    %94 = vector.shape_cast %93 : vector<1x128x1xf32> to vector<128x1xf32>
    %cst_47 = arith.constant 0.000000e+00 : f32
    %95 = vector.broadcast %cst_47 : f32 to vector<7x32xf32>
    %96 = vector.extract_strided_slice %16 {offsets = [7, 0], sizes = [121, 32], strides = [1, 1]} : vector<128x32xf32> to vector<121x32xf32>
    %97 = tpu.concatenate %96, %95 in 0 : vector<121x32xf32>, vector<7x32xf32> -> vector<128x32xf32>
    %98 = vector.broadcast %94 : vector<128x1xf32> to vector<128x32xf32>
    %99 = arith.mulf %97, %98 : vector<128x32xf32>
    %c7 = arith.constant 7 : index
    %c0_48 = arith.constant 0 : index
    %c0_49 = arith.constant 0 : index
    %100 = vector.load %arg6[%c7, %c0_48, %c0_49] : memref<9x128x1xf32, #tpu.memory_space<vmem>>, vector<1x128x1xf32>
    %101 = vector.shape_cast %100 : vector<1x128x1xf32> to vector<128x1xf32>
    %cst_50 = arith.constant 0.000000e+00 : f32
    %102 = vector.broadcast %cst_50 : f32 to vector<8x32xf32>
    %103 = vector.extract_strided_slice %15 {offsets = [8, 0], sizes = [120, 32], strides = [1, 1]} : vector<128x32xf32> to vector<120x32xf32>
    %104 = tpu.concatenate %103, %102 in 0 : vector<120x32xf32>, vector<8x32xf32> -> vector<128x32xf32>
    %105 = vector.broadcast %101 : vector<128x1xf32> to vector<128x32xf32>
    %106 = arith.mulf %104, %105 : vector<128x32xf32>
    %c7_51 = arith.constant 7 : index
    %c0_52 = arith.constant 0 : index
    %c0_53 = arith.constant 0 : index
    %107 = vector.load %arg6[%c7_51, %c0_52, %c0_53] : memref<9x128x1xf32, #tpu.memory_space<vmem>>, vector<1x128x1xf32>
    %108 = vector.shape_cast %107 : vector<1x128x1xf32> to vector<128x1xf32>
    %cst_54 = arith.constant 0.000000e+00 : f32
    %109 = vector.broadcast %cst_54 : f32 to vector<8x32xf32>
    %110 = vector.extract_strided_slice %16 {offsets = [8, 0], sizes = [120, 32], strides = [1, 1]} : vector<128x32xf32> to vector<120x32xf32>
    %111 = tpu.concatenate %110, %109 in 0 : vector<120x32xf32>, vector<8x32xf32> -> vector<128x32xf32>
    %112 = vector.broadcast %108 : vector<128x1xf32> to vector<128x32xf32>
    %113 = arith.mulf %111, %112 : vector<128x32xf32>
    %114 = tpu.concatenate %46, %50, %54, %61, %65, %69, %99, %106, %113 in 1 : vector<128x32xf32>, vector<128x32xf32>, vector<128x32xf32>, vector<128x32xf32>, vector<128x32xf32>, vector<128x32xf32>, vector<128x32xf32>, vector<128x32xf32>, vector<128x32xf32> -> vector<128x288xf32>
    %c8 = arith.constant 8 : index
    %c0_55 = arith.constant 0 : index
    %c0_56 = arith.constant 0 : index
    %115 = vector.load %arg6[%c8, %c0_55, %c0_56] : memref<9x128x1xf32, #tpu.memory_space<vmem>>, vector<1x128x1xf32>
    %116 = vector.shape_cast %115 : vector<1x128x1xf32> to vector<128x1xf32>
    %cst_57 = arith.constant 0.000000e+00 : f32
    %117 = vector.broadcast %cst_57 : f32 to vector<9x32xf32>
    %118 = vector.extract_strided_slice %15 {offsets = [9, 0], sizes = [119, 32], strides = [1, 1]} : vector<128x32xf32> to vector<119x32xf32>
    %119 = tpu.concatenate %118, %117 in 0 : vector<119x32xf32>, vector<9x32xf32> -> vector<128x32xf32>
    %120 = vector.broadcast %116 : vector<128x1xf32> to vector<128x32xf32>
    %121 = arith.mulf %119, %120 : vector<128x32xf32>
    %122 = tpu.concatenate %50, %54, %84, %65, %69, %91, %106, %113, %121 in 1 : vector<128x32xf32>, vector<128x32xf32>, vector<128x32xf32>, vector<128x32xf32>, vector<128x32xf32>, vector<128x32xf32>, vector<128x32xf32>, vector<128x32xf32>, vector<128x32xf32> -> vector<128x288xf32>
    %123 = tpu.concatenate %70, %92, %114, %122 in 0 : vector<128x288xf32>, vector<128x288xf32>, vector<128x288xf32>, vector<128x288xf32> -> vector<512x288xf32>
    %124 = arith.truncf %123 : vector<512x288xf32> to vector<512x288xbf16>
    %c0_58 = arith.constant 0 : index
    %c0_59 = arith.constant 0 : index
    %125 = vector.load %arg4[%c0_58, %c0_59] : memref<288x32xbf16, #tpu.memory_space<vmem>>, vector<288x32xbf16>
    %cst_60 = arith.constant dense<0.000000e+00> : vector<512x32xf32>
    %126 = tpu.matmul %124, %125, %cst_60 {dimension_numbers = #tpu.dot_dimension_numbers<[1], [0], [0], [1], [0, 0, 1, 1], [], []>} : vector<512x288xbf16>, vector<288x32xbf16>, vector<512x32xf32> -> vector<512x32xf32>
    %127 = vector.extract_strided_slice %126 {offsets = [0, 0], sizes = [128, 32], strides = [1, 1]} : vector<512x32xf32> to vector<128x32xf32>
    %128 = vector.extract_strided_slice %126 {offsets = [128, 0], sizes = [128, 32], strides = [1, 1]} : vector<512x32xf32> to vector<128x32xf32>
    %129 = arith.maximumf %127, %128 : vector<128x32xf32>
    %130 = vector.extract_strided_slice %126 {offsets = [256, 0], sizes = [128, 32], strides = [1, 1]} : vector<512x32xf32> to vector<128x32xf32>
    %131 = vector.extract_strided_slice %126 {offsets = [384, 0], sizes = [128, 32], strides = [1, 1]} : vector<512x32xf32> to vector<128x32xf32>
    %132 = arith.maximumf %130, %131 : vector<128x32xf32>
    %133 = arith.maximumf %129, %132 : vector<128x32xf32>
    %c0_61 = arith.constant 0 : index
    %c0_62 = arith.constant 0 : index
    %134 = vector.load %arg5[%c0_61, %c0_62] : memref<1x32xf32, #tpu.memory_space<vmem>>, vector<1x32xf32>
    %135 = vector.broadcast %134 : vector<1x32xf32> to vector<128x32xf32>
    %136 = arith.addf %133, %135 : vector<128x32xf32>
    %cst_63 = arith.constant 0.000000e+00 : f32
    %137 = vector.broadcast %cst_63 : f32 to vector<128x32xf32>
    %138 = arith.maximumf %136, %137 : vector<128x32xf32>
    %c0_64 = arith.constant 0 : index
    %c0_65 = arith.constant 0 : index
    %139 = vector.load %arg13[%c0_64, %c0_65] : memref<128x128xf32, #tpu.memory_space<vmem>>, vector<128x128xf32>
    %cst_66 = arith.constant dense<0.000000e+00> : vector<128x32xf32>
    %140 = tpu.matmul %139, %138, %cst_66 {dimension_numbers = #tpu.dot_dimension_numbers<[1], [0], [0], [1], [0, 0, 1, 1], [], []>} : vector<128x128xf32>, vector<128x32xf32>, vector<128x32xf32> -> vector<128x32xf32>
    %141 = vector.extract_strided_slice %140 {offsets = [0, 0], sizes = [32, 32], strides = [1, 1]} : vector<128x32xf32> to vector<32x32xf32>
    %142 = vector.extract_strided_slice %140 {offsets = [32, 0], sizes = [32, 32], strides = [1, 1]} : vector<128x32xf32> to vector<32x32xf32>
    %143 = vector.extract_strided_slice %140 {offsets = [64, 0], sizes = [32, 32], strides = [1, 1]} : vector<128x32xf32> to vector<32x32xf32>
    %144 = vector.extract_strided_slice %140 {offsets = [96, 0], sizes = [32, 32], strides = [1, 1]} : vector<128x32xf32> to vector<32x32xf32>
    %c0_67 = arith.constant 0 : index
    %c0_68 = arith.constant 0 : index
    %c0_69 = arith.constant 0 : index
    %145 = vector.load %arg9[%c0_67, %c0_68, %c0_69] : memref<9x32x1xf32, #tpu.memory_space<vmem>>, vector<1x32x1xf32>
    %146 = vector.shape_cast %145 : vector<1x32x1xf32> to vector<32x1xf32>
    %cst_70 = arith.constant 0.000000e+00 : f32
    %147 = vector.broadcast %cst_70 : f32 to vector<5x32xf32>
    %148 = vector.extract_strided_slice %144 {offsets = [0, 0], sizes = [27, 32], strides = [1, 1]} : vector<32x32xf32> to vector<27x32xf32>
    %149 = tpu.concatenate %147, %148 in 0 : vector<5x32xf32>, vector<27x32xf32> -> vector<32x32xf32>
    %150 = vector.broadcast %146 : vector<32x1xf32> to vector<32x32xf32>
    %151 = arith.mulf %149, %150 : vector<32x32xf32>
    %c1_71 = arith.constant 1 : index
    %c0_72 = arith.constant 0 : index
    %c0_73 = arith.constant 0 : index
    %152 = vector.load %arg9[%c1_71, %c0_72, %c0_73] : memref<9x32x1xf32, #tpu.memory_space<vmem>>, vector<1x32x1xf32>
    %153 = vector.shape_cast %152 : vector<1x32x1xf32> to vector<32x1xf32>
    %cst_74 = arith.constant 0.000000e+00 : f32
    %154 = vector.broadcast %cst_74 : f32 to vector<4x32xf32>
    %155 = vector.extract_strided_slice %143 {offsets = [0, 0], sizes = [28, 32], strides = [1, 1]} : vector<32x32xf32> to vector<28x32xf32>
    %156 = tpu.concatenate %154, %155 in 0 : vector<4x32xf32>, vector<28x32xf32> -> vector<32x32xf32>
    %157 = vector.broadcast %153 : vector<32x1xf32> to vector<32x32xf32>
    %158 = arith.mulf %156, %157 : vector<32x32xf32>
    %c1_75 = arith.constant 1 : index
    %c0_76 = arith.constant 0 : index
    %c0_77 = arith.constant 0 : index
    %159 = vector.load %arg9[%c1_75, %c0_76, %c0_77] : memref<9x32x1xf32, #tpu.memory_space<vmem>>, vector<1x32x1xf32>
    %160 = vector.shape_cast %159 : vector<1x32x1xf32> to vector<32x1xf32>
    %cst_78 = arith.constant 0.000000e+00 : f32
    %161 = vector.broadcast %cst_78 : f32 to vector<4x32xf32>
    %162 = vector.extract_strided_slice %144 {offsets = [0, 0], sizes = [28, 32], strides = [1, 1]} : vector<32x32xf32> to vector<28x32xf32>
    %163 = tpu.concatenate %161, %162 in 0 : vector<4x32xf32>, vector<28x32xf32> -> vector<32x32xf32>
    %164 = vector.broadcast %160 : vector<32x1xf32> to vector<32x32xf32>
    %165 = arith.mulf %163, %164 : vector<32x32xf32>
    %c3_79 = arith.constant 3 : index
    %c0_80 = arith.constant 0 : index
    %c0_81 = arith.constant 0 : index
    %166 = vector.load %arg9[%c3_79, %c0_80, %c0_81] : memref<9x32x1xf32, #tpu.memory_space<vmem>>, vector<1x32x1xf32>
    %167 = vector.shape_cast %166 : vector<1x32x1xf32> to vector<32x1xf32>
    %cst_82 = arith.constant 0.000000e+00 : f32
    %168 = vector.broadcast %cst_82 : f32 to vector<1x32xf32>
    %169 = vector.extract_strided_slice %142 {offsets = [0, 0], sizes = [31, 32], strides = [1, 1]} : vector<32x32xf32> to vector<31x32xf32>
    %170 = tpu.concatenate %168, %169 in 0 : vector<1x32xf32>, vector<31x32xf32> -> vector<32x32xf32>
    %171 = vector.broadcast %167 : vector<32x1xf32> to vector<32x32xf32>
    %172 = arith.mulf %170, %171 : vector<32x32xf32>
    %c4_83 = arith.constant 4 : index
    %c0_84 = arith.constant 0 : index
    %c0_85 = arith.constant 0 : index
    %173 = vector.load %arg9[%c4_83, %c0_84, %c0_85] : memref<9x32x1xf32, #tpu.memory_space<vmem>>, vector<1x32x1xf32>
    %174 = vector.shape_cast %173 : vector<1x32x1xf32> to vector<32x1xf32>
    %175 = vector.broadcast %174 : vector<32x1xf32> to vector<32x32xf32>
    %176 = arith.mulf %141, %175 : vector<32x32xf32>
    %c4_86 = arith.constant 4 : index
    %c0_87 = arith.constant 0 : index
    %c0_88 = arith.constant 0 : index
    %177 = vector.load %arg9[%c4_86, %c0_87, %c0_88] : memref<9x32x1xf32, #tpu.memory_space<vmem>>, vector<1x32x1xf32>
    %178 = vector.shape_cast %177 : vector<1x32x1xf32> to vector<32x1xf32>
    %179 = vector.broadcast %178 : vector<32x1xf32> to vector<32x32xf32>
    %180 = arith.mulf %142, %179 : vector<32x32xf32>
    %c3_89 = arith.constant 3 : index
    %c0_90 = arith.constant 0 : index
    %c0_91 = arith.constant 0 : index
    %181 = vector.load %arg9[%c3_89, %c0_90, %c0_91] : memref<9x32x1xf32, #tpu.memory_space<vmem>>, vector<1x32x1xf32>
    %182 = vector.shape_cast %181 : vector<1x32x1xf32> to vector<32x1xf32>
    %cst_92 = arith.constant 0.000000e+00 : f32
    %183 = vector.broadcast %cst_92 : f32 to vector<1x32xf32>
    %184 = vector.extract_strided_slice %144 {offsets = [0, 0], sizes = [31, 32], strides = [1, 1]} : vector<32x32xf32> to vector<31x32xf32>
    %185 = tpu.concatenate %183, %184 in 0 : vector<1x32xf32>, vector<31x32xf32> -> vector<32x32xf32>
    %186 = vector.broadcast %182 : vector<32x1xf32> to vector<32x32xf32>
    %187 = arith.mulf %185, %186 : vector<32x32xf32>
    %c4_93 = arith.constant 4 : index
    %c0_94 = arith.constant 0 : index
    %c0_95 = arith.constant 0 : index
    %188 = vector.load %arg9[%c4_93, %c0_94, %c0_95] : memref<9x32x1xf32, #tpu.memory_space<vmem>>, vector<1x32x1xf32>
    %189 = vector.shape_cast %188 : vector<1x32x1xf32> to vector<32x1xf32>
    %190 = vector.broadcast %189 : vector<32x1xf32> to vector<32x32xf32>
    %191 = arith.mulf %143, %190 : vector<32x32xf32>
    %c4_96 = arith.constant 4 : index
    %c0_97 = arith.constant 0 : index
    %c0_98 = arith.constant 0 : index
    %192 = vector.load %arg9[%c4_96, %c0_97, %c0_98] : memref<9x32x1xf32, #tpu.memory_space<vmem>>, vector<1x32x1xf32>
    %193 = vector.shape_cast %192 : vector<1x32x1xf32> to vector<32x1xf32>
    %194 = vector.broadcast %193 : vector<32x1xf32> to vector<32x32xf32>
    %195 = arith.mulf %144, %194 : vector<32x32xf32>
    %196 = tpu.concatenate %151, %158, %165, %172, %176, %180, %187, %191, %195 in 1 : vector<32x32xf32>, vector<32x32xf32>, vector<32x32xf32>, vector<32x32xf32>, vector<32x32xf32>, vector<32x32xf32>, vector<32x32xf32>, vector<32x32xf32>, vector<32x32xf32> -> vector<32x288xf32>
    %c2_99 = arith.constant 2 : index
    %c0_100 = arith.constant 0 : index
    %c0_101 = arith.constant 0 : index
    %197 = vector.load %arg9[%c2_99, %c0_100, %c0_101] : memref<9x32x1xf32, #tpu.memory_space<vmem>>, vector<1x32x1xf32>
    %198 = vector.shape_cast %197 : vector<1x32x1xf32> to vector<32x1xf32>
    %cst_102 = arith.constant 0.000000e+00 : f32
    %199 = vector.broadcast %cst_102 : f32 to vector<3x32xf32>
    %200 = vector.extract_strided_slice %143 {offsets = [0, 0], sizes = [29, 32], strides = [1, 1]} : vector<32x32xf32> to vector<29x32xf32>
    %201 = tpu.concatenate %199, %200 in 0 : vector<3x32xf32>, vector<29x32xf32> -> vector<32x32xf32>
    %202 = vector.broadcast %198 : vector<32x1xf32> to vector<32x32xf32>
    %203 = arith.mulf %201, %202 : vector<32x32xf32>
    %c5_103 = arith.constant 5 : index
    %c0_104 = arith.constant 0 : index
    %c0_105 = arith.constant 0 : index
    %204 = vector.load %arg9[%c5_103, %c0_104, %c0_105] : memref<9x32x1xf32, #tpu.memory_space<vmem>>, vector<1x32x1xf32>
    %205 = vector.shape_cast %204 : vector<1x32x1xf32> to vector<32x1xf32>
    %cst_106 = arith.constant 0.000000e+00 : f32
    %206 = vector.broadcast %cst_106 : f32 to vector<1x32xf32>
    %207 = vector.extract_strided_slice %141 {offsets = [1, 0], sizes = [31, 32], strides = [1, 1]} : vector<32x32xf32> to vector<31x32xf32>
    %208 = tpu.concatenate %207, %206 in 0 : vector<31x32xf32>, vector<1x32xf32> -> vector<32x32xf32>
    %209 = vector.broadcast %205 : vector<32x1xf32> to vector<32x32xf32>
    %210 = arith.mulf %208, %209 : vector<32x32xf32>
    %c5_107 = arith.constant 5 : index
    %c0_108 = arith.constant 0 : index
    %c0_109 = arith.constant 0 : index
    %211 = vector.load %arg9[%c5_107, %c0_108, %c0_109] : memref<9x32x1xf32, #tpu.memory_space<vmem>>, vector<1x32x1xf32>
    %212 = vector.shape_cast %211 : vector<1x32x1xf32> to vector<32x1xf32>
    %cst_110 = arith.constant 0.000000e+00 : f32
    %213 = vector.broadcast %cst_110 : f32 to vector<1x32xf32>
    %214 = vector.extract_strided_slice %143 {offsets = [1, 0], sizes = [31, 32], strides = [1, 1]} : vector<32x32xf32> to vector<31x32xf32>
    %215 = tpu.concatenate %214, %213 in 0 : vector<31x32xf32>, vector<1x32xf32> -> vector<32x32xf32>
    %216 = vector.broadcast %212 : vector<32x1xf32> to vector<32x32xf32>
    %217 = arith.mulf %215, %216 : vector<32x32xf32>
    %218 = tpu.concatenate %158, %165, %203, %176, %180, %210, %191, %195, %217 in 1 : vector<32x32xf32>, vector<32x32xf32>, vector<32x32xf32>, vector<32x32xf32>, vector<32x32xf32>, vector<32x32xf32>, vector<32x32xf32>, vector<32x32xf32>, vector<32x32xf32> -> vector<32x288xf32>
    %c6_111 = arith.constant 6 : index
    %c0_112 = arith.constant 0 : index
    %c0_113 = arith.constant 0 : index
    %219 = vector.load %arg9[%c6_111, %c0_112, %c0_113] : memref<9x32x1xf32, #tpu.memory_space<vmem>>, vector<1x32x1xf32>
    %220 = vector.shape_cast %219 : vector<1x32x1xf32> to vector<32x1xf32>
    %cst_114 = arith.constant 0.000000e+00 : f32
    %221 = vector.broadcast %cst_114 : f32 to vector<3x32xf32>
    %222 = vector.extract_strided_slice %142 {offsets = [3, 0], sizes = [29, 32], strides = [1, 1]} : vector<32x32xf32> to vector<29x32xf32>
    %223 = tpu.concatenate %222, %221 in 0 : vector<29x32xf32>, vector<3x32xf32> -> vector<32x32xf32>
    %224 = vector.broadcast %220 : vector<32x1xf32> to vector<32x32xf32>
    %225 = arith.mulf %223, %224 : vector<32x32xf32>
    %c7_115 = arith.constant 7 : index
    %c0_116 = arith.constant 0 : index
    %c0_117 = arith.constant 0 : index
    %226 = vector.load %arg9[%c7_115, %c0_116, %c0_117] : memref<9x32x1xf32, #tpu.memory_space<vmem>>, vector<1x32x1xf32>
    %227 = vector.shape_cast %226 : vector<1x32x1xf32> to vector<32x1xf32>
    %cst_118 = arith.constant 0.000000e+00 : f32
    %228 = vector.broadcast %cst_118 : f32 to vector<4x32xf32>
    %229 = vector.extract_strided_slice %141 {offsets = [4, 0], sizes = [28, 32], strides = [1, 1]} : vector<32x32xf32> to vector<28x32xf32>
    %230 = tpu.concatenate %229, %228 in 0 : vector<28x32xf32>, vector<4x32xf32> -> vector<32x32xf32>
    %231 = vector.broadcast %227 : vector<32x1xf32> to vector<32x32xf32>
    %232 = arith.mulf %230, %231 : vector<32x32xf32>
    %c7_119 = arith.constant 7 : index
    %c0_120 = arith.constant 0 : index
    %c0_121 = arith.constant 0 : index
    %233 = vector.load %arg9[%c7_119, %c0_120, %c0_121] : memref<9x32x1xf32, #tpu.memory_space<vmem>>, vector<1x32x1xf32>
    %234 = vector.shape_cast %233 : vector<1x32x1xf32> to vector<32x1xf32>
    %cst_122 = arith.constant 0.000000e+00 : f32
    %235 = vector.broadcast %cst_122 : f32 to vector<4x32xf32>
    %236 = vector.extract_strided_slice %142 {offsets = [4, 0], sizes = [28, 32], strides = [1, 1]} : vector<32x32xf32> to vector<28x32xf32>
    %237 = tpu.concatenate %236, %235 in 0 : vector<28x32xf32>, vector<4x32xf32> -> vector<32x32xf32>
    %238 = vector.broadcast %234 : vector<32x1xf32> to vector<32x32xf32>
    %239 = arith.mulf %237, %238 : vector<32x32xf32>
    %240 = tpu.concatenate %172, %176, %180, %187, %191, %195, %225, %232, %239 in 1 : vector<32x32xf32>, vector<32x32xf32>, vector<32x32xf32>, vector<32x32xf32>, vector<32x32xf32>, vector<32x32xf32>, vector<32x32xf32>, vector<32x32xf32>, vector<32x32xf32> -> vector<32x288xf32>
    %c8_123 = arith.constant 8 : index
    %c0_124 = arith.constant 0 : index
    %c0_125 = arith.constant 0 : index
    %241 = vector.load %arg9[%c8_123, %c0_124, %c0_125] : memref<9x32x1xf32, #tpu.memory_space<vmem>>, vector<1x32x1xf32>
    %242 = vector.shape_cast %241 : vector<1x32x1xf32> to vector<32x1xf32>
    %cst_126 = arith.constant 0.000000e+00 : f32
    %243 = vector.broadcast %cst_126 : f32 to vector<5x32xf32>
    %244 = vector.extract_strided_slice %141 {offsets = [5, 0], sizes = [27, 32], strides = [1, 1]} : vector<32x32xf32> to vector<27x32xf32>
    %245 = tpu.concatenate %244, %243 in 0 : vector<27x32xf32>, vector<5x32xf32> -> vector<32x32xf32>
    %246 = vector.broadcast %242 : vector<32x1xf32> to vector<32x32xf32>
    %247 = arith.mulf %245, %246 : vector<32x32xf32>
    %248 = tpu.concatenate %176, %180, %210, %191, %195, %217, %232, %239, %247 in 1 : vector<32x32xf32>, vector<32x32xf32>, vector<32x32xf32>, vector<32x32xf32>, vector<32x32xf32>, vector<32x32xf32>, vector<32x32xf32>, vector<32x32xf32>, vector<32x32xf32> -> vector<32x288xf32>
    %249 = tpu.concatenate %196, %218, %240, %248 in 0 : vector<32x288xf32>, vector<32x288xf32>, vector<32x288xf32>, vector<32x288xf32> -> vector<128x288xf32>
    %250 = arith.truncf %249 : vector<128x288xf32> to vector<128x288xbf16>
    %c0_127 = arith.constant 0 : index
    %c0_128 = arith.constant 0 : index
    %251 = vector.load %arg7[%c0_127, %c0_128] : memref<288x32xbf16, #tpu.memory_space<vmem>>, vector<288x32xbf16>
    %cst_129 = arith.constant dense<0.000000e+00> : vector<128x32xf32>
    %252 = tpu.matmul %250, %251, %cst_129 {dimension_numbers = #tpu.dot_dimension_numbers<[1], [0], [0], [1], [0, 0, 1, 1], [], []>} : vector<128x288xbf16>, vector<288x32xbf16>, vector<128x32xf32> -> vector<128x32xf32>
    %253 = vector.extract_strided_slice %252 {offsets = [0, 0], sizes = [32, 32], strides = [1, 1]} : vector<128x32xf32> to vector<32x32xf32>
    %254 = vector.extract_strided_slice %252 {offsets = [32, 0], sizes = [32, 32], strides = [1, 1]} : vector<128x32xf32> to vector<32x32xf32>
    %255 = arith.maximumf %253, %254 : vector<32x32xf32>
    %256 = vector.extract_strided_slice %252 {offsets = [64, 0], sizes = [32, 32], strides = [1, 1]} : vector<128x32xf32> to vector<32x32xf32>
    %257 = vector.extract_strided_slice %252 {offsets = [96, 0], sizes = [32, 32], strides = [1, 1]} : vector<128x32xf32> to vector<32x32xf32>
    %258 = arith.maximumf %256, %257 : vector<32x32xf32>
    %259 = arith.maximumf %255, %258 : vector<32x32xf32>
    %c0_130 = arith.constant 0 : index
    %c0_131 = arith.constant 0 : index
    %260 = vector.load %arg8[%c0_130, %c0_131] : memref<1x32xf32, #tpu.memory_space<vmem>>, vector<1x32xf32>
    %261 = vector.broadcast %260 : vector<1x32xf32> to vector<32x32xf32>
    %262 = arith.addf %259, %261 : vector<32x32xf32>
    %cst_132 = arith.constant 0.000000e+00 : f32
    %263 = vector.broadcast %cst_132 : f32 to vector<32x32xf32>
    %264 = arith.maximumf %262, %263 : vector<32x32xf32>
    %c0_133 = arith.constant 0 : index
    %c0_134 = arith.constant 0 : index
    %265 = vector.load %arg14[%c0_133, %c0_134] : memref<32x32xf32, #tpu.memory_space<vmem>>, vector<32x32xf32>
    %cst_135 = arith.constant dense<0.000000e+00> : vector<32x32xf32>
    %266 = tpu.matmul %265, %264, %cst_135 {dimension_numbers = #tpu.dot_dimension_numbers<[1], [0], [0], [1], [0, 0, 1, 1], [], []>} : vector<32x32xf32>, vector<32x32xf32>, vector<32x32xf32> -> vector<32x32xf32>
    %267 = vector.extract_strided_slice %266 {offsets = [0, 0], sizes = [8, 32], strides = [1, 1]} : vector<32x32xf32> to vector<8x32xf32>
    %268 = vector.extract_strided_slice %266 {offsets = [8, 0], sizes = [8, 32], strides = [1, 1]} : vector<32x32xf32> to vector<8x32xf32>
    %269 = vector.extract_strided_slice %266 {offsets = [16, 0], sizes = [8, 32], strides = [1, 1]} : vector<32x32xf32> to vector<8x32xf32>
    %270 = vector.extract_strided_slice %266 {offsets = [24, 0], sizes = [8, 32], strides = [1, 1]} : vector<32x32xf32> to vector<8x32xf32>
    %c0_136 = arith.constant 0 : index
    %c0_137 = arith.constant 0 : index
    %c0_138 = arith.constant 0 : index
    %271 = vector.load %arg12[%c0_136, %c0_137, %c0_138] : memref<9x8x1xf32, #tpu.memory_space<vmem>>, vector<1x8x1xf32>
    %272 = vector.shape_cast %271 : vector<1x8x1xf32> to vector<8x1xf32>
    %cst_139 = arith.constant 0.000000e+00 : f32
    %273 = vector.broadcast %cst_139 : f32 to vector<3x32xf32>
    %274 = vector.extract_strided_slice %270 {offsets = [0, 0], sizes = [5, 32], strides = [1, 1]} : vector<8x32xf32> to vector<5x32xf32>
    %275 = tpu.concatenate %273, %274 in 0 : vector<3x32xf32>, vector<5x32xf32> -> vector<8x32xf32>
    %276 = vector.broadcast %272 : vector<8x1xf32> to vector<8x32xf32>
    %277 = arith.mulf %275, %276 : vector<8x32xf32>
    %c1_140 = arith.constant 1 : index
    %c0_141 = arith.constant 0 : index
    %c0_142 = arith.constant 0 : index
    %278 = vector.load %arg12[%c1_140, %c0_141, %c0_142] : memref<9x8x1xf32, #tpu.memory_space<vmem>>, vector<1x8x1xf32>
    %279 = vector.shape_cast %278 : vector<1x8x1xf32> to vector<8x1xf32>
    %cst_143 = arith.constant 0.000000e+00 : f32
    %280 = vector.broadcast %cst_143 : f32 to vector<2x32xf32>
    %281 = vector.extract_strided_slice %269 {offsets = [0, 0], sizes = [6, 32], strides = [1, 1]} : vector<8x32xf32> to vector<6x32xf32>
    %282 = tpu.concatenate %280, %281 in 0 : vector<2x32xf32>, vector<6x32xf32> -> vector<8x32xf32>
    %283 = vector.broadcast %279 : vector<8x1xf32> to vector<8x32xf32>
    %284 = arith.mulf %282, %283 : vector<8x32xf32>
    %c1_144 = arith.constant 1 : index
    %c0_145 = arith.constant 0 : index
    %c0_146 = arith.constant 0 : index
    %285 = vector.load %arg12[%c1_144, %c0_145, %c0_146] : memref<9x8x1xf32, #tpu.memory_space<vmem>>, vector<1x8x1xf32>
    %286 = vector.shape_cast %285 : vector<1x8x1xf32> to vector<8x1xf32>
    %cst_147 = arith.constant 0.000000e+00 : f32
    %287 = vector.broadcast %cst_147 : f32 to vector<2x32xf32>
    %288 = vector.extract_strided_slice %270 {offsets = [0, 0], sizes = [6, 32], strides = [1, 1]} : vector<8x32xf32> to vector<6x32xf32>
    %289 = tpu.concatenate %287, %288 in 0 : vector<2x32xf32>, vector<6x32xf32> -> vector<8x32xf32>
    %290 = vector.broadcast %286 : vector<8x1xf32> to vector<8x32xf32>
    %291 = arith.mulf %289, %290 : vector<8x32xf32>
    %c3_148 = arith.constant 3 : index
    %c0_149 = arith.constant 0 : index
    %c0_150 = arith.constant 0 : index
    %292 = vector.load %arg12[%c3_148, %c0_149, %c0_150] : memref<9x8x1xf32, #tpu.memory_space<vmem>>, vector<1x8x1xf32>
    %293 = vector.shape_cast %292 : vector<1x8x1xf32> to vector<8x1xf32>
    %cst_151 = arith.constant 0.000000e+00 : f32
    %294 = vector.broadcast %cst_151 : f32 to vector<1x32xf32>
    %295 = vector.extract_strided_slice %268 {offsets = [0, 0], sizes = [7, 32], strides = [1, 1]} : vector<8x32xf32> to vector<7x32xf32>
    %296 = tpu.concatenate %294, %295 in 0 : vector<1x32xf32>, vector<7x32xf32> -> vector<8x32xf32>
    %297 = vector.broadcast %293 : vector<8x1xf32> to vector<8x32xf32>
    %298 = arith.mulf %296, %297 : vector<8x32xf32>
    %c4_152 = arith.constant 4 : index
    %c0_153 = arith.constant 0 : index
    %c0_154 = arith.constant 0 : index
    %299 = vector.load %arg12[%c4_152, %c0_153, %c0_154] : memref<9x8x1xf32, #tpu.memory_space<vmem>>, vector<1x8x1xf32>
    %300 = vector.shape_cast %299 : vector<1x8x1xf32> to vector<8x1xf32>
    %301 = vector.broadcast %300 : vector<8x1xf32> to vector<8x32xf32>
    %302 = arith.mulf %267, %301 : vector<8x32xf32>
    %c4_155 = arith.constant 4 : index
    %c0_156 = arith.constant 0 : index
    %c0_157 = arith.constant 0 : index
    %303 = vector.load %arg12[%c4_155, %c0_156, %c0_157] : memref<9x8x1xf32, #tpu.memory_space<vmem>>, vector<1x8x1xf32>
    %304 = vector.shape_cast %303 : vector<1x8x1xf32> to vector<8x1xf32>
    %305 = vector.broadcast %304 : vector<8x1xf32> to vector<8x32xf32>
    %306 = arith.mulf %268, %305 : vector<8x32xf32>
    %c3_158 = arith.constant 3 : index
    %c0_159 = arith.constant 0 : index
    %c0_160 = arith.constant 0 : index
    %307 = vector.load %arg12[%c3_158, %c0_159, %c0_160] : memref<9x8x1xf32, #tpu.memory_space<vmem>>, vector<1x8x1xf32>
    %308 = vector.shape_cast %307 : vector<1x8x1xf32> to vector<8x1xf32>
    %cst_161 = arith.constant 0.000000e+00 : f32
    %309 = vector.broadcast %cst_161 : f32 to vector<1x32xf32>
    %310 = vector.extract_strided_slice %270 {offsets = [0, 0], sizes = [7, 32], strides = [1, 1]} : vector<8x32xf32> to vector<7x32xf32>
    %311 = tpu.concatenate %309, %310 in 0 : vector<1x32xf32>, vector<7x32xf32> -> vector<8x32xf32>
    %312 = vector.broadcast %308 : vector<8x1xf32> to vector<8x32xf32>
    %313 = arith.mulf %311, %312 : vector<8x32xf32>
    %c4_162 = arith.constant 4 : index
    %c0_163 = arith.constant 0 : index
    %c0_164 = arith.constant 0 : index
    %314 = vector.load %arg12[%c4_162, %c0_163, %c0_164] : memref<9x8x1xf32, #tpu.memory_space<vmem>>, vector<1x8x1xf32>
    %315 = vector.shape_cast %314 : vector<1x8x1xf32> to vector<8x1xf32>
    %316 = vector.broadcast %315 : vector<8x1xf32> to vector<8x32xf32>
    %317 = arith.mulf %269, %316 : vector<8x32xf32>
    %c4_165 = arith.constant 4 : index
    %c0_166 = arith.constant 0 : index
    %c0_167 = arith.constant 0 : index
    %318 = vector.load %arg12[%c4_165, %c0_166, %c0_167] : memref<9x8x1xf32, #tpu.memory_space<vmem>>, vector<1x8x1xf32>
    %319 = vector.shape_cast %318 : vector<1x8x1xf32> to vector<8x1xf32>
    %320 = vector.broadcast %319 : vector<8x1xf32> to vector<8x32xf32>
    %321 = arith.mulf %270, %320 : vector<8x32xf32>
    %322 = tpu.concatenate %277, %284, %291, %298, %302, %306, %313, %317, %321 in 1 : vector<8x32xf32>, vector<8x32xf32>, vector<8x32xf32>, vector<8x32xf32>, vector<8x32xf32>, vector<8x32xf32>, vector<8x32xf32>, vector<8x32xf32>, vector<8x32xf32> -> vector<8x288xf32>
    %c2_168 = arith.constant 2 : index
    %c0_169 = arith.constant 0 : index
    %c0_170 = arith.constant 0 : index
    %323 = vector.load %arg12[%c2_168, %c0_169, %c0_170] : memref<9x8x1xf32, #tpu.memory_space<vmem>>, vector<1x8x1xf32>
    %324 = vector.shape_cast %323 : vector<1x8x1xf32> to vector<8x1xf32>
    %cst_171 = arith.constant 0.000000e+00 : f32
    %325 = vector.broadcast %cst_171 : f32 to vector<1x32xf32>
    %326 = vector.extract_strided_slice %269 {offsets = [0, 0], sizes = [7, 32], strides = [1, 1]} : vector<8x32xf32> to vector<7x32xf32>
    %327 = tpu.concatenate %325, %326 in 0 : vector<1x32xf32>, vector<7x32xf32> -> vector<8x32xf32>
    %328 = vector.broadcast %324 : vector<8x1xf32> to vector<8x32xf32>
    %329 = arith.mulf %327, %328 : vector<8x32xf32>
    %c5_172 = arith.constant 5 : index
    %c0_173 = arith.constant 0 : index
    %c0_174 = arith.constant 0 : index
    %330 = vector.load %arg12[%c5_172, %c0_173, %c0_174] : memref<9x8x1xf32, #tpu.memory_space<vmem>>, vector<1x8x1xf32>
    %331 = vector.shape_cast %330 : vector<1x8x1xf32> to vector<8x1xf32>
    %cst_175 = arith.constant 0.000000e+00 : f32
    %332 = vector.broadcast %cst_175 : f32 to vector<1x32xf32>
    %333 = vector.extract_strided_slice %267 {offsets = [1, 0], sizes = [7, 32], strides = [1, 1]} : vector<8x32xf32> to vector<7x32xf32>
    %334 = tpu.concatenate %333, %332 in 0 : vector<7x32xf32>, vector<1x32xf32> -> vector<8x32xf32>
    %335 = vector.broadcast %331 : vector<8x1xf32> to vector<8x32xf32>
    %336 = arith.mulf %334, %335 : vector<8x32xf32>
    %c5_176 = arith.constant 5 : index
    %c0_177 = arith.constant 0 : index
    %c0_178 = arith.constant 0 : index
    %337 = vector.load %arg12[%c5_176, %c0_177, %c0_178] : memref<9x8x1xf32, #tpu.memory_space<vmem>>, vector<1x8x1xf32>
    %338 = vector.shape_cast %337 : vector<1x8x1xf32> to vector<8x1xf32>
    %cst_179 = arith.constant 0.000000e+00 : f32
    %339 = vector.broadcast %cst_179 : f32 to vector<1x32xf32>
    %340 = vector.extract_strided_slice %269 {offsets = [1, 0], sizes = [7, 32], strides = [1, 1]} : vector<8x32xf32> to vector<7x32xf32>
    %341 = tpu.concatenate %340, %339 in 0 : vector<7x32xf32>, vector<1x32xf32> -> vector<8x32xf32>
    %342 = vector.broadcast %338 : vector<8x1xf32> to vector<8x32xf32>
    %343 = arith.mulf %341, %342 : vector<8x32xf32>
    %344 = tpu.concatenate %284, %291, %329, %302, %306, %336, %317, %321, %343 in 1 : vector<8x32xf32>, vector<8x32xf32>, vector<8x32xf32>, vector<8x32xf32>, vector<8x32xf32>, vector<8x32xf32>, vector<8x32xf32>, vector<8x32xf32>, vector<8x32xf32> -> vector<8x288xf32>
    %c6_180 = arith.constant 6 : index
    %c0_181 = arith.constant 0 : index
    %c0_182 = arith.constant 0 : index
    %345 = vector.load %arg12[%c6_180, %c0_181, %c0_182] : memref<9x8x1xf32, #tpu.memory_space<vmem>>, vector<1x8x1xf32>
    %346 = vector.shape_cast %345 : vector<1x8x1xf32> to vector<8x1xf32>
    %cst_183 = arith.constant 0.000000e+00 : f32
    %347 = vector.broadcast %cst_183 : f32 to vector<1x32xf32>
    %348 = vector.extract_strided_slice %268 {offsets = [1, 0], sizes = [7, 32], strides = [1, 1]} : vector<8x32xf32> to vector<7x32xf32>
    %349 = tpu.concatenate %348, %347 in 0 : vector<7x32xf32>, vector<1x32xf32> -> vector<8x32xf32>
    %350 = vector.broadcast %346 : vector<8x1xf32> to vector<8x32xf32>
    %351 = arith.mulf %349, %350 : vector<8x32xf32>
    %c7_184 = arith.constant 7 : index
    %c0_185 = arith.constant 0 : index
    %c0_186 = arith.constant 0 : index
    %352 = vector.load %arg12[%c7_184, %c0_185, %c0_186] : memref<9x8x1xf32, #tpu.memory_space<vmem>>, vector<1x8x1xf32>
    %353 = vector.shape_cast %352 : vector<1x8x1xf32> to vector<8x1xf32>
    %cst_187 = arith.constant 0.000000e+00 : f32
    %354 = vector.broadcast %cst_187 : f32 to vector<2x32xf32>
    %355 = vector.extract_strided_slice %267 {offsets = [2, 0], sizes = [6, 32], strides = [1, 1]} : vector<8x32xf32> to vector<6x32xf32>
    %356 = tpu.concatenate %355, %354 in 0 : vector<6x32xf32>, vector<2x32xf32> -> vector<8x32xf32>
    %357 = vector.broadcast %353 : vector<8x1xf32> to vector<8x32xf32>
    %358 = arith.mulf %356, %357 : vector<8x32xf32>
    %c7_188 = arith.constant 7 : index
    %c0_189 = arith.constant 0 : index
    %c0_190 = arith.constant 0 : index
    %359 = vector.load %arg12[%c7_188, %c0_189, %c0_190] : memref<9x8x1xf32, #tpu.memory_space<vmem>>, vector<1x8x1xf32>
    %360 = vector.shape_cast %359 : vector<1x8x1xf32> to vector<8x1xf32>
    %cst_191 = arith.constant 0.000000e+00 : f32
    %361 = vector.broadcast %cst_191 : f32 to vector<2x32xf32>
    %362 = vector.extract_strided_slice %268 {offsets = [2, 0], sizes = [6, 32], strides = [1, 1]} : vector<8x32xf32> to vector<6x32xf32>
    %363 = tpu.concatenate %362, %361 in 0 : vector<6x32xf32>, vector<2x32xf32> -> vector<8x32xf32>
    %364 = vector.broadcast %360 : vector<8x1xf32> to vector<8x32xf32>
    %365 = arith.mulf %363, %364 : vector<8x32xf32>
    %366 = tpu.concatenate %298, %302, %306, %313, %317, %321, %351, %358, %365 in 1 : vector<8x32xf32>, vector<8x32xf32>, vector<8x32xf32>, vector<8x32xf32>, vector<8x32xf32>, vector<8x32xf32>, vector<8x32xf32>, vector<8x32xf32>, vector<8x32xf32> -> vector<8x288xf32>
    %c8_192 = arith.constant 8 : index
    %c0_193 = arith.constant 0 : index
    %c0_194 = arith.constant 0 : index
    %367 = vector.load %arg12[%c8_192, %c0_193, %c0_194] : memref<9x8x1xf32, #tpu.memory_space<vmem>>, vector<1x8x1xf32>
    %368 = vector.shape_cast %367 : vector<1x8x1xf32> to vector<8x1xf32>
    %cst_195 = arith.constant 0.000000e+00 : f32
    %369 = vector.broadcast %cst_195 : f32 to vector<3x32xf32>
    %370 = vector.extract_strided_slice %267 {offsets = [3, 0], sizes = [5, 32], strides = [1, 1]} : vector<8x32xf32> to vector<5x32xf32>
    %371 = tpu.concatenate %370, %369 in 0 : vector<5x32xf32>, vector<3x32xf32> -> vector<8x32xf32>
    %372 = vector.broadcast %368 : vector<8x1xf32> to vector<8x32xf32>
    %373 = arith.mulf %371, %372 : vector<8x32xf32>
    %374 = tpu.concatenate %302, %306, %336, %317, %321, %343, %358, %365, %373 in 1 : vector<8x32xf32>, vector<8x32xf32>, vector<8x32xf32>, vector<8x32xf32>, vector<8x32xf32>, vector<8x32xf32>, vector<8x32xf32>, vector<8x32xf32>, vector<8x32xf32> -> vector<8x288xf32>
    %375 = tpu.concatenate %322, %344, %366, %374 in 0 : vector<8x288xf32>, vector<8x288xf32>, vector<8x288xf32>, vector<8x288xf32> -> vector<32x288xf32>
    %376 = arith.truncf %375 : vector<32x288xf32> to vector<32x288xbf16>
    %c0_196 = arith.constant 0 : index
    %c0_197 = arith.constant 0 : index
    %377 = vector.load %arg10[%c0_196, %c0_197] : memref<288x32xbf16, #tpu.memory_space<vmem>>, vector<288x32xbf16>
    %cst_198 = arith.constant dense<0.000000e+00> : vector<32x32xf32>
    %378 = tpu.matmul %376, %377, %cst_198 {dimension_numbers = #tpu.dot_dimension_numbers<[1], [0], [0], [1], [0, 0, 1, 1], [], []>} : vector<32x288xbf16>, vector<288x32xbf16>, vector<32x32xf32> -> vector<32x32xf32>
    %379 = vector.extract_strided_slice %378 {offsets = [0, 0], sizes = [8, 32], strides = [1, 1]} : vector<32x32xf32> to vector<8x32xf32>
    %380 = vector.extract_strided_slice %378 {offsets = [8, 0], sizes = [8, 32], strides = [1, 1]} : vector<32x32xf32> to vector<8x32xf32>
    %381 = arith.maximumf %379, %380 : vector<8x32xf32>
    %382 = vector.extract_strided_slice %378 {offsets = [16, 0], sizes = [8, 32], strides = [1, 1]} : vector<32x32xf32> to vector<8x32xf32>
    %383 = vector.extract_strided_slice %378 {offsets = [24, 0], sizes = [8, 32], strides = [1, 1]} : vector<32x32xf32> to vector<8x32xf32>
    %384 = arith.maximumf %382, %383 : vector<8x32xf32>
    %385 = arith.maximumf %381, %384 : vector<8x32xf32>
    %c0_199 = arith.constant 0 : index
    %c0_200 = arith.constant 0 : index
    %386 = vector.load %arg11[%c0_199, %c0_200] : memref<1x32xf32, #tpu.memory_space<vmem>>, vector<1x32xf32>
    %387 = vector.broadcast %386 : vector<1x32xf32> to vector<8x32xf32>
    %388 = arith.addf %385, %387 : vector<8x32xf32>
    %cst_201 = arith.constant 0.000000e+00 : f32
    %389 = vector.broadcast %cst_201 : f32 to vector<8x32xf32>
    %390 = arith.maximumf %388, %389 : vector<8x32xf32>
    %c0_202 = arith.constant 0 : index
    %c0_203 = arith.constant 0 : index
    %391 = vector.load %arg15[%c0_202, %c0_203] : memref<2x8xf32, #tpu.memory_space<vmem>>, vector<2x8xf32>
    %cst_204 = arith.constant dense<0.000000e+00> : vector<2x32xf32>
    %392 = tpu.matmul %391, %390, %cst_204 {dimension_numbers = #tpu.dot_dimension_numbers<[1], [0], [0], [1], [0, 0, 1, 1], [], []>} : vector<2x8xf32>, vector<8x32xf32>, vector<2x32xf32> -> vector<2x32xf32>
    %c0_205 = arith.constant 0 : index
    %c0_206 = arith.constant 0 : index
    %393 = vector.load %arg16[%c0_205, %c0_206] : memref<32x2xf32, #tpu.memory_space<vmem>>, vector<32x2xf32>
    %cst_207 = arith.constant dense<0.000000e+00> : vector<2x2xf32>
    %394 = tpu.matmul %392, %393, %cst_207 {dimension_numbers = #tpu.dot_dimension_numbers<[1], [0], [0], [1], [0, 0, 1, 1], [], []>} : vector<2x32xf32>, vector<32x2xf32>, vector<2x2xf32> -> vector<2x2xf32>
    %c0_208 = arith.constant 0 : index
    %c0_209 = arith.constant 0 : index
    %395 = vector.load %arg17[%c0_208, %c0_209] : memref<1x2xf32, #tpu.memory_space<vmem>>, vector<1x2xf32>
    %396 = vector.broadcast %395 : vector<1x2xf32> to vector<2x2xf32>
    %397 = arith.addf %394, %396 : vector<2x2xf32>
    %398 = vector.shape_cast %397 : vector<2x2xf32> to vector<1x2x2xf32>
    %c0_210 = arith.constant 0 : index
    %c0_211 = arith.constant 0 : index
    %c0_212 = arith.constant 0 : index
    %399 = vector.load %arg18[%c0_210, %c0_211, %c0_212] : memref<1x2x2xf32, #tpu.memory_space<vmem>>, vector<1x2x2xf32>
    tpu.vector_store %arg18[%c0_210, %c0_211, %c0_212], %398 {strides = array<i32>} : memref<1x2x2xf32, #tpu.memory_space<vmem>>, vector<1x2x2xf32>,
    return
  }
  func.func @transform_0(%arg0: i32) -> (i32, i32) {
    %c0_i32 = arith.constant 0 : i32
    %c0_i32_0 = arith.constant 0 : i32
    return %arg0, %c0_i32 : i32, i32
  }
  func.func @transform_1(%arg0: i32) -> (i32, i32) {
    %c0_i32 = arith.constant 0 : i32
    %c0_i32_0 = arith.constant 0 : i32
    %c0_i32_1 = arith.constant 0 : i32
    return %c0_i32, %c0_i32_0 : i32, i32
  }
  func.func @transform_2(%arg0: i32) -> (i32, i32) {
    %c0_i32 = arith.constant 0 : i32
    %c0_i32_0 = arith.constant 0 : i32
    %c0_i32_1 = arith.constant 0 : i32
    return %c0_i32, %c0_i32_0 : i32, i32
  }
  func.func @transform_3(%arg0: i32) -> (i32, i32) {
    %c0_i32 = arith.constant 0 : i32
    %c0_i32_0 = arith.constant 0 : i32
    %c0_i32_1 = arith.constant 0 : i32
    return %c0_i32, %c0_i32_0 : i32, i32
  }
  func.func @transform_4(%arg0: i32) -> (i32, i32) {
    %c0_i32 = arith.constant 0 : i32
    %c0_i32_0 = arith.constant 0 : i32
    %c0_i32_1 = arith.constant 0 : i32
    return %c0_i32, %c0_i32_0 : i32, i32
  }
  func.func @transform_5(%arg0: i32) -> (i32, i32, i32) {
    %c0_i32 = arith.constant 0 : i32
    %c0_i32_0 = arith.constant 0 : i32
    %c0_i32_1 = arith.constant 0 : i32
    %c0_i32_2 = arith.constant 0 : i32
    return %c0_i32, %c0_i32_0, %c0_i32_1 : i32, i32, i32
  }
  func.func @transform_6(%arg0: i32) -> (i32, i32) {
    %c0_i32 = arith.constant 0 : i32
    %c0_i32_0 = arith.constant 0 : i32
    %c0_i32_1 = arith.constant 0 : i32
    return %c0_i32, %c0_i32_0 : i32, i32
  }
  func.func @transform_7(%arg0: i32) -> (i32, i32) {
    %c0_i32 = arith.constant 0 : i32
    %c0_i32_0 = arith.constant 0 : i32
    %c0_i32_1 = arith.constant 0 : i32
    return %c0_i32, %c0_i32_0 : i32, i32
  }
  func.func @transform_8(%arg0: i32) -> (i32, i32, i32) {
    %c0_i32 = arith.constant 0 : i32
    %c0_i32_0 = arith.constant 0 : i32
    %c0_i32_1 = arith.constant 0 : i32
    %c0_i32_2 = arith.constant 0 : i32
    return %c0_i32, %c0_i32_0, %c0_i32_1 : i32, i32, i32
  }
  func.func @transform_9(%arg0: i32) -> (i32, i32) {
    %c0_i32 = arith.constant 0 : i32
    %c0_i32_0 = arith.constant 0 : i32
    %c0_i32_1 = arith.constant 0 : i32
    return %c0_i32, %c0_i32_0 : i32, i32
  }
  func.func @transform_10(%arg0: i32) -> (i32, i32) {
    %c0_i32 = arith.constant 0 : i32
    %c0_i32_0 = arith.constant 0 : i32
    %c0_i32_1 = arith.constant 0 : i32
    return %c0_i32, %c0_i32_0 : i32, i32
  }
  func.func @transform_11(%arg0: i32) -> (i32, i32, i32) {
    %c0_i32 = arith.constant 0 : i32
    %c0_i32_0 = arith.constant 0 : i32
    %c0_i32_1 = arith.constant 0 : i32
    %c0_i32_2 = arith.constant 0 : i32
    return %c0_i32, %c0_i32_0, %c0_i32_1 : i32, i32, i32
  }
  func.func @transform_12(%arg0: i32) -> (i32, i32) {
    %c0_i32 = arith.constant 0 : i32
    %c0_i32_0 = arith.constant 0 : i32
    %c0_i32_1 = arith.constant 0 : i32
    return %c0_i32, %c0_i32_0 : i32, i32
  }
  func.func @transform_13(%arg0: i32) -> (i32, i32) {
    %c0_i32 = arith.constant 0 : i32
    %c0_i32_0 = arith.constant 0 : i32
    %c0_i32_1 = arith.constant 0 : i32
    return %c0_i32, %c0_i32_0 : i32, i32
  }
  func.func @transform_14(%arg0: i32) -> (i32, i32) {
    %c0_i32 = arith.constant 0 : i32
    %c0_i32_0 = arith.constant 0 : i32
    %c0_i32_1 = arith.constant 0 : i32
    return %c0_i32, %c0_i32_0 : i32, i32
  }
  func.func @transform_15(%arg0: i32) -> (i32, i32) {
    %c0_i32 = arith.constant 0 : i32
    %c0_i32_0 = arith.constant 0 : i32
    %c0_i32_1 = arith.constant 0 : i32
    return %c0_i32, %c0_i32_0 : i32, i32
  }
  func.func @transform_16(%arg0: i32) -> (i32, i32) {
    %c0_i32 = arith.constant 0 : i32
    %c0_i32_0 = arith.constant 0 : i32
    %c0_i32_1 = arith.constant 0 : i32
    return %c0_i32, %c0_i32_0 : i32, i32
  }
  func.func @transform_17(%arg0: i32) -> (i32, i32, i32) {
    %c0_i32 = arith.constant 0 : i32
    %c0_i32_0 = arith.constant 0 : i32
    %c0_i32_1 = arith.constant 0 : i32
    return %arg0, %c0_i32, %c0_i32_0 : i32, i32, i32
  }
}

</mosaic_0001>

<llo_original>
// kernel: yearbook_forward.1
$region0: #{yearbook_forward.1}
  #allocation0 [shape = 'u32[]', space=smem, size = 0x4, offset = 0x4, fixed_abs, tag = 'smem constant byte address 0x4 - core index']
  #allocation1 [shape = 'u32[144,128]{1,0:T(1,128)}', space=vmem, size = 0x12000, scoped, tag = 'internal scratch']
  %s0 = inlined_call_operand.vmem [shape: bf16[4096,32], index: 0, kind: input, shape index: {}]
  %s1 = inlined_call_operand.vmem [shape: bf16[32,32], index: 1, kind: input, shape index: {}]
  %s2 = inlined_call_operand.vmem [shape: f32[1,32], index: 2, kind: input, shape index: {}]
  %s3 = inlined_call_operand.vmem [shape: bf16[288,32], index: 3, kind: input, shape index: {}]
  %s4 = inlined_call_operand.vmem [shape: f32[1,32], index: 4, kind: input, shape index: {}]
  %s5 = inlined_call_operand.vmem [shape: f32[9,128,1], index: 5, kind: input, shape index: {}]
  %s6 = inlined_call_operand.vmem [shape: bf16[288,32], index: 6, kind: input, shape index: {}]
  %s7 = inlined_call_operand.vmem [shape: f32[1,32], index: 7, kind: input, shape index: {}]
  %s8 = inlined_call_operand.vmem [shape: f32[9,32,1], index: 8, kind: input, shape index: {}]
  %s9 = inlined_call_operand.vmem [shape: bf16[288,32], index: 9, kind: input, shape index: {}]
  %s10 = inlined_call_operand.vmem [shape: f32[1,32], index: 10, kind: input, shape index: {}]
  %s11 = inlined_call_operand.vmem [shape: f32[9,8,1], index: 11, kind: input, shape index: {}]
  %s12 = inlined_call_operand.vmem [shape: f32[128,128], index: 12, kind: input, shape index: {}]
  %s13 = inlined_call_operand.vmem [shape: f32[32,32], index: 13, kind: input, shape index: {}]
  %s14 = inlined_call_operand.vmem [shape: f32[2,8], index: 14, kind: input, shape index: {}]
  %s15 = inlined_call_operand.vmem [shape: f32[32,2], index: 15, kind: input, shape index: {}]
  %s16 = inlined_call_operand.vmem [shape: f32[1,2], index: 16, kind: input, shape index: {}]
  %s17 = inlined_call_operand.vmem [shape: f32[2,2,2], index: 17, kind: output, shape index: {}]
  %s18 = sld [smem:[#allocation0]]
  $region101: #{yearbook_forward.1} parent=0
    _
  %s20 = ssub.s32 1, %s18
  %s21 = scalar_select 0, %s20, %s18
  loop: start=0, step=1, limit=4
  $region2: #{yearbook_forward.1} parent=0 // loop_pre_header
    _
  $region3: #{yearbook_forward.1} parent=0 // loop_header
    %s23 = sphi 0, %s27
    %p24 = scmp.ge.s32.totalorder %s23, 4
    %s33 = sphi 0, %s35
    %s36 = sphi 0, %s33
    %s37 = sphi 0, %s36
    %s53 = sphi 0, %s37
    %s57 = sphi 0, %s57
    %s59 = sphi 0, %s57
    %s60 = sphi 0, %s59
    %s74 = sphi 0, %s60
    %s78 = sphi 0, %s78
    %s80 = sphi 0, %s78
    %s81 = sphi 0, %s80
    %s95 = sphi 0, %s81
    %s99 = sphi 0, %s99
    %s101 = sphi 0, %s99
    %s102 = sphi 0, %s101
    %s116 = sphi 0, %s102
    %s120 = sphi 0, %s120
    %s122 = sphi 0, %s120
    %s123 = sphi 0, %s122
    %s137 = sphi 0, %s123
    %s141 = sphi 0, %s141
    %s143 = sphi 0, %s141
    %s144 = sphi 0, %s143
    %s158 = sphi 0, %s144
    %s162 = sphi 0, %s162
    %s164 = sphi 0, %s162
    %s165 = sphi 0, %s164
    %s179 = sphi 0, %s165
    %s183 = sphi 0, %s183
    %s185 = sphi 0, %s183
    %s186 = sphi 0, %s185
    %s200 = sphi 0, %s186
    %s204 = sphi 0, %s204
    %s206 = sphi 0, %s204
    %s207 = sphi 0, %s206
    %s221 = sphi 0, %s207
    %s225 = sphi 0, %s225
    %s227 = sphi 0, %s225
    %s228 = sphi 0, %s227
    %s242 = sphi 0, %s228
    %s246 = sphi 0, %s246
    %s248 = sphi 0, %s246
    %s249 = sphi 0, %s248
    %s263 = sphi 0, %s249
    %s267 = sphi 0, %s267
    %s269 = sphi 0, %s267
    %s270 = sphi 0, %s269
    %s284 = sphi 0, %s270
    %s288 = sphi 0, %s288
    %s290 = sphi 0, %s288
    %s291 = sphi 0, %s290
    %s305 = sphi 0, %s291
    %s309 = sphi 0, %s309
    %s311 = sphi 0, %s309
    %s312 = sphi 0, %s311
    %s326 = sphi 0, %s312
    %s330 = sphi 0, %s330
    %s332 = sphi 0, %s330
    %s333 = sphi 0, %s332
    %s347 = sphi 0, %s333
    %s351 = sphi 0, %s351
    %s353 = sphi 0, %s351
    %s354 = sphi 0, %s353
    %s368 = sphi 0, %s354
    %s372 = sphi 0, %s372
    %s374 = sphi 0, %s372
    %s375 = sphi 0, %s374
    %s389 = sphi 0, %s375
    %s395 = sphi 0, %s397
    %s398 = sphi 0, %s395
    %s399 = sphi 0, %s398
    %s415 = sphi 0, %s399
  $region4: #{yearbook_forward.1} parent=0 // loop_header_branch
    %26 = sbr.rel (%p24) target = $region8
  $region5: #{yearbook_forward.1} parent=0 // loop_body
    %s28 = ssub.s32 %s23, 1
    %s29 = ssub.s32 %s23, 2
    %s30 = sadd.s32 %s23, 1
    %s31 = ssub.s32 %s23, %s30
    %p32 = scmp.eq.s32.totalorder %s31, 0
    %s34 = sadd.s32 %s33, 1
    %s35 = scalar_select %p32, %s33, %s34
    %p38 = pneg %p32
    %p39 = scmp.eq.s32.totalorder %s23, 1
    %p40 = por %p38, %p39
    %p41 = scmp.ne.s32.totalorder %s33, %s36
    %p42 = scmp.eq.s32.totalorder %s23, 0
    %p43 = por %p41, %p42
    %p44 = scmp.ne.s32.totalorder %s33, %s36
    %p45 = scmp.eq.s32.totalorder %s28, 1
    %p46 = por %p44, %p45
    %p47 = scmp.ne.s32.totalorder %s36, %s37
    %p48 = scmp.eq.s32.totalorder %s28, 0
    %p49 = por %p47, %p48
    %p50 = scmp.ne.s32.totalorder %s36, %s37
    %p51 = scmp.eq.s32.totalorder %s29, 1
    %p52 = por %p50, %p51
    %p54 = scmp.ne.s32.totalorder %s37, %s53
    %p55 = scmp.eq.s32.totalorder %s29, 0
    %p56 = por %p54, %p55
    %s58 = sadd.s32 %s57, 1
    %p61 = scmp.eq.s32.totalorder %s23, 1
    %p62 = scmp.ne.s32.totalorder %s57, %s59
    %p63 = scmp.eq.s32.totalorder %s23, 0
    %p64 = por %p62, %p63
    %p65 = scmp.ne.s32.totalorder %s57, %s59
    %p66 = scmp.eq.s32.totalorder %s28, 1
    %p67 = por %p65, %p66
    %p68 = scmp.ne.s32.totalorder %s59, %s60
    %p69 = scmp.eq.s32.totalorder %s28, 0
    %p70 = por %p68, %p69
    %p71 = scmp.ne.s32.totalorder %s59, %s60
    %p72 = scmp.eq.s32.totalorder %s29, 1
    %p73 = por %p71, %p72
    %p75 = scmp.ne.s32.totalorder %s60, %s74
    %p76 = scmp.eq.s32.totalorder %s29, 0
    %p77 = por %p75, %p76
    %s79 = sadd.s32 %s78, 1
    %p82 = scmp.eq.s32.totalorder %s23, 1
    %p83 = scmp.ne.s32.totalorder %s78, %s80
    %p84 = scmp.eq.s32.totalorder %s23, 0
    %p85 = por %p83, %p84
    %p86 = scmp.ne.s32.totalorder %s78, %s80
    %p87 = scmp.eq.s32.totalorder %s28, 1
    %p88 = por %p86, %p87
    %p89 = scmp.ne.s32.totalorder %s80, %s81
    %p90 = scmp.eq.s32.totalorder %s28, 0
    %p91 = por %p89, %p90
    %p92 = scmp.ne.s32.totalorder %s80, %s81
    %p93 = scmp.eq.s32.totalorder %s29, 1
    %p94 = por %p92, %p93
    %p96 = scmp.ne.s32.totalorder %s81, %s95
    %p97 = scmp.eq.s32.totalorder %s29, 0
    %p98 = por %p96, %p97
    %s100 = sadd.s32 %s99, 1
    %p103 = scmp.eq.s32.totalorder %s23, 1
    %p104 = scmp.ne.s32.totalorder %s99, %s101
    %p105 = scmp.eq.s32.totalorder %s23, 0
    %p106 = por %p104, %p105
    %p107 = scmp.ne.s32.totalorder %s99, %s101
    %p108 = scmp.eq.s32.totalorder %s28, 1
    %p109 = por %p107, %p108
    %p110 = scmp.ne.s32.totalorder %s101, %s102
    %p111 = scmp.eq.s32.totalorder %s28, 0
    %p112 = por %p110, %p111
    %p113 = scmp.ne.s32.totalorder %s101, %s102
    %p114 = scmp.eq.s32.totalorder %s29, 1
    %p115 = por %p113, %p114
    %p117 = scmp.ne.s32.totalorder %s102, %s116
    %p118 = scmp.eq.s32.totalorder %s29, 0
    %p119 = por %p117, %p118
    %s121 = sadd.s32 %s120, 1
    %p124 = scmp.eq.s32.totalorder %s23, 1
    %p125 = scmp.ne.s32.totalorder %s120, %s122
    %p126 = scmp.eq.s32.totalorder %s23, 0
    %p127 = por %p125, %p126
    %p128 = scmp.ne.s32.totalorder %s120, %s122
    %p129 = scmp.eq.s32.totalorder %s28, 1
    %p130 = por %p128, %p129
    %p131 = scmp.ne.s32.totalorder %s122, %s123
    %p132 = scmp.eq.s32.totalorder %s28, 0
    %p133 = por %p131, %p132
    %p134 = scmp.ne.s32.totalorder %s122, %s123
    %p135 = scmp.eq.s32.totalorder %s29, 1
    %p136 = por %p134, %p135
    %p138 = scmp.ne.s32.totalorder %s123, %s137
    %p139 = scmp.eq.s32.totalorder %s29, 0
    %p140 = por %p138, %p139
    %s142 = sadd.s32 %s141, 1
    %p145 = scmp.eq.s32.totalorder %s23, 1
    %p146 = scmp.ne.s32.totalorder %s141, %s143
    %p147 = scmp.eq.s32.totalorder %s23, 0
    %p148 = por %p146, %p147
    %p149 = scmp.ne.s32.totalorder %s141, %s143
    %p150 = scmp.eq.s32.totalorder %s28, 1
    %p151 = por %p149, %p150
    %p152 = scmp.ne.s32.totalorder %s143, %s144
    %p153 = scmp.eq.s32.totalorder %s28, 0
    %p154 = por %p152, %p153
    %p155 = scmp.ne.s32.totalorder %s143, %s144
    %p156 = scmp.eq.s32.totalorder %s29, 1
    %p157 = por %p155, %p156
    %p159 = scmp.ne.s32.totalorder %s144, %s158
    %p160 = scmp.eq.s32.totalorder %s29, 0
    %p161 = por %p159, %p160
    %s163 = sadd.s32 %s162, 1
    %p166 = scmp.eq.s32.totalorder %s23, 1
    %p167 = scmp.ne.s32.totalorder %s162, %s164
    %p168 = scmp.eq.s32.totalorder %s23, 0
    %p169 = por %p167, %p168
    %p170 = scmp.ne.s32.totalorder %s162, %s164
    %p171 = scmp.eq.s32.totalorder %s28, 1
    %p172 = por %p170, %p171
    %p173 = scmp.ne.s32.totalorder %s164, %s165
    %p174 = scmp.eq.s32.totalorder %s28, 0
    %p175 = por %p173, %p174
    %p176 = scmp.ne.s32.totalorder %s164, %s165
    %p177 = scmp.eq.s32.totalorder %s29, 1
    %p178 = por %p176, %p177
    %p180 = scmp.ne.s32.totalorder %s165, %s179
    %p181 = scmp.eq.s32.totalorder %s29, 0
    %p182 = por %p180, %p181
    %s184 = sadd.s32 %s183, 1
    %p187 = scmp.eq.s32.totalorder %s23, 1
    %p188 = scmp.ne.s32.totalorder %s183, %s185
    %p189 = scmp.eq.s32.totalorder %s23, 0
    %p190 = por %p188, %p189
    %p191 = scmp.ne.s32.totalorder %s183, %s185
    %p192 = scmp.eq.s32.totalorder %s28, 1
    %p193 = por %p191, %p192
    %p194 = scmp.ne.s32.totalorder %s185, %s186
    %p195 = scmp.eq.s32.totalorder %s28, 0
    %p196 = por %p194, %p195
    %p197 = scmp.ne.s32.totalorder %s185, %s186
    %p198 = scmp.eq.s32.totalorder %s29, 1
    %p199 = por %p197, %p198
    %p201 = scmp.ne.s32.totalorder %s186, %s200
    %p202 = scmp.eq.s32.totalorder %s29, 0
    %p203 = por %p201, %p202
    %s205 = sadd.s32 %s204, 1
    %p208 = scmp.eq.s32.totalorder %s23, 1
    %p209 = scmp.ne.s32.totalorder %s204, %s206
    %p210 = scmp.eq.s32.totalorder %s23, 0
    %p211 = por %p209, %p210
    %p212 = scmp.ne.s32.totalorder %s204, %s206
    %p213 = scmp.eq.s32.totalorder %s28, 1
    %p214 = por %p212, %p213
    %p215 = scmp.ne.s32.totalorder %s206, %s207
    %p216 = scmp.eq.s32.totalorder %s28, 0
    %p217 = por %p215, %p216
    %p218 = scmp.ne.s32.totalorder %s206, %s207
    %p219 = scmp.eq.s32.totalorder %s29, 1
    %p220 = por %p218, %p219
    %p222 = scmp.ne.s32.totalorder %s207, %s221
    %p223 = scmp.eq.s32.totalorder %s29, 0
    %p224 = por %p222, %p223
    %s226 = sadd.s32 %s225, 1
    %p229 = scmp.eq.s32.totalorder %s23, 1
    %p230 = scmp.ne.s32.totalorder %s225, %s227
    %p231 = scmp.eq.s32.totalorder %s23, 0
    %p232 = por %p230, %p231
    %p233 = scmp.ne.s32.totalorder %s225, %s227
    %p234 = scmp.eq.s32.totalorder %s28, 1
    %p235 = por %p233, %p234
    %p236 = scmp.ne.s32.totalorder %s227, %s228
    %p237 = scmp.eq.s32.totalorder %s28, 0
    %p238 = por %p236, %p237
    %p239 = scmp.ne.s32.totalorder %s227, %s228
    %p240 = scmp.eq.s32.totalorder %s29, 1
    %p241 = por %p239, %p240
    %p243 = scmp.ne.s32.totalorder %s228, %s242
    %p244 = scmp.eq.s32.totalorder %s29, 0
    %p245 = por %p243, %p244
    %s247 = sadd.s32 %s246, 1
    %p250 = scmp.eq.s32.totalorder %s23, 1
    %p251 = scmp.ne.s32.totalorder %s246, %s248
    %p252 = scmp.eq.s32.totalorder %s23, 0
    %p253 = por %p251, %p252
    %p254 = scmp.ne.s32.totalorder %s246, %s248
    %p255 = scmp.eq.s32.totalorder %s28, 1
    %p256 = por %p254, %p255
    %p257 = scmp.ne.s32.totalorder %s248, %s249
    %p258 = scmp.eq.s32.totalorder %s28, 0
    %p259 = por %p257, %p258
    %p260 = scmp.ne.s32.totalorder %s248, %s249
    %p261 = scmp.eq.s32.totalorder %s29, 1
    %p262 = por %p260, %p261
    %p264 = scmp.ne.s32.totalorder %s249, %s263
    %p265 = scmp.eq.s32.totalorder %s29, 0
    %p266 = por %p264, %p265
    %s268 = sadd.s32 %s267, 1
    %p271 = scmp.eq.s32.totalorder %s23, 1
    %p272 = scmp.ne.s32.totalorder %s267, %s269
    %p273 = scmp.eq.s32.totalorder %s23, 0
    %p274 = por %p272, %p273
    %p275 = scmp.ne.s32.totalorder %s267, %s269
    %p276 = scmp.eq.s32.totalorder %s28, 1
    %p277 = por %p275, %p276
    %p278 = scmp.ne.s32.totalorder %s269, %s270
    %p279 = scmp.eq.s32.totalorder %s28, 0
    %p280 = por %p278, %p279
    %p281 = scmp.ne.s32.totalorder %s269, %s270
    %p282 = scmp.eq.s32.totalorder %s29, 1
    %p283 = por %p281, %p282
    %p285 = scmp.ne.s32.totalorder %s270, %s284
    %p286 = scmp.eq.s32.totalorder %s29, 0
    %p287 = por %p285, %p286
    %s289 = sadd.s32 %s288, 1
    %p292 = scmp.eq.s32.totalorder %s23, 1
    %p293 = scmp.ne.s32.totalorder %s288, %s290
    %p294 = scmp.eq.s32.totalorder %s23, 0
    %p295 = por %p293, %p294
    %p296 = scmp.ne.s32.totalorder %s288, %s290
    %p297 = scmp.eq.s32.totalorder %s28, 1
    %p298 = por %p296, %p297
    %p299 = scmp.ne.s32.totalorder %s290, %s291
    %p300 = scmp.eq.s32.totalorder %s28, 0
    %p301 = por %p299, %p300
    %p302 = scmp.ne.s32.totalorder %s290, %s291
    %p303 = scmp.eq.s32.totalorder %s29, 1
    %p304 = por %p302, %p303
    %p306 = scmp.ne.s32.totalorder %s291, %s305
    %p307 = scmp.eq.s32.totalorder %s29, 0
    %p308 = por %p306, %p307
    %s310 = sadd.s32 %s309, 1
    %p313 = scmp.eq.s32.totalorder %s23, 1
    %p314 = scmp.ne.s32.totalorder %s309, %s311
    %p315 = scmp.eq.s32.totalorder %s23, 0
    %p316 = por %p314, %p315
    %p317 = scmp.ne.s32.totalorder %s309, %s311
    %p318 = scmp.eq.s32.totalorder %s28, 1
    %p319 = por %p317, %p318
    %p320 = scmp.ne.s32.totalorder %s311, %s312
    %p321 = scmp.eq.s32.totalorder %s28, 0
    %p322 = por %p320, %p321
    %p323 = scmp.ne.s32.totalorder %s311, %s312
    %p324 = scmp.eq.s32.totalorder %s29, 1
    %p325 = por %p323, %p324
    %p327 = scmp.ne.s32.totalorder %s312, %s326
    %p328 = scmp.eq.s32.totalorder %s29, 0
    %p329 = por %p327, %p328
    %s331 = sadd.s32 %s330, 1
    %p334 = scmp.eq.s32.totalorder %s23, 1
    %p335 = scmp.ne.s32.totalorder %s330, %s332
    %p336 = scmp.eq.s32.totalorder %s23, 0
    %p337 = por %p335, %p336
    %p338 = scmp.ne.s32.totalorder %s330, %s332
    %p339 = scmp.eq.s32.totalorder %s28, 1
    %p340 = por %p338, %p339
    %p341 = scmp.ne.s32.totalorder %s332, %s333
    %p342 = scmp.eq.s32.totalorder %s28, 0
    %p343 = por %p341, %p342
    %p344 = scmp.ne.s32.totalorder %s332, %s333
    %p345 = scmp.eq.s32.totalorder %s29, 1
    %p346 = por %p344, %p345
    %p348 = scmp.ne.s32.totalorder %s333, %s347
    %p349 = scmp.eq.s32.totalorder %s29, 0
    %p350 = por %p348, %p349
    %s352 = sadd.s32 %s351, 1
    %p355 = scmp.eq.s32.totalorder %s23, 1
    %p356 = scmp.ne.s32.totalorder %s351, %s353
    %p357 = scmp.eq.s32.totalorder %s23, 0
    %p358 = por %p356, %p357
    %p359 = scmp.ne.s32.totalorder %s351, %s353
    %p360 = scmp.eq.s32.totalorder %s28, 1
    %p361 = por %p359, %p360
    %p362 = scmp.ne.s32.totalorder %s353, %s354
    %p363 = scmp.eq.s32.totalorder %s28, 0
    %p364 = por %p362, %p363
    %p365 = scmp.ne.s32.totalorder %s353, %s354
    %p366 = scmp.eq.s32.totalorder %s29, 1
    %p367 = por %p365, %p366
    %p369 = scmp.ne.s32.totalorder %s354, %s368
    %p370 = scmp.eq.s32.totalorder %s29, 0
    %p371 = por %p369, %p370
    %s373 = sadd.s32 %s372, 1
    %p376 = scmp.eq.s32.totalorder %s23, 1
    %p377 = scmp.ne.s32.totalorder %s372, %s374
    %p378 = scmp.eq.s32.totalorder %s23, 0
    %p379 = por %p377, %p378
    %p380 = scmp.ne.s32.totalorder %s372, %s374
    %p381 = scmp.eq.s32.totalorder %s28, 1
    %p382 = por %p380, %p381
    %p383 = scmp.ne.s32.totalorder %s374, %s375
    %p384 = scmp.eq.s32.totalorder %s28, 0
    %p385 = por %p383, %p384
    %p386 = scmp.ne.s32.totalorder %s374, %s375
    %p387 = scmp.eq.s32.totalorder %s29, 1
    %p388 = por %p386, %p387
    %p390 = scmp.ne.s32.totalorder %s375, %s389
    %p391 = scmp.eq.s32.totalorder %s29, 0
    %p392 = por %p390, %p391
    %s393 = ssub.s32 %s23, %s30
    %p394 = scmp.eq.s32.totalorder %s393, 0
    %s396 = sadd.s32 %s395, 1
    %s397 = scalar_select %p394, %s395, %s396
    %p400 = pneg %p394
    %p401 = scmp.eq.s32.totalorder %s23, 1
    %p402 = por %p400, %p401
    %p403 = scmp.ne.s32.totalorder %s395, %s398
    %p404 = scmp.eq.s32.totalorder %s23, 0
    %p405 = por %p403, %p404
    %p406 = scmp.ne.s32.totalorder %s395, %s398
    %p407 = scmp.eq.s32.totalorder %s28, 1
    %p408 = por %p406, %p407
    %p409 = scmp.ne.s32.totalorder %s398, %s399
    %p410 = scmp.eq.s32.totalorder %s28, 0
    %p411 = por %p409, %p410
    %p412 = scmp.ne.s32.totalorder %s398, %s399
    %p413 = scmp.eq.s32.totalorder %s29, 1
    %p414 = por %p412, %p413
    %p416 = scmp.ne.s32.totalorder %s399, %s415
    %p417 = scmp.eq.s32.totalorder %s29, 0
    %p418 = por %p416, %p417
    %p419 = scmp.le.s32.totalorder 1, %s23
    %p420 = scmp.lt.s32.totalorder %s23, 3
    %p421 = pnand %p419, %p420
    %p422 = pneg %p421
    // Predicated region
    $region9: #{yearbook_forward.1} parent=5 // pred_check
      _
    $region10: #{yearbook_forward.1} parent=5 // pred_check_branch
      %424 = sbr.rel (%p421) target = $region12
    $region11: #{yearbook_forward.1} parent=5 // pred_region
      %s425 = ssub.s32 %s23, 1
      // Predicated region
      $region13: #{yearbook_forward.1} parent=11 // pred_check
        %p426 = pneg %p70
      $region14: #{yearbook_forward.1} parent=11 // pred_check_branch
        %428 = sbr.rel (%p426) target = $region16
      $region15: #{yearbook_forward.1} parent=11 // pred_region
        _
      $region16: #{yearbook_forward.1} parent=11 // pred_fallthru
        _
      // Predicated region
      $region17: #{yearbook_forward.1} parent=11 // pred_check
        %p429 = pneg %p91
      $region18: #{yearbook_forward.1} parent=11 // pred_check_branch
        %431 = sbr.rel (%p429) target = $region20
      $region19: #{yearbook_forward.1} parent=11 // pred_region
        _
      $region20: #{yearbook_forward.1} parent=11 // pred_fallthru
        _
      // Predicated region
      $region21: #{yearbook_forward.1} parent=11 // pred_check
        %p432 = pneg %p112
      $region22: #{yearbook_forward.1} parent=11 // pred_check_branch
        %434 = sbr.rel (%p432) target = $region24
      $region23: #{yearbook_forward.1} parent=11 // pred_region
        _
      $region24: #{yearbook_forward.1} parent=11 // pred_fallthru
        _
      // Predicated region
      $region25: #{yearbook_forward.1} parent=11 // pred_check
        %p435 = pneg %p133
      $region26: #{yearbook_forward.1} parent=11 // pred_check_branch
        %437 = sbr.rel (%p435) target = $region28
      $region27: #{yearbook_forward.1} parent=11 // pred_region
        _
      $region28: #{yearbook_forward.1} parent=11 // pred_fallthru
        _
      // Predicated region
      $region29: #{yearbook_forward.1} parent=11 // pred_check
        %p438 = pneg %p154
      $region30: #{yearbook_forward.1} parent=11 // pred_check_branch
        %440 = sbr.rel (%p438) target = $region32
      $region31: #{yearbook_forward.1} parent=11 // pred_region
        _
      $region32: #{yearbook_forward.1} parent=11 // pred_fallthru
        _
      // Predicated region
      $region33: #{yearbook_forward.1} parent=11 // pred_check
        %p441 = pneg %p175
      $region34: #{yearbook_forward.1} parent=11 // pred_check_branch
        %443 = sbr.rel (%p441) target = $region36
      $region35: #{yearbook_forward.1} parent=11 // pred_region
        _
      $region36: #{yearbook_forward.1} parent=11 // pred_fallthru
        _
      // Predicated region
      $region37: #{yearbook_forward.1} parent=11 // pred_check
        %p444 = pneg %p196
      $region38: #{yearbook_forward.1} parent=11 // pred_check_branch
        %446 = sbr.rel (%p444) target = $region40
      $region39: #{yearbook_forward.1} parent=11 // pred_region
        _
      $region40: #{yearbook_forward.1} parent=11 // pred_fallthru
        _
      // Predicated region
      $region41: #{yearbook_forward.1} parent=11 // pred_check
        %p447 = pneg %p217
      $region42: #{yearbook_forward.1} parent=11 // pred_check_branch
        %449 = sbr.rel (%p447) target = $region44
      $region43: #{yearbook_forward.1} parent=11 // pred_region
        _
      $region44: #{yearbook_forward.1} parent=11 // pred_fallthru
        _
      // Predicated region
      $region45: #{yearbook_forward.1} parent=11 // pred_check
        %p450 = pneg %p238
      $region46: #{yearbook_forward.1} parent=11 // pred_check_branch
        %452 = sbr.rel (%p450) target = $region48
      $region47: #{yearbook_forward.1} parent=11 // pred_region
        _
      $region48: #{yearbook_forward.1} parent=11 // pred_fallthru
        _
      // Predicated region
      $region49: #{yearbook_forward.1} parent=11 // pred_check
        %p453 = pneg %p259
      $region50: #{yearbook_forward.1} parent=11 // pred_check_branch
        %455 = sbr.rel (%p453) target = $region52
      $region51: #{yearbook_forward.1} parent=11 // pred_region
        _
      $region52: #{yearbook_forward.1} parent=11 // pred_fallthru
        _
      // Predicated region
      $region53: #{yearbook_forward.1} parent=11 // pred_check
        %p456 = pneg %p280
      $region54: #{yearbook_forward.1} parent=11 // pred_check_branch
        %458 = sbr.rel (%p456) target = $region56
      $region55: #{yearbook_forward.1} parent=11 // pred_region
        _
      $region56: #{yearbook_forward.1} parent=11 // pred_fallthru
        _
      // Predicated region
      $region57: #{yearbook_forward.1} parent=11 // pred_check
        %p459 = pneg %p301
      $region58: #{yearbook_forward.1} parent=11 // pred_check_branch
        %461 = sbr.rel (%p459) target = $region60
      $region59: #{yearbook_forward.1} parent=11 // pred_region
        _
      $region60: #{yearbook_forward.1} parent=11 // pred_fallthru
        _
      // Predicated region
      $region61: #{yearbook_forward.1} parent=11 // pred_check
        %p462 = pneg %p322
      $region62: #{yearbook_forward.1} parent=11 // pred_check_branch
        %464 = sbr.rel (%p462) target = $region64
      $region63: #{yearbook_forward.1} parent=11 // pred_region
        _
      $region64: #{yearbook_forward.1} parent=11 // pred_fallthru
        _
      // Predicated region
      $region65: #{yearbook_forward.1} parent=11 // pred_check
        %p465 = pneg %p343
      $region66: #{yearbook_forward.1} parent=11 // pred_check_branch
        %467 = sbr.rel (%p465) target = $region68
      $region67: #{yearbook_forward.1} parent=11 // pred_region
        _
      $region68: #{yearbook_forward.1} parent=11 // pred_fallthru
        _
      // Predicated region
      $region69: #{yearbook_forward.1} parent=11 // pred_check
        %p468 = pneg %p364
      $region70: #{yearbook_forward.1} parent=11 // pred_check_branch
        %470 = sbr.rel (%p468) target = $region72
      $region71: #{yearbook_forward.1} parent=11 // pred_region
        _
      $region72: #{yearbook_forward.1} parent=11 // pred_fallthru
        _
      // Predicated region
      $region73: #{yearbook_forward.1} parent=11 // pred_check
        %p471 = pneg %p385
      $region74: #{yearbook_forward.1} parent=11 // pred_check_branch
        %473 = sbr.rel (%p471) target = $region76
      $region75: #{yearbook_forward.1} parent=11 // pred_region
        _
      $region76: #{yearbook_forward.1} parent=11 // pred_fallthru
        _
    $region12: #{yearbook_forward.1} parent=5 // pred_fallthru
      _
    %p474 = scmp.lt.s32.totalorder %s23, 2
    // Predicated region
    $region77: #{yearbook_forward.1} parent=5 // pred_check
      %p475 = pneg %p474
    $region78: #{yearbook_forward.1} parent=5 // pred_check_branch
      %477 = sbr.rel (%p475) target = $region80
    $region79: #{yearbook_forward.1} parent=5 // pred_region
      // Predicated region
      $region81: #{yearbook_forward.1} parent=79 // pred_check
        %p478 = pneg %p43
      $region82: #{yearbook_forward.1} parent=79 // pred_check_branch
        %480 = sbr.rel (%p478) target = $region84
      $region83: #{yearbook_forward.1} parent=79 // pred_region
        %s481 = smul.u32 256, %s23
        %p482 = scmp.lt.s32.totalorder %s481, 511
        %s483 = scalar_select %p482, %s481, 511
        %s484 = smul.addr %s483, 4
        %s485 = scalar_lea.vmem %s0, %s484
        %s486 = smul.u32 256, %s23
      $region84: #{yearbook_forward.1} parent=79 // pred_fallthru
        _
    $region80: #{yearbook_forward.1} parent=5 // pred_fallthru
      _
    %p487 = scmp.le.s32.totalorder 1, %s23
    %p488 = scmp.lt.s32.totalorder %s23, 3
    %p489 = pnand %p487, %p488
    %p490 = pneg %p489
    // Predicated region
    $region85: #{yearbook_forward.1} parent=5 // pred_check
      _
    $region86: #{yearbook_forward.1} parent=5 // pred_check_branch
      %492 = sbr.rel (%p489) target = $region88
    $region87: #{yearbook_forward.1} parent=5 // pred_region
      %s493 = ssub.s32 %s23, 1
      %s494 = smul.u32 256, %s28
      %p495 = scmp.lt.s32.totalorder %s494, 511
      %s496 = scalar_select %p495, %s494, 511
      %s497 = smul.addr %s496, 4
      %s498 = scalar_lea.vmem %s0, %s497
      %p499 = pneg %p49
      %p500 = pneg %p46
      %p501 = pneg %p70
      %p502 = pneg %p67
      %p503 = pneg %p91
      %p504 = pneg %p88
      %p505 = pneg %p112
      %p506 = pneg %p109
      %p507 = pneg %p133
      %p508 = pneg %p130
      %p509 = pneg %p154
      %p510 = pneg %p151
      %p511 = pneg %p175
      %p512 = pneg %p172
      %p513 = pneg %p196
      %p514 = pneg %p193
      %p515 = pneg %p217
      %p516 = pneg %p214
      %p517 = pneg %p238
      %p518 = pneg %p235
      %p519 = pneg %p259
      %p520 = pneg %p256
      %p521 = pneg %p280
      %p522 = pneg %p277
      %p523 = pneg %p301
      %p524 = pneg %p298
      %p525 = pneg %p322
      %p526 = pneg %p319
      %p527 = pneg %p343
      %p528 = pneg %p340
      %p529 = pneg %p364
      %p530 = pneg %p361
      %p531 = pneg %p385
      %p532 = pneg %p382
      %p533 = pneg %p411
      %p534 = pneg %p408
      %p535 = scmp.lt.s32.totalorder %s28, 1
      %s536 = scalar_select %p535, %s28, 1
      %s537 = smul.addr %s536, 2
      %s538 = scalar_lea.vmem %s17, %s537
      %s539 = smul.u32 256, %s28
      %p540 = scmp.lt.s32.totalorder %s539, 511
      %s541 = scalar_select %p540, %s539, 511
      %s542 = smul.addr %s541, 4
      %s543 = scalar_lea.vmem %s0, %s542
      %s544 = smul.u32 256, %s28
      %p545 = scmp.lt.s32.totalorder %s28, 1
      %s546 = scalar_select %p545, %s28, 1
      %s547 = smul.addr %s546, 2
      %s548 = scalar_lea.vmem %s17, %s547
      %v550 = vld [vmem:[%s543] sm:$0xf]
      %v551 = vld [vmem:[%s543 + $0x4] sm:$0xf]
      %v552 = vld [vmem:[%s543 + $0x8] sm:$0xf]
      %v553 = vld [vmem:[%s543 + $0xc] sm:$0xf]
      %v554 = vld [vmem:[%s543 + $0x10] sm:$0xf]
      %v555 = vld [vmem:[%s543 + $0x14] sm:$0xf]
      %v556 = vld [vmem:[%s543 + $0x18] sm:$0xf]
      %v557 = vld [vmem:[%s543 + $0x1c] sm:$0xf]
      %v558 = vld [vmem:[%s543 + $0x20] sm:$0xf]
      %v559 = vld [vmem:[%s543 + $0x24] sm:$0xf]
      %v560 = vld [vmem:[%s543 + $0x28] sm:$0xf]
      %v561 = vld [vmem:[%s543 + $0x2c] sm:$0xf]
      %v562 = vld [vmem:[%s543 + $0x30] sm:$0xf]
      %v563 = vld [vmem:[%s543 + $0x34] sm:$0xf]
      %v564 = vld [vmem:[%s543 + $0x38] sm:$0xf]
      %v565 = vld [vmem:[%s543 + $0x3c] sm:$0xf]
      %v566 = vld [vmem:[%s543 + $0x40] sm:$0xf]
      %v567 = vld [vmem:[%s543 + $0x44] sm:$0xf]
      %v568 = vld [vmem:[%s543 + $0x48] sm:$0xf]
      %v569 = vld [vmem:[%s543 + $0x4c] sm:$0xf]
      %v570 = vld [vmem:[%s543 + $0x50] sm:$0xf]
      %v571 = vld [vmem:[%s543 + $0x54] sm:$0xf]
      %v572 = vld [vmem:[%s543 + $0x58] sm:$0xf]
      %v573 = vld [vmem:[%s543 + $0x5c] sm:$0xf]
      %v574 = vld [vmem:[%s543 + $0x60] sm:$0xf]
      %v575 = vld [vmem:[%s543 + $0x64] sm:$0xf]
      %v576 = vld [vmem:[%s543 + $0x68] sm:$0xf]
      %v577 = vld [vmem:[%s543 + $0x6c] sm:$0xf]
      %v578 = vld [vmem:[%s543 + $0x70] sm:$0xf]
      %v579 = vld [vmem:[%s543 + $0x74] sm:$0xf]
      %v580 = vld [vmem:[%s543 + $0x78] sm:$0xf]
      %v581 = vld [vmem:[%s543 + $0x7c] sm:$0xf]
      %v582 = vld [vmem:[%s543 + $0x80] sm:$0xf]
      %v583 = vld [vmem:[%s543 + $0x84] sm:$0xf]
      %v584 = vld [vmem:[%s543 + $0x88] sm:$0xf]
      %v585 = vld [vmem:[%s543 + $0x8c] sm:$0xf]
      %v586 = vld [vmem:[%s543 + $0x90] sm:$0xf]
      %v587 = vld [vmem:[%s543 + $0x94] sm:$0xf]
      %v588 = vld [vmem:[%s543 + $0x98] sm:$0xf]
      %v589 = vld [vmem:[%s543 + $0x9c] sm:$0xf]
      %v590 = vld [vmem:[%s543 + $0xa0] sm:$0xf]
      %v591 = vld [vmem:[%s543 + $0xa4] sm:$0xf]
      %v592 = vld [vmem:[%s543 + $0xa8] sm:$0xf]
      %v593 = vld [vmem:[%s543 + $0xac] sm:$0xf]
      %v594 = vld [vmem:[%s543 + $0xb0] sm:$0xf]
      %v595 = vld [vmem:[%s543 + $0xb4] sm:$0xf]
      %v596 = vld [vmem:[%s543 + $0xb8] sm:$0xf]
      %v597 = vld [vmem:[%s543 + $0xbc] sm:$0xf]
      %v598 = vld [vmem:[%s543 + $0xc0] sm:$0xf]
      %v599 = vld [vmem:[%s543 + $0xc4] sm:$0xf]
      %v600 = vld [vmem:[%s543 + $0xc8] sm:$0xf]
      %v601 = vld [vmem:[%s543 + $0xcc] sm:$0xf]
      %v602 = vld [vmem:[%s543 + $0xd0] sm:$0xf]
      %v603 = vld [vmem:[%s543 + $0xd4] sm:$0xf]
      %v604 = vld [vmem:[%s543 + $0xd8] sm:$0xf]
      %v605 = vld [vmem:[%s543 + $0xdc] sm:$0xf]
      %v606 = vld [vmem:[%s543 + $0xe0] sm:$0xf]
      %v607 = vld [vmem:[%s543 + $0xe4] sm:$0xf]
      %v608 = vld [vmem:[%s543 + $0xe8] sm:$0xf]
      %v609 = vld [vmem:[%s543 + $0xec] sm:$0xf]
      %v610 = vld [vmem:[%s543 + $0xf0] sm:$0xf]
      %v611 = vld [vmem:[%s543 + $0xf4] sm:$0xf]
      %v612 = vld [vmem:[%s543 + $0xf8] sm:$0xf]
      %v613 = vld [vmem:[%s543 + $0xfc] sm:$0xf]
      %v614 = vld [vmem:[%s543 + $0x100] sm:$0xf]
      %v615 = vld [vmem:[%s543 + $0x104] sm:$0xf]
      %v616 = vld [vmem:[%s543 + $0x108] sm:$0xf]
      %v617 = vld [vmem:[%s543 + $0x10c] sm:$0xf]
      %v618 = vld [vmem:[%s543 + $0x110] sm:$0xf]
      %v619 = vld [vmem:[%s543 + $0x114] sm:$0xf]
      %v620 = vld [vmem:[%s543 + $0x118] sm:$0xf]
      %v621 = vld [vmem:[%s543 + $0x11c] sm:$0xf]
      %v622 = vld [vmem:[%s543 + $0x120] sm:$0xf]
      %v623 = vld [vmem:[%s543 + $0x124] sm:$0xf]
      %v624 = vld [vmem:[%s543 + $0x128] sm:$0xf]
      %v625 = vld [vmem:[%s543 + $0x12c] sm:$0xf]
      %v626 = vld [vmem:[%s543 + $0x130] sm:$0xf]
      %v627 = vld [vmem:[%s543 + $0x134] sm:$0xf]
      %v628 = vld [vmem:[%s543 + $0x138] sm:$0xf]
      %v629 = vld [vmem:[%s543 + $0x13c] sm:$0xf]
      %v630 = vld [vmem:[%s543 + $0x140] sm:$0xf]
      %v631 = vld [vmem:[%s543 + $0x144] sm:$0xf]
      %v632 = vld [vmem:[%s543 + $0x148] sm:$0xf]
      %v633 = vld [vmem:[%s543 + $0x14c] sm:$0xf]
      %v634 = vld [vmem:[%s543 + $0x150] sm:$0xf]
      %v635 = vld [vmem:[%s543 + $0x154] sm:$0xf]
      %v636 = vld [vmem:[%s543 + $0x158] sm:$0xf]
      %v637 = vld [vmem:[%s543 + $0x15c] sm:$0xf]
      %v638 = vld [vmem:[%s543 + $0x160] sm:$0xf]
      %v639 = vld [vmem:[%s543 + $0x164] sm:$0xf]
      %v640 = vld [vmem:[%s543 + $0x168] sm:$0xf]
      %v641 = vld [vmem:[%s543 + $0x16c] sm:$0xf]
      %v642 = vld [vmem:[%s543 + $0x170] sm:$0xf]
      %v643 = vld [vmem:[%s543 + $0x174] sm:$0xf]
      %v644 = vld [vmem:[%s543 + $0x178] sm:$0xf]
      %v645 = vld [vmem:[%s543 + $0x17c] sm:$0xf]
      %v646 = vld [vmem:[%s543 + $0x180] sm:$0xf]
      %v647 = vld [vmem:[%s543 + $0x184] sm:$0xf]
      %v648 = vld [vmem:[%s543 + $0x188] sm:$0xf]
      %v649 = vld [vmem:[%s543 + $0x18c] sm:$0xf]
      %v650 = vld [vmem:[%s543 + $0x190] sm:$0xf]
      %v651 = vld [vmem:[%s543 + $0x194] sm:$0xf]
      %v652 = vld [vmem:[%s543 + $0x198] sm:$0xf]
      %v653 = vld [vmem:[%s543 + $0x19c] sm:$0xf]
      %v654 = vld [vmem:[%s543 + $0x1a0] sm:$0xf]
      %v655 = vld [vmem:[%s543 + $0x1a4] sm:$0xf]
      %v656 = vld [vmem:[%s543 + $0x1a8] sm:$0xf]
      %v657 = vld [vmem:[%s543 + $0x1ac] sm:$0xf]
      %v658 = vld [vmem:[%s543 + $0x1b0] sm:$0xf]
      %v659 = vld [vmem:[%s543 + $0x1b4] sm:$0xf]
      %v660 = vld [vmem:[%s543 + $0x1b8] sm:$0xf]
      %v661 = vld [vmem:[%s543 + $0x1bc] sm:$0xf]
      %v662 = vld [vmem:[%s543 + $0x1c0] sm:$0xf]
      %v663 = vld [vmem:[%s543 + $0x1c4] sm:$0xf]
      %v664 = vld [vmem:[%s543 + $0x1c8] sm:$0xf]
      %v665 = vld [vmem:[%s543 + $0x1cc] sm:$0xf]
      %v666 = vld [vmem:[%s543 + $0x1d0] sm:$0xf]
      %v667 = vld [vmem:[%s543 + $0x1d4] sm:$0xf]
      %v668 = vld [vmem:[%s543 + $0x1d8] sm:$0xf]
      %v669 = vld [vmem:[%s543 + $0x1dc] sm:$0xf]
      %v670 = vld [vmem:[%s543 + $0x1e0] sm:$0xf]
      %v671 = vld [vmem:[%s543 + $0x1e4] sm:$0xf]
      %v672 = vld [vmem:[%s543 + $0x1e8] sm:$0xf]
      %v673 = vld [vmem:[%s543 + $0x1ec] sm:$0xf]
      %v674 = vld [vmem:[%s543 + $0x1f0] sm:$0xf]
      %v675 = vld [vmem:[%s543 + $0x1f4] sm:$0xf]
      %v676 = vld [vmem:[%s543 + $0x1f8] sm:$0xf]
      %v677 = vld [vmem:[%s543 + $0x1fc] sm:$0xf]
      %v678 = vld [vmem:[%s543 + $0x200] sm:$0xf]
      %v679 = vld [vmem:[%s543 + $0x204] sm:$0xf]
      %v680 = vld [vmem:[%s543 + $0x208] sm:$0xf]
      %v681 = vld [vmem:[%s543 + $0x20c] sm:$0xf]
      %v682 = vld [vmem:[%s543 + $0x210] sm:$0xf]
      %v683 = vld [vmem:[%s543 + $0x214] sm:$0xf]
      %v684 = vld [vmem:[%s543 + $0x218] sm:$0xf]
      %v685 = vld [vmem:[%s543 + $0x21c] sm:$0xf]
      %v686 = vld [vmem:[%s543 + $0x220] sm:$0xf]
      %v687 = vld [vmem:[%s543 + $0x224] sm:$0xf]
      %v688 = vld [vmem:[%s543 + $0x228] sm:$0xf]
      %v689 = vld [vmem:[%s543 + $0x22c] sm:$0xf]
      %v690 = vld [vmem:[%s543 + $0x230] sm:$0xf]
      %v691 = vld [vmem:[%s543 + $0x234] sm:$0xf]
      %v692 = vld [vmem:[%s543 + $0x238] sm:$0xf]
      %v693 = vld [vmem:[%s543 + $0x23c] sm:$0xf]
      %v694 = vld [vmem:[%s543 + $0x240] sm:$0xf]
      %v695 = vld [vmem:[%s543 + $0x244] sm:$0xf]
      %v696 = vld [vmem:[%s543 + $0x248] sm:$0xf]
      %v697 = vld [vmem:[%s543 + $0x24c] sm:$0xf]
      %v698 = vld [vmem:[%s543 + $0x250] sm:$0xf]
      %v699 = vld [vmem:[%s543 + $0x254] sm:$0xf]
      %v700 = vld [vmem:[%s543 + $0x258] sm:$0xf]
      %v701 = vld [vmem:[%s543 + $0x25c] sm:$0xf]
      %v702 = vld [vmem:[%s543 + $0x260] sm:$0xf]
      %v703 = vld [vmem:[%s543 + $0x264] sm:$0xf]
      %v704 = vld [vmem:[%s543 + $0x268] sm:$0xf]
      %v705 = vld [vmem:[%s543 + $0x26c] sm:$0xf]
      %v706 = vld [vmem:[%s543 + $0x270] sm:$0xf]
      %v707 = vld [vmem:[%s543 + $0x274] sm:$0xf]
      %v708 = vld [vmem:[%s543 + $0x278] sm:$0xf]
      %v709 = vld [vmem:[%s543 + $0x27c] sm:$0xf]
      %v710 = vld [vmem:[%s543 + $0x280] sm:$0xf]
      %v711 = vld [vmem:[%s543 + $0x284] sm:$0xf]
      %v712 = vld [vmem:[%s543 + $0x288] sm:$0xf]
      %v713 = vld [vmem:[%s543 + $0x28c] sm:$0xf]
      %v714 = vld [vmem:[%s543 + $0x290] sm:$0xf]
      %v715 = vld [vmem:[%s543 + $0x294] sm:$0xf]
      %v716 = vld [vmem:[%s543 + $0x298] sm:$0xf]
      %v717 = vld [vmem:[%s543 + $0x29c] sm:$0xf]
      %v718 = vld [vmem:[%s543 + $0x2a0] sm:$0xf]
      %v719 = vld [vmem:[%s543 + $0x2a4] sm:$0xf]
      %v720 = vld [vmem:[%s543 + $0x2a8] sm:$0xf]
      %v721 = vld [vmem:[%s543 + $0x2ac] sm:$0xf]
      %v722 = vld [vmem:[%s543 + $0x2b0] sm:$0xf]
      %v723 = vld [vmem:[%s543 + $0x2b4] sm:$0xf]
      %v724 = vld [vmem:[%s543 + $0x2b8] sm:$0xf]
      %v725 = vld [vmem:[%s543 + $0x2bc] sm:$0xf]
      %v726 = vld [vmem:[%s543 + $0x2c0] sm:$0xf]
      %v727 = vld [vmem:[%s543 + $0x2c4] sm:$0xf]
      %v728 = vld [vmem:[%s543 + $0x2c8] sm:$0xf]
      %v729 = vld [vmem:[%s543 + $0x2cc] sm:$0xf]
      %v730 = vld [vmem:[%s543 + $0x2d0] sm:$0xf]
      %v731 = vld [vmem:[%s543 + $0x2d4] sm:$0xf]
      %v732 = vld [vmem:[%s543 + $0x2d8] sm:$0xf]
      %v733 = vld [vmem:[%s543 + $0x2dc] sm:$0xf]
      %v734 = vld [vmem:[%s543 + $0x2e0] sm:$0xf]
      %v735 = vld [vmem:[%s543 + $0x2e4] sm:$0xf]
      %v736 = vld [vmem:[%s543 + $0x2e8] sm:$0xf]
      %v737 = vld [vmem:[%s543 + $0x2ec] sm:$0xf]
      %v738 = vld [vmem:[%s543 + $0x2f0] sm:$0xf]
      %v739 = vld [vmem:[%s543 + $0x2f4] sm:$0xf]
      %v740 = vld [vmem:[%s543 + $0x2f8] sm:$0xf]
      %v741 = vld [vmem:[%s543 + $0x2fc] sm:$0xf]
      %v742 = vld [vmem:[%s543 + $0x300] sm:$0xf]
      %v743 = vld [vmem:[%s543 + $0x304] sm:$0xf]
      %v744 = vld [vmem:[%s543 + $0x308] sm:$0xf]
      %v745 = vld [vmem:[%s543 + $0x30c] sm:$0xf]
      %v746 = vld [vmem:[%s543 + $0x310] sm:$0xf]
      %v747 = vld [vmem:[%s543 + $0x314] sm:$0xf]
      %v748 = vld [vmem:[%s543 + $0x318] sm:$0xf]
      %v749 = vld [vmem:[%s543 + $0x31c] sm:$0xf]
      %v750 = vld [vmem:[%s543 + $0x320] sm:$0xf]
      %v751 = vld [vmem:[%s543 + $0x324] sm:$0xf]
      %v752 = vld [vmem:[%s543 + $0x328] sm:$0xf]
      %v753 = vld [vmem:[%s543 + $0x32c] sm:$0xf]
      %v754 = vld [vmem:[%s543 + $0x330] sm:$0xf]
      %v755 = vld [vmem:[%s543 + $0x334] sm:$0xf]
      %v756 = vld [vmem:[%s543 + $0x338] sm:$0xf]
      %v757 = vld [vmem:[%s543 + $0x33c] sm:$0xf]
      %v758 = vld [vmem:[%s543 + $0x340] sm:$0xf]
      %v759 = vld [vmem:[%s543 + $0x344] sm:$0xf]
      %v760 = vld [vmem:[%s543 + $0x348] sm:$0xf]
      %v761 = vld [vmem:[%s543 + $0x34c] sm:$0xf]
      %v762 = vld [vmem:[%s543 + $0x350] sm:$0xf]
      %v763 = vld [vmem:[%s543 + $0x354] sm:$0xf]
      %v764 = vld [vmem:[%s543 + $0x358] sm:$0xf]
      %v765 = vld [vmem:[%s543 + $0x35c] sm:$0xf]
      %v766 = vld [vmem:[%s543 + $0x360] sm:$0xf]
      %v767 = vld [vmem:[%s543 + $0x364] sm:$0xf]
      %v768 = vld [vmem:[%s543 + $0x368] sm:$0xf]
      %v769 = vld [vmem:[%s543 + $0x36c] sm:$0xf]
      %v770 = vld [vmem:[%s543 + $0x370] sm:$0xf]
      %v771 = vld [vmem:[%s543 + $0x374] sm:$0xf]
      %v772 = vld [vmem:[%s543 + $0x378] sm:$0xf]
      %v773 = vld [vmem:[%s543 + $0x37c] sm:$0xf]
      %v774 = vld [vmem:[%s543 + $0x380] sm:$0xf]
      %v775 = vld [vmem:[%s543 + $0x384] sm:$0xf]
      %v776 = vld [vmem:[%s543 + $0x388] sm:$0xf]
      %v777 = vld [vmem:[%s543 + $0x38c] sm:$0xf]
      %v778 = vld [vmem:[%s543 + $0x390] sm:$0xf]
      %v779 = vld [vmem:[%s543 + $0x394] sm:$0xf]
      %v780 = vld [vmem:[%s543 + $0x398] sm:$0xf]
      %v781 = vld [vmem:[%s543 + $0x39c] sm:$0xf]
      %v782 = vld [vmem:[%s543 + $0x3a0] sm:$0xf]
      %v783 = vld [vmem:[%s543 + $0x3a4] sm:$0xf]
      %v784 = vld [vmem:[%s543 + $0x3a8] sm:$0xf]
      %v785 = vld [vmem:[%s543 + $0x3ac] sm:$0xf]
      %v786 = vld [vmem:[%s543 + $0x3b0] sm:$0xf]
      %v787 = vld [vmem:[%s543 + $0x3b4] sm:$0xf]
      %v788 = vld [vmem:[%s543 + $0x3b8] sm:$0xf]
      %v789 = vld [vmem:[%s543 + $0x3bc] sm:$0xf]
      %v790 = vld [vmem:[%s543 + $0x3c0] sm:$0xf]
      %v791 = vld [vmem:[%s543 + $0x3c4] sm:$0xf]
      %v792 = vld [vmem:[%s543 + $0x3c8] sm:$0xf]
      %v793 = vld [vmem:[%s543 + $0x3cc] sm:$0xf]
      %v794 = vld [vmem:[%s543 + $0x3d0] sm:$0xf]
      %v795 = vld [vmem:[%s543 + $0x3d4] sm:$0xf]
      %v796 = vld [vmem:[%s543 + $0x3d8] sm:$0xf]
      %v797 = vld [vmem:[%s543 + $0x3dc] sm:$0xf]
      %v798 = vld [vmem:[%s543 + $0x3e0] sm:$0xf]
      %v799 = vld [vmem:[%s543 + $0x3e4] sm:$0xf]
      %v800 = vld [vmem:[%s543 + $0x3e8] sm:$0xf]
      %v801 = vld [vmem:[%s543 + $0x3ec] sm:$0xf]
      %v802 = vld [vmem:[%s543 + $0x3f0] sm:$0xf]
      %v803 = vld [vmem:[%s543 + $0x3f4] sm:$0xf]
      %v804 = vld [vmem:[%s543 + $0x3f8] sm:$0xf]
      %v805 = vld [vmem:[%s543 + $0x3fc] sm:$0xf]
      %v806 = vld [vmem:[%s1] sm:$0xf]
      %v807 = vld [vmem:[%s1 + $0x4] sm:$0xf]
      %v808 = vld [vmem:[%s1 + $0x8] sm:$0xf]
      %v809 = vld [vmem:[%s1 + $0xc] sm:$0xf]
      %v1066 = vunpack.c.l.b16 %v550
      %v1067 = vunpack.c.l.b16 %v551
      %v1068 = vunpack.c.l.b16 %v552
      %v1069 = vunpack.c.l.b16 %v553
      %v1070 = vunpack.c.l.b16 %v554
      %v1071 = vunpack.c.l.b16 %v555
      %v1072 = vunpack.c.l.b16 %v556
      %v1073 = vunpack.c.l.b16 %v557
      %v1074 = vunpack.c.l.b16 %v558
      %v1075 = vunpack.c.l.b16 %v559
      %v1076 = vunpack.c.l.b16 %v560
      %v1077 = vunpack.c.l.b16 %v561
      %v1078 = vunpack.c.l.b16 %v562
      %v1079 = vunpack.c.l.b16 %v563
      %v1080 = vunpack.c.l.b16 %v564
      %v1081 = vunpack.c.l.b16 %v565
      %v1082 = vunpack.c.l.b16 %v566
      %v1083 = vunpack.c.l.b16 %v567
      %v1084 = vunpack.c.l.b16 %v568
      %v1085 = vunpack.c.l.b16 %v569
      %v1086 = vunpack.c.l.b16 %v570
      %v1087 = vunpack.c.l.b16 %v571
      %v1088 = vunpack.c.l.b16 %v572
      %v1089 = vunpack.c.l.b16 %v573
      %v1090 = vunpack.c.l.b16 %v574
      %v1091 = vunpack.c.l.b16 %v575
      %v1092 = vunpack.c.l.b16 %v576
      %v1093 = vunpack.c.l.b16 %v577
      %v1094 = vunpack.c.l.b16 %v578
      %v1095 = vunpack.c.l.b16 %v579
      %v1096 = vunpack.c.l.b16 %v580
      %v1097 = vunpack.c.l.b16 %v581
      %v1098 = vunpack.c.l.b16 %v582
      %v1099 = vunpack.c.l.b16 %v583
      %v1100 = vunpack.c.l.b16 %v584
      %v1101 = vunpack.c.l.b16 %v585
      %v1102 = vunpack.c.l.b16 %v586
      %v1103 = vunpack.c.l.b16 %v587
      %v1104 = vunpack.c.l.b16 %v588
      %v1105 = vunpack.c.l.b16 %v589
      %v1106 = vunpack.c.l.b16 %v590
      %v1107 = vunpack.c.l.b16 %v591
      %v1108 = vunpack.c.l.b16 %v592
      %v1109 = vunpack.c.l.b16 %v593
      %v1110 = vunpack.c.l.b16 %v594
      %v1111 = vunpack.c.l.b16 %v595
      %v1112 = vunpack.c.l.b16 %v596
      %v1113 = vunpack.c.l.b16 %v597
      %v1114 = vunpack.c.l.b16 %v598
      %v1115 = vunpack.c.l.b16 %v599
      %v1116 = vunpack.c.l.b16 %v600
      %v1117 = vunpack.c.l.b16 %v601
      %v1118 = vunpack.c.l.b16 %v602
      %v1119 = vunpack.c.l.b16 %v603
      %v1120 = vunpack.c.l.b16 %v604
      %v1121 = vunpack.c.l.b16 %v605
      %v1122 = vunpack.c.l.b16 %v606
      %v1123 = vunpack.c.l.b16 %v607
      %v1124 = vunpack.c.l.b16 %v608
      %v1125 = vunpack.c.l.b16 %v609
      %v1126 = vunpack.c.l.b16 %v610
      %v1127 = vunpack.c.l.b16 %v611
      %v1128 = vunpack.c.l.b16 %v612
      %v1129 = vunpack.c.l.b16 %v613
      %v1130 = vunpack.c.l.b16 %v614
      %v1131 = vunpack.c.l.b16 %v615
      %v1132 = vunpack.c.l.b16 %v616
      %v1133 = vunpack.c.l.b16 %v617
      %v1134 = vunpack.c.l.b16 %v618
      %v1135 = vunpack.c.l.b16 %v619
      %v1136 = vunpack.c.l.b16 %v620
      %v1137 = vunpack.c.l.b16 %v621
      %v1138 = vunpack.c.l.b16 %v622
      %v1139 = vunpack.c.l.b16 %v623
      %v1140 = vunpack.c.l.b16 %v624
      %v1141 = vunpack.c.l.b16 %v625
      %v1142 = vunpack.c.l.b16 %v626
      %v1143 = vunpack.c.l.b16 %v627
      %v1144 = vunpack.c.l.b16 %v628
      %v1145 = vunpack.c.l.b16 %v629
      %v1146 = vunpack.c.l.b16 %v630
      %v1147 = vunpack.c.l.b16 %v631
      %v1148 = vunpack.c.l.b16 %v632
      %v1149 = vunpack.c.l.b16 %v633
      %v1150 = vunpack.c.l.b16 %v634
      %v1151 = vunpack.c.l.b16 %v635
      %v1152 = vunpack.c.l.b16 %v636
      %v1153 = vunpack.c.l.b16 %v637
      %v1154 = vunpack.c.l.b16 %v638
      %v1155 = vunpack.c.l.b16 %v639
      %v1156 = vunpack.c.l.b16 %v640
      %v1157 = vunpack.c.l.b16 %v641
      %v1158 = vunpack.c.l.b16 %v642
      %v1159 = vunpack.c.l.b16 %v643
      %v1160 = vunpack.c.l.b16 %v644
      %v1161 = vunpack.c.l.b16 %v645
      %v1162 = vunpack.c.l.b16 %v646
      %v1163 = vunpack.c.l.b16 %v647
      %v1164 = vunpack.c.l.b16 %v648
      %v1165 = vunpack.c.l.b16 %v649
      %v1166 = vunpack.c.l.b16 %v650
      %v1167 = vunpack.c.l.b16 %v651
      %v1168 = vunpack.c.l.b16 %v652
      %v1169 = vunpack.c.l.b16 %v653
      %v1170 = vunpack.c.l.b16 %v654
      %v1171 = vunpack.c.l.b16 %v655
      %v1172 = vunpack.c.l.b16 %v656
      %v1173 = vunpack.c.l.b16 %v657
      %v1174 = vunpack.c.l.b16 %v658
      %v1175 = vunpack.c.l.b16 %v659
      %v1176 = vunpack.c.l.b16 %v660
      %v1177 = vunpack.c.l.b16 %v661
      %v1178 = vunpack.c.l.b16 %v662
      %v1179 = vunpack.c.l.b16 %v663
      %v1180 = vunpack.c.l.b16 %v664
      %v1181 = vunpack.c.l.b16 %v665
      %v1182 = vunpack.c.l.b16 %v666
      %v1183 = vunpack.c.l.b16 %v667
      %v1184 = vunpack.c.l.b16 %v668
      %v1185 = vunpack.c.l.b16 %v669
      %v1186 = vunpack.c.l.b16 %v670
      %v1187 = vunpack.c.l.b16 %v671
      %v1188 = vunpack.c.l.b16 %v672
      %v1189 = vunpack.c.l.b16 %v673
      %v1190 = vunpack.c.l.b16 %v674
      %v1191 = vunpack.c.l.b16 %v675
      %v1192 = vunpack.c.l.b16 %v676
      %v1193 = vunpack.c.l.b16 %v677
      %v1194 = vunpack.c.l.b16 %v678
      %v1195 = vunpack.c.l.b16 %v679
      %v1196 = vunpack.c.l.b16 %v680
      %v1197 = vunpack.c.l.b16 %v681
      %v1198 = vunpack.c.l.b16 %v682
      %v1199 = vunpack.c.l.b16 %v683
      %v1200 = vunpack.c.l.b16 %v684
      %v1201 = vunpack.c.l.b16 %v685
      %v1202 = vunpack.c.l.b16 %v686
      %v1203 = vunpack.c.l.b16 %v687
      %v1204 = vunpack.c.l.b16 %v688
      %v1205 = vunpack.c.l.b16 %v689
      %v1206 = vunpack.c.l.b16 %v690
      %v1207 = vunpack.c.l.b16 %v691
      %v1208 = vunpack.c.l.b16 %v692
      %v1209 = vunpack.c.l.b16 %v693
      %v1210 = vunpack.c.l.b16 %v694
      %v1211 = vunpack.c.l.b16 %v695
      %v1212 = vunpack.c.l.b16 %v696
      %v1213 = vunpack.c.l.b16 %v697
      %v1214 = vunpack.c.l.b16 %v698
      %v1215 = vunpack.c.l.b16 %v699
      %v1216 = vunpack.c.l.b16 %v700
      %v1217 = vunpack.c.l.b16 %v701
      %v1218 = vunpack.c.l.b16 %v702
      %v1219 = vunpack.c.l.b16 %v703
      %v1220 = vunpack.c.l.b16 %v704
      %v1221 = vunpack.c.l.b16 %v705
      %v1222 = vunpack.c.l.b16 %v706
      %v1223 = vunpack.c.l.b16 %v707
      %v1224 = vunpack.c.l.b16 %v708
      %v1225 = vunpack.c.l.b16 %v709
      %v1226 = vunpack.c.l.b16 %v710
      %v1227 = vunpack.c.l.b16 %v711
      %v1228 = vunpack.c.l.b16 %v712
      %v1229 = vunpack.c.l.b16 %v713
      %v1230 = vunpack.c.l.b16 %v714
      %v1231 = vunpack.c.l.b16 %v715
      %v1232 = vunpack.c.l.b16 %v716
      %v1233 = vunpack.c.l.b16 %v717
      %v1234 = vunpack.c.l.b16 %v718
      %v1235 = vunpack.c.l.b16 %v719
      %v1236 = vunpack.c.l.b16 %v720
      %v1237 = vunpack.c.l.b16 %v721
      %v1238 = vunpack.c.l.b16 %v722
      %v1239 = vunpack.c.l.b16 %v723
      %v1240 = vunpack.c.l.b16 %v724
      %v1241 = vunpack.c.l.b16 %v725
      %v1242 = vunpack.c.l.b16 %v726
      %v1243 = vunpack.c.l.b16 %v727
      %v1244 = vunpack.c.l.b16 %v728
      %v1245 = vunpack.c.l.b16 %v729
      %v1246 = vunpack.c.l.b16 %v730
      %v1247 = vunpack.c.l.b16 %v731
      %v1248 = vunpack.c.l.b16 %v732
      %v1249 = vunpack.c.l.b16 %v733
      %v1250 = vunpack.c.l.b16 %v734
      %v1251 = vunpack.c.l.b16 %v735
      %v1252 = vunpack.c.l.b16 %v736
      %v1253 = vunpack.c.l.b16 %v737
      %v1254 = vunpack.c.l.b16 %v738
      %v1255 = vunpack.c.l.b16 %v739
      %v1256 = vunpack.c.l.b16 %v740
      %v1257 = vunpack.c.l.b16 %v741
      %v1258 = vunpack.c.l.b16 %v742
      %v1259 = vunpack.c.l.b16 %v743
      %v1260 = vunpack.c.l.b16 %v744
      %v1261 = vunpack.c.l.b16 %v745
      %v1262 = vunpack.c.l.b16 %v746
      %v1263 = vunpack.c.l.b16 %v747
      %v1264 = vunpack.c.l.b16 %v748
      %v1265 = vunpack.c.l.b16 %v749
      %v1266 = vunpack.c.l.b16 %v750
      %v1267 = vunpack.c.l.b16 %v751
      %v1268 = vunpack.c.l.b16 %v752
      %v1269 = vunpack.c.l.b16 %v753
      %v1270 = vunpack.c.l.b16 %v754
      %v1271 = vunpack.c.l.b16 %v755
      %v1272 = vunpack.c.l.b16 %v756
      %v1273 = vunpack.c.l.b16 %v757
      %v1274 = vunpack.c.l.b16 %v758
      %v1275 = vunpack.c.l.b16 %v759
      %v1276 = vunpack.c.l.b16 %v760
      %v1277 = vunpack.c.l.b16 %v761
      %v1278 = vunpack.c.l.b16 %v762
      %v1279 = vunpack.c.l.b16 %v763
      %v1280 = vunpack.c.l.b16 %v764
      %v1281 = vunpack.c.l.b16 %v765
      %v1282 = vunpack.c.l.b16 %v766
      %v1283 = vunpack.c.l.b16 %v767
      %v1284 = vunpack.c.l.b16 %v768
      %v1285 = vunpack.c.l.b16 %v769
      %v1286 = vunpack.c.l.b16 %v770
      %v1287 = vunpack.c.l.b16 %v771
      %v1288 = vunpack.c.l.b16 %v772
      %v1289 = vunpack.c.l.b16 %v773
      %v1290 = vunpack.c.l.b16 %v774
      %v1291 = vunpack.c.l.b16 %v775
      %v1292 = vunpack.c.l.b16 %v776
      %v1293 = vunpack.c.l.b16 %v777
      %v1294 = vunpack.c.l.b16 %v778
      %v1295 = vunpack.c.l.b16 %v779
      %v1296 = vunpack.c.l.b16 %v780
      %v1297 = vunpack.c.l.b16 %v781
      %v1298 = vunpack.c.l.b16 %v782
      %v1299 = vunpack.c.l.b16 %v783
      %v1300 = vunpack.c.l.b16 %v784
      %v1301 = vunpack.c.l.b16 %v785
      %v1302 = vunpack.c.l.b16 %v786
      %v1303 = vunpack.c.l.b16 %v787
      %v1304 = vunpack.c.l.b16 %v788
      %v1305 = vunpack.c.l.b16 %v789
      %v1306 = vunpack.c.l.b16 %v790
      %v1307 = vunpack.c.l.b16 %v791
      %v1308 = vunpack.c.l.b16 %v792
      %v1309 = vunpack.c.l.b16 %v793
      %v1310 = vunpack.c.l.b16 %v794
      %v1311 = vunpack.c.l.b16 %v795
      %v1312 = vunpack.c.l.b16 %v796
      %v1313 = vunpack.c.l.b16 %v797
      %v1314 = vunpack.c.l.b16 %v798
      %v1315 = vunpack.c.l.b16 %v799
      %v1316 = vunpack.c.l.b16 %v800
      %v1317 = vunpack.c.l.b16 %v801
      %v1318 = vunpack.c.l.b16 %v802
      %v1319 = vunpack.c.l.b16 %v803
      %v1320 = vunpack.c.l.b16 %v804
      %v1321 = vunpack.c.l.b16 %v805
      %v1322 = vpack.c.b16 %v1067, %v1066
      %v1323 = vpack.c.b16 %v1069, %v1068
      %v1324 = vpack.c.b16 %v1071, %v1070
      %v1325 = vpack.c.b16 %v1073, %v1072
      %v1326 = vpack.c.b16 %v1075, %v1074
      %v1327 = vpack.c.b16 %v1077, %v1076
      %v1328 = vpack.c.b16 %v1079, %v1078
      %v1329 = vpack.c.b16 %v1081, %v1080
      %v1330 = vpack.c.b16 %v1083, %v1082
      %v1331 = vpack.c.b16 %v1085, %v1084
      %v1332 = vpack.c.b16 %v1087, %v1086
      %v1333 = vpack.c.b16 %v1089, %v1088
      %v1334 = vpack.c.b16 %v1091, %v1090
      %v1335 = vpack.c.b16 %v1093, %v1092
      %v1336 = vpack.c.b16 %v1095, %v1094
      %v1337 = vpack.c.b16 %v1097, %v1096
      %v1338 = vpack.c.b16 %v1099, %v1098
      %v1339 = vpack.c.b16 %v1101, %v1100
      %v1340 = vpack.c.b16 %v1103, %v1102
      %v1341 = vpack.c.b16 %v1105, %v1104
      %v1342 = vpack.c.b16 %v1107, %v1106
      %v1343 = vpack.c.b16 %v1109, %v1108
      %v1344 = vpack.c.b16 %v1111, %v1110
      %v1345 = vpack.c.b16 %v1113, %v1112
      %v1346 = vpack.c.b16 %v1115, %v1114
      %v1347 = vpack.c.b16 %v1117, %v1116
      %v1348 = vpack.c.b16 %v1119, %v1118
      %v1349 = vpack.c.b16 %v1121, %v1120
      %v1350 = vpack.c.b16 %v1123, %v1122
      %v1351 = vpack.c.b16 %v1125, %v1124
      %v1352 = vpack.c.b16 %v1127, %v1126
      %v1353 = vpack.c.b16 %v1129, %v1128
      %v1354 = vpack.c.b16 %v1131, %v1130
      %v1355 = vpack.c.b16 %v1133, %v1132
      %v1356 = vpack.c.b16 %v1135, %v1134
      %v1357 = vpack.c.b16 %v1137, %v1136
      %v1358 = vpack.c.b16 %v1139, %v1138
      %v1359 = vpack.c.b16 %v1141, %v1140
      %v1360 = vpack.c.b16 %v1143, %v1142
      %v1361 = vpack.c.b16 %v1145, %v1144
      %v1362 = vpack.c.b16 %v1147, %v1146
      %v1363 = vpack.c.b16 %v1149, %v1148
      %v1364 = vpack.c.b16 %v1151, %v1150
      %v1365 = vpack.c.b16 %v1153, %v1152
      %v1366 = vpack.c.b16 %v1155, %v1154
      %v1367 = vpack.c.b16 %v1157, %v1156
      %v1368 = vpack.c.b16 %v1159, %v1158
      %v1369 = vpack.c.b16 %v1161, %v1160
      %v1370 = vpack.c.b16 %v1163, %v1162
      %v1371 = vpack.c.b16 %v1165, %v1164
      %v1372 = vpack.c.b16 %v1167, %v1166
      %v1373 = vpack.c.b16 %v1169, %v1168
      %v1374 = vpack.c.b16 %v1171, %v1170
      %v1375 = vpack.c.b16 %v1173, %v1172
      %v1376 = vpack.c.b16 %v1175, %v1174
      %v1377 = vpack.c.b16 %v1177, %v1176
      %v1378 = vpack.c.b16 %v1179, %v1178
      %v1379 = vpack.c.b16 %v1181, %v1180
      %v1380 = vpack.c.b16 %v1183, %v1182
      %v1381 = vpack.c.b16 %v1185, %v1184
      %v1382 = vpack.c.b16 %v1187, %v1186
      %v1383 = vpack.c.b16 %v1189, %v1188
      %v1384 = vpack.c.b16 %v1191, %v1190
      %v1385 = vpack.c.b16 %v1193, %v1192
      %v1386 = vpack.c.b16 %v1195, %v1194
      %v1387 = vpack.c.b16 %v1197, %v1196
      %v1388 = vpack.c.b16 %v1199, %v1198
      %v1389 = vpack.c.b16 %v1201, %v1200
      %v1390 = vpack.c.b16 %v1203, %v1202
      %v1391 = vpack.c.b16 %v1205, %v1204
      %v1392 = vpack.c.b16 %v1207, %v1206
      %v1393 = vpack.c.b16 %v1209, %v1208
      %v1394 = vpack.c.b16 %v1211, %v1210
      %v1395 = vpack.c.b16 %v1213, %v1212
      %v1396 = vpack.c.b16 %v1215, %v1214
      %v1397 = vpack.c.b16 %v1217, %v1216
      %v1398 = vpack.c.b16 %v1219, %v1218
      %v1399 = vpack.c.b16 %v1221, %v1220
      %v1400 = vpack.c.b16 %v1223, %v1222
      %v1401 = vpack.c.b16 %v1225, %v1224
      %v1402 = vpack.c.b16 %v1227, %v1226
      %v1403 = vpack.c.b16 %v1229, %v1228
      %v1404 = vpack.c.b16 %v1231, %v1230
      %v1405 = vpack.c.b16 %v1233, %v1232
      %v1406 = vpack.c.b16 %v1235, %v1234
      %v1407 = vpack.c.b16 %v1237, %v1236
      %v1408 = vpack.c.b16 %v1239, %v1238
      %v1409 = vpack.c.b16 %v1241, %v1240
      %v1410 = vpack.c.b16 %v1243, %v1242
      %v1411 = vpack.c.b16 %v1245, %v1244
      %v1412 = vpack.c.b16 %v1247, %v1246
      %v1413 = vpack.c.b16 %v1249, %v1248
      %v1414 = vpack.c.b16 %v1251, %v1250
      %v1415 = vpack.c.b16 %v1253, %v1252
      %v1416 = vpack.c.b16 %v1255, %v1254
      %v1417 = vpack.c.b16 %v1257, %v1256
      %v1418 = vpack.c.b16 %v1259, %v1258
      %v1419 = vpack.c.b16 %v1261, %v1260
      %v1420 = vpack.c.b16 %v1263, %v1262
      %v1421 = vpack.c.b16 %v1265, %v1264
      %v1422 = vpack.c.b16 %v1267, %v1266
      %v1423 = vpack.c.b16 %v1269, %v1268
      %v1424 = vpack.c.b16 %v1271, %v1270
      %v1425 = vpack.c.b16 %v1273, %v1272
      %v1426 = vpack.c.b16 %v1275, %v1274
      %v1427 = vpack.c.b16 %v1277, %v1276
      %v1428 = vpack.c.b16 %v1279, %v1278
      %v1429 = vpack.c.b16 %v1281, %v1280
      %v1430 = vpack.c.b16 %v1283, %v1282
      %v1431 = vpack.c.b16 %v1285, %v1284
      %v1432 = vpack.c.b16 %v1287, %v1286
      %v1433 = vpack.c.b16 %v1289, %v1288
      %v1434 = vpack.c.b16 %v1291, %v1290
      %v1435 = vpack.c.b16 %v1293, %v1292
      %v1436 = vpack.c.b16 %v1295, %v1294
      %v1437 = vpack.c.b16 %v1297, %v1296
      %v1438 = vpack.c.b16 %v1299, %v1298
      %v1439 = vpack.c.b16 %v1301, %v1300
      %v1440 = vpack.c.b16 %v1303, %v1302
      %v1441 = vpack.c.b16 %v1305, %v1304
      %v1442 = vpack.c.b16 %v1307, %v1306
      %v1443 = vpack.c.b16 %v1309, %v1308
      %v1444 = vpack.c.b16 %v1311, %v1310
      %v1445 = vpack.c.b16 %v1313, %v1312
      %v1446 = vpack.c.b16 %v1315, %v1314
      %v1447 = vpack.c.b16 %v1317, %v1316
      %v1448 = vpack.c.b16 %v1319, %v1318
      %v1449 = vpack.c.b16 %v1321, %v1320
      %v1454 = vunpack.c.l.b16 %v806
      %v1455 = vunpack.c.l.b16 %v807
      %v1456 = vunpack.c.l.b16 %v808
      %v1457 = vunpack.c.l.b16 %v809
      %v1458 = vpack.c.b16 %v1455, %v1454
      %v1459 = vpack.c.b16 %v1457, %v1456
      %vm1462 = vcmask 261120
      %v1464 = vsel %vm1462, %v1322, 0
      %v1467 = vsel %vm1462, %v1323, 0
      %v1470 = vsel %vm1462, %v1324, 0
      %v1473 = vsel %vm1462, %v1325, 0
      %v1476 = vsel %vm1462, %v1326, 0
      %v1479 = vsel %vm1462, %v1327, 0
      %v1482 = vsel %vm1462, %v1328, 0
      %v1485 = vsel %vm1462, %v1329, 0
      %v1488 = vsel %vm1462, %v1330, 0
      %v1491 = vsel %vm1462, %v1331, 0
      %v1494 = vsel %vm1462, %v1332, 0
      %v1497 = vsel %vm1462, %v1333, 0
      %v1500 = vsel %vm1462, %v1334, 0
      %v1503 = vsel %vm1462, %v1335, 0
      %v1506 = vsel %vm1462, %v1336, 0
      %v1509 = vsel %vm1462, %v1337, 0
      %v1512 = vsel %vm1462, %v1338, 0
      %v1515 = vsel %vm1462, %v1339, 0
      %v1518 = vsel %vm1462, %v1340, 0
      %v1521 = vsel %vm1462, %v1341, 0
      %v1524 = vsel %vm1462, %v1342, 0
      %v1527 = vsel %vm1462, %v1343, 0
      %v1530 = vsel %vm1462, %v1344, 0
      %v1533 = vsel %vm1462, %v1345, 0
      %v1536 = vsel %vm1462, %v1346, 0
      %v1539 = vsel %vm1462, %v1347, 0
      %v1542 = vsel %vm1462, %v1348, 0
      %v1545 = vsel %vm1462, %v1349, 0
      %v1548 = vsel %vm1462, %v1350, 0
      %v1551 = vsel %vm1462, %v1351, 0
      %v1554 = vsel %vm1462, %v1352, 0
      %v1557 = vsel %vm1462, %v1353, 0
      %v1560 = vsel %vm1462, %v1354, 0
      %v1563 = vsel %vm1462, %v1355, 0
      %v1566 = vsel %vm1462, %v1356, 0
      %v1569 = vsel %vm1462, %v1357, 0
      %v1572 = vsel %vm1462, %v1358, 0
      %v1575 = vsel %vm1462, %v1359, 0
      %v1578 = vsel %vm1462, %v1360, 0
      %v1581 = vsel %vm1462, %v1361, 0
      %v1584 = vsel %vm1462, %v1362, 0
      %v1587 = vsel %vm1462, %v1363, 0
      %v1590 = vsel %vm1462, %v1364, 0
      %v1593 = vsel %vm1462, %v1365, 0
      %v1596 = vsel %vm1462, %v1366, 0
      %v1599 = vsel %vm1462, %v1367, 0
      %v1602 = vsel %vm1462, %v1368, 0
      %v1605 = vsel %vm1462, %v1369, 0
      %v1608 = vsel %vm1462, %v1370, 0
      %v1611 = vsel %vm1462, %v1371, 0
      %v1614 = vsel %vm1462, %v1372, 0
      %v1617 = vsel %vm1462, %v1373, 0
      %v1620 = vsel %vm1462, %v1374, 0
      %v1623 = vsel %vm1462, %v1375, 0
      %v1626 = vsel %vm1462, %v1376, 0
      %v1629 = vsel %vm1462, %v1377, 0
      %v1632 = vsel %vm1462, %v1378, 0
      %v1635 = vsel %vm1462, %v1379, 0
      %v1638 = vsel %vm1462, %v1380, 0
      %v1641 = vsel %vm1462, %v1381, 0
      %v1644 = vsel %vm1462, %v1382, 0
      %v1647 = vsel %vm1462, %v1383, 0
      %v1650 = vsel %vm1462, %v1384, 0
      %v1653 = vsel %vm1462, %v1385, 0
      %v1656 = vsel %vm1462, %v1386, 0
      %v1659 = vsel %vm1462, %v1387, 0
      %v1662 = vsel %vm1462, %v1388, 0
      %v1665 = vsel %vm1462, %v1389, 0
      %v1668 = vsel %vm1462, %v1390, 0
      %v1671 = vsel %vm1462, %v1391, 0
      %v1674 = vsel %vm1462, %v1392, 0
      %v1677 = vsel %vm1462, %v1393, 0
      %v1680 = vsel %vm1462, %v1394, 0
      %v1683 = vsel %vm1462, %v1395, 0
      %v1686 = vsel %vm1462, %v1396, 0
      %v1689 = vsel %vm1462, %v1397, 0
      %v1692 = vsel %vm1462, %v1398, 0
      %v1695 = vsel %vm1462, %v1399, 0
      %v1698 = vsel %vm1462, %v1400, 0
      %v1701 = vsel %vm1462, %v1401, 0
      %v1704 = vsel %vm1462, %v1402, 0
      %v1707 = vsel %vm1462, %v1403, 0
      %v1710 = vsel %vm1462, %v1404, 0
      %v1713 = vsel %vm1462, %v1405, 0
      %v1716 = vsel %vm1462, %v1406, 0
      %v1719 = vsel %vm1462, %v1407, 0
      %v1722 = vsel %vm1462, %v1408, 0
      %v1725 = vsel %vm1462, %v1409, 0
      %v1728 = vsel %vm1462, %v1410, 0
      %v1731 = vsel %vm1462, %v1411, 0
      %v1734 = vsel %vm1462, %v1412, 0
      %v1737 = vsel %vm1462, %v1413, 0
      %v1740 = vsel %vm1462, %v1414, 0
      %v1743 = vsel %vm1462, %v1415, 0
      %v1746 = vsel %vm1462, %v1416, 0
      %v1749 = vsel %vm1462, %v1417, 0
      %v1752 = vsel %vm1462, %v1418, 0
      %v1755 = vsel %vm1462, %v1419, 0
      %v1758 = vsel %vm1462, %v1420, 0
      %v1761 = vsel %vm1462, %v1421, 0
      %v1764 = vsel %vm1462, %v1422, 0
      %v1767 = vsel %vm1462, %v1423, 0
      %v1770 = vsel %vm1462, %v1424, 0
      %v1773 = vsel %vm1462, %v1425, 0
      %v1776 = vsel %vm1462, %v1426, 0
      %v1779 = vsel %vm1462, %v1427, 0
      %v1782 = vsel %vm1462, %v1428, 0
      %v1785 = vsel %vm1462, %v1429, 0
      %v1788 = vsel %vm1462, %v1430, 0
      %v1791 = vsel %vm1462, %v1431, 0
      %v1794 = vsel %vm1462, %v1432, 0
      %v1797 = vsel %vm1462, %v1433, 0
      %v1800 = vsel %vm1462, %v1434, 0
      %v1803 = vsel %vm1462, %v1435, 0
      %v1806 = vsel %vm1462, %v1436, 0
      %v1809 = vsel %vm1462, %v1437, 0
      %v1812 = vsel %vm1462, %v1438, 0
      %v1815 = vsel %vm1462, %v1439, 0
      %v1818 = vsel %vm1462, %v1440, 0
      %v1821 = vsel %vm1462, %v1441, 0
      %v1824 = vsel %vm1462, %v1442, 0
      %v1827 = vsel %vm1462, %v1443, 0
      %v1830 = vsel %vm1462, %v1444, 0
      %v1833 = vsel %vm1462, %v1445, 0
      %v1836 = vsel %vm1462, %v1446, 0
      %v1839 = vsel %vm1462, %v1447, 0
      %v1842 = vsel %vm1462, %v1448, 0
      %v1845 = vsel %vm1462, %v1449, 0
      %1847 = vmatprep.subr.bf16.mxu0 0
      %1848 = vmatpush1.bf16.msra.mxu0 %v1458
      %1849 = vmatprep.subr.bf16.mxu0 0
      %1850 = vmatpush1.bf16.msra.mxu0 %v1459
      %1851 = vmatprep.subr.bf16.mxu0 0
      %1852 = vmatpush1.bf16.msra.mxu0 0
      %1853 = vmatprep.subr.bf16.mxu0 0
      %1854 = vmatpush1.bf16.msra.mxu0 0
      %1855 = vmatprep.subr.bf16.mxu0 0
      %1856 = vmatpush1.bf16.msra.mxu0 0
      %1857 = vmatprep.subr.bf16.mxu0 0
      %1858 = vmatpush1.bf16.msra.mxu0 0
      %1859 = vmatprep.subr.bf16.mxu0 0
      %1860 = vmatpush1.bf16.msra.mxu0 0
      %1861 = vmatprep.subr.bf16.mxu0 0
      %1862 = vmatpush1.bf16.msra.mxu0 0
      %1863 = vmatprep.subr.bf16.mxu0 0
      %1864 = vmatpush1.bf16.msra.mxu0 0
      %1865 = vmatprep.subr.bf16.mxu0 0
      %1866 = vmatpush1.bf16.msra.mxu0 0
      %1867 = vmatprep.subr.bf16.mxu0 0
      %1868 = vmatpush1.bf16.msra.mxu0 0
      %1869 = vmatprep.subr.bf16.mxu0 0
      %1870 = vmatpush1.bf16.msra.mxu0 0
      %1871 = vmatprep.subr.bf16.mxu0 0
      %1872 = vmatpush1.bf16.msra.mxu0 0
      %1873 = vmatprep.subr.bf16.mxu0 0
      %1874 = vmatpush1.bf16.msra.mxu0 0
      %1875 = vmatprep.subr.bf16.mxu0 0
      %1876 = vmatpush1.bf16.msra.mxu0 0
      %1877 = vmatprep.subr.bf16.mxu0 0
      %1878 = vmatpush1.bf16.msra.mxu0 0
      %1879 = vmatprep.mubr.bf16.mxu0 0
      %1880 = vmatmul.mubr.bf16.gmra.mrb[0].mxu0 %v1464
      %v1881 = vpop.f32.mrb[0].mxu0
      %v1882 = vadd.f32 0.0, %v1881
      %v1883 = vpop.f32.mrb[0].mxu0
      %v1884 = vpop.f32.mrb[0].mxu0
      %v1885 = vadd.f32 0.0, %v1884
      %v1886 = vpop.f32.mrb[0].mxu0
      %1887 = vmatprep.mubr.bf16.mxu0 0
      %1888 = vmatmul.mubr.bf16.gmra.mrb[0].mxu0 %v1467
      %v1889 = vpop.f32.mrb[0].mxu0
      %v1890 = vadd.f32 0.0, %v1889
      %v1891 = vpop.f32.mrb[0].mxu0
      %v1892 = vpop.f32.mrb[0].mxu0
      %v1893 = vadd.f32 0.0, %v1892
      %v1894 = vpop.f32.mrb[0].mxu0
      %1895 = vmatprep.mubr.bf16.mxu0 0
      %1896 = vmatmul.mubr.bf16.gmra.mrb[0].mxu0 %v1470
      %v1897 = vpop.f32.mrb[0].mxu0
      %v1898 = vadd.f32 0.0, %v1897
      %v1899 = vpop.f32.mrb[0].mxu0
      %v1900 = vpop.f32.mrb[0].mxu0
      %v1901 = vadd.f32 0.0, %v1900
      %v1902 = vpop.f32.mrb[0].mxu0
      %1903 = vmatprep.mubr.bf16.mxu0 0
      %1904 = vmatmul.mubr.bf16.gmra.mrb[0].mxu0 %v1473
      %v1905 = vpop.f32.mrb[0].mxu0
      %v1906 = vadd.f32 0.0, %v1905
      %v1907 = vpop.f32.mrb[0].mxu0
      %v1908 = vpop.f32.mrb[0].mxu0
      %v1909 = vadd.f32 0.0, %v1908
      %v1910 = vpop.f32.mrb[0].mxu0
      %1911 = vmatprep.mubr.bf16.mxu0 0
      %1912 = vmatmul.mubr.bf16.gmra.mrb[0].mxu0 %v1476
      %v1913 = vpop.f32.mrb[0].mxu0
      %v1914 = vadd.f32 0.0, %v1913
      %v1915 = vpop.f32.mrb[0].mxu0
      %v1916 = vpop.f32.mrb[0].mxu0
      %v1917 = vadd.f32 0.0, %v1916
      %v1918 = vpop.f32.mrb[0].mxu0
      %1919 = vmatprep.mubr.bf16.mxu0 0
      %1920 = vmatmul.mubr.bf16.gmra.mrb[0].mxu0 %v1479
      %v1921 = vpop.f32.mrb[0].mxu0
      %v1922 = vadd.f32 0.0, %v1921
      %v1923 = vpop.f32.mrb[0].mxu0
      %v1924 = vpop.f32.mrb[0].mxu0
      %v1925 = vadd.f32 0.0, %v1924
      %v1926 = vpop.f32.mrb[0].mxu0
      %1927 = vmatprep.mubr.bf16.mxu0 0
      %1928 = vmatmul.mubr.bf16.gmra.mrb[0].mxu0 %v1482
      %v1929 = vpop.f32.mrb[0].mxu0
      %v1930 = vadd.f32 0.0, %v1929
      %v1931 = vpop.f32.mrb[0].mxu0
      %v1932 = vpop.f32.mrb[0].mxu0
      %v1933 = vadd.f32 0.0, %v1932
      %v1934 = vpop.f32.mrb[0].mxu0
      %1935 = vmatprep.mubr.bf16.mxu0 0
      %1936 = vmatmul.mubr.bf16.gmra.mrb[0].mxu0 %v1485
      %v1937 = vpop.f32.mrb[0].mxu0
      %v1938 = vadd.f32 0.0, %v1937
      %v1939 = vpop.f32.mrb[0].mxu0
      %v1940 = vpop.f32.mrb[0].mxu0
      %v1941 = vadd.f32 0.0, %v1940
      %v1942 = vpop.f32.mrb[0].mxu0
      %1943 = vmatprep.mubr.bf16.mxu0 0
      %1944 = vmatmul.mubr.bf16.gmra.mrb[0].mxu0 %v1488
      %v1945 = vpop.f32.mrb[0].mxu0
      %v1946 = vadd.f32 0.0, %v1945
      %v1947 = vpop.f32.mrb[0].mxu0
      %v1948 = vpop.f32.mrb[0].mxu0
      %v1949 = vadd.f32 0.0, %v1948
      %v1950 = vpop.f32.mrb[0].mxu0
      %1951 = vmatprep.mubr.bf16.mxu0 0
      %1952 = vmatmul.mubr.bf16.gmra.mrb[0].mxu0 %v1491
      %v1953 = vpop.f32.mrb[0].mxu0
      %v1954 = vadd.f32 0.0, %v1953
      %v1955 = vpop.f32.mrb[0].mxu0
      %v1956 = vpop.f32.mrb[0].mxu0
      %v1957 = vadd.f32 0.0, %v1956
      %v1958 = vpop.f32.mrb[0].mxu0
      %1959 = vmatprep.mubr.bf16.mxu0 0
      %1960 = vmatmul.mubr.bf16.gmra.mrb[0].mxu0 %v1494
      %v1961 = vpop.f32.mrb[0].mxu0
      %v1962 = vadd.f32 0.0, %v1961
      %v1963 = vpop.f32.mrb[0].mxu0
      %v1964 = vpop.f32.mrb[0].mxu0
      %v1965 = vadd.f32 0.0, %v1964
      %v1966 = vpop.f32.mrb[0].mxu0
      %1967 = vmatprep.mubr.bf16.mxu0 0
      %1968 = vmatmul.mubr.bf16.gmra.mrb[0].mxu0 %v1497
      %v1969 = vpop.f32.mrb[0].mxu0
      %v1970 = vadd.f32 0.0, %v1969
      %v1971 = vpop.f32.mrb[0].mxu0
      %v1972 = vpop.f32.mrb[0].mxu0
      %v1973 = vadd.f32 0.0, %v1972
      %v1974 = vpop.f32.mrb[0].mxu0
      %1975 = vmatprep.mubr.bf16.mxu0 0
      %1976 = vmatmul.mubr.bf16.gmra.mrb[0].mxu0 %v1500
      %v1977 = vpop.f32.mrb[0].mxu0
      %v1978 = vadd.f32 0.0, %v1977
      %v1979 = vpop.f32.mrb[0].mxu0
      %v1980 = vpop.f32.mrb[0].mxu0
      %v1981 = vadd.f32 0.0, %v1980
      %v1982 = vpop.f32.mrb[0].mxu0
      %1983 = vmatprep.mubr.bf16.mxu0 0
      %1984 = vmatmul.mubr.bf16.gmra.mrb[0].mxu0 %v1503
      %v1985 = vpop.f32.mrb[0].mxu0
      %v1986 = vadd.f32 0.0, %v1985
      %v1987 = vpop.f32.mrb[0].mxu0
      %v1988 = vpop.f32.mrb[0].mxu0
      %v1989 = vadd.f32 0.0, %v1988
      %v1990 = vpop.f32.mrb[0].mxu0
      %1991 = vmatprep.mubr.bf16.mxu0 0
      %1992 = vmatmul.mubr.bf16.gmra.mrb[0].mxu0 %v1506
      %v1993 = vpop.f32.mrb[0].mxu0
      %v1994 = vadd.f32 0.0, %v1993
      %v1995 = vpop.f32.mrb[0].mxu0
      %v1996 = vpop.f32.mrb[0].mxu0
      %v1997 = vadd.f32 0.0, %v1996
      %v1998 = vpop.f32.mrb[0].mxu0
      %1999 = vmatprep.mubr.bf16.mxu0 0
      %2000 = vmatmul.mubr.bf16.gmra.mrb[0].mxu0 %v1509
      %v2001 = vpop.f32.mrb[0].mxu0
      %v2002 = vadd.f32 0.0, %v2001
      %v2003 = vpop.f32.mrb[0].mxu0
      %v2004 = vpop.f32.mrb[0].mxu0
      %v2005 = vadd.f32 0.0, %v2004
      %v2006 = vpop.f32.mrb[0].mxu0
      %2007 = vmatprep.mubr.bf16.mxu0 0
      %2008 = vmatmul.mubr.bf16.gmra.mrb[0].mxu0 %v1512
      %v2009 = vpop.f32.mrb[0].mxu0
      %v2010 = vadd.f32 0.0, %v2009
      %v2011 = vpop.f32.mrb[0].mxu0
      %v2012 = vpop.f32.mrb[0].mxu0
      %v2013 = vadd.f32 0.0, %v2012
      %v2014 = vpop.f32.mrb[0].mxu0
      %2015 = vmatprep.mubr.bf16.mxu0 0
      %2016 = vmatmul.mubr.bf16.gmra.mrb[0].mxu0 %v1515
      %v2017 = vpop.f32.mrb[0].mxu0
      %v2018 = vadd.f32 0.0, %v2017
      %v2019 = vpop.f32.mrb[0].mxu0
      %v2020 = vpop.f32.mrb[0].mxu0
      %v2021 = vadd.f32 0.0, %v2020
      %v2022 = vpop.f32.mrb[0].mxu0
      %2023 = vmatprep.mubr.bf16.mxu0 0
      %2024 = vmatmul.mubr.bf16.gmra.mrb[0].mxu0 %v1518
      %v2025 = vpop.f32.mrb[0].mxu0
      %v2026 = vadd.f32 0.0, %v2025
      %v2027 = vpop.f32.mrb[0].mxu0
      %v2028 = vpop.f32.mrb[0].mxu0
      %v2029 = vadd.f32 0.0, %v2028
      %v2030 = vpop.f32.mrb[0].mxu0
      %2031 = vmatprep.mubr.bf16.mxu0 0
      %2032 = vmatmul.mubr.bf16.gmra.mrb[0].mxu0 %v1521
      %v2033 = vpop.f32.mrb[0].mxu0
      %v2034 = vadd.f32 0.0, %v2033
      %v2035 = vpop.f32.mrb[0].mxu0
      %v2036 = vpop.f32.mrb[0].mxu0
      %v2037 = vadd.f32 0.0, %v2036
      %v2038 = vpop.f32.mrb[0].mxu0
      %2039 = vmatprep.mubr.bf16.mxu0 0
      %2040 = vmatmul.mubr.bf16.gmra.mrb[0].mxu0 %v1524
      %v2041 = vpop.f32.mrb[0].mxu0
      %v2042 = vadd.f32 0.0, %v2041
      %v2043 = vpop.f32.mrb[0].mxu0
      %v2044 = vpop.f32.mrb[0].mxu0
      %v2045 = vadd.f32 0.0, %v2044
      %v2046 = vpop.f32.mrb[0].mxu0
      %2047 = vmatprep.mubr.bf16.mxu0 0
      %2048 = vmatmul.mubr.bf16.gmra.mrb[0].mxu0 %v1527
      %v2049 = vpop.f32.mrb[0].mxu0
      %v2050 = vadd.f32 0.0, %v2049
      %v2051 = vpop.f32.mrb[0].mxu0
      %v2052 = vpop.f32.mrb[0].mxu0
      %v2053 = vadd.f32 0.0, %v2052
      %v2054 = vpop.f32.mrb[0].mxu0
      %2055 = vmatprep.mubr.bf16.mxu0 0
      %2056 = vmatmul.mubr.bf16.gmra.mrb[0].mxu0 %v1530
      %v2057 = vpop.f32.mrb[0].mxu0
      %v2058 = vadd.f32 0.0, %v2057
      %v2059 = vpop.f32.mrb[0].mxu0
      %v2060 = vpop.f32.mrb[0].mxu0
      %v2061 = vadd.f32 0.0, %v2060
      %v2062 = vpop.f32.mrb[0].mxu0
      %2063 = vmatprep.mubr.bf16.mxu0 0
      %2064 = vmatmul.mubr.bf16.gmra.mrb[0].mxu0 %v1533
      %v2065 = vpop.f32.mrb[0].mxu0
      %v2066 = vadd.f32 0.0, %v2065
      %v2067 = vpop.f32.mrb[0].mxu0
      %v2068 = vpop.f32.mrb[0].mxu0
      %v2069 = vadd.f32 0.0, %v2068
      %v2070 = vpop.f32.mrb[0].mxu0
      %2071 = vmatprep.mubr.bf16.mxu0 0
      %2072 = vmatmul.mubr.bf16.gmra.mrb[0].mxu0 %v1536
      %v2073 = vpop.f32.mrb[0].mxu0
      %v2074 = vadd.f32 0.0, %v2073
      %v2075 = vpop.f32.mrb[0].mxu0
      %v2076 = vpop.f32.mrb[0].mxu0
      %v2077 = vadd.f32 0.0, %v2076
      %v2078 = vpop.f32.mrb[0].mxu0
      %2079 = vmatprep.mubr.bf16.mxu0 0
      %2080 = vmatmul.mubr.bf16.gmra.mrb[0].mxu0 %v1539
      %v2081 = vpop.f32.mrb[0].mxu0
      %v2082 = vadd.f32 0.0, %v2081
      %v2083 = vpop.f32.mrb[0].mxu0
      %v2084 = vpop.f32.mrb[0].mxu0
      %v2085 = vadd.f32 0.0, %v2084
      %v2086 = vpop.f32.mrb[0].mxu0
      %2087 = vmatprep.mubr.bf16.mxu0 0
      %2088 = vmatmul.mubr.bf16.gmra.mrb[0].mxu0 %v1542
      %v2089 = vpop.f32.mrb[0].mxu0
      %v2090 = vadd.f32 0.0, %v2089
      %v2091 = vpop.f32.mrb[0].mxu0
      %v2092 = vpop.f32.mrb[0].mxu0
      %v2093 = vadd.f32 0.0, %v2092
      %v2094 = vpop.f32.mrb[0].mxu0
      %2095 = vmatprep.mubr.bf16.mxu0 0
      %2096 = vmatmul.mubr.bf16.gmra.mrb[0].mxu0 %v1545
      %v2097 = vpop.f32.mrb[0].mxu0
      %v2098 = vadd.f32 0.0, %v2097
      %v2099 = vpop.f32.mrb[0].mxu0
      %v2100 = vpop.f32.mrb[0].mxu0
      %v2101 = vadd.f32 0.0, %v2100
      %v2102 = vpop.f32.mrb[0].mxu0
      %2103 = vmatprep.mubr.bf16.mxu0 0
      %2104 = vmatmul.mubr.bf16.gmra.mrb[0].mxu0 %v1548
      %v2105 = vpop.f32.mrb[0].mxu0
      %v2106 = vadd.f32 0.0, %v2105
      %v2107 = vpop.f32.mrb[0].mxu0
      %v2108 = vpop.f32.mrb[0].mxu0
      %v2109 = vadd.f32 0.0, %v2108
      %v2110 = vpop.f32.mrb[0].mxu0
      %2111 = vmatprep.mubr.bf16.mxu0 0
      %2112 = vmatmul.mubr.bf16.gmra.mrb[0].mxu0 %v1551
      %v2113 = vpop.f32.mrb[0].mxu0
      %v2114 = vadd.f32 0.0, %v2113
      %v2115 = vpop.f32.mrb[0].mxu0
      %v2116 = vpop.f32.mrb[0].mxu0
      %v2117 = vadd.f32 0.0, %v2116
      %v2118 = vpop.f32.mrb[0].mxu0
      %2119 = vmatprep.mubr.bf16.mxu0 0
      %2120 = vmatmul.mubr.bf16.gmra.mrb[0].mxu0 %v1554
      %v2121 = vpop.f32.mrb[0].mxu0
      %v2122 = vadd.f32 0.0, %v2121
      %v2123 = vpop.f32.mrb[0].mxu0
      %v2124 = vpop.f32.mrb[0].mxu0
      %v2125 = vadd.f32 0.0, %v2124
      %v2126 = vpop.f32.mrb[0].mxu0
      %2127 = vmatprep.mubr.bf16.mxu0 0
      %2128 = vmatmul.mubr.bf16.gmra.mrb[0].mxu0 %v1557
      %v2129 = vpop.f32.mrb[0].mxu0
      %v2130 = vadd.f32 0.0, %v2129
      %v2131 = vpop.f32.mrb[0].mxu0
      %v2132 = vpop.f32.mrb[0].mxu0
      %v2133 = vadd.f32 0.0, %v2132
      %v2134 = vpop.f32.mrb[0].mxu0
      %2135 = vmatprep.mubr.bf16.mxu0 0
      %2136 = vmatmul.mubr.bf16.gmra.mrb[0].mxu0 %v1560
      %v2137 = vpop.f32.mrb[0].mxu0
      %v2138 = vadd.f32 0.0, %v2137
      %v2139 = vpop.f32.mrb[0].mxu0
      %v2140 = vpop.f32.mrb[0].mxu0
      %v2141 = vadd.f32 0.0, %v2140
      %v2142 = vpop.f32.mrb[0].mxu0
      %2143 = vmatprep.mubr.bf16.mxu0 0
      %2144 = vmatmul.mubr.bf16.gmra.mrb[0].mxu0 %v1563
      %v2145 = vpop.f32.mrb[0].mxu0
      %v2146 = vadd.f32 0.0, %v2145
      %v2147 = vpop.f32.mrb[0].mxu0
      %v2148 = vpop.f32.mrb[0].mxu0
      %v2149 = vadd.f32 0.0, %v2148
      %v2150 = vpop.f32.mrb[0].mxu0
      %2151 = vmatprep.mubr.bf16.mxu0 0
      %2152 = vmatmul.mubr.bf16.gmra.mrb[0].mxu0 %v1566
      %v2153 = vpop.f32.mrb[0].mxu0
      %v2154 = vadd.f32 0.0, %v2153
      %v2155 = vpop.f32.mrb[0].mxu0
      %v2156 = vpop.f32.mrb[0].mxu0
      %v2157 = vadd.f32 0.0, %v2156
      %v2158 = vpop.f32.mrb[0].mxu0
      %2159 = vmatprep.mubr.bf16.mxu0 0
      %2160 = vmatmul.mubr.bf16.gmra.mrb[0].mxu0 %v1569
      %v2161 = vpop.f32.mrb[0].mxu0
      %v2162 = vadd.f32 0.0, %v2161
      %v2163 = vpop.f32.mrb[0].mxu0
      %v2164 = vpop.f32.mrb[0].mxu0
      %v2165 = vadd.f32 0.0, %v2164
      %v2166 = vpop.f32.mrb[0].mxu0
      %2167 = vmatprep.mubr.bf16.mxu0 0
      %2168 = vmatmul.mubr.bf16.gmra.mrb[0].mxu0 %v1572
      %v2169 = vpop.f32.mrb[0].mxu0
      %v2170 = vadd.f32 0.0, %v2169
      %v2171 = vpop.f32.mrb[0].mxu0
      %v2172 = vpop.f32.mrb[0].mxu0
      %v2173 = vadd.f32 0.0, %v2172
      %v2174 = vpop.f32.mrb[0].mxu0
      %2175 = vmatprep.mubr.bf16.mxu0 0
      %2176 = vmatmul.mubr.bf16.gmra.mrb[0].mxu0 %v1575
      %v2177 = vpop.f32.mrb[0].mxu0
      %v2178 = vadd.f32 0.0, %v2177
      %v2179 = vpop.f32.mrb[0].mxu0
      %v2180 = vpop.f32.mrb[0].mxu0
      %v2181 = vadd.f32 0.0, %v2180
      %v2182 = vpop.f32.mrb[0].mxu0
      %2183 = vmatprep.mubr.bf16.mxu0 0
      %2184 = vmatmul.mubr.bf16.gmra.mrb[0].mxu0 %v1578
      %v2185 = vpop.f32.mrb[0].mxu0
      %v2186 = vadd.f32 0.0, %v2185
      %v2187 = vpop.f32.mrb[0].mxu0
      %v2188 = vpop.f32.mrb[0].mxu0
      %v2189 = vadd.f32 0.0, %v2188
      %v2190 = vpop.f32.mrb[0].mxu0
      %2191 = vmatprep.mubr.bf16.mxu0 0
      %2192 = vmatmul.mubr.bf16.gmra.mrb[0].mxu0 %v1581
      %v2193 = vpop.f32.mrb[0].mxu0
      %v2194 = vadd.f32 0.0, %v2193
      %v2195 = vpop.f32.mrb[0].mxu0
      %v2196 = vpop.f32.mrb[0].mxu0
      %v2197 = vadd.f32 0.0, %v2196
      %v2198 = vpop.f32.mrb[0].mxu0
      %2199 = vmatprep.mubr.bf16.mxu0 0
      %2200 = vmatmul.mubr.bf16.gmra.mrb[0].mxu0 %v1584
      %v2201 = vpop.f32.mrb[0].mxu0
      %v2202 = vadd.f32 0.0, %v2201
      %v2203 = vpop.f32.mrb[0].mxu0
      %v2204 = vpop.f32.mrb[0].mxu0
      %v2205 = vadd.f32 0.0, %v2204
      %v2206 = vpop.f32.mrb[0].mxu0
      %2207 = vmatprep.mubr.bf16.mxu0 0
      %2208 = vmatmul.mubr.bf16.gmra.mrb[0].mxu0 %v1587
      %v2209 = vpop.f32.mrb[0].mxu0
      %v2210 = vadd.f32 0.0, %v2209
      %v2211 = vpop.f32.mrb[0].mxu0
      %v2212 = vpop.f32.mrb[0].mxu0
      %v2213 = vadd.f32 0.0, %v2212
      %v2214 = vpop.f32.mrb[0].mxu0
      %2215 = vmatprep.mubr.bf16.mxu0 0
      %2216 = vmatmul.mubr.bf16.gmra.mrb[0].mxu0 %v1590
      %v2217 = vpop.f32.mrb[0].mxu0
      %v2218 = vadd.f32 0.0, %v2217
      %v2219 = vpop.f32.mrb[0].mxu0
      %v2220 = vpop.f32.mrb[0].mxu0
      %v2221 = vadd.f32 0.0, %v2220
      %v2222 = vpop.f32.mrb[0].mxu0
      %2223 = vmatprep.mubr.bf16.mxu0 0
      %2224 = vmatmul.mubr.bf16.gmra.mrb[0].mxu0 %v1593
      %v2225 = vpop.f32.mrb[0].mxu0
      %v2226 = vadd.f32 0.0, %v2225
      %v2227 = vpop.f32.mrb[0].mxu0
      %v2228 = vpop.f32.mrb[0].mxu0
      %v2229 = vadd.f32 0.0, %v2228
      %v2230 = vpop.f32.mrb[0].mxu0
      %2231 = vmatprep.mubr.bf16.mxu0 0
      %2232 = vmatmul.mubr.bf16.gmra.mrb[0].mxu0 %v1596
      %v2233 = vpop.f32.mrb[0].mxu0
      %v2234 = vadd.f32 0.0, %v2233
      %v2235 = vpop.f32.mrb[0].mxu0
      %v2236 = vpop.f32.mrb[0].mxu0
      %v2237 = vadd.f32 0.0, %v2236
      %v2238 = vpop.f32.mrb[0].mxu0
      %2239 = vmatprep.mubr.bf16.mxu0 0
      %2240 = vmatmul.mubr.bf16.gmra.mrb[0].mxu0 %v1599
      %v2241 = vpop.f32.mrb[0].mxu0
      %v2242 = vadd.f32 0.0, %v2241
      %v2243 = vpop.f32.mrb[0].mxu0
      %v2244 = vpop.f32.mrb[0].mxu0
      %v2245 = vadd.f32 0.0, %v2244
      %v2246 = vpop.f32.mrb[0].mxu0
      %2247 = vmatprep.mubr.bf16.mxu0 0
      %2248 = vmatmul.mubr.bf16.gmra.mrb[0].mxu0 %v1602
      %v2249 = vpop.f32.mrb[0].mxu0
      %v2250 = vadd.f32 0.0, %v2249
      %v2251 = vpop.f32.mrb[0].mxu0
      %v2252 = vpop.f32.mrb[0].mxu0
      %v2253 = vadd.f32 0.0, %v2252
      %v2254 = vpop.f32.mrb[0].mxu0
      %2255 = vmatprep.mubr.bf16.mxu0 0
      %2256 = vmatmul.mubr.bf16.gmra.mrb[0].mxu0 %v1605
      %v2257 = vpop.f32.mrb[0].mxu0
      %v2258 = vadd.f32 0.0, %v2257
      %v2259 = vpop.f32.mrb[0].mxu0
      %v2260 = vpop.f32.mrb[0].mxu0
      %v2261 = vadd.f32 0.0, %v2260
      %v2262 = vpop.f32.mrb[0].mxu0
      %2263 = vmatprep.mubr.bf16.mxu0 0
      %2264 = vmatmul.mubr.bf16.gmra.mrb[0].mxu0 %v1608
      %v2265 = vpop.f32.mrb[0].mxu0
      %v2266 = vadd.f32 0.0, %v2265
      %v2267 = vpop.f32.mrb[0].mxu0
      %v2268 = vpop.f32.mrb[0].mxu0
      %v2269 = vadd.f32 0.0, %v2268
      %v2270 = vpop.f32.mrb[0].mxu0
      %2271 = vmatprep.mubr.bf16.mxu0 0
      %2272 = vmatmul.mubr.bf16.gmra.mrb[0].mxu0 %v1611
      %v2273 = vpop.f32.mrb[0].mxu0
      %v2274 = vadd.f32 0.0, %v2273
      %v2275 = vpop.f32.mrb[0].mxu0
      %v2276 = vpop.f32.mrb[0].mxu0
      %v2277 = vadd.f32 0.0, %v2276
      %v2278 = vpop.f32.mrb[0].mxu0
      %2279 = vmatprep.mubr.bf16.mxu0 0
      %2280 = vmatmul.mubr.bf16.gmra.mrb[0].mxu0 %v1614
      %v2281 = vpop.f32.mrb[0].mxu0
      %v2282 = vadd.f32 0.0, %v2281
      %v2283 = vpop.f32.mrb[0].mxu0
      %v2284 = vpop.f32.mrb[0].mxu0
      %v2285 = vadd.f32 0.0, %v2284
      %v2286 = vpop.f32.mrb[0].mxu0
      %2287 = vmatprep.mubr.bf16.mxu0 0
      %2288 = vmatmul.mubr.bf16.gmra.mrb[0].mxu0 %v1617
      %v2289 = vpop.f32.mrb[0].mxu0
      %v2290 = vadd.f32 0.0, %v2289
      %v2291 = vpop.f32.mrb[0].mxu0
      %v2292 = vpop.f32.mrb[0].mxu0
      %v2293 = vadd.f32 0.0, %v2292
      %v2294 = vpop.f32.mrb[0].mxu0
      %2295 = vmatprep.mubr.bf16.mxu0 0
      %2296 = vmatmul.mubr.bf16.gmra.mrb[0].mxu0 %v1620
      %v2297 = vpop.f32.mrb[0].mxu0
      %v2298 = vadd.f32 0.0, %v2297
      %v2299 = vpop.f32.mrb[0].mxu0
      %v2300 = vpop.f32.mrb[0].mxu0
      %v2301 = vadd.f32 0.0, %v2300
      %v2302 = vpop.f32.mrb[0].mxu0
      %2303 = vmatprep.mubr.bf16.mxu0 0
      %2304 = vmatmul.mubr.bf16.gmra.mrb[0].mxu0 %v1623
      %v2305 = vpop.f32.mrb[0].mxu0
      %v2306 = vadd.f32 0.0, %v2305
      %v2307 = vpop.f32.mrb[0].mxu0
      %v2308 = vpop.f32.mrb[0].mxu0
      %v2309 = vadd.f32 0.0, %v2308
      %v2310 = vpop.f32.mrb[0].mxu0
      %2311 = vmatprep.mubr.bf16.mxu0 0
      %2312 = vmatmul.mubr.bf16.gmra.mrb[0].mxu0 %v1626
      %v2313 = vpop.f32.mrb[0].mxu0
      %v2314 = vadd.f32 0.0, %v2313
      %v2315 = vpop.f32.mrb[0].mxu0
      %v2316 = vpop.f32.mrb[0].mxu0
      %v2317 = vadd.f32 0.0, %v2316
      %v2318 = vpop.f32.mrb[0].mxu0
      %2319 = vmatprep.mubr.bf16.mxu0 0
      %2320 = vmatmul.mubr.bf16.gmra.mrb[0].mxu0 %v1629
      %v2321 = vpop.f32.mrb[0].mxu0
      %v2322 = vadd.f32 0.0, %v2321
      %v2323 = vpop.f32.mrb[0].mxu0
      %v2324 = vpop.f32.mrb[0].mxu0
      %v2325 = vadd.f32 0.0, %v2324
      %v2326 = vpop.f32.mrb[0].mxu0
      %2327 = vmatprep.mubr.bf16.mxu0 0
      %2328 = vmatmul.mubr.bf16.gmra.mrb[0].mxu0 %v1632
      %v2329 = vpop.f32.mrb[0].mxu0
      %v2330 = vadd.f32 0.0, %v2329
      %v2331 = vpop.f32.mrb[0].mxu0
      %v2332 = vpop.f32.mrb[0].mxu0
      %v2333 = vadd.f32 0.0, %v2332
      %v2334 = vpop.f32.mrb[0].mxu0
      %2335 = vmatprep.mubr.bf16.mxu0 0
      %2336 = vmatmul.mubr.bf16.gmra.mrb[0].mxu0 %v1635
      %v2337 = vpop.f32.mrb[0].mxu0
      %v2338 = vadd.f32 0.0, %v2337
      %v2339 = vpop.f32.mrb[0].mxu0
      %v2340 = vpop.f32.mrb[0].mxu0
      %v2341 = vadd.f32 0.0, %v2340
      %v2342 = vpop.f32.mrb[0].mxu0
      %2343 = vmatprep.mubr.bf16.mxu0 0
      %2344 = vmatmul.mubr.bf16.gmra.mrb[0].mxu0 %v1638
      %v2345 = vpop.f32.mrb[0].mxu0
      %v2346 = vadd.f32 0.0, %v2345
      %v2347 = vpop.f32.mrb[0].mxu0
      %v2348 = vpop.f32.mrb[0].mxu0
      %v2349 = vadd.f32 0.0, %v2348
      %v2350 = vpop.f32.mrb[0].mxu0
      %2351 = vmatprep.mubr.bf16.mxu0 0
      %2352 = vmatmul.mubr.bf16.gmra.mrb[0].mxu0 %v1641
      %v2353 = vpop.f32.mrb[0].mxu0
      %v2354 = vadd.f32 0.0, %v2353
      %v2355 = vpop.f32.mrb[0].mxu0
      %v2356 = vpop.f32.mrb[0].mxu0
      %v2357 = vadd.f32 0.0, %v2356
      %v2358 = vpop.f32.mrb[0].mxu0
      %2359 = vmatprep.mubr.bf16.mxu0 0
      %2360 = vmatmul.mubr.bf16.gmra.mrb[0].mxu0 %v1644
      %v2361 = vpop.f32.mrb[0].mxu0
      %v2362 = vadd.f32 0.0, %v2361
      %v2363 = vpop.f32.mrb[0].mxu0
      %v2364 = vpop.f32.mrb[0].mxu0
      %v2365 = vadd.f32 0.0, %v2364
      %v2366 = vpop.f32.mrb[0].mxu0
      %2367 = vmatprep.mubr.bf16.mxu0 0
      %2368 = vmatmul.mubr.bf16.gmra.mrb[0].mxu0 %v1647
      %v2369 = vpop.f32.mrb[0].mxu0
      %v2370 = vadd.f32 0.0, %v2369
      %v2371 = vpop.f32.mrb[0].mxu0
      %v2372 = vpop.f32.mrb[0].mxu0
      %v2373 = vadd.f32 0.0, %v2372
      %v2374 = vpop.f32.mrb[0].mxu0
      %2375 = vmatprep.mubr.bf16.mxu0 0
      %2376 = vmatmul.mubr.bf16.gmra.mrb[0].mxu0 %v1650
      %v2377 = vpop.f32.mrb[0].mxu0
      %v2378 = vadd.f32 0.0, %v2377
      %v2379 = vpop.f32.mrb[0].mxu0
      %v2380 = vpop.f32.mrb[0].mxu0
      %v2381 = vadd.f32 0.0, %v2380
      %v2382 = vpop.f32.mrb[0].mxu0
      %2383 = vmatprep.mubr.bf16.mxu0 0
      %2384 = vmatmul.mubr.bf16.gmra.mrb[0].mxu0 %v1653
      %v2385 = vpop.f32.mrb[0].mxu0
      %v2386 = vadd.f32 0.0, %v2385
      %v2387 = vpop.f32.mrb[0].mxu0
      %v2388 = vpop.f32.mrb[0].mxu0
      %v2389 = vadd.f32 0.0, %v2388
      %v2390 = vpop.f32.mrb[0].mxu0
      %2391 = vmatprep.mubr.bf16.mxu0 0
      %2392 = vmatmul.mubr.bf16.gmra.mrb[0].mxu0 %v1656
      %v2393 = vpop.f32.mrb[0].mxu0
      %v2394 = vadd.f32 0.0, %v2393
      %v2395 = vpop.f32.mrb[0].mxu0
      %v2396 = vpop.f32.mrb[0].mxu0
      %v2397 = vadd.f32 0.0, %v2396
      %v2398 = vpop.f32.mrb[0].mxu0
      %2399 = vmatprep.mubr.bf16.mxu0 0
      %2400 = vmatmul.mubr.bf16.gmra.mrb[0].mxu0 %v1659
      %v2401 = vpop.f32.mrb[0].mxu0
      %v2402 = vadd.f32 0.0, %v2401
      %v2403 = vpop.f32.mrb[0].mxu0
      %v2404 = vpop.f32.mrb[0].mxu0
      %v2405 = vadd.f32 0.0, %v2404
      %v2406 = vpop.f32.mrb[0].mxu0
      %2407 = vmatprep.mubr.bf16.mxu0 0
      %2408 = vmatmul.mubr.bf16.gmra.mrb[0].mxu0 %v1662
      %v2409 = vpop.f32.mrb[0].mxu0
      %v2410 = vadd.f32 0.0, %v2409
      %v2411 = vpop.f32.mrb[0].mxu0
      %v2412 = vpop.f32.mrb[0].mxu0
      %v2413 = vadd.f32 0.0, %v2412
      %v2414 = vpop.f32.mrb[0].mxu0
      %2415 = vmatprep.mubr.bf16.mxu0 0
      %2416 = vmatmul.mubr.bf16.gmra.mrb[0].mxu0 %v1665
      %v2417 = vpop.f32.mrb[0].mxu0
      %v2418 = vadd.f32 0.0, %v2417
      %v2419 = vpop.f32.mrb[0].mxu0
      %v2420 = vpop.f32.mrb[0].mxu0
      %v2421 = vadd.f32 0.0, %v2420
      %v2422 = vpop.f32.mrb[0].mxu0
      %2423 = vmatprep.mubr.bf16.mxu0 0
      %2424 = vmatmul.mubr.bf16.gmra.mrb[0].mxu0 %v1668
      %v2425 = vpop.f32.mrb[0].mxu0
      %v2426 = vadd.f32 0.0, %v2425
      %v2427 = vpop.f32.mrb[0].mxu0
      %v2428 = vpop.f32.mrb[0].mxu0
      %v2429 = vadd.f32 0.0, %v2428
      %v2430 = vpop.f32.mrb[0].mxu0
      %2431 = vmatprep.mubr.bf16.mxu0 0
      %2432 = vmatmul.mubr.bf16.gmra.mrb[0].mxu0 %v1671
      %v2433 = vpop.f32.mrb[0].mxu0
      %v2434 = vadd.f32 0.0, %v2433
      %v2435 = vpop.f32.mrb[0].mxu0
      %v2436 = vpop.f32.mrb[0].mxu0
      %v2437 = vadd.f32 0.0, %v2436
      %v2438 = vpop.f32.mrb[0].mxu0
      %2439 = vmatprep.mubr.bf16.mxu0 0
      %2440 = vmatmul.mubr.bf16.gmra.mrb[0].mxu0 %v1674
      %v2441 = vpop.f32.mrb[0].mxu0
      %v2442 = vadd.f32 0.0, %v2441
      %v2443 = vpop.f32.mrb[0].mxu0
      %v2444 = vpop.f32.mrb[0].mxu0
      %v2445 = vadd.f32 0.0, %v2444
      %v2446 = vpop.f32.mrb[0].mxu0
      %2447 = vmatprep.mubr.bf16.mxu0 0
      %2448 = vmatmul.mubr.bf16.gmra.mrb[0].mxu0 %v1677
      %v2449 = vpop.f32.mrb[0].mxu0
      %v2450 = vadd.f32 0.0, %v2449
      %v2451 = vpop.f32.mrb[0].mxu0
      %v2452 = vpop.f32.mrb[0].mxu0
      %v2453 = vadd.f32 0.0, %v2452
      %v2454 = vpop.f32.mrb[0].mxu0
      %2455 = vmatprep.mubr.bf16.mxu0 0
      %2456 = vmatmul.mubr.bf16.gmra.mrb[0].mxu0 %v1680
      %v2457 = vpop.f32.mrb[0].mxu0
      %v2458 = vadd.f32 0.0, %v2457
      %v2459 = vpop.f32.mrb[0].mxu0
      %v2460 = vpop.f32.mrb[0].mxu0
      %v2461 = vadd.f32 0.0, %v2460
      %v2462 = vpop.f32.mrb[0].mxu0
      %2463 = vmatprep.mubr.bf16.mxu0 0
      %2464 = vmatmul.mubr.bf16.gmra.mrb[0].mxu0 %v1683
      %v2465 = vpop.f32.mrb[0].mxu0
      %v2466 = vadd.f32 0.0, %v2465
      %v2467 = vpop.f32.mrb[0].mxu0
      %v2468 = vpop.f32.mrb[0].mxu0
      %v2469 = vadd.f32 0.0, %v2468
      %v2470 = vpop.f32.mrb[0].mxu0
      %2471 = vmatprep.mubr.bf16.mxu0 0
      %2472 = vmatmul.mubr.bf16.gmra.mrb[0].mxu0 %v1686
      %v2473 = vpop.f32.mrb[0].mxu0
      %v2474 = vadd.f32 0.0, %v2473
      %v2475 = vpop.f32.mrb[0].mxu0
      %v2476 = vpop.f32.mrb[0].mxu0
      %v2477 = vadd.f32 0.0, %v2476
      %v2478 = vpop.f32.mrb[0].mxu0
      %2479 = vmatprep.mubr.bf16.mxu0 0
      %2480 = vmatmul.mubr.bf16.gmra.mrb[0].mxu0 %v1689
      %v2481 = vpop.f32.mrb[0].mxu0
      %v2482 = vadd.f32 0.0, %v2481
      %v2483 = vpop.f32.mrb[0].mxu0
      %v2484 = vpop.f32.mrb[0].mxu0
      %v2485 = vadd.f32 0.0, %v2484
      %v2486 = vpop.f32.mrb[0].mxu0
      %2487 = vmatprep.mubr.bf16.mxu0 0
      %2488 = vmatmul.mubr.bf16.gmra.mrb[0].mxu0 %v1692
      %v2489 = vpop.f32.mrb[0].mxu0
      %v2490 = vadd.f32 0.0, %v2489
      %v2491 = vpop.f32.mrb[0].mxu0
      %v2492 = vpop.f32.mrb[0].mxu0
      %v2493 = vadd.f32 0.0, %v2492
      %v2494 = vpop.f32.mrb[0].mxu0
      %2495 = vmatprep.mubr.bf16.mxu0 0
      %2496 = vmatmul.mubr.bf16.gmra.mrb[0].mxu0 %v1695
      %v2497 = vpop.f32.mrb[0].mxu0
      %v2498 = vadd.f32 0.0, %v2497
      %v2499 = vpop.f32.mrb[0].mxu0
      %v2500 = vpop.f32.mrb[0].mxu0
      %v2501 = vadd.f32 0.0, %v2500
      %v2502 = vpop.f32.mrb[0].mxu0
      %2503 = vmatprep.mubr.bf16.mxu0 0
      %2504 = vmatmul.mubr.bf16.gmra.mrb[0].mxu0 %v1698
      %v2505 = vpop.f32.mrb[0].mxu0
      %v2506 = vadd.f32 0.0, %v2505
      %v2507 = vpop.f32.mrb[0].mxu0
      %v2508 = vpop.f32.mrb[0].mxu0
      %v2509 = vadd.f32 0.0, %v2508
      %v2510 = vpop.f32.mrb[0].mxu0
      %2511 = vmatprep.mubr.bf16.mxu0 0
      %2512 = vmatmul.mubr.bf16.gmra.mrb[0].mxu0 %v1701
      %v2513 = vpop.f32.mrb[0].mxu0
      %v2514 = vadd.f32 0.0, %v2513
      %v2515 = vpop.f32.mrb[0].mxu0
      %v2516 = vpop.f32.mrb[0].mxu0
      %v2517 = vadd.f32 0.0, %v2516
      %v2518 = vpop.f32.mrb[0].mxu0
      %2519 = vmatprep.mubr.bf16.mxu0 0
      %2520 = vmatmul.mubr.bf16.gmra.mrb[0].mxu0 %v1704
      %v2521 = vpop.f32.mrb[0].mxu0
      %v2522 = vadd.f32 0.0, %v2521
      %v2523 = vpop.f32.mrb[0].mxu0
      %v2524 = vpop.f32.mrb[0].mxu0
      %v2525 = vadd.f32 0.0, %v2524
      %v2526 = vpop.f32.mrb[0].mxu0
      %2527 = vmatprep.mubr.bf16.mxu0 0
      %2528 = vmatmul.mubr.bf16.gmra.mrb[0].mxu0 %v1707
      %v2529 = vpop.f32.mrb[0].mxu0
      %v2530 = vadd.f32 0.0, %v2529
      %v2531 = vpop.f32.mrb[0].mxu0
      %v2532 = vpop.f32.mrb[0].mxu0
      %v2533 = vadd.f32 0.0, %v2532
      %v2534 = vpop.f32.mrb[0].mxu0
      %2535 = vmatprep.mubr.bf16.mxu0 0
      %2536 = vmatmul.mubr.bf16.gmra.mrb[0].mxu0 %v1710
      %v2537 = vpop.f32.mrb[0].mxu0
      %v2538 = vadd.f32 0.0, %v2537
      %v2539 = vpop.f32.mrb[0].mxu0
      %v2540 = vpop.f32.mrb[0].mxu0
      %v2541 = vadd.f32 0.0, %v2540
      %v2542 = vpop.f32.mrb[0].mxu0
      %2543 = vmatprep.mubr.bf16.mxu0 0
      %2544 = vmatmul.mubr.bf16.gmra.mrb[0].mxu0 %v1713
      %v2545 = vpop.f32.mrb[0].mxu0
      %v2546 = vadd.f32 0.0, %v2545
      %v2547 = vpop.f32.mrb[0].mxu0
      %v2548 = vpop.f32.mrb[0].mxu0
      %v2549 = vadd.f32 0.0, %v2548
      %v2550 = vpop.f32.mrb[0].mxu0
      %2551 = vmatprep.mubr.bf16.mxu0 0
      %2552 = vmatmul.mubr.bf16.gmra.mrb[0].mxu0 %v1716
      %v2553 = vpop.f32.mrb[0].mxu0
      %v2554 = vadd.f32 0.0, %v2553
      %v2555 = vpop.f32.mrb[0].mxu0
      %v2556 = vpop.f32.mrb[0].mxu0
      %v2557 = vadd.f32 0.0, %v2556
      %v2558 = vpop.f32.mrb[0].mxu0
      %2559 = vmatprep.mubr.bf16.mxu0 0
      %2560 = vmatmul.mubr.bf16.gmra.mrb[0].mxu0 %v1719
      %v2561 = vpop.f32.mrb[0].mxu0
      %v2562 = vadd.f32 0.0, %v2561
      %v2563 = vpop.f32.mrb[0].mxu0
      %v2564 = vpop.f32.mrb[0].mxu0
      %v2565 = vadd.f32 0.0, %v2564
      %v2566 = vpop.f32.mrb[0].mxu0
      %2567 = vmatprep.mubr.bf16.mxu0 0
      %2568 = vmatmul.mubr.bf16.gmra.mrb[0].mxu0 %v1722
      %v2569 = vpop.f32.mrb[0].mxu0
      %v2570 = vadd.f32 0.0, %v2569
      %v2571 = vpop.f32.mrb[0].mxu0
      %v2572 = vpop.f32.mrb[0].mxu0
      %v2573 = vadd.f32 0.0, %v2572
      %v2574 = vpop.f32.mrb[0].mxu0
      %2575 = vmatprep.mubr.bf16.mxu0 0
      %2576 = vmatmul.mubr.bf16.gmra.mrb[0].mxu0 %v1725
      %v2577 = vpop.f32.mrb[0].mxu0
      %v2578 = vadd.f32 0.0, %v2577
      %v2579 = vpop.f32.mrb[0].mxu0
      %v2580 = vpop.f32.mrb[0].mxu0
      %v2581 = vadd.f32 0.0, %v2580
      %v2582 = vpop.f32.mrb[0].mxu0
      %2583 = vmatprep.mubr.bf16.mxu0 0
      %2584 = vmatmul.mubr.bf16.gmra.mrb[0].mxu0 %v1728
      %v2585 = vpop.f32.mrb[0].mxu0
      %v2586 = vadd.f32 0.0, %v2585
      %v2587 = vpop.f32.mrb[0].mxu0
      %v2588 = vpop.f32.mrb[0].mxu0
      %v2589 = vadd.f32 0.0, %v2588
      %v2590 = vpop.f32.mrb[0].mxu0
      %2591 = vmatprep.mubr.bf16.mxu0 0
      %2592 = vmatmul.mubr.bf16.gmra.mrb[0].mxu0 %v1731
      %v2593 = vpop.f32.mrb[0].mxu0
      %v2594 = vadd.f32 0.0, %v2593
      %v2595 = vpop.f32.mrb[0].mxu0
      %v2596 = vpop.f32.mrb[0].mxu0
      %v2597 = vadd.f32 0.0, %v2596
      %v2598 = vpop.f32.mrb[0].mxu0
      %2599 = vmatprep.mubr.bf16.mxu0 0
      %2600 = vmatmul.mubr.bf16.gmra.mrb[0].mxu0 %v1734
      %v2601 = vpop.f32.mrb[0].mxu0
      %v2602 = vadd.f32 0.0, %v2601
      %v2603 = vpop.f32.mrb[0].mxu0
      %v2604 = vpop.f32.mrb[0].mxu0
      %v2605 = vadd.f32 0.0, %v2604
      %v2606 = vpop.f32.mrb[0].mxu0
      %2607 = vmatprep.mubr.bf16.mxu0 0
      %2608 = vmatmul.mubr.bf16.gmra.mrb[0].mxu0 %v1737
      %v2609 = vpop.f32.mrb[0].mxu0
      %v2610 = vadd.f32 0.0, %v2609
      %v2611 = vpop.f32.mrb[0].mxu0
      %v2612 = vpop.f32.mrb[0].mxu0
      %v2613 = vadd.f32 0.0, %v2612
      %v2614 = vpop.f32.mrb[0].mxu0
      %2615 = vmatprep.mubr.bf16.mxu0 0
      %2616 = vmatmul.mubr.bf16.gmra.mrb[0].mxu0 %v1740
      %v2617 = vpop.f32.mrb[0].mxu0
      %v2618 = vadd.f32 0.0, %v2617
      %v2619 = vpop.f32.mrb[0].mxu0
      %v2620 = vpop.f32.mrb[0].mxu0
      %v2621 = vadd.f32 0.0, %v2620
      %v2622 = vpop.f32.mrb[0].mxu0
      %2623 = vmatprep.mubr.bf16.mxu0 0
      %2624 = vmatmul.mubr.bf16.gmra.mrb[0].mxu0 %v1743
      %v2625 = vpop.f32.mrb[0].mxu0
      %v2626 = vadd.f32 0.0, %v2625
      %v2627 = vpop.f32.mrb[0].mxu0
      %v2628 = vpop.f32.mrb[0].mxu0
      %v2629 = vadd.f32 0.0, %v2628
      %v2630 = vpop.f32.mrb[0].mxu0
      %2631 = vmatprep.mubr.bf16.mxu0 0
      %2632 = vmatmul.mubr.bf16.gmra.mrb[0].mxu0 %v1746
      %v2633 = vpop.f32.mrb[0].mxu0
      %v2634 = vadd.f32 0.0, %v2633
      %v2635 = vpop.f32.mrb[0].mxu0
      %v2636 = vpop.f32.mrb[0].mxu0
      %v2637 = vadd.f32 0.0, %v2636
      %v2638 = vpop.f32.mrb[0].mxu0
      %2639 = vmatprep.mubr.bf16.mxu0 0
      %2640 = vmatmul.mubr.bf16.gmra.mrb[0].mxu0 %v1749
      %v2641 = vpop.f32.mrb[0].mxu0
      %v2642 = vadd.f32 0.0, %v2641
      %v2643 = vpop.f32.mrb[0].mxu0
      %v2644 = vpop.f32.mrb[0].mxu0
      %v2645 = vadd.f32 0.0, %v2644
      %v2646 = vpop.f32.mrb[0].mxu0
      %2647 = vmatprep.mubr.bf16.mxu0 0
      %2648 = vmatmul.mubr.bf16.gmra.mrb[0].mxu0 %v1752
      %v2649 = vpop.f32.mrb[0].mxu0
      %v2650 = vadd.f32 0.0, %v2649
      %v2651 = vpop.f32.mrb[0].mxu0
      %v2652 = vpop.f32.mrb[0].mxu0
      %v2653 = vadd.f32 0.0, %v2652
      %v2654 = vpop.f32.mrb[0].mxu0
      %2655 = vmatprep.mubr.bf16.mxu0 0
      %2656 = vmatmul.mubr.bf16.gmra.mrb[0].mxu0 %v1755
      %v2657 = vpop.f32.mrb[0].mxu0
      %v2658 = vadd.f32 0.0, %v2657
      %v2659 = vpop.f32.mrb[0].mxu0
      %v2660 = vpop.f32.mrb[0].mxu0
      %v2661 = vadd.f32 0.0, %v2660
      %v2662 = vpop.f32.mrb[0].mxu0
      %2663 = vmatprep.mubr.bf16.mxu0 0
      %2664 = vmatmul.mubr.bf16.gmra.mrb[0].mxu0 %v1758
      %v2665 = vpop.f32.mrb[0].mxu0
      %v2666 = vadd.f32 0.0, %v2665
      %v2667 = vpop.f32.mrb[0].mxu0
      %v2668 = vpop.f32.mrb[0].mxu0
      %v2669 = vadd.f32 0.0, %v2668
      %v2670 = vpop.f32.mrb[0].mxu0
      %2671 = vmatprep.mubr.bf16.mxu0 0
      %2672 = vmatmul.mubr.bf16.gmra.mrb[0].mxu0 %v1761
      %v2673 = vpop.f32.mrb[0].mxu0
      %v2674 = vadd.f32 0.0, %v2673
      %v2675 = vpop.f32.mrb[0].mxu0
      %v2676 = vpop.f32.mrb[0].mxu0
      %v2677 = vadd.f32 0.0, %v2676
      %v2678 = vpop.f32.mrb[0].mxu0
      %2679 = vmatprep.mubr.bf16.mxu0 0
      %2680 = vmatmul.mubr.bf16.gmra.mrb[0].mxu0 %v1764
      %v2681 = vpop.f32.mrb[0].mxu0
      %v2682 = vadd.f32 0.0, %v2681
      %v2683 = vpop.f32.mrb[0].mxu0
      %v2684 = vpop.f32.mrb[0].mxu0
      %v2685 = vadd.f32 0.0, %v2684
      %v2686 = vpop.f32.mrb[0].mxu0
      %2687 = vmatprep.mubr.bf16.mxu0 0
      %2688 = vmatmul.mubr.bf16.gmra.mrb[0].mxu0 %v1767
      %v2689 = vpop.f32.mrb[0].mxu0
      %v2690 = vadd.f32 0.0, %v2689
      %v2691 = vpop.f32.mrb[0].mxu0
      %v2692 = vpop.f32.mrb[0].mxu0
      %v2693 = vadd.f32 0.0, %v2692
      %v2694 = vpop.f32.mrb[0].mxu0
      %2695 = vmatprep.mubr.bf16.mxu0 0
      %2696 = vmatmul.mubr.bf16.gmra.mrb[0].mxu0 %v1770
      %v2697 = vpop.f32.mrb[0].mxu0
      %v2698 = vadd.f32 0.0, %v2697
      %v2699 = vpop.f32.mrb[0].mxu0
      %v2700 = vpop.f32.mrb[0].mxu0
      %v2701 = vadd.f32 0.0, %v2700
      %v2702 = vpop.f32.mrb[0].mxu0
      %2703 = vmatprep.mubr.bf16.mxu0 0
      %2704 = vmatmul.mubr.bf16.gmra.mrb[0].mxu0 %v1773
      %v2705 = vpop.f32.mrb[0].mxu0
      %v2706 = vadd.f32 0.0, %v2705
      %v2707 = vpop.f32.mrb[0].mxu0
      %v2708 = vpop.f32.mrb[0].mxu0
      %v2709 = vadd.f32 0.0, %v2708
      %v2710 = vpop.f32.mrb[0].mxu0
      %2711 = vmatprep.mubr.bf16.mxu0 0
      %2712 = vmatmul.mubr.bf16.gmra.mrb[0].mxu0 %v1776
      %v2713 = vpop.f32.mrb[0].mxu0
      %v2714 = vadd.f32 0.0, %v2713
      %v2715 = vpop.f32.mrb[0].mxu0
      %v2716 = vpop.f32.mrb[0].mxu0
      %v2717 = vadd.f32 0.0, %v2716
      %v2718 = vpop.f32.mrb[0].mxu0
      %2719 = vmatprep.mubr.bf16.mxu0 0
      %2720 = vmatmul.mubr.bf16.gmra.mrb[0].mxu0 %v1779
      %v2721 = vpop.f32.mrb[0].mxu0
      %v2722 = vadd.f32 0.0, %v2721
      %v2723 = vpop.f32.mrb[0].mxu0
      %v2724 = vpop.f32.mrb[0].mxu0
      %v2725 = vadd.f32 0.0, %v2724
      %v2726 = vpop.f32.mrb[0].mxu0
      %2727 = vmatprep.mubr.bf16.mxu0 0
      %2728 = vmatmul.mubr.bf16.gmra.mrb[0].mxu0 %v1782
      %v2729 = vpop.f32.mrb[0].mxu0
      %v2730 = vadd.f32 0.0, %v2729
      %v2731 = vpop.f32.mrb[0].mxu0
      %v2732 = vpop.f32.mrb[0].mxu0
      %v2733 = vadd.f32 0.0, %v2732
      %v2734 = vpop.f32.mrb[0].mxu0
      %2735 = vmatprep.mubr.bf16.mxu0 0
      %2736 = vmatmul.mubr.bf16.gmra.mrb[0].mxu0 %v1785
      %v2737 = vpop.f32.mrb[0].mxu0
      %v2738 = vadd.f32 0.0, %v2737
      %v2739 = vpop.f32.mrb[0].mxu0
      %v2740 = vpop.f32.mrb[0].mxu0
      %v2741 = vadd.f32 0.0, %v2740
      %v2742 = vpop.f32.mrb[0].mxu0
      %2743 = vmatprep.mubr.bf16.mxu0 0
      %2744 = vmatmul.mubr.bf16.gmra.mrb[0].mxu0 %v1788
      %v2745 = vpop.f32.mrb[0].mxu0
      %v2746 = vadd.f32 0.0, %v2745
      %v2747 = vpop.f32.mrb[0].mxu0
      %v2748 = vpop.f32.mrb[0].mxu0
      %v2749 = vadd.f32 0.0, %v2748
      %v2750 = vpop.f32.mrb[0].mxu0
      %2751 = vmatprep.mubr.bf16.mxu0 0
      %2752 = vmatmul.mubr.bf16.gmra.mrb[0].mxu0 %v1791
      %v2753 = vpop.f32.mrb[0].mxu0
      %v2754 = vadd.f32 0.0, %v2753
      %v2755 = vpop.f32.mrb[0].mxu0
      %v2756 = vpop.f32.mrb[0].mxu0
      %v2757 = vadd.f32 0.0, %v2756
      %v2758 = vpop.f32.mrb[0].mxu0
      %2759 = vmatprep.mubr.bf16.mxu0 0
      %2760 = vmatmul.mubr.bf16.gmra.mrb[0].mxu0 %v1794
      %v2761 = vpop.f32.mrb[0].mxu0
      %v2762 = vadd.f32 0.0, %v2761
      %v2763 = vpop.f32.mrb[0].mxu0
      %v2764 = vpop.f32.mrb[0].mxu0
      %v2765 = vadd.f32 0.0, %v2764
      %v2766 = vpop.f32.mrb[0].mxu0
      %2767 = vmatprep.mubr.bf16.mxu0 0
      %2768 = vmatmul.mubr.bf16.gmra.mrb[0].mxu0 %v1797
      %v2769 = vpop.f32.mrb[0].mxu0
      %v2770 = vadd.f32 0.0, %v2769
      %v2771 = vpop.f32.mrb[0].mxu0
      %v2772 = vpop.f32.mrb[0].mxu0
      %v2773 = vadd.f32 0.0, %v2772
      %v2774 = vpop.f32.mrb[0].mxu0
      %2775 = vmatprep.mubr.bf16.mxu0 0
      %2776 = vmatmul.mubr.bf16.gmra.mrb[0].mxu0 %v1800
      %v2777 = vpop.f32.mrb[0].mxu0
      %v2778 = vadd.f32 0.0, %v2777
      %v2779 = vpop.f32.mrb[0].mxu0
      %v2780 = vpop.f32.mrb[0].mxu0
      %v2781 = vadd.f32 0.0, %v2780
      %v2782 = vpop.f32.mrb[0].mxu0
      %2783 = vmatprep.mubr.bf16.mxu0 0
      %2784 = vmatmul.mubr.bf16.gmra.mrb[0].mxu0 %v1803
      %v2785 = vpop.f32.mrb[0].mxu0
      %v2786 = vadd.f32 0.0, %v2785
      %v2787 = vpop.f32.mrb[0].mxu0
      %v2788 = vpop.f32.mrb[0].mxu0
      %v2789 = vadd.f32 0.0, %v2788
      %v2790 = vpop.f32.mrb[0].mxu0
      %2791 = vmatprep.mubr.bf16.mxu0 0
      %2792 = vmatmul.mubr.bf16.gmra.mrb[0].mxu0 %v1806
      %v2793 = vpop.f32.mrb[0].mxu0
      %v2794 = vadd.f32 0.0, %v2793
      %v2795 = vpop.f32.mrb[0].mxu0
      %v2796 = vpop.f32.mrb[0].mxu0
      %v2797 = vadd.f32 0.0, %v2796
      %v2798 = vpop.f32.mrb[0].mxu0
      %2799 = vmatprep.mubr.bf16.mxu0 0
      %2800 = vmatmul.mubr.bf16.gmra.mrb[0].mxu0 %v1809
      %v2801 = vpop.f32.mrb[0].mxu0
      %v2802 = vadd.f32 0.0, %v2801
      %v2803 = vpop.f32.mrb[0].mxu0
      %v2804 = vpop.f32.mrb[0].mxu0
      %v2805 = vadd.f32 0.0, %v2804
      %v2806 = vpop.f32.mrb[0].mxu0
      %2807 = vmatprep.mubr.bf16.mxu0 0
      %2808 = vmatmul.mubr.bf16.gmra.mrb[0].mxu0 %v1812
      %v2809 = vpop.f32.mrb[0].mxu0
      %v2810 = vadd.f32 0.0, %v2809
      %v2811 = vpop.f32.mrb[0].mxu0
      %v2812 = vpop.f32.mrb[0].mxu0
      %v2813 = vadd.f32 0.0, %v2812
      %v2814 = vpop.f32.mrb[0].mxu0
      %2815 = vmatprep.mubr.bf16.mxu0 0
      %2816 = vmatmul.mubr.bf16.gmra.mrb[0].mxu0 %v1815
      %v2817 = vpop.f32.mrb[0].mxu0
      %v2818 = vadd.f32 0.0, %v2817
      %v2819 = vpop.f32.mrb[0].mxu0
      %v2820 = vpop.f32.mrb[0].mxu0
      %v2821 = vadd.f32 0.0, %v2820
      %v2822 = vpop.f32.mrb[0].mxu0
      %2823 = vmatprep.mubr.bf16.mxu0 0
      %2824 = vmatmul.mubr.bf16.gmra.mrb[0].mxu0 %v1818
      %v2825 = vpop.f32.mrb[0].mxu0
      %v2826 = vadd.f32 0.0, %v2825
      %v2827 = vpop.f32.mrb[0].mxu0
      %v2828 = vpop.f32.mrb[0].mxu0
      %v2829 = vadd.f32 0.0, %v2828
      %v2830 = vpop.f32.mrb[0].mxu0
      %2831 = vmatprep.mubr.bf16.mxu0 0
      %2832 = vmatmul.mubr.bf16.gmra.mrb[0].mxu0 %v1821
      %v2833 = vpop.f32.mrb[0].mxu0
      %v2834 = vadd.f32 0.0, %v2833
      %v2835 = vpop.f32.mrb[0].mxu0
      %v2836 = vpop.f32.mrb[0].mxu0
      %v2837 = vadd.f32 0.0, %v2836
      %v2838 = vpop.f32.mrb[0].mxu0
      %2839 = vmatprep.mubr.bf16.mxu0 0
      %2840 = vmatmul.mubr.bf16.gmra.mrb[0].mxu0 %v1824
      %v2841 = vpop.f32.mrb[0].mxu0
      %v2842 = vadd.f32 0.0, %v2841
      %v2843 = vpop.f32.mrb[0].mxu0
      %v2844 = vpop.f32.mrb[0].mxu0
      %v2845 = vadd.f32 0.0, %v2844
      %v2846 = vpop.f32.mrb[0].mxu0
      %2847 = vmatprep.mubr.bf16.mxu0 0
      %2848 = vmatmul.mubr.bf16.gmra.mrb[0].mxu0 %v1827
      %v2849 = vpop.f32.mrb[0].mxu0
      %v2850 = vadd.f32 0.0, %v2849
      %v2851 = vpop.f32.mrb[0].mxu0
      %v2852 = vpop.f32.mrb[0].mxu0
      %v2853 = vadd.f32 0.0, %v2852
      %v2854 = vpop.f32.mrb[0].mxu0
      %2855 = vmatprep.mubr.bf16.mxu0 0
      %2856 = vmatmul.mubr.bf16.gmra.mrb[0].mxu0 %v1830
      %v2857 = vpop.f32.mrb[0].mxu0
      %v2858 = vadd.f32 0.0, %v2857
      %v2859 = vpop.f32.mrb[0].mxu0
      %v2860 = vpop.f32.mrb[0].mxu0
      %v2861 = vadd.f32 0.0, %v2860
      %v2862 = vpop.f32.mrb[0].mxu0
      %2863 = vmatprep.mubr.bf16.mxu0 0
      %2864 = vmatmul.mubr.bf16.gmra.mrb[0].mxu0 %v1833
      %v2865 = vpop.f32.mrb[0].mxu0
      %v2866 = vadd.f32 0.0, %v2865
      %v2867 = vpop.f32.mrb[0].mxu0
      %v2868 = vpop.f32.mrb[0].mxu0
      %v2869 = vadd.f32 0.0, %v2868
      %v2870 = vpop.f32.mrb[0].mxu0
      %2871 = vmatprep.mubr.bf16.mxu0 0
      %2872 = vmatmul.mubr.bf16.gmra.mrb[0].mxu0 %v1836
      %v2873 = vpop.f32.mrb[0].mxu0
      %v2874 = vadd.f32 0.0, %v2873
      %v2875 = vpop.f32.mrb[0].mxu0
      %v2876 = vpop.f32.mrb[0].mxu0
      %v2877 = vadd.f32 0.0, %v2876
      %v2878 = vpop.f32.mrb[0].mxu0
      %2879 = vmatprep.mubr.bf16.mxu0 0
      %2880 = vmatmul.mubr.bf16.gmra.mrb[0].mxu0 %v1839
      %v2881 = vpop.f32.mrb[0].mxu0
      %v2882 = vadd.f32 0.0, %v2881
      %v2883 = vpop.f32.mrb[0].mxu0
      %v2884 = vpop.f32.mrb[0].mxu0
      %v2885 = vadd.f32 0.0, %v2884
      %v2886 = vpop.f32.mrb[0].mxu0
      %2887 = vmatprep.mubr.bf16.mxu0 0
      %2888 = vmatmul.mubr.bf16.gmra.mrb[0].mxu0 %v1842
      %v2889 = vpop.f32.mrb[0].mxu0
      %v2890 = vadd.f32 0.0, %v2889
      %v2891 = vpop.f32.mrb[0].mxu0
      %v2892 = vpop.f32.mrb[0].mxu0
      %v2893 = vadd.f32 0.0, %v2892
      %v2894 = vpop.f32.mrb[0].mxu0
      %2895 = vmatprep.mubr.bf16.mxu0 0
      %2896 = vmatmul.mubr.bf16.gmra.mrb[0].mxu0 %v1845
      %v2897 = vpop.f32.mrb[0].mxu0
      %v2898 = vadd.f32 0.0, %v2897
      %v2899 = vpop.f32.mrb[0].mxu0
      %v2900 = vpop.f32.mrb[0].mxu0
      %v2901 = vadd.f32 0.0, %v2900
      %v2902 = vpop.f32.mrb[0].mxu0
      %2903 = vdwg.mxu0
      %v2904 = vmax.f32 %v1882, %v2138
      %v2905 = vmax.f32 %v1885, %v2141
      %v2906 = vmax.f32 %v1890, %v2146
      %v2907 = vmax.f32 %v1893, %v2149
      %v2908 = vmax.f32 %v1898, %v2154
      %v2909 = vmax.f32 %v1901, %v2157
      %v2910 = vmax.f32 %v1906, %v2162
      %v2911 = vmax.f32 %v1909, %v2165
      %v2912 = vmax.f32 %v1914, %v2170
      %v2913 = vmax.f32 %v1917, %v2173
      %v2914 = vmax.f32 %v1922, %v2178
      %v2915 = vmax.f32 %v1925, %v2181
      %v2916 = vmax.f32 %v1930, %v2186
      %v2917 = vmax.f32 %v1933, %v2189
      %v2918 = vmax.f32 %v1938, %v2194
      %v2919 = vmax.f32 %v1941, %v2197
      %v2920 = vmax.f32 %v1946, %v2202
      %v2921 = vmax.f32 %v1949, %v2205
      %v2922 = vmax.f32 %v1954, %v2210
      %v2923 = vmax.f32 %v1957, %v2213
      %v2924 = vmax.f32 %v1962, %v2218
      %v2925 = vmax.f32 %v1965, %v2221
      %v2926 = vmax.f32 %v1970, %v2226
      %v2927 = vmax.f32 %v1973, %v2229
      %v2928 = vmax.f32 %v1978, %v2234
      %v2929 = vmax.f32 %v1981, %v2237
      %v2930 = vmax.f32 %v1986, %v2242
      %v2931 = vmax.f32 %v1989, %v2245
      %v2932 = vmax.f32 %v1994, %v2250
      %v2933 = vmax.f32 %v1997, %v2253
      %v2934 = vmax.f32 %v2002, %v2258
      %v2935 = vmax.f32 %v2005, %v2261
      %v2936 = vmax.f32 %v2010, %v2266
      %v2937 = vmax.f32 %v2013, %v2269
      %v2938 = vmax.f32 %v2018, %v2274
      %v2939 = vmax.f32 %v2021, %v2277
      %v2940 = vmax.f32 %v2026, %v2282
      %v2941 = vmax.f32 %v2029, %v2285
      %v2942 = vmax.f32 %v2034, %v2290
      %v2943 = vmax.f32 %v2037, %v2293
      %v2944 = vmax.f32 %v2042, %v2298
      %v2945 = vmax.f32 %v2045, %v2301
      %v2946 = vmax.f32 %v2050, %v2306
      %v2947 = vmax.f32 %v2053, %v2309
      %v2948 = vmax.f32 %v2058, %v2314
      %v2949 = vmax.f32 %v2061, %v2317
      %v2950 = vmax.f32 %v2066, %v2322
      %v2951 = vmax.f32 %v2069, %v2325
      %v2952 = vmax.f32 %v2074, %v2330
      %v2953 = vmax.f32 %v2077, %v2333
      %v2954 = vmax.f32 %v2082, %v2338
      %v2955 = vmax.f32 %v2085, %v2341
      %v2956 = vmax.f32 %v2090, %v2346
      %v2957 = vmax.f32 %v2093, %v2349
      %v2958 = vmax.f32 %v2098, %v2354
      %v2959 = vmax.f32 %v2101, %v2357
      %v2960 = vmax.f32 %v2106, %v2362
      %v2961 = vmax.f32 %v2109, %v2365
      %v2962 = vmax.f32 %v2114, %v2370
      %v2963 = vmax.f32 %v2117, %v2373
      %v2964 = vmax.f32 %v2122, %v2378
      %v2965 = vmax.f32 %v2125, %v2381
      %v2966 = vmax.f32 %v2130, %v2386
      %v2967 = vmax.f32 %v2133, %v2389
      %v2968 = vmax.f32 %v2394, %v2650
      %v2969 = vmax.f32 %v2397, %v2653
      %v2970 = vmax.f32 %v2402, %v2658
      %v2971 = vmax.f32 %v2405, %v2661
      %v2972 = vmax.f32 %v2410, %v2666
      %v2973 = vmax.f32 %v2413, %v2669
      %v2974 = vmax.f32 %v2418, %v2674
      %v2975 = vmax.f32 %v2421, %v2677
      %v2976 = vmax.f32 %v2426, %v2682
      %v2977 = vmax.f32 %v2429, %v2685
      %v2978 = vmax.f32 %v2434, %v2690
      %v2979 = vmax.f32 %v2437, %v2693
      %v2980 = vmax.f32 %v2442, %v2698
      %v2981 = vmax.f32 %v2445, %v2701
      %v2982 = vmax.f32 %v2450, %v2706
      %v2983 = vmax.f32 %v2453, %v2709
      %v2984 = vmax.f32 %v2458, %v2714
      %v2985 = vmax.f32 %v2461, %v2717
      %v2986 = vmax.f32 %v2466, %v2722
      %v2987 = vmax.f32 %v2469, %v2725
      %v2988 = vmax.f32 %v2474, %v2730
      %v2989 = vmax.f32 %v2477, %v2733
      %v2990 = vmax.f32 %v2482, %v2738
      %v2991 = vmax.f32 %v2485, %v2741
      %v2992 = vmax.f32 %v2490, %v2746
      %v2993 = vmax.f32 %v2493, %v2749
      %v2994 = vmax.f32 %v2498, %v2754
      %v2995 = vmax.f32 %v2501, %v2757
      %v2996 = vmax.f32 %v2506, %v2762
      %v2997 = vmax.f32 %v2509, %v2765
      %v2998 = vmax.f32 %v2514, %v2770
      %v2999 = vmax.f32 %v2517, %v2773
      %v3000 = vmax.f32 %v2522, %v2778
      %v3001 = vmax.f32 %v2525, %v2781
      %v3002 = vmax.f32 %v2530, %v2786
      %v3003 = vmax.f32 %v2533, %v2789
      %v3004 = vmax.f32 %v2538, %v2794
      %v3005 = vmax.f32 %v2541, %v2797
      %v3006 = vmax.f32 %v2546, %v2802
      %v3007 = vmax.f32 %v2549, %v2805
      %v3008 = vmax.f32 %v2554, %v2810
      %v3009 = vmax.f32 %v2557, %v2813
      %v3010 = vmax.f32 %v2562, %v2818
      %v3011 = vmax.f32 %v2565, %v2821
      %v3012 = vmax.f32 %v2570, %v2826
      %v3013 = vmax.f32 %v2573, %v2829
      %v3014 = vmax.f32 %v2578, %v2834
      %v3015 = vmax.f32 %v2581, %v2837
      %v3016 = vmax.f32 %v2586, %v2842
      %v3017 = vmax.f32 %v2589, %v2845
      %v3018 = vmax.f32 %v2594, %v2850
      %v3019 = vmax.f32 %v2597, %v2853
      %v3020 = vmax.f32 %v2602, %v2858
      %v3021 = vmax.f32 %v2605, %v2861
      %v3022 = vmax.f32 %v2610, %v2866
      %v3023 = vmax.f32 %v2613, %v2869
      %v3024 = vmax.f32 %v2618, %v2874
      %v3025 = vmax.f32 %v2621, %v2877
      %v3026 = vmax.f32 %v2626, %v2882
      %v3027 = vmax.f32 %v2629, %v2885
      %v3028 = vmax.f32 %v2634, %v2890
      %v3029 = vmax.f32 %v2637, %v2893
      %v3030 = vmax.f32 %v2642, %v2898
      %v3031 = vmax.f32 %v2645, %v2901
      %v3032 = vmax.f32 %v2904, %v2968
      %v3033 = vmax.f32 %v2905, %v2969
      %v3034 = vmax.f32 %v2906, %v2970
      %v3035 = vmax.f32 %v2907, %v2971
      %v3036 = vmax.f32 %v2908, %v2972
      %v3037 = vmax.f32 %v2909, %v2973
      %v3038 = vmax.f32 %v2910, %v2974
      %v3039 = vmax.f32 %v2911, %v2975
      %v3040 = vmax.f32 %v2912, %v2976
      %v3041 = vmax.f32 %v2913, %v2977
      %v3042 = vmax.f32 %v2914, %v2978
      %v3043 = vmax.f32 %v2915, %v2979
      %v3044 = vmax.f32 %v2916, %v2980
      %v3045 = vmax.f32 %v2917, %v2981
      %v3046 = vmax.f32 %v2918, %v2982
      %v3047 = vmax.f32 %v2919, %v2983
      %v3048 = vmax.f32 %v2920, %v2984
      %v3049 = vmax.f32 %v2921, %v2985
      %v3050 = vmax.f32 %v2922, %v2986
      %v3051 = vmax.f32 %v2923, %v2987
      %v3052 = vmax.f32 %v2924, %v2988
      %v3053 = vmax.f32 %v2925, %v2989
      %v3054 = vmax.f32 %v2926, %v2990
      %v3055 = vmax.f32 %v2927, %v2991
      %v3056 = vmax.f32 %v2928, %v2992
      %v3057 = vmax.f32 %v2929, %v2993
      %v3058 = vmax.f32 %v2930, %v2994
      %v3059 = vmax.f32 %v2931, %v2995
      %v3060 = vmax.f32 %v2932, %v2996
      %v3061 = vmax.f32 %v2933, %v2997
      %v3062 = vmax.f32 %v2934, %v2998
      %v3063 = vmax.f32 %v2935, %v2999
      %v3064 = vmax.f32 %v2936, %v3000
      %v3065 = vmax.f32 %v2937, %v3001
      %v3066 = vmax.f32 %v2938, %v3002
      %v3067 = vmax.f32 %v2939, %v3003
      %v3068 = vmax.f32 %v2940, %v3004
      %v3069 = vmax.f32 %v2941, %v3005
      %v3070 = vmax.f32 %v2942, %v3006
      %v3071 = vmax.f32 %v2943, %v3007
      %v3072 = vmax.f32 %v2944, %v3008
      %v3073 = vmax.f32 %v2945, %v3009
      %v3074 = vmax.f32 %v2946, %v3010
      %v3075 = vmax.f32 %v2947, %v3011
      %v3076 = vmax.f32 %v2948, %v3012
      %v3077 = vmax.f32 %v2949, %v3013
      %v3078 = vmax.f32 %v2950, %v3014
      %v3079 = vmax.f32 %v2951, %v3015
      %v3080 = vmax.f32 %v2952, %v3016
      %v3081 = vmax.f32 %v2953, %v3017
      %v3082 = vmax.f32 %v2954, %v3018
      %v3083 = vmax.f32 %v2955, %v3019
      %v3084 = vmax.f32 %v2956, %v3020
      %v3085 = vmax.f32 %v2957, %v3021
      %v3086 = vmax.f32 %v2958, %v3022
      %v3087 = vmax.f32 %v2959, %v3023
      %v3088 = vmax.f32 %v2960, %v3024
      %v3089 = vmax.f32 %v2961, %v3025
      %v3090 = vmax.f32 %v2962, %v3026
      %v3091 = vmax.f32 %v2963, %v3027
      %v3092 = vmax.f32 %v2964, %v3028
      %v3093 = vmax.f32 %v2965, %v3029
      %v3094 = vmax.f32 %v2966, %v3030
      %v3095 = vmax.f32 %v2967, %v3031
      %v3096 = vld [vmem:[%s2] sm:$0x1]
      %v3098 = vlaneseq
      %v3099 = vshrl.u32 %v3098, 7
      %v3100 = vsub.s32 0, %v3099
      %v3101 = vrot.slane %v3096, %v3100
      %v3103 = vadd.f32 %v3032, %v3101
      %v3104 = vadd.f32 %v3033, %v3101
      %v3105 = vadd.f32 %v3034, %v3101
      %v3106 = vadd.f32 %v3035, %v3101
      %v3107 = vadd.f32 %v3036, %v3101
      %v3108 = vadd.f32 %v3037, %v3101
      %v3109 = vadd.f32 %v3038, %v3101
      %v3110 = vadd.f32 %v3039, %v3101
      %v3111 = vadd.f32 %v3040, %v3101
      %v3112 = vadd.f32 %v3041, %v3101
      %v3113 = vadd.f32 %v3042, %v3101
      %v3114 = vadd.f32 %v3043, %v3101
      %v3115 = vadd.f32 %v3044, %v3101
      %v3116 = vadd.f32 %v3045, %v3101
      %v3117 = vadd.f32 %v3046, %v3101
      %v3118 = vadd.f32 %v3047, %v3101
      %v3119 = vadd.f32 %v3048, %v3101
      %v3120 = vadd.f32 %v3049, %v3101
      %v3121 = vadd.f32 %v3050, %v3101
      %v3122 = vadd.f32 %v3051, %v3101
      %v3123 = vadd.f32 %v3052, %v3101
      %v3124 = vadd.f32 %v3053, %v3101
      %v3125 = vadd.f32 %v3054, %v3101
      %v3126 = vadd.f32 %v3055, %v3101
      %v3127 = vadd.f32 %v3056, %v3101
      %v3128 = vadd.f32 %v3057, %v3101
      %v3129 = vadd.f32 %v3058, %v3101
      %v3130 = vadd.f32 %v3059, %v3101
      %v3131 = vadd.f32 %v3060, %v3101
      %v3132 = vadd.f32 %v3061, %v3101
      %v3133 = vadd.f32 %v3062, %v3101
      %v3134 = vadd.f32 %v3063, %v3101
      %v3135 = vadd.f32 %v3064, %v3101
      %v3136 = vadd.f32 %v3065, %v3101
      %v3137 = vadd.f32 %v3066, %v3101
      %v3138 = vadd.f32 %v3067, %v3101
      %v3139 = vadd.f32 %v3068, %v3101
      %v3140 = vadd.f32 %v3069, %v3101
      %v3141 = vadd.f32 %v3070, %v3101
      %v3142 = vadd.f32 %v3071, %v3101
      %v3143 = vadd.f32 %v3072, %v3101
      %v3144 = vadd.f32 %v3073, %v3101
      %v3145 = vadd.f32 %v3074, %v3101
      %v3146 = vadd.f32 %v3075, %v3101
      %v3147 = vadd.f32 %v3076, %v3101
      %v3148 = vadd.f32 %v3077, %v3101
      %v3149 = vadd.f32 %v3078, %v3101
      %v3150 = vadd.f32 %v3079, %v3101
      %v3151 = vadd.f32 %v3080, %v3101
      %v3152 = vadd.f32 %v3081, %v3101
      %v3153 = vadd.f32 %v3082, %v3101
      %v3154 = vadd.f32 %v3083, %v3101
      %v3155 = vadd.f32 %v3084, %v3101
      %v3156 = vadd.f32 %v3085, %v3101
      %v3157 = vadd.f32 %v3086, %v3101
      %v3158 = vadd.f32 %v3087, %v3101
      %v3159 = vadd.f32 %v3088, %v3101
      %v3160 = vadd.f32 %v3089, %v3101
      %v3161 = vadd.f32 %v3090, %v3101
      %v3162 = vadd.f32 %v3091, %v3101
      %v3163 = vadd.f32 %v3092, %v3101
      %v3164 = vadd.f32 %v3093, %v3101
      %v3165 = vadd.f32 %v3094, %v3101
      %v3166 = vadd.f32 %v3095, %v3101
      %v3167 = vmax.f32 %v3103, 0.0
      %v3168 = vmax.f32 %v3104, 0.0
      %v3169 = vmax.f32 %v3105, 0.0
      %v3170 = vmax.f32 %v3106, 0.0
      %v3171 = vmax.f32 %v3107, 0.0
      %v3172 = vmax.f32 %v3108, 0.0
      %v3173 = vmax.f32 %v3109, 0.0
      %v3174 = vmax.f32 %v3110, 0.0
      %v3175 = vmax.f32 %v3111, 0.0
      %v3176 = vmax.f32 %v3112, 0.0
      %v3177 = vmax.f32 %v3113, 0.0
      %v3178 = vmax.f32 %v3114, 0.0
      %v3179 = vmax.f32 %v3115, 0.0
      %v3180 = vmax.f32 %v3116, 0.0
      %v3181 = vmax.f32 %v3117, 0.0
      %v3182 = vmax.f32 %v3118, 0.0
      %v3183 = vmax.f32 %v3119, 0.0
      %v3184 = vmax.f32 %v3120, 0.0
      %v3185 = vmax.f32 %v3121, 0.0
      %v3186 = vmax.f32 %v3122, 0.0
      %v3187 = vmax.f32 %v3123, 0.0
      %v3188 = vmax.f32 %v3124, 0.0
      %v3189 = vmax.f32 %v3125, 0.0
      %v3190 = vmax.f32 %v3126, 0.0
      %v3191 = vmax.f32 %v3127, 0.0
      %v3192 = vmax.f32 %v3128, 0.0
      %v3193 = vmax.f32 %v3129, 0.0
      %v3194 = vmax.f32 %v3130, 0.0
      %v3195 = vmax.f32 %v3131, 0.0
      %v3196 = vmax.f32 %v3132, 0.0
      %v3197 = vmax.f32 %v3133, 0.0
      %v3198 = vmax.f32 %v3134, 0.0
      %v3199 = vmax.f32 %v3135, 0.0
      %v3200 = vmax.f32 %v3136, 0.0
      %v3201 = vmax.f32 %v3137, 0.0
      %v3202 = vmax.f32 %v3138, 0.0
      %v3203 = vmax.f32 %v3139, 0.0
      %v3204 = vmax.f32 %v3140, 0.0
      %v3205 = vmax.f32 %v3141, 0.0
      %v3206 = vmax.f32 %v3142, 0.0
      %v3207 = vmax.f32 %v3143, 0.0
      %v3208 = vmax.f32 %v3144, 0.0
      %v3209 = vmax.f32 %v3145, 0.0
      %v3210 = vmax.f32 %v3146, 0.0
      %v3211 = vmax.f32 %v3147, 0.0
      %v3212 = vmax.f32 %v3148, 0.0
      %v3213 = vmax.f32 %v3149, 0.0
      %v3214 = vmax.f32 %v3150, 0.0
      %v3215 = vmax.f32 %v3151, 0.0
      %v3216 = vmax.f32 %v3152, 0.0
      %v3217 = vmax.f32 %v3153, 0.0
      %v3218 = vmax.f32 %v3154, 0.0
      %v3219 = vmax.f32 %v3155, 0.0
      %v3220 = vmax.f32 %v3156, 0.0
      %v3221 = vmax.f32 %v3157, 0.0
      %v3222 = vmax.f32 %v3158, 0.0
      %v3223 = vmax.f32 %v3159, 0.0
      %v3224 = vmax.f32 %v3160, 0.0
      %v3225 = vmax.f32 %v3161, 0.0
      %v3226 = vmax.f32 %v3162, 0.0
      %v3227 = vmax.f32 %v3163, 0.0
      %v3228 = vmax.f32 %v3164, 0.0
      %v3229 = vmax.f32 %v3165, 0.0
      %v3230 = vmax.f32 %v3166, 0.0
      %v3231 = vld [vmem:[%s5] sm:$0xff]
      %v3232 = vld [vmem:[%s5 + $0x8] sm:$0xff]
      %v3233 = vld [vmem:[%s5 + $0x10] sm:$0xff]
      %v3234 = vld [vmem:[%s5 + $0x18] sm:$0xff]
      %v3235 = vld [vmem:[%s5 + $0x20] sm:$0xff]
      %v3236 = vld [vmem:[%s5 + $0x28] sm:$0xff]
      %v3237 = vld [vmem:[%s5 + $0x30] sm:$0xff]
      %v3238 = vld [vmem:[%s5 + $0x38] sm:$0xff]
      %v3239 = vld [vmem:[%s5 + $0x40] sm:$0xff]
      %v3240 = vld [vmem:[%s5 + $0x48] sm:$0xff]
      %v3241 = vld [vmem:[%s5 + $0x50] sm:$0xff]
      %v3242 = vld [vmem:[%s5 + $0x58] sm:$0xff]
      %v3243 = vld [vmem:[%s5 + $0x60] sm:$0xff]
      %v3244 = vld [vmem:[%s5 + $0x68] sm:$0xff]
      %v3245 = vld [vmem:[%s5 + $0x70] sm:$0xff]
      %v3246 = vld [vmem:[%s5 + $0x78] sm:$0xff]
      %vm3262 = vcmask 1040384
      %v3263 = vrot.slane %v3215, 7
      %v3264 = vrot.slane %v3216, 7
      %v3265 = vsel %vm3262, %v3263, %v3264
      %v3266 = vrot.slane %v3217, 7
      %v3267 = vsel %vm3262, %v3264, %v3266
      %v3268 = vrot.slane %v3218, 7
      %v3269 = vsel %vm3262, %v3266, %v3268
      %v3270 = vrot.slane %v3219, 7
      %v3271 = vsel %vm3262, %v3268, %v3270
      %v3272 = vrot.slane %v3220, 7
      %v3273 = vsel %vm3262, %v3270, %v3272
      %v3274 = vrot.slane %v3221, 7
      %v3275 = vsel %vm3262, %v3272, %v3274
      %v3276 = vrot.slane %v3222, 7
      %v3277 = vsel %vm3262, %v3274, %v3276
      %v3278 = vrot.slane %v3223, 7
      %v3279 = vsel %vm3262, %v3276, %v3278
      %v3280 = vrot.slane %v3224, 7
      %v3281 = vsel %vm3262, %v3278, %v3280
      %v3282 = vrot.slane %v3225, 7
      %v3283 = vsel %vm3262, %v3280, %v3282
      %v3284 = vrot.slane %v3226, 7
      %v3285 = vsel %vm3262, %v3282, %v3284
      %v3286 = vrot.slane %v3227, 7
      %v3287 = vsel %vm3262, %v3284, %v3286
      %v3288 = vrot.slane %v3228, 7
      %v3289 = vsel %vm3262, %v3286, %v3288
      %v3290 = vrot.slane %v3229, 7
      %v3291 = vsel %vm3262, %v3288, %v3290
      %v3307 = vsel %vm3262, 0.0, %v3263
      %3309 = vset.pattern.permute.xlu0 0
      %3310 = vperm.xlu0 %3309, %v3231
      %v3311 = vpop.permute.xlu0 %3310
      %3314 = vset.pattern.permute.xlu0 0
      %3315 = vperm.xlu0 %3314, %v3232
      %v3316 = vpop.permute.xlu0 %3315
      %3319 = vset.pattern.permute.xlu0 0
      %3320 = vperm.xlu0 %3319, %v3233
      %v3321 = vpop.permute.xlu0 %3320
      %3324 = vset.pattern.permute.xlu0 0
      %3325 = vperm.xlu0 %3324, %v3234
      %v3326 = vpop.permute.xlu0 %3325
      %3329 = vset.pattern.permute.xlu0 0
      %3330 = vperm.xlu0 %3329, %v3235
      %v3331 = vpop.permute.xlu0 %3330
      %3334 = vset.pattern.permute.xlu0 0
      %3335 = vperm.xlu0 %3334, %v3236
      %v3336 = vpop.permute.xlu0 %3335
      %3339 = vset.pattern.permute.xlu0 0
      %3340 = vperm.xlu0 %3339, %v3237
      %v3341 = vpop.permute.xlu0 %3340
      %3344 = vset.pattern.permute.xlu0 0
      %3345 = vperm.xlu0 %3344, %v3238
      %v3346 = vpop.permute.xlu0 %3345
      %3349 = vset.pattern.permute.xlu0 0
      %3350 = vperm.xlu0 %3349, %v3239
      %v3351 = vpop.permute.xlu0 %3350
      %3354 = vset.pattern.permute.xlu0 0
      %3355 = vperm.xlu0 %3354, %v3240
      %v3356 = vpop.permute.xlu0 %3355
      %3359 = vset.pattern.permute.xlu0 0
      %3360 = vperm.xlu0 %3359, %v3241
      %v3361 = vpop.permute.xlu0 %3360
      %3364 = vset.pattern.permute.xlu0 0
      %3365 = vperm.xlu0 %3364, %v3242
      %v3366 = vpop.permute.xlu0 %3365
      %3369 = vset.pattern.permute.xlu0 0
      %3370 = vperm.xlu0 %3369, %v3243
      %v3371 = vpop.permute.xlu0 %3370
      %3374 = vset.pattern.permute.xlu0 0
      %3375 = vperm.xlu0 %3374, %v3244
      %v3376 = vpop.permute.xlu0 %3375
      %3379 = vset.pattern.permute.xlu0 0
      %3380 = vperm.xlu0 %3379, %v3245
      %v3381 = vpop.permute.xlu0 %3380
      %3384 = vset.pattern.permute.xlu0 0
      %3385 = vperm.xlu0 %3384, %v3246
      %v3386 = vpop.permute.xlu0 %3385
      %v3388 = vmul.f32 %v3311, 0.0
      %v3389 = vmul.f32 %v3307, %v3316
      %v3390 = vmul.f32 %v3265, %v3321
      %v3391 = vmul.f32 %v3267, %v3326
      %v3392 = vmul.f32 %v3269, %v3331
      %v3393 = vmul.f32 %v3271, %v3336
      %v3394 = vmul.f32 %v3273, %v3341
      %v3395 = vmul.f32 %v3275, %v3346
      %v3396 = vmul.f32 %v3277, %v3351
      %v3397 = vmul.f32 %v3279, %v3356
      %v3398 = vmul.f32 %v3281, %v3361
      %v3399 = vmul.f32 %v3283, %v3366
      %v3400 = vmul.f32 %v3285, %v3371
      %v3401 = vmul.f32 %v3287, %v3376
      %v3402 = vmul.f32 %v3289, %v3381
      %v3403 = vmul.f32 %v3291, %v3386
      %s3404 = scalar_lea.vmem %s5, 128
      %v3405 = vld [vmem:[%s3404] sm:$0xff]
      %v3406 = vld [vmem:[%s3404 + $0x8] sm:$0xff]
      %v3407 = vld [vmem:[%s3404 + $0x10] sm:$0xff]
      %v3408 = vld [vmem:[%s3404 + $0x18] sm:$0xff]
      %v3409 = vld [vmem:[%s3404 + $0x20] sm:$0xff]
      %v3410 = vld [vmem:[%s3404 + $0x28] sm:$0xff]
      %v3411 = vld [vmem:[%s3404 + $0x30] sm:$0xff]
      %v3412 = vld [vmem:[%s3404 + $0x38] sm:$0xff]
      %v3413 = vld [vmem:[%s3404 + $0x40] sm:$0xff]
      %v3414 = vld [vmem:[%s3404 + $0x48] sm:$0xff]
      %v3415 = vld [vmem:[%s3404 + $0x50] sm:$0xff]
      %v3416 = vld [vmem:[%s3404 + $0x58] sm:$0xff]
      %v3417 = vld [vmem:[%s3404 + $0x60] sm:$0xff]
      %v3418 = vld [vmem:[%s3404 + $0x68] sm:$0xff]
      %v3419 = vld [vmem:[%s3404 + $0x70] sm:$0xff]
      %v3420 = vld [vmem:[%s3404 + $0x78] sm:$0xff]
      %3422 = vset.pattern.permute.xlu0 0
      %3423 = vperm.xlu0 %3422, %v3405
      %v3424 = vpop.permute.xlu0 %3423
      %3427 = vset.pattern.permute.xlu0 0
      %3428 = vperm.xlu0 %3427, %v3406
      %v3429 = vpop.permute.xlu0 %3428
      %3432 = vset.pattern.permute.xlu0 0
      %3433 = vperm.xlu0 %3432, %v3407
      %v3434 = vpop.permute.xlu0 %3433
      %3437 = vset.pattern.permute.xlu0 0
      %3438 = vperm.xlu0 %3437, %v3408
      %v3439 = vpop.permute.xlu0 %3438
      %3442 = vset.pattern.permute.xlu0 0
      %3443 = vperm.xlu0 %3442, %v3409
      %v3444 = vpop.permute.xlu0 %3443
      %3447 = vset.pattern.permute.xlu0 0
      %3448 = vperm.xlu0 %3447, %v3410
      %v3449 = vpop.permute.xlu0 %3448
      %3452 = vset.pattern.permute.xlu0 0
      %3453 = vperm.xlu0 %3452, %v3411
      %v3454 = vpop.permute.xlu0 %3453
      %3457 = vset.pattern.permute.xlu0 0
      %3458 = vperm.xlu0 %3457, %v3412
      %v3459 = vpop.permute.xlu0 %3458
      %3462 = vset.pattern.permute.xlu0 0
      %3463 = vperm.xlu0 %3462, %v3413
      %v3464 = vpop.permute.xlu0 %3463
      %3467 = vset.pattern.permute.xlu0 0
      %3468 = vperm.xlu0 %3467, %v3414
      %v3469 = vpop.permute.xlu0 %3468
      %3472 = vset.pattern.permute.xlu0 0
      %3473 = vperm.xlu0 %3472, %v3415
      %v3474 = vpop.permute.xlu0 %3473
      %3477 = vset.pattern.permute.xlu0 0
      %3478 = vperm.xlu0 %3477, %v3416
      %v3479 = vpop.permute.xlu0 %3478
      %3482 = vset.pattern.permute.xlu0 0
      %3483 = vperm.xlu0 %3482, %v3417
      %v3484 = vpop.permute.xlu0 %3483
      %3487 = vset.pattern.permute.xlu0 0
      %3488 = vperm.xlu0 %3487, %v3418
      %v3489 = vpop.permute.xlu0 %3488
      %3492 = vset.pattern.permute.xlu0 0
      %3493 = vperm.xlu0 %3492, %v3419
      %v3494 = vpop.permute.xlu0 %3493
      %3497 = vset.pattern.permute.xlu0 0
      %3498 = vperm.xlu0 %3497, %v3420
      %v3499 = vpop.permute.xlu0 %3498
      %v3501 = vmul.f32 %v3424, 0.0
      %v3502 = vmul.f32 %v3199, %v3429
      %v3503 = vmul.f32 %v3200, %v3434
      %v3504 = vmul.f32 %v3201, %v3439
      %v3505 = vmul.f32 %v3202, %v3444
      %v3506 = vmul.f32 %v3203, %v3449
      %v3507 = vmul.f32 %v3204, %v3454
      %v3508 = vmul.f32 %v3205, %v3459
      %v3509 = vmul.f32 %v3206, %v3464
      %v3510 = vmul.f32 %v3207, %v3469
      %v3511 = vmul.f32 %v3208, %v3474
      %v3512 = vmul.f32 %v3209, %v3479
      %v3513 = vmul.f32 %v3210, %v3484
      %v3514 = vmul.f32 %v3211, %v3489
      %v3515 = vmul.f32 %v3212, %v3494
      %v3516 = vmul.f32 %v3213, %v3499
      %v3517 = vmul.f32 %v3215, %v3429
      %v3518 = vmul.f32 %v3216, %v3434
      %v3519 = vmul.f32 %v3217, %v3439
      %v3520 = vmul.f32 %v3218, %v3444
      %v3521 = vmul.f32 %v3219, %v3449
      %v3522 = vmul.f32 %v3220, %v3454
      %v3523 = vmul.f32 %v3221, %v3459
      %v3524 = vmul.f32 %v3222, %v3464
      %v3525 = vmul.f32 %v3223, %v3469
      %v3526 = vmul.f32 %v3224, %v3474
      %v3527 = vmul.f32 %v3225, %v3479
      %v3528 = vmul.f32 %v3226, %v3484
      %v3529 = vmul.f32 %v3227, %v3489
      %v3530 = vmul.f32 %v3228, %v3494
      %v3531 = vmul.f32 %v3229, %v3499
      %s3532 = scalar_lea.vmem %s5, 384
      %v3533 = vld [vmem:[%s3532] sm:$0xff]
      %v3534 = vld [vmem:[%s3532 + $0x8] sm:$0xff]
      %v3535 = vld [vmem:[%s3532 + $0x10] sm:$0xff]
      %v3536 = vld [vmem:[%s3532 + $0x18] sm:$0xff]
      %v3537 = vld [vmem:[%s3532 + $0x20] sm:$0xff]
      %v3538 = vld [vmem:[%s3532 + $0x28] sm:$0xff]
      %v3539 = vld [vmem:[%s3532 + $0x30] sm:$0xff]
      %v3540 = vld [vmem:[%s3532 + $0x38] sm:$0xff]
      %v3541 = vld [vmem:[%s3532 + $0x40] sm:$0xff]
      %v3542 = vld [vmem:[%s3532 + $0x48] sm:$0xff]
      %v3543 = vld [vmem:[%s3532 + $0x50] sm:$0xff]
      %v3544 = vld [vmem:[%s3532 + $0x58] sm:$0xff]
      %v3545 = vld [vmem:[%s3532 + $0x60] sm:$0xff]
      %v3546 = vld [vmem:[%s3532 + $0x68] sm:$0xff]
      %v3547 = vld [vmem:[%s3532 + $0x70] sm:$0xff]
      %v3548 = vld [vmem:[%s3532 + $0x78] sm:$0xff]
      %v3565 = vrot.slane %v3183, 7
      %v3566 = vrot.slane %v3184, 7
      %v3567 = vsel %vm3262, %v3565, %v3566
      %v3568 = vrot.slane %v3185, 7
      %v3569 = vsel %vm3262, %v3566, %v3568
      %v3570 = vrot.slane %v3186, 7
      %v3571 = vsel %vm3262, %v3568, %v3570
      %v3572 = vrot.slane %v3187, 7
      %v3573 = vsel %vm3262, %v3570, %v3572
      %v3574 = vrot.slane %v3188, 7
      %v3575 = vsel %vm3262, %v3572, %v3574
      %v3576 = vrot.slane %v3189, 7
      %v3577 = vsel %vm3262, %v3574, %v3576
      %v3578 = vrot.slane %v3190, 7
      %v3579 = vsel %vm3262, %v3576, %v3578
      %v3580 = vrot.slane %v3191, 7
      %v3581 = vsel %vm3262, %v3578, %v3580
      %v3582 = vrot.slane %v3192, 7
      %v3583 = vsel %vm3262, %v3580, %v3582
      %v3584 = vrot.slane %v3193, 7
      %v3585 = vsel %vm3262, %v3582, %v3584
      %v3586 = vrot.slane %v3194, 7
      %v3587 = vsel %vm3262, %v3584, %v3586
      %v3588 = vrot.slane %v3195, 7
      %v3589 = vsel %vm3262, %v3586, %v3588
      %v3590 = vrot.slane %v3196, 7
      %v3591 = vsel %vm3262, %v3588, %v3590
      %v3592 = vrot.slane %v3197, 7
      %v3593 = vsel %vm3262, %v3590, %v3592
      %v3594 = vrot.slane %v3198, 7
      %v3595 = vsel %vm3262, %v3592, %v3594
      %v3612 = vsel %vm3262, 0.0, %v3565
      %3614 = vset.pattern.permute.xlu0 0
      %3615 = vperm.xlu0 %3614, %v3533
      %v3616 = vpop.permute.xlu0 %3615
      %3619 = vset.pattern.permute.xlu0 0
      %3620 = vperm.xlu0 %3619, %v3534
      %v3621 = vpop.permute.xlu0 %3620
      %3624 = vset.pattern.permute.xlu0 0
      %3625 = vperm.xlu0 %3624, %v3535
      %v3626 = vpop.permute.xlu0 %3625
      %3629 = vset.pattern.permute.xlu0 0
      %3630 = vperm.xlu0 %3629, %v3536
      %v3631 = vpop.permute.xlu0 %3630
      %3634 = vset.pattern.permute.xlu0 0
      %3635 = vperm.xlu0 %3634, %v3537
      %v3636 = vpop.permute.xlu0 %3635
      %3639 = vset.pattern.permute.xlu0 0
      %3640 = vperm.xlu0 %3639, %v3538
      %v3641 = vpop.permute.xlu0 %3640
      %3644 = vset.pattern.permute.xlu0 0
      %3645 = vperm.xlu0 %3644, %v3539
      %v3646 = vpop.permute.xlu0 %3645
      %3649 = vset.pattern.permute.xlu0 0
      %3650 = vperm.xlu0 %3649, %v3540
      %v3651 = vpop.permute.xlu0 %3650
      %3654 = vset.pattern.permute.xlu0 0
      %3655 = vperm.xlu0 %3654, %v3541
      %v3656 = vpop.permute.xlu0 %3655
      %3659 = vset.pattern.permute.xlu0 0
      %3660 = vperm.xlu0 %3659, %v3542
      %v3661 = vpop.permute.xlu0 %3660
      %3664 = vset.pattern.permute.xlu0 0
      %3665 = vperm.xlu0 %3664, %v3543
      %v3666 = vpop.permute.xlu0 %3665
      %3669 = vset.pattern.permute.xlu0 0
      %3670 = vperm.xlu0 %3669, %v3544
      %v3671 = vpop.permute.xlu0 %3670
      %3674 = vset.pattern.permute.xlu0 0
      %3675 = vperm.xlu0 %3674, %v3545
      %v3676 = vpop.permute.xlu0 %3675
      %3679 = vset.pattern.permute.xlu0 0
      %3680 = vperm.xlu0 %3679, %v3546
      %v3681 = vpop.permute.xlu0 %3680
      %3684 = vset.pattern.permute.xlu0 0
      %3685 = vperm.xlu0 %3684, %v3547
      %v3686 = vpop.permute.xlu0 %3685
      %3689 = vset.pattern.permute.xlu0 0
      %3690 = vperm.xlu0 %3689, %v3548
      %v3691 = vpop.permute.xlu0 %3690
      %v3693 = vmul.f32 %v3612, %v3616
      %v3694 = vmul.f32 %v3567, %v3621
      %v3695 = vmul.f32 %v3569, %v3626
      %v3696 = vmul.f32 %v3571, %v3631
      %v3697 = vmul.f32 %v3573, %v3636
      %v3698 = vmul.f32 %v3575, %v3641
      %v3699 = vmul.f32 %v3577, %v3646
      %v3700 = vmul.f32 %v3579, %v3651
      %v3701 = vmul.f32 %v3581, %v3656
      %v3702 = vmul.f32 %v3583, %v3661
      %v3703 = vmul.f32 %v3585, %v3666
      %v3704 = vmul.f32 %v3587, %v3671
      %v3705 = vmul.f32 %v3589, %v3676
      %v3706 = vmul.f32 %v3591, %v3681
      %v3707 = vmul.f32 %v3593, %v3686
      %v3708 = vmul.f32 %v3595, %v3691
      %s3709 = scalar_lea.vmem %s5, 512
      %v3710 = vld [vmem:[%s3709] sm:$0xff]
      %v3711 = vld [vmem:[%s3709 + $0x8] sm:$0xff]
      %v3712 = vld [vmem:[%s3709 + $0x10] sm:$0xff]
      %v3713 = vld [vmem:[%s3709 + $0x18] sm:$0xff]
      %v3714 = vld [vmem:[%s3709 + $0x20] sm:$0xff]
      %v3715 = vld [vmem:[%s3709 + $0x28] sm:$0xff]
      %v3716 = vld [vmem:[%s3709 + $0x30] sm:$0xff]
      %v3717 = vld [vmem:[%s3709 + $0x38] sm:$0xff]
      %v3718 = vld [vmem:[%s3709 + $0x40] sm:$0xff]
      %v3719 = vld [vmem:[%s3709 + $0x48] sm:$0xff]
      %v3720 = vld [vmem:[%s3709 + $0x50] sm:$0xff]
      %v3721 = vld [vmem:[%s3709 + $0x58] sm:$0xff]
      %v3722 = vld [vmem:[%s3709 + $0x60] sm:$0xff]
      %v3723 = vld [vmem:[%s3709 + $0x68] sm:$0xff]
      %v3724 = vld [vmem:[%s3709 + $0x70] sm:$0xff]
      %v3725 = vld [vmem:[%s3709 + $0x78] sm:$0xff]
      %3727 = vset.pattern.permute.xlu0 0
      %3728 = vperm.xlu0 %3727, %v3710
      %v3729 = vpop.permute.xlu0 %3728
      %3732 = vset.pattern.permute.xlu0 0
      %3733 = vperm.xlu0 %3732, %v3711
      %v3734 = vpop.permute.xlu0 %3733
      %3737 = vset.pattern.permute.xlu0 0
      %3738 = vperm.xlu0 %3737, %v3712
      %v3739 = vpop.permute.xlu0 %3738
      %3742 = vset.pattern.permute.xlu0 0
      %3743 = vperm.xlu0 %3742, %v3713
      %v3744 = vpop.permute.xlu0 %3743
      %3747 = vset.pattern.permute.xlu0 0
      %3748 = vperm.xlu0 %3747, %v3714
      %v3749 = vpop.permute.xlu0 %3748
      %3752 = vset.pattern.permute.xlu0 0
      %3753 = vperm.xlu0 %3752, %v3715
      %v3754 = vpop.permute.xlu0 %3753
      %3757 = vset.pattern.permute.xlu0 0
      %3758 = vperm.xlu0 %3757, %v3716
      %v3759 = vpop.permute.xlu0 %3758
      %3762 = vset.pattern.permute.xlu0 0
      %3763 = vperm.xlu0 %3762, %v3717
      %v3764 = vpop.permute.xlu0 %3763
      %3767 = vset.pattern.permute.xlu0 0
      %3768 = vperm.xlu0 %3767, %v3718
      %v3769 = vpop.permute.xlu0 %3768
      %3772 = vset.pattern.permute.xlu0 0
      %3773 = vperm.xlu0 %3772, %v3719
      %v3774 = vpop.permute.xlu0 %3773
      %3777 = vset.pattern.permute.xlu0 0
      %3778 = vperm.xlu0 %3777, %v3720
      %v3779 = vpop.permute.xlu0 %3778
      %3782 = vset.pattern.permute.xlu0 0
      %3783 = vperm.xlu0 %3782, %v3721
      %v3784 = vpop.permute.xlu0 %3783
      %3787 = vset.pattern.permute.xlu0 0
      %3788 = vperm.xlu0 %3787, %v3722
      %v3789 = vpop.permute.xlu0 %3788
      %3792 = vset.pattern.permute.xlu0 0
      %3793 = vperm.xlu0 %3792, %v3723
      %v3794 = vpop.permute.xlu0 %3793
      %3797 = vset.pattern.permute.xlu0 0
      %3798 = vperm.xlu0 %3797, %v3724
      %v3799 = vpop.permute.xlu0 %3798
      %3802 = vset.pattern.permute.xlu0 0
      %3803 = vperm.xlu0 %3802, %v3725
      %v3804 = vpop.permute.xlu0 %3803
      %v3806 = vmul.f32 %v3167, %v3729
      %v3807 = vmul.f32 %v3168, %v3734
      %v3808 = vmul.f32 %v3169, %v3739
      %v3809 = vmul.f32 %v3170, %v3744
      %v3810 = vmul.f32 %v3171, %v3749
      %v3811 = vmul.f32 %v3172, %v3754
      %v3812 = vmul.f32 %v3173, %v3759
      %v3813 = vmul.f32 %v3174, %v3764
      %v3814 = vmul.f32 %v3175, %v3769
      %v3815 = vmul.f32 %v3176, %v3774
      %v3816 = vmul.f32 %v3177, %v3779
      %v3817 = vmul.f32 %v3178, %v3784
      %v3818 = vmul.f32 %v3179, %v3789
      %v3819 = vmul.f32 %v3180, %v3794
      %v3820 = vmul.f32 %v3181, %v3799
      %v3821 = vmul.f32 %v3182, %v3804
      %v3822 = vmul.f32 %v3183, %v3729
      %v3823 = vmul.f32 %v3184, %v3734
      %v3824 = vmul.f32 %v3185, %v3739
      %v3825 = vmul.f32 %v3186, %v3744
      %v3826 = vmul.f32 %v3187, %v3749
      %v3827 = vmul.f32 %v3188, %v3754
      %v3828 = vmul.f32 %v3189, %v3759
      %v3829 = vmul.f32 %v3190, %v3764
      %v3830 = vmul.f32 %v3191, %v3769
      %v3831 = vmul.f32 %v3192, %v3774
      %v3832 = vmul.f32 %v3193, %v3779
      %v3833 = vmul.f32 %v3194, %v3784
      %v3834 = vmul.f32 %v3195, %v3789
      %v3835 = vmul.f32 %v3196, %v3794
      %v3836 = vmul.f32 %v3197, %v3799
      %v3837 = vmul.f32 %v3198, %v3804
      %v3839 = vrot.slane %v3230, 7
      %v3840 = vsel %vm3262, %v3290, %v3839
      %v3842 = vmul.f32 %v3307, %v3616
      %v3843 = vmul.f32 %v3265, %v3621
      %v3844 = vmul.f32 %v3267, %v3626
      %v3845 = vmul.f32 %v3269, %v3631
      %v3846 = vmul.f32 %v3271, %v3636
      %v3847 = vmul.f32 %v3273, %v3641
      %v3848 = vmul.f32 %v3275, %v3646
      %v3849 = vmul.f32 %v3277, %v3651
      %v3850 = vmul.f32 %v3279, %v3656
      %v3851 = vmul.f32 %v3281, %v3661
      %v3852 = vmul.f32 %v3283, %v3666
      %v3853 = vmul.f32 %v3285, %v3671
      %v3854 = vmul.f32 %v3287, %v3676
      %v3855 = vmul.f32 %v3289, %v3681
      %v3856 = vmul.f32 %v3291, %v3686
      %v3857 = vmul.f32 %v3840, %v3691
      %v3858 = vmul.f32 %v3199, %v3729
      %v3859 = vmul.f32 %v3200, %v3734
      %v3860 = vmul.f32 %v3201, %v3739
      %v3861 = vmul.f32 %v3202, %v3744
      %v3862 = vmul.f32 %v3203, %v3749
      %v3863 = vmul.f32 %v3204, %v3754
      %v3864 = vmul.f32 %v3205, %v3759
      %v3865 = vmul.f32 %v3206, %v3764
      %v3866 = vmul.f32 %v3207, %v3769
      %v3867 = vmul.f32 %v3208, %v3774
      %v3868 = vmul.f32 %v3209, %v3779
      %v3869 = vmul.f32 %v3210, %v3784
      %v3870 = vmul.f32 %v3211, %v3789
      %v3871 = vmul.f32 %v3212, %v3794
      %v3872 = vmul.f32 %v3213, %v3799
      %v3873 = vmul.f32 %v3214, %v3804
      %v3874 = vmul.f32 %v3215, %v3729
      %v3875 = vmul.f32 %v3216, %v3734
      %v3876 = vmul.f32 %v3217, %v3739
      %v3877 = vmul.f32 %v3218, %v3744
      %v3878 = vmul.f32 %v3219, %v3749
      %v3879 = vmul.f32 %v3220, %v3754
      %v3880 = vmul.f32 %v3221, %v3759
      %v3881 = vmul.f32 %v3222, %v3764
      %v3882 = vmul.f32 %v3223, %v3769
      %v3883 = vmul.f32 %v3224, %v3774
      %v3884 = vmul.f32 %v3225, %v3779
      %v3885 = vmul.f32 %v3226, %v3784
      %v3886 = vmul.f32 %v3227, %v3789
      %v3887 = vmul.f32 %v3228, %v3794
      %v3888 = vmul.f32 %v3229, %v3799
      %v3889 = vmul.f32 %v3230, %v3804
      %3906 = vrot.lane.b32.xlu0 %v3501, 32
      %v3907 = vpop.permute.xlu0 %3906
      %3908 = vrot.lane.b32.xlu0 %v3502, 32
      %v3909 = vpop.permute.xlu0 %3908
      %3910 = vrot.lane.b32.xlu0 %v3503, 32
      %v3911 = vpop.permute.xlu0 %3910
      %3912 = vrot.lane.b32.xlu0 %v3504, 32
      %v3913 = vpop.permute.xlu0 %3912
      %3914 = vrot.lane.b32.xlu0 %v3505, 32
      %v3915 = vpop.permute.xlu0 %3914
      %3916 = vrot.lane.b32.xlu0 %v3506, 32
      %v3917 = vpop.permute.xlu0 %3916
      %3918 = vrot.lane.b32.xlu0 %v3507, 32
      %v3919 = vpop.permute.xlu0 %3918
      %3920 = vrot.lane.b32.xlu0 %v3508, 32
      %v3921 = vpop.permute.xlu0 %3920
      %3922 = vrot.lane.b32.xlu0 %v3509, 32
      %v3923 = vpop.permute.xlu0 %3922
      %3924 = vrot.lane.b32.xlu0 %v3510, 32
      %v3925 = vpop.permute.xlu0 %3924
      %3926 = vrot.lane.b32.xlu0 %v3511, 32
      %v3927 = vpop.permute.xlu0 %3926
      %3928 = vrot.lane.b32.xlu0 %v3512, 32
      %v3929 = vpop.permute.xlu0 %3928
      %3930 = vrot.lane.b32.xlu0 %v3513, 32
      %v3931 = vpop.permute.xlu0 %3930
      %3932 = vrot.lane.b32.xlu0 %v3514, 32
      %v3933 = vpop.permute.xlu0 %3932
      %3934 = vrot.lane.b32.xlu0 %v3515, 32
      %v3935 = vpop.permute.xlu0 %3934
      %3936 = vrot.lane.b32.xlu0 %v3516, 32
      %v3937 = vpop.permute.xlu0 %3936
      %3969 = vrot.lane.b32.xlu0 %v3501, 64
      %v3970 = vpop.permute.xlu0 %3969
      %3971 = vrot.lane.b32.xlu0 %v3517, 64
      %v3972 = vpop.permute.xlu0 %3971
      %3973 = vrot.lane.b32.xlu0 %v3518, 64
      %v3974 = vpop.permute.xlu0 %3973
      %3975 = vrot.lane.b32.xlu0 %v3519, 64
      %v3976 = vpop.permute.xlu0 %3975
      %3977 = vrot.lane.b32.xlu0 %v3520, 64
      %v3978 = vpop.permute.xlu0 %3977
      %3979 = vrot.lane.b32.xlu0 %v3521, 64
      %v3980 = vpop.permute.xlu0 %3979
      %3981 = vrot.lane.b32.xlu0 %v3522, 64
      %v3982 = vpop.permute.xlu0 %3981
      %3983 = vrot.lane.b32.xlu0 %v3523, 64
      %v3984 = vpop.permute.xlu0 %3983
      %3985 = vrot.lane.b32.xlu0 %v3524, 64
      %v3986 = vpop.permute.xlu0 %3985
      %3987 = vrot.lane.b32.xlu0 %v3525, 64
      %v3988 = vpop.permute.xlu0 %3987
      %3989 = vrot.lane.b32.xlu0 %v3526, 64
      %v3990 = vpop.permute.xlu0 %3989
      %3991 = vrot.lane.b32.xlu0 %v3527, 64
      %v3992 = vpop.permute.xlu0 %3991
      %3993 = vrot.lane.b32.xlu0 %v3528, 64
      %v3994 = vpop.permute.xlu0 %3993
      %3995 = vrot.lane.b32.xlu0 %v3529, 64
      %v3996 = vpop.permute.xlu0 %3995
      %3997 = vrot.lane.b32.xlu0 %v3530, 64
      %v3998 = vpop.permute.xlu0 %3997
      %3999 = vrot.lane.b32.xlu0 %v3531, 64
      %v4000 = vpop.permute.xlu0 %3999
      %4033 = vrot.lane.b32.xlu0 %v3693, 96
      %v4034 = vpop.permute.xlu0 %4033
      %4035 = vrot.lane.b32.xlu0 %v3694, 96
      %v4036 = vpop.permute.xlu0 %4035
      %4037 = vrot.lane.b32.xlu0 %v3695, 96
      %v4038 = vpop.permute.xlu0 %4037
      %4039 = vrot.lane.b32.xlu0 %v3696, 96
      %v4040 = vpop.permute.xlu0 %4039
      %4041 = vrot.lane.b32.xlu0 %v3697, 96
      %v4042 = vpop.permute.xlu0 %4041
      %4043 = vrot.lane.b32.xlu0 %v3698, 96
      %v4044 = vpop.permute.xlu0 %4043
      %4045 = vrot.lane.b32.xlu0 %v3699, 96
      %v4046 = vpop.permute.xlu0 %4045
      %4047 = vrot.lane.b32.xlu0 %v3700, 96
      %v4048 = vpop.permute.xlu0 %4047
      %4049 = vrot.lane.b32.xlu0 %v3701, 96
      %v4050 = vpop.permute.xlu0 %4049
      %4051 = vrot.lane.b32.xlu0 %v3702, 96
      %v4052 = vpop.permute.xlu0 %4051
      %4053 = vrot.lane.b32.xlu0 %v3703, 96
      %v4054 = vpop.permute.xlu0 %4053
      %4055 = vrot.lane.b32.xlu0 %v3704, 96
      %v4056 = vpop.permute.xlu0 %4055
      %4057 = vrot.lane.b32.xlu0 %v3705, 96
      %v4058 = vpop.permute.xlu0 %4057
      %4059 = vrot.lane.b32.xlu0 %v3706, 96
      %v4060 = vpop.permute.xlu0 %4059
      %4061 = vrot.lane.b32.xlu0 %v3707, 96
      %v4062 = vpop.permute.xlu0 %4061
      %4063 = vrot.lane.b32.xlu0 %v3708, 96
      %v4064 = vpop.permute.xlu0 %4063
      %4097 = vrot.lane.b32.xlu0 %v3822, 32
      %v4098 = vpop.permute.xlu0 %4097
      %4099 = vrot.lane.b32.xlu0 %v3823, 32
      %v4100 = vpop.permute.xlu0 %4099
      %4101 = vrot.lane.b32.xlu0 %v3824, 32
      %v4102 = vpop.permute.xlu0 %4101
      %4103 = vrot.lane.b32.xlu0 %v3825, 32
      %v4104 = vpop.permute.xlu0 %4103
      %4105 = vrot.lane.b32.xlu0 %v3826, 32
      %v4106 = vpop.permute.xlu0 %4105
      %4107 = vrot.lane.b32.xlu0 %v3827, 32
      %v4108 = vpop.permute.xlu0 %4107
      %4109 = vrot.lane.b32.xlu0 %v3828, 32
      %v4110 = vpop.permute.xlu0 %4109
      %4111 = vrot.lane.b32.xlu0 %v3829, 32
      %v4112 = vpop.permute.xlu0 %4111
      %4113 = vrot.lane.b32.xlu0 %v3830, 32
      %v4114 = vpop.permute.xlu0 %4113
      %4115 = vrot.lane.b32.xlu0 %v3831, 32
      %v4116 = vpop.permute.xlu0 %4115
      %4117 = vrot.lane.b32.xlu0 %v3832, 32
      %v4118 = vpop.permute.xlu0 %4117
      %4119 = vrot.lane.b32.xlu0 %v3833, 32
      %v4120 = vpop.permute.xlu0 %4119
      %4121 = vrot.lane.b32.xlu0 %v3834, 32
      %v4122 = vpop.permute.xlu0 %4121
      %4123 = vrot.lane.b32.xlu0 %v3835, 32
      %v4124 = vpop.permute.xlu0 %4123
      %4125 = vrot.lane.b32.xlu0 %v3836, 32
      %v4126 = vpop.permute.xlu0 %4125
      %4127 = vrot.lane.b32.xlu0 %v3837, 32
      %v4128 = vpop.permute.xlu0 %4127
      %4161 = vrot.lane.b32.xlu0 %v3842, 64
      %v4162 = vpop.permute.xlu0 %4161
      %4163 = vrot.lane.b32.xlu0 %v3843, 64
      %v4164 = vpop.permute.xlu0 %4163
      %4165 = vrot.lane.b32.xlu0 %v3844, 64
      %v4166 = vpop.permute.xlu0 %4165
      %4167 = vrot.lane.b32.xlu0 %v3845, 64
      %v4168 = vpop.permute.xlu0 %4167
      %4169 = vrot.lane.b32.xlu0 %v3846, 64
      %v4170 = vpop.permute.xlu0 %4169
      %4171 = vrot.lane.b32.xlu0 %v3847, 64
      %v4172 = vpop.permute.xlu0 %4171
      %4173 = vrot.lane.b32.xlu0 %v3848, 64
      %v4174 = vpop.permute.xlu0 %4173
      %4175 = vrot.lane.b32.xlu0 %v3849, 64
      %v4176 = vpop.permute.xlu0 %4175
      %4177 = vrot.lane.b32.xlu0 %v3850, 64
      %v4178 = vpop.permute.xlu0 %4177
      %4179 = vrot.lane.b32.xlu0 %v3851, 64
      %v4180 = vpop.permute.xlu0 %4179
      %4181 = vrot.lane.b32.xlu0 %v3852, 64
      %v4182 = vpop.permute.xlu0 %4181
      %4183 = vrot.lane.b32.xlu0 %v3853, 64
      %v4184 = vpop.permute.xlu0 %4183
      %4185 = vrot.lane.b32.xlu0 %v3854, 64
      %v4186 = vpop.permute.xlu0 %4185
      %4187 = vrot.lane.b32.xlu0 %v3855, 64
      %v4188 = vpop.permute.xlu0 %4187
      %4189 = vrot.lane.b32.xlu0 %v3856, 64
      %v4190 = vpop.permute.xlu0 %4189
      %4191 = vrot.lane.b32.xlu0 %v3857, 64
      %v4192 = vpop.permute.xlu0 %4191
      %4225 = vrot.lane.b32.xlu0 %v3858, 96
      %v4226 = vpop.permute.xlu0 %4225
      %4227 = vrot.lane.b32.xlu0 %v3859, 96
      %v4228 = vpop.permute.xlu0 %4227
      %4229 = vrot.lane.b32.xlu0 %v3860, 96
      %v4230 = vpop.permute.xlu0 %4229
      %4231 = vrot.lane.b32.xlu0 %v3861, 96
      %v4232 = vpop.permute.xlu0 %4231
      %4233 = vrot.lane.b32.xlu0 %v3862, 96
      %v4234 = vpop.permute.xlu0 %4233
      %4235 = vrot.lane.b32.xlu0 %v3863, 96
      %v4236 = vpop.permute.xlu0 %4235
      %4237 = vrot.lane.b32.xlu0 %v3864, 96
      %v4238 = vpop.permute.xlu0 %4237
      %4239 = vrot.lane.b32.xlu0 %v3865, 96
      %v4240 = vpop.permute.xlu0 %4239
      %4241 = vrot.lane.b32.xlu0 %v3866, 96
      %v4242 = vpop.permute.xlu0 %4241
      %4243 = vrot.lane.b32.xlu0 %v3867, 96
      %v4244 = vpop.permute.xlu0 %4243
      %4245 = vrot.lane.b32.xlu0 %v3868, 96
      %v4246 = vpop.permute.xlu0 %4245
      %4247 = vrot.lane.b32.xlu0 %v3869, 96
      %v4248 = vpop.permute.xlu0 %4247
      %4249 = vrot.lane.b32.xlu0 %v3870, 96
      %v4250 = vpop.permute.xlu0 %4249
      %4251 = vrot.lane.b32.xlu0 %v3871, 96
      %v4252 = vpop.permute.xlu0 %4251
      %4253 = vrot.lane.b32.xlu0 %v3872, 96
      %v4254 = vpop.permute.xlu0 %4253
      %4255 = vrot.lane.b32.xlu0 %v3873, 96
      %v4256 = vpop.permute.xlu0 %4255
      %v4273 = vsel %vm1462, %v3388, %v3907
      %v4274 = vsel %vm1462, %v3389, %v3909
      %v4275 = vsel %vm1462, %v3390, %v3911
      %v4276 = vsel %vm1462, %v3391, %v3913
      %v4277 = vsel %vm1462, %v3392, %v3915
      %v4278 = vsel %vm1462, %v3393, %v3917
      %v4279 = vsel %vm1462, %v3394, %v3919
      %v4280 = vsel %vm1462, %v3395, %v3921
      %v4281 = vsel %vm1462, %v3396, %v3923
      %v4282 = vsel %vm1462, %v3397, %v3925
      %v4283 = vsel %vm1462, %v3398, %v3927
      %v4284 = vsel %vm1462, %v3399, %v3929
      %v4285 = vsel %vm1462, %v3400, %v3931
      %v4286 = vsel %vm1462, %v3401, %v3933
      %v4287 = vsel %vm1462, %v3402, %v3935
      %v4288 = vsel %vm1462, %v3403, %v3937
      %vm4289 = vcmask 523264
      %v4290 = vsel %vm4289, %v4273, %v3970
      %v4291 = vsel %vm4289, %v4274, %v3972
      %v4292 = vsel %vm4289, %v4275, %v3974
      %v4293 = vsel %vm4289, %v4276, %v3976
      %v4294 = vsel %vm4289, %v4277, %v3978
      %v4295 = vsel %vm4289, %v4278, %v3980
      %v4296 = vsel %vm4289, %v4279, %v3982
      %v4297 = vsel %vm4289, %v4280, %v3984
      %v4298 = vsel %vm4289, %v4281, %v3986
      %v4299 = vsel %vm4289, %v4282, %v3988
      %v4300 = vsel %vm4289, %v4283, %v3990
      %v4301 = vsel %vm4289, %v4284, %v3992
      %v4302 = vsel %vm4289, %v4285, %v3994
      %v4303 = vsel %vm4289, %v4286, %v3996
      %v4304 = vsel %vm4289, %v4287, %v3998
      %v4305 = vsel %vm4289, %v4288, %v4000
      %vm4306 = vcmask 785408
      %v4307 = vsel %vm4306, %v4290, %v4034
      %v4308 = vsel %vm4306, %v4291, %v4036
      %v4309 = vsel %vm4306, %v4292, %v4038
      %v4310 = vsel %vm4306, %v4293, %v4040
      %v4311 = vsel %vm4306, %v4294, %v4042
      %v4312 = vsel %vm4306, %v4295, %v4044
      %v4313 = vsel %vm4306, %v4296, %v4046
      %v4314 = vsel %vm4306, %v4297, %v4048
      %v4315 = vsel %vm4306, %v4298, %v4050
      %v4316 = vsel %vm4306, %v4299, %v4052
      %v4317 = vsel %vm4306, %v4300, %v4054
      %v4318 = vsel %vm4306, %v4301, %v4056
      %v4319 = vsel %vm4306, %v4302, %v4058
      %v4320 = vsel %vm4306, %v4303, %v4060
      %v4321 = vsel %vm4306, %v4304, %v4062
      %v4322 = vsel %vm4306, %v4305, %v4064
      %v4323 = vsel %vm1462, %v3806, %v4098
      %v4324 = vsel %vm1462, %v3807, %v4100
      %v4325 = vsel %vm1462, %v3808, %v4102
      %v4326 = vsel %vm1462, %v3809, %v4104
      %v4327 = vsel %vm1462, %v3810, %v4106
      %v4328 = vsel %vm1462, %v3811, %v4108
      %v4329 = vsel %vm1462, %v3812, %v4110
      %v4330 = vsel %vm1462, %v3813, %v4112
      %v4331 = vsel %vm1462, %v3814, %v4114
      %v4332 = vsel %vm1462, %v3815, %v4116
      %v4333 = vsel %vm1462, %v3816, %v4118
      %v4334 = vsel %vm1462, %v3817, %v4120
      %v4335 = vsel %vm1462, %v3818, %v4122
      %v4336 = vsel %vm1462, %v3819, %v4124
      %v4337 = vsel %vm1462, %v3820, %v4126
      %v4338 = vsel %vm1462, %v3821, %v4128
      %v4339 = vsel %vm4289, %v4323, %v4162
      %v4340 = vsel %vm4289, %v4324, %v4164
      %v4341 = vsel %vm4289, %v4325, %v4166
      %v4342 = vsel %vm4289, %v4326, %v4168
      %v4343 = vsel %vm4289, %v4327, %v4170
      %v4344 = vsel %vm4289, %v4328, %v4172
      %v4345 = vsel %vm4289, %v4329, %v4174
      %v4346 = vsel %vm4289, %v4330, %v4176
      %v4347 = vsel %vm4289, %v4331, %v4178
      %v4348 = vsel %vm4289, %v4332, %v4180
      %v4349 = vsel %vm4289, %v4333, %v4182
      %v4350 = vsel %vm4289, %v4334, %v4184
      %v4351 = vsel %vm4289, %v4335, %v4186
      %v4352 = vsel %vm4289, %v4336, %v4188
      %v4353 = vsel %vm4289, %v4337, %v4190
      %v4354 = vsel %vm4289, %v4338, %v4192
      %v4355 = vsel %vm4306, %v4339, %v4226
      %v4356 = vsel %vm4306, %v4340, %v4228
      %v4357 = vsel %vm4306, %v4341, %v4230
      %v4358 = vsel %vm4306, %v4342, %v4232
      %v4359 = vsel %vm4306, %v4343, %v4234
      %v4360 = vsel %vm4306, %v4344, %v4236
      %v4361 = vsel %vm4306, %v4345, %v4238
      %v4362 = vsel %vm4306, %v4346, %v4240
      %v4363 = vsel %vm4306, %v4347, %v4242
      %v4364 = vsel %vm4306, %v4348, %v4244
      %v4365 = vsel %vm4306, %v4349, %v4246
      %v4366 = vsel %vm4306, %v4350, %v4248
      %v4367 = vsel %vm4306, %v4351, %v4250
      %v4368 = vsel %vm4306, %v4352, %v4252
      %v4369 = vsel %vm4306, %v4353, %v4254
      %v4370 = vsel %vm4306, %v4354, %v4256
      %s4371 = scalar_lea.vmem %s5, 256
      %v4372 = vld [vmem:[%s4371] sm:$0xff]
      %v4373 = vld [vmem:[%s4371 + $0x8] sm:$0xff]
      %v4374 = vld [vmem:[%s4371 + $0x10] sm:$0xff]
      %v4375 = vld [vmem:[%s4371 + $0x18] sm:$0xff]
      %v4376 = vld [vmem:[%s4371 + $0x20] sm:$0xff]
      %v4377 = vld [vmem:[%s4371 + $0x28] sm:$0xff]
      %v4378 = vld [vmem:[%s4371 + $0x30] sm:$0xff]
      %v4379 = vld [vmem:[%s4371 + $0x38] sm:$0xff]
      %v4380 = vld [vmem:[%s4371 + $0x40] sm:$0xff]
      %v4381 = vld [vmem:[%s4371 + $0x48] sm:$0xff]
      %v4382 = vld [vmem:[%s4371 + $0x50] sm:$0xff]
      %v4383 = vld [vmem:[%s4371 + $0x58] sm:$0xff]
      %v4384 = vld [vmem:[%s4371 + $0x60] sm:$0xff]
      %v4385 = vld [vmem:[%s4371 + $0x68] sm:$0xff]
      %v4386 = vld [vmem:[%s4371 + $0x70] sm:$0xff]
      %v4387 = vld [vmem:[%s4371 + $0x78] sm:$0xff]
      %vm4404 = vcmask 1046528
      %v4405 = vrot.slane %v3199, 1
      %v4406 = vrot.slane %v3200, 1
      %v4407 = vsel %vm4404, %v4405, %v4406
      %v4408 = vrot.slane %v3201, 1
      %v4409 = vsel %vm4404, %v4406, %v4408
      %v4410 = vrot.slane %v3202, 1
      %v4411 = vsel %vm4404, %v4408, %v4410
      %v4412 = vrot.slane %v3203, 1
      %v4413 = vsel %vm4404, %v4410, %v4412
      %v4414 = vrot.slane %v3204, 1
      %v4415 = vsel %vm4404, %v4412, %v4414
      %v4416 = vrot.slane %v3205, 1
      %v4417 = vsel %vm4404, %v4414, %v4416
      %v4418 = vrot.slane %v3206, 1
      %v4419 = vsel %vm4404, %v4416, %v4418
      %v4420 = vrot.slane %v3207, 1
      %v4421 = vsel %vm4404, %v4418, %v4420
      %v4422 = vrot.slane %v3208, 1
      %v4423 = vsel %vm4404, %v4420, %v4422
      %v4424 = vrot.slane %v3209, 1
      %v4425 = vsel %vm4404, %v4422, %v4424
      %v4426 = vrot.slane %v3210, 1
      %v4427 = vsel %vm4404, %v4424, %v4426
      %v4428 = vrot.slane %v3211, 1
      %v4429 = vsel %vm4404, %v4426, %v4428
      %v4430 = vrot.slane %v3212, 1
      %v4431 = vsel %vm4404, %v4428, %v4430
      %v4432 = vrot.slane %v3213, 1
      %v4433 = vsel %vm4404, %v4430, %v4432
      %v4434 = vrot.slane %v3214, 1
      %v4435 = vsel %vm4404, %v4432, %v4434
      %v4452 = vsel %vm4404, 0.0, %v4405
      %4454 = vset.pattern.permute.xlu0 0
      %4455 = vperm.xlu0 %4454, %v4372
      %v4456 = vpop.permute.xlu0 %4455
      %4459 = vset.pattern.permute.xlu0 0
      %4460 = vperm.xlu0 %4459, %v4373
      %v4461 = vpop.permute.xlu0 %4460
      %4464 = vset.pattern.permute.xlu0 0
      %4465 = vperm.xlu0 %4464, %v4374
      %v4466 = vpop.permute.xlu0 %4465
      %4469 = vset.pattern.permute.xlu0 0
      %4470 = vperm.xlu0 %4469, %v4375
      %v4471 = vpop.permute.xlu0 %4470
      %4474 = vset.pattern.permute.xlu0 0
      %4475 = vperm.xlu0 %4474, %v4376
      %v4476 = vpop.permute.xlu0 %4475
      %4479 = vset.pattern.permute.xlu0 0
      %4480 = vperm.xlu0 %4479, %v4377
      %v4481 = vpop.permute.xlu0 %4480
      %4484 = vset.pattern.permute.xlu0 0
      %4485 = vperm.xlu0 %4484, %v4378
      %v4486 = vpop.permute.xlu0 %4485
      %4489 = vset.pattern.permute.xlu0 0
      %4490 = vperm.xlu0 %4489, %v4379
      %v4491 = vpop.permute.xlu0 %4490
      %4494 = vset.pattern.permute.xlu0 0
      %4495 = vperm.xlu0 %4494, %v4380
      %v4496 = vpop.permute.xlu0 %4495
      %4499 = vset.pattern.permute.xlu0 0
      %4500 = vperm.xlu0 %4499, %v4381
      %v4501 = vpop.permute.xlu0 %4500
      %4504 = vset.pattern.permute.xlu0 0
      %4505 = vperm.xlu0 %4504, %v4382
      %v4506 = vpop.permute.xlu0 %4505
      %4509 = vset.pattern.permute.xlu0 0
      %4510 = vperm.xlu0 %4509, %v4383
      %v4511 = vpop.permute.xlu0 %4510
      %4514 = vset.pattern.permute.xlu0 0
      %4515 = vperm.xlu0 %4514, %v4384
      %v4516 = vpop.permute.xlu0 %4515
      %4519 = vset.pattern.permute.xlu0 0
      %4520 = vperm.xlu0 %4519, %v4385
      %v4521 = vpop.permute.xlu0 %4520
      %4524 = vset.pattern.permute.xlu0 0
      %4525 = vperm.xlu0 %4524, %v4386
      %v4526 = vpop.permute.xlu0 %4525
      %4529 = vset.pattern.permute.xlu0 0
      %4530 = vperm.xlu0 %4529, %v4387
      %v4531 = vpop.permute.xlu0 %4530
      %v4533 = vmul.f32 %v4452, %v4456
      %v4534 = vmul.f32 %v4407, %v4461
      %v4535 = vmul.f32 %v4409, %v4466
      %v4536 = vmul.f32 %v4411, %v4471
      %v4537 = vmul.f32 %v4413, %v4476
      %v4538 = vmul.f32 %v4415, %v4481
      %v4539 = vmul.f32 %v4417, %v4486
      %v4540 = vmul.f32 %v4419, %v4491
      %v4541 = vmul.f32 %v4421, %v4496
      %v4542 = vmul.f32 %v4423, %v4501
      %v4543 = vmul.f32 %v4425, %v4506
      %v4544 = vmul.f32 %v4427, %v4511
      %v4545 = vmul.f32 %v4429, %v4516
      %v4546 = vmul.f32 %v4431, %v4521
      %v4547 = vmul.f32 %v4433, %v4526
      %v4548 = vmul.f32 %v4435, %v4531
      %s4549 = scalar_lea.vmem %s5, 640
      %v4550 = vld [vmem:[%s4549] sm:$0xff]
      %v4551 = vld [vmem:[%s4549 + $0x8] sm:$0xff]
      %v4552 = vld [vmem:[%s4549 + $0x10] sm:$0xff]
      %v4553 = vld [vmem:[%s4549 + $0x18] sm:$0xff]
      %v4554 = vld [vmem:[%s4549 + $0x20] sm:$0xff]
      %v4555 = vld [vmem:[%s4549 + $0x28] sm:$0xff]
      %v4556 = vld [vmem:[%s4549 + $0x30] sm:$0xff]
      %v4557 = vld [vmem:[%s4549 + $0x38] sm:$0xff]
      %v4558 = vld [vmem:[%s4549 + $0x40] sm:$0xff]
      %v4559 = vld [vmem:[%s4549 + $0x48] sm:$0xff]
      %v4560 = vld [vmem:[%s4549 + $0x50] sm:$0xff]
      %v4561 = vld [vmem:[%s4549 + $0x58] sm:$0xff]
      %v4562 = vld [vmem:[%s4549 + $0x60] sm:$0xff]
      %v4563 = vld [vmem:[%s4549 + $0x68] sm:$0xff]
      %v4564 = vld [vmem:[%s4549 + $0x70] sm:$0xff]
      %v4565 = vld [vmem:[%s4549 + $0x78] sm:$0xff]
      %v4582 = vrot.slane %v3167, 1
      %v4583 = vrot.slane %v3168, 1
      %v4584 = vsel %vm4404, %v4582, %v4583
      %v4585 = vrot.slane %v3169, 1
      %v4586 = vsel %vm4404, %v4583, %v4585
      %v4587 = vrot.slane %v3170, 1
      %v4588 = vsel %vm4404, %v4585, %v4587
      %v4589 = vrot.slane %v3171, 1
      %v4590 = vsel %vm4404, %v4587, %v4589
      %v4591 = vrot.slane %v3172, 1
      %v4592 = vsel %vm4404, %v4589, %v4591
      %v4593 = vrot.slane %v3173, 1
      %v4594 = vsel %vm4404, %v4591, %v4593
      %v4595 = vrot.slane %v3174, 1
      %v4596 = vsel %vm4404, %v4593, %v4595
      %v4597 = vrot.slane %v3175, 1
      %v4598 = vsel %vm4404, %v4595, %v4597
      %v4599 = vrot.slane %v3176, 1
      %v4600 = vsel %vm4404, %v4597, %v4599
      %v4601 = vrot.slane %v3177, 1
      %v4602 = vsel %vm4404, %v4599, %v4601
      %v4603 = vrot.slane %v3178, 1
      %v4604 = vsel %vm4404, %v4601, %v4603
      %v4605 = vrot.slane %v3179, 1
      %v4606 = vsel %vm4404, %v4603, %v4605
      %v4607 = vrot.slane %v3180, 1
      %v4608 = vsel %vm4404, %v4605, %v4607
      %v4609 = vrot.slane %v3181, 1
      %v4610 = vsel %vm4404, %v4607, %v4609
      %v4611 = vrot.slane %v3182, 1
      %v4612 = vsel %vm4404, %v4609, %v4611
      %v4629 = vsel %vm4404, %v4611, 0.0
      %4631 = vset.pattern.permute.xlu0 0
      %4632 = vperm.xlu0 %4631, %v4550
      %v4633 = vpop.permute.xlu0 %4632
      %4636 = vset.pattern.permute.xlu0 0
      %4637 = vperm.xlu0 %4636, %v4551
      %v4638 = vpop.permute.xlu0 %4637
      %4641 = vset.pattern.permute.xlu0 0
      %4642 = vperm.xlu0 %4641, %v4552
      %v4643 = vpop.permute.xlu0 %4642
      %4646 = vset.pattern.permute.xlu0 0
      %4647 = vperm.xlu0 %4646, %v4553
      %v4648 = vpop.permute.xlu0 %4647
      %4651 = vset.pattern.permute.xlu0 0
      %4652 = vperm.xlu0 %4651, %v4554
      %v4653 = vpop.permute.xlu0 %4652
      %4656 = vset.pattern.permute.xlu0 0
      %4657 = vperm.xlu0 %4656, %v4555
      %v4658 = vpop.permute.xlu0 %4657
      %4661 = vset.pattern.permute.xlu0 0
      %4662 = vperm.xlu0 %4661, %v4556
      %v4663 = vpop.permute.xlu0 %4662
      %4666 = vset.pattern.permute.xlu0 0
      %4667 = vperm.xlu0 %4666, %v4557
      %v4668 = vpop.permute.xlu0 %4667
      %4671 = vset.pattern.permute.xlu0 0
      %4672 = vperm.xlu0 %4671, %v4558
      %v4673 = vpop.permute.xlu0 %4672
      %4676 = vset.pattern.permute.xlu0 0
      %4677 = vperm.xlu0 %4676, %v4559
      %v4678 = vpop.permute.xlu0 %4677
      %4681 = vset.pattern.permute.xlu0 0
      %4682 = vperm.xlu0 %4681, %v4560
      %v4683 = vpop.permute.xlu0 %4682
      %4686 = vset.pattern.permute.xlu0 0
      %4687 = vperm.xlu0 %4686, %v4561
      %v4688 = vpop.permute.xlu0 %4687
      %4691 = vset.pattern.permute.xlu0 0
      %4692 = vperm.xlu0 %4691, %v4562
      %v4693 = vpop.permute.xlu0 %4692
      %4696 = vset.pattern.permute.xlu0 0
      %4697 = vperm.xlu0 %4696, %v4563
      %v4698 = vpop.permute.xlu0 %4697
      %4701 = vset.pattern.permute.xlu0 0
      %4702 = vperm.xlu0 %4701, %v4564
      %v4703 = vpop.permute.xlu0 %4702
      %4706 = vset.pattern.permute.xlu0 0
      %4707 = vperm.xlu0 %4706, %v4565
      %v4708 = vpop.permute.xlu0 %4707
      %v4710 = vmul.f32 %v4584, %v4633
      %v4711 = vmul.f32 %v4586, %v4638
      %v4712 = vmul.f32 %v4588, %v4643
      %v4713 = vmul.f32 %v4590, %v4648
      %v4714 = vmul.f32 %v4592, %v4653
      %v4715 = vmul.f32 %v4594, %v4658
      %v4716 = vmul.f32 %v4596, %v4663
      %v4717 = vmul.f32 %v4598, %v4668
      %v4718 = vmul.f32 %v4600, %v4673
      %v4719 = vmul.f32 %v4602, %v4678
      %v4720 = vmul.f32 %v4604, %v4683
      %v4721 = vmul.f32 %v4606, %v4688
      %v4722 = vmul.f32 %v4608, %v4693
      %v4723 = vmul.f32 %v4610, %v4698
      %v4724 = vmul.f32 %v4612, %v4703
      %v4725 = vmul.f32 %v4629, %v4708
      %v4727 = vsel %vm4404, %v4434, 0.0
      %v4728 = vmul.f32 %v4407, %v4633
      %v4729 = vmul.f32 %v4409, %v4638
      %v4730 = vmul.f32 %v4411, %v4643
      %v4731 = vmul.f32 %v4413, %v4648
      %v4732 = vmul.f32 %v4415, %v4653
      %v4733 = vmul.f32 %v4417, %v4658
      %v4734 = vmul.f32 %v4419, %v4663
      %v4735 = vmul.f32 %v4421, %v4668
      %v4736 = vmul.f32 %v4423, %v4673
      %v4737 = vmul.f32 %v4425, %v4678
      %v4738 = vmul.f32 %v4427, %v4683
      %v4739 = vmul.f32 %v4429, %v4688
      %v4740 = vmul.f32 %v4431, %v4693
      %v4741 = vmul.f32 %v4433, %v4698
      %v4742 = vmul.f32 %v4435, %v4703
      %v4743 = vmul.f32 %v4727, %v4708
      %4744 = vrot.lane.b32.xlu0 %v3517, 32
      %v4745 = vpop.permute.xlu0 %4744
      %4746 = vrot.lane.b32.xlu0 %v3518, 32
      %v4747 = vpop.permute.xlu0 %4746
      %4748 = vrot.lane.b32.xlu0 %v3519, 32
      %v4749 = vpop.permute.xlu0 %4748
      %4750 = vrot.lane.b32.xlu0 %v3520, 32
      %v4751 = vpop.permute.xlu0 %4750
      %4752 = vrot.lane.b32.xlu0 %v3521, 32
      %v4753 = vpop.permute.xlu0 %4752
      %4754 = vrot.lane.b32.xlu0 %v3522, 32
      %v4755 = vpop.permute.xlu0 %4754
      %4756 = vrot.lane.b32.xlu0 %v3523, 32
      %v4757 = vpop.permute.xlu0 %4756
      %4758 = vrot.lane.b32.xlu0 %v3524, 32
      %v4759 = vpop.permute.xlu0 %4758
      %4760 = vrot.lane.b32.xlu0 %v3525, 32
      %v4761 = vpop.permute.xlu0 %4760
      %4762 = vrot.lane.b32.xlu0 %v3526, 32
      %v4763 = vpop.permute.xlu0 %4762
      %4764 = vrot.lane.b32.xlu0 %v3527, 32
      %v4765 = vpop.permute.xlu0 %4764
      %4766 = vrot.lane.b32.xlu0 %v3528, 32
      %v4767 = vpop.permute.xlu0 %4766
      %4768 = vrot.lane.b32.xlu0 %v3529, 32
      %v4769 = vpop.permute.xlu0 %4768
      %4770 = vrot.lane.b32.xlu0 %v3530, 32
      %v4771 = vpop.permute.xlu0 %4770
      %4772 = vrot.lane.b32.xlu0 %v3531, 32
      %v4773 = vpop.permute.xlu0 %4772
      %4805 = vrot.lane.b32.xlu0 %v4533, 64
      %v4806 = vpop.permute.xlu0 %4805
      %4807 = vrot.lane.b32.xlu0 %v4534, 64
      %v4808 = vpop.permute.xlu0 %4807
      %4809 = vrot.lane.b32.xlu0 %v4535, 64
      %v4810 = vpop.permute.xlu0 %4809
      %4811 = vrot.lane.b32.xlu0 %v4536, 64
      %v4812 = vpop.permute.xlu0 %4811
      %4813 = vrot.lane.b32.xlu0 %v4537, 64
      %v4814 = vpop.permute.xlu0 %4813
      %4815 = vrot.lane.b32.xlu0 %v4538, 64
      %v4816 = vpop.permute.xlu0 %4815
      %4817 = vrot.lane.b32.xlu0 %v4539, 64
      %v4818 = vpop.permute.xlu0 %4817
      %4819 = vrot.lane.b32.xlu0 %v4540, 64
      %v4820 = vpop.permute.xlu0 %4819
      %4821 = vrot.lane.b32.xlu0 %v4541, 64
      %v4822 = vpop.permute.xlu0 %4821
      %4823 = vrot.lane.b32.xlu0 %v4542, 64
      %v4824 = vpop.permute.xlu0 %4823
      %4825 = vrot.lane.b32.xlu0 %v4543, 64
      %v4826 = vpop.permute.xlu0 %4825
      %4827 = vrot.lane.b32.xlu0 %v4544, 64
      %v4828 = vpop.permute.xlu0 %4827
      %4829 = vrot.lane.b32.xlu0 %v4545, 64
      %v4830 = vpop.permute.xlu0 %4829
      %4831 = vrot.lane.b32.xlu0 %v4546, 64
      %v4832 = vpop.permute.xlu0 %4831
      %4833 = vrot.lane.b32.xlu0 %v4547, 64
      %v4834 = vpop.permute.xlu0 %4833
      %4835 = vrot.lane.b32.xlu0 %v4548, 64
      %v4836 = vpop.permute.xlu0 %4835
      %4869 = vrot.lane.b32.xlu0 %v3806, 96
      %v4870 = vpop.permute.xlu0 %4869
      %4871 = vrot.lane.b32.xlu0 %v3807, 96
      %v4872 = vpop.permute.xlu0 %4871
      %4873 = vrot.lane.b32.xlu0 %v3808, 96
      %v4874 = vpop.permute.xlu0 %4873
      %4875 = vrot.lane.b32.xlu0 %v3809, 96
      %v4876 = vpop.permute.xlu0 %4875
      %4877 = vrot.lane.b32.xlu0 %v3810, 96
      %v4878 = vpop.permute.xlu0 %4877
      %4879 = vrot.lane.b32.xlu0 %v3811, 96
      %v4880 = vpop.permute.xlu0 %4879
      %4881 = vrot.lane.b32.xlu0 %v3812, 96
      %v4882 = vpop.permute.xlu0 %4881
      %4883 = vrot.lane.b32.xlu0 %v3813, 96
      %v4884 = vpop.permute.xlu0 %4883
      %4885 = vrot.lane.b32.xlu0 %v3814, 96
      %v4886 = vpop.permute.xlu0 %4885
      %4887 = vrot.lane.b32.xlu0 %v3815, 96
      %v4888 = vpop.permute.xlu0 %4887
      %4889 = vrot.lane.b32.xlu0 %v3816, 96
      %v4890 = vpop.permute.xlu0 %4889
      %4891 = vrot.lane.b32.xlu0 %v3817, 96
      %v4892 = vpop.permute.xlu0 %4891
      %4893 = vrot.lane.b32.xlu0 %v3818, 96
      %v4894 = vpop.permute.xlu0 %4893
      %4895 = vrot.lane.b32.xlu0 %v3819, 96
      %v4896 = vpop.permute.xlu0 %4895
      %4897 = vrot.lane.b32.xlu0 %v3820, 96
      %v4898 = vpop.permute.xlu0 %4897
      %4899 = vrot.lane.b32.xlu0 %v3821, 96
      %v4900 = vpop.permute.xlu0 %4899
      %4933 = vrot.lane.b32.xlu0 %v4710, 32
      %v4934 = vpop.permute.xlu0 %4933
      %4935 = vrot.lane.b32.xlu0 %v4711, 32
      %v4936 = vpop.permute.xlu0 %4935
      %4937 = vrot.lane.b32.xlu0 %v4712, 32
      %v4938 = vpop.permute.xlu0 %4937
      %4939 = vrot.lane.b32.xlu0 %v4713, 32
      %v4940 = vpop.permute.xlu0 %4939
      %4941 = vrot.lane.b32.xlu0 %v4714, 32
      %v4942 = vpop.permute.xlu0 %4941
      %4943 = vrot.lane.b32.xlu0 %v4715, 32
      %v4944 = vpop.permute.xlu0 %4943
      %4945 = vrot.lane.b32.xlu0 %v4716, 32
      %v4946 = vpop.permute.xlu0 %4945
      %4947 = vrot.lane.b32.xlu0 %v4717, 32
      %v4948 = vpop.permute.xlu0 %4947
      %4949 = vrot.lane.b32.xlu0 %v4718, 32
      %v4950 = vpop.permute.xlu0 %4949
      %4951 = vrot.lane.b32.xlu0 %v4719, 32
      %v4952 = vpop.permute.xlu0 %4951
      %4953 = vrot.lane.b32.xlu0 %v4720, 32
      %v4954 = vpop.permute.xlu0 %4953
      %4955 = vrot.lane.b32.xlu0 %v4721, 32
      %v4956 = vpop.permute.xlu0 %4955
      %4957 = vrot.lane.b32.xlu0 %v4722, 32
      %v4958 = vpop.permute.xlu0 %4957
      %4959 = vrot.lane.b32.xlu0 %v4723, 32
      %v4960 = vpop.permute.xlu0 %4959
      %4961 = vrot.lane.b32.xlu0 %v4724, 32
      %v4962 = vpop.permute.xlu0 %4961
      %4963 = vrot.lane.b32.xlu0 %v4725, 32
      %v4964 = vpop.permute.xlu0 %4963
      %4981 = vrot.lane.b32.xlu0 %v3858, 64
      %v4982 = vpop.permute.xlu0 %4981
      %4983 = vrot.lane.b32.xlu0 %v3859, 64
      %v4984 = vpop.permute.xlu0 %4983
      %4985 = vrot.lane.b32.xlu0 %v3860, 64
      %v4986 = vpop.permute.xlu0 %4985
      %4987 = vrot.lane.b32.xlu0 %v3861, 64
      %v4988 = vpop.permute.xlu0 %4987
      %4989 = vrot.lane.b32.xlu0 %v3862, 64
      %v4990 = vpop.permute.xlu0 %4989
      %4991 = vrot.lane.b32.xlu0 %v3863, 64
      %v4992 = vpop.permute.xlu0 %4991
      %4993 = vrot.lane.b32.xlu0 %v3864, 64
      %v4994 = vpop.permute.xlu0 %4993
      %4995 = vrot.lane.b32.xlu0 %v3865, 64
      %v4996 = vpop.permute.xlu0 %4995
      %4997 = vrot.lane.b32.xlu0 %v3866, 64
      %v4998 = vpop.permute.xlu0 %4997
      %4999 = vrot.lane.b32.xlu0 %v3867, 64
      %v5000 = vpop.permute.xlu0 %4999
      %5001 = vrot.lane.b32.xlu0 %v3868, 64
      %v5002 = vpop.permute.xlu0 %5001
      %5003 = vrot.lane.b32.xlu0 %v3869, 64
      %v5004 = vpop.permute.xlu0 %5003
      %5005 = vrot.lane.b32.xlu0 %v3870, 64
      %v5006 = vpop.permute.xlu0 %5005
      %5007 = vrot.lane.b32.xlu0 %v3871, 64
      %v5008 = vpop.permute.xlu0 %5007
      %5009 = vrot.lane.b32.xlu0 %v3872, 64
      %v5010 = vpop.permute.xlu0 %5009
      %5011 = vrot.lane.b32.xlu0 %v3873, 64
      %v5012 = vpop.permute.xlu0 %5011
      %5045 = vrot.lane.b32.xlu0 %v3874, 96
      %v5046 = vpop.permute.xlu0 %5045
      %5047 = vrot.lane.b32.xlu0 %v3875, 96
      %v5048 = vpop.permute.xlu0 %5047
      %5049 = vrot.lane.b32.xlu0 %v3876, 96
      %v5050 = vpop.permute.xlu0 %5049
      %5051 = vrot.lane.b32.xlu0 %v3877, 96
      %v5052 = vpop.permute.xlu0 %5051
      %5053 = vrot.lane.b32.xlu0 %v3878, 96
      %v5054 = vpop.permute.xlu0 %5053
      %5055 = vrot.lane.b32.xlu0 %v3879, 96
      %v5056 = vpop.permute.xlu0 %5055
      %5057 = vrot.lane.b32.xlu0 %v3880, 96
      %v5058 = vpop.permute.xlu0 %5057
      %5059 = vrot.lane.b32.xlu0 %v3881, 96
      %v5060 = vpop.permute.xlu0 %5059
      %5061 = vrot.lane.b32.xlu0 %v3882, 96
      %v5062 = vpop.permute.xlu0 %5061
      %5063 = vrot.lane.b32.xlu0 %v3883, 96
      %v5064 = vpop.permute.xlu0 %5063
      %5065 = vrot.lane.b32.xlu0 %v3884, 96
      %v5066 = vpop.permute.xlu0 %5065
      %5067 = vrot.lane.b32.xlu0 %v3885, 96
      %v5068 = vpop.permute.xlu0 %5067
      %5069 = vrot.lane.b32.xlu0 %v3886, 96
      %v5070 = vpop.permute.xlu0 %5069
      %5071 = vrot.lane.b32.xlu0 %v3887, 96
      %v5072 = vpop.permute.xlu0 %5071
      %5073 = vrot.lane.b32.xlu0 %v3888, 96
      %v5074 = vpop.permute.xlu0 %5073
      %5075 = vrot.lane.b32.xlu0 %v3889, 96
      %v5076 = vpop.permute.xlu0 %5075
      %v5093 = vsel %vm1462, %v3501, %v3907
      %v5094 = vsel %vm1462, %v3502, %v4745
      %v5095 = vsel %vm1462, %v3503, %v4747
      %v5096 = vsel %vm1462, %v3504, %v4749
      %v5097 = vsel %vm1462, %v3505, %v4751
      %v5098 = vsel %vm1462, %v3506, %v4753
      %v5099 = vsel %vm1462, %v3507, %v4755
      %v5100 = vsel %vm1462, %v3508, %v4757
      %v5101 = vsel %vm1462, %v3509, %v4759
      %v5102 = vsel %vm1462, %v3510, %v4761
      %v5103 = vsel %vm1462, %v3511, %v4763
      %v5104 = vsel %vm1462, %v3512, %v4765
      %v5105 = vsel %vm1462, %v3513, %v4767
      %v5106 = vsel %vm1462, %v3514, %v4769
      %v5107 = vsel %vm1462, %v3515, %v4771
      %v5108 = vsel %vm1462, %v3516, %v4773
      %v5109 = vsel %vm4289, %v5093, %v4806
      %v5110 = vsel %vm4289, %v5094, %v4808
      %v5111 = vsel %vm4289, %v5095, %v4810
      %v5112 = vsel %vm4289, %v5096, %v4812
      %v5113 = vsel %vm4289, %v5097, %v4814
      %v5114 = vsel %vm4289, %v5098, %v4816
      %v5115 = vsel %vm4289, %v5099, %v4818
      %v5116 = vsel %vm4289, %v5100, %v4820
      %v5117 = vsel %vm4289, %v5101, %v4822
      %v5118 = vsel %vm4289, %v5102, %v4824
      %v5119 = vsel %vm4289, %v5103, %v4826
      %v5120 = vsel %vm4289, %v5104, %v4828
      %v5121 = vsel %vm4289, %v5105, %v4830
      %v5122 = vsel %vm4289, %v5106, %v4832
      %v5123 = vsel %vm4289, %v5107, %v4834
      %v5124 = vsel %vm4289, %v5108, %v4836
      %v5125 = vsel %vm4306, %v5109, %v4870
      %v5126 = vsel %vm4306, %v5110, %v4872
      %v5127 = vsel %vm4306, %v5111, %v4874
      %v5128 = vsel %vm4306, %v5112, %v4876
      %v5129 = vsel %vm4306, %v5113, %v4878
      %v5130 = vsel %vm4306, %v5114, %v4880
      %v5131 = vsel %vm4306, %v5115, %v4882
      %v5132 = vsel %vm4306, %v5116, %v4884
      %v5133 = vsel %vm4306, %v5117, %v4886
      %v5134 = vsel %vm4306, %v5118, %v4888
      %v5135 = vsel %vm4306, %v5119, %v4890
      %v5136 = vsel %vm4306, %v5120, %v4892
      %v5137 = vsel %vm4306, %v5121, %v4894
      %v5138 = vsel %vm4306, %v5122, %v4896
      %v5139 = vsel %vm4306, %v5123, %v4898
      %v5140 = vsel %vm4306, %v5124, %v4900
      %v5141 = vsel %vm1462, %v3822, %v4934
      %v5142 = vsel %vm1462, %v3823, %v4936
      %v5143 = vsel %vm1462, %v3824, %v4938
      %v5144 = vsel %vm1462, %v3825, %v4940
      %v5145 = vsel %vm1462, %v3826, %v4942
      %v5146 = vsel %vm1462, %v3827, %v4944
      %v5147 = vsel %vm1462, %v3828, %v4946
      %v5148 = vsel %vm1462, %v3829, %v4948
      %v5149 = vsel %vm1462, %v3830, %v4950
      %v5150 = vsel %vm1462, %v3831, %v4952
      %v5151 = vsel %vm1462, %v3832, %v4954
      %v5152 = vsel %vm1462, %v3833, %v4956
      %v5153 = vsel %vm1462, %v3834, %v4958
      %v5154 = vsel %vm1462, %v3835, %v4960
      %v5155 = vsel %vm1462, %v3836, %v4962
      %v5156 = vsel %vm1462, %v3837, %v4964
      %v5157 = vsel %vm4289, %v5141, %v4982
      %v5158 = vsel %vm4289, %v5142, %v4984
      %v5159 = vsel %vm4289, %v5143, %v4986
      %v5160 = vsel %vm4289, %v5144, %v4988
      %v5161 = vsel %vm4289, %v5145, %v4990
      %v5162 = vsel %vm4289, %v5146, %v4992
      %v5163 = vsel %vm4289, %v5147, %v4994
      %v5164 = vsel %vm4289, %v5148, %v4996
      %v5165 = vsel %vm4289, %v5149, %v4998
      %v5166 = vsel %vm4289, %v5150, %v5000
      %v5167 = vsel %vm4289, %v5151, %v5002
      %v5168 = vsel %vm4289, %v5152, %v5004
      %v5169 = vsel %vm4289, %v5153, %v5006
      %v5170 = vsel %vm4289, %v5154, %v5008
      %v5171 = vsel %vm4289, %v5155, %v5010
      %v5172 = vsel %vm4289, %v5156, %v5012
      %v5173 = vsel %vm4306, %v5157, %v5046
      %v5174 = vsel %vm4306, %v5158, %v5048
      %v5175 = vsel %vm4306, %v5159, %v5050
      %v5176 = vsel %vm4306, %v5160, %v5052
      %v5177 = vsel %vm4306, %v5161, %v5054
      %v5178 = vsel %vm4306, %v5162, %v5056
      %v5179 = vsel %vm4306, %v5163, %v5058
      %v5180 = vsel %vm4306, %v5164, %v5060
      %v5181 = vsel %vm4306, %v5165, %v5062
      %v5182 = vsel %vm4306, %v5166, %v5064
      %v5183 = vsel %vm4306, %v5167, %v5066
      %v5184 = vsel %vm4306, %v5168, %v5068
      %v5185 = vsel %vm4306, %v5169, %v5070
      %v5186 = vsel %vm4306, %v5170, %v5072
      %v5187 = vsel %vm4306, %v5171, %v5074
      %v5188 = vsel %vm4306, %v5172, %v5076
      %s5189 = scalar_lea.vmem %s5, 768
      %v5190 = vld [vmem:[%s5189] sm:$0xff]
      %v5191 = vld [vmem:[%s5189 + $0x8] sm:$0xff]
      %v5192 = vld [vmem:[%s5189 + $0x10] sm:$0xff]
      %v5193 = vld [vmem:[%s5189 + $0x18] sm:$0xff]
      %v5194 = vld [vmem:[%s5189 + $0x20] sm:$0xff]
      %v5195 = vld [vmem:[%s5189 + $0x28] sm:$0xff]
      %v5196 = vld [vmem:[%s5189 + $0x30] sm:$0xff]
      %v5197 = vld [vmem:[%s5189 + $0x38] sm:$0xff]
      %v5198 = vld [vmem:[%s5189 + $0x40] sm:$0xff]
      %v5199 = vld [vmem:[%s5189 + $0x48] sm:$0xff]
      %v5200 = vld [vmem:[%s5189 + $0x50] sm:$0xff]
      %v5201 = vld [vmem:[%s5189 + $0x58] sm:$0xff]
      %v5202 = vld [vmem:[%s5189 + $0x60] sm:$0xff]
      %v5203 = vld [vmem:[%s5189 + $0x68] sm:$0xff]
      %v5204 = vld [vmem:[%s5189 + $0x70] sm:$0xff]
      %v5205 = vld [vmem:[%s5189 + $0x78] sm:$0xff]
      %v5207 = vsel %vm3262, %v3594, 0.0
      %5209 = vset.pattern.permute.xlu0 0
      %5210 = vperm.xlu0 %5209, %v5190
      %v5211 = vpop.permute.xlu0 %5210
      %5214 = vset.pattern.permute.xlu0 0
      %5215 = vperm.xlu0 %5214, %v5191
      %v5216 = vpop.permute.xlu0 %5215
      %5219 = vset.pattern.permute.xlu0 0
      %5220 = vperm.xlu0 %5219, %v5192
      %v5221 = vpop.permute.xlu0 %5220
      %5224 = vset.pattern.permute.xlu0 0
      %5225 = vperm.xlu0 %5224, %v5193
      %v5226 = vpop.permute.xlu0 %5225
      %5229 = vset.pattern.permute.xlu0 0
      %5230 = vperm.xlu0 %5229, %v5194
      %v5231 = vpop.permute.xlu0 %5230
      %5234 = vset.pattern.permute.xlu0 0
      %5235 = vperm.xlu0 %5234, %v5195
      %v5236 = vpop.permute.xlu0 %5235
      %5239 = vset.pattern.permute.xlu0 0
      %5240 = vperm.xlu0 %5239, %v5196
      %v5241 = vpop.permute.xlu0 %5240
      %5244 = vset.pattern.permute.xlu0 0
      %5245 = vperm.xlu0 %5244, %v5197
      %v5246 = vpop.permute.xlu0 %5245
      %5249 = vset.pattern.permute.xlu0 0
      %5250 = vperm.xlu0 %5249, %v5198
      %v5251 = vpop.permute.xlu0 %5250
      %5254 = vset.pattern.permute.xlu0 0
      %5255 = vperm.xlu0 %5254, %v5199
      %v5256 = vpop.permute.xlu0 %5255
      %5259 = vset.pattern.permute.xlu0 0
      %5260 = vperm.xlu0 %5259, %v5200
      %v5261 = vpop.permute.xlu0 %5260
      %5264 = vset.pattern.permute.xlu0 0
      %5265 = vperm.xlu0 %5264, %v5201
      %v5266 = vpop.permute.xlu0 %5265
      %5269 = vset.pattern.permute.xlu0 0
      %5270 = vperm.xlu0 %5269, %v5202
      %v5271 = vpop.permute.xlu0 %5270
      %5274 = vset.pattern.permute.xlu0 0
      %5275 = vperm.xlu0 %5274, %v5203
      %v5276 = vpop.permute.xlu0 %5275
      %5279 = vset.pattern.permute.xlu0 0
      %5280 = vperm.xlu0 %5279, %v5204
      %v5281 = vpop.permute.xlu0 %5280
      %5284 = vset.pattern.permute.xlu0 0
      %5285 = vperm.xlu0 %5284, %v5205
      %v5286 = vpop.permute.xlu0 %5285
      %v5288 = vmul.f32 %v3567, %v5211
      %v5289 = vmul.f32 %v3569, %v5216
      %v5290 = vmul.f32 %v3571, %v5221
      %v5291 = vmul.f32 %v3573, %v5226
      %v5292 = vmul.f32 %v3575, %v5231
      %v5293 = vmul.f32 %v3577, %v5236
      %v5294 = vmul.f32 %v3579, %v5241
      %v5295 = vmul.f32 %v3581, %v5246
      %v5296 = vmul.f32 %v3583, %v5251
      %v5297 = vmul.f32 %v3585, %v5256
      %v5298 = vmul.f32 %v3587, %v5261
      %v5299 = vmul.f32 %v3589, %v5266
      %v5300 = vmul.f32 %v3591, %v5271
      %v5301 = vmul.f32 %v3593, %v5276
      %v5302 = vmul.f32 %v3595, %v5281
      %v5303 = vmul.f32 %v5207, %v5286
      %s5304 = scalar_lea.vmem %s5, 896
      %v5305 = vld [vmem:[%s5304] sm:$0xff]
      %v5306 = vld [vmem:[%s5304 + $0x8] sm:$0xff]
      %v5307 = vld [vmem:[%s5304 + $0x10] sm:$0xff]
      %v5308 = vld [vmem:[%s5304 + $0x18] sm:$0xff]
      %v5309 = vld [vmem:[%s5304 + $0x20] sm:$0xff]
      %v5310 = vld [vmem:[%s5304 + $0x28] sm:$0xff]
      %v5311 = vld [vmem:[%s5304 + $0x30] sm:$0xff]
      %v5312 = vld [vmem:[%s5304 + $0x38] sm:$0xff]
      %v5313 = vld [vmem:[%s5304 + $0x40] sm:$0xff]
      %v5314 = vld [vmem:[%s5304 + $0x48] sm:$0xff]
      %v5315 = vld [vmem:[%s5304 + $0x50] sm:$0xff]
      %v5316 = vld [vmem:[%s5304 + $0x58] sm:$0xff]
      %v5317 = vld [vmem:[%s5304 + $0x60] sm:$0xff]
      %v5318 = vld [vmem:[%s5304 + $0x68] sm:$0xff]
      %v5319 = vld [vmem:[%s5304 + $0x70] sm:$0xff]
      %v5320 = vld [vmem:[%s5304 + $0x78] sm:$0xff]
      %5322 = vset.pattern.permute.xlu0 0
      %5323 = vperm.xlu0 %5322, %v5305
      %v5324 = vpop.permute.xlu0 %5323
      %5327 = vset.pattern.permute.xlu0 0
      %5328 = vperm.xlu0 %5327, %v5306
      %v5329 = vpop.permute.xlu0 %5328
      %5332 = vset.pattern.permute.xlu0 0
      %5333 = vperm.xlu0 %5332, %v5307
      %v5334 = vpop.permute.xlu0 %5333
      %5337 = vset.pattern.permute.xlu0 0
      %5338 = vperm.xlu0 %5337, %v5308
      %v5339 = vpop.permute.xlu0 %5338
      %5342 = vset.pattern.permute.xlu0 0
      %5343 = vperm.xlu0 %5342, %v5309
      %v5344 = vpop.permute.xlu0 %5343
      %5347 = vset.pattern.permute.xlu0 0
      %5348 = vperm.xlu0 %5347, %v5310
      %v5349 = vpop.permute.xlu0 %5348
      %5352 = vset.pattern.permute.xlu0 0
      %5353 = vperm.xlu0 %5352, %v5311
      %v5354 = vpop.permute.xlu0 %5353
      %5357 = vset.pattern.permute.xlu0 0
      %5358 = vperm.xlu0 %5357, %v5312
      %v5359 = vpop.permute.xlu0 %5358
      %5362 = vset.pattern.permute.xlu0 0
      %5363 = vperm.xlu0 %5362, %v5313
      %v5364 = vpop.permute.xlu0 %5363
      %5367 = vset.pattern.permute.xlu0 0
      %5368 = vperm.xlu0 %5367, %v5314
      %v5369 = vpop.permute.xlu0 %5368
      %5372 = vset.pattern.permute.xlu0 0
      %5373 = vperm.xlu0 %5372, %v5315
      %v5374 = vpop.permute.xlu0 %5373
      %5377 = vset.pattern.permute.xlu0 0
      %5378 = vperm.xlu0 %5377, %v5316
      %v5379 = vpop.permute.xlu0 %5378
      %5382 = vset.pattern.permute.xlu0 0
      %5383 = vperm.xlu0 %5382, %v5317
      %v5384 = vpop.permute.xlu0 %5383
      %5387 = vset.pattern.permute.xlu0 0
      %5388 = vperm.xlu0 %5387, %v5318
      %v5389 = vpop.permute.xlu0 %5388
      %5392 = vset.pattern.permute.xlu0 0
      %5393 = vperm.xlu0 %5392, %v5319
      %v5394 = vpop.permute.xlu0 %5393
      %5397 = vset.pattern.permute.xlu0 0
      %5398 = vperm.xlu0 %5397, %v5320
      %v5399 = vpop.permute.xlu0 %5398
      %v5401 = vmul.f32 %v3168, %v5324
      %v5402 = vmul.f32 %v3169, %v5329
      %v5403 = vmul.f32 %v3170, %v5334
      %v5404 = vmul.f32 %v3171, %v5339
      %v5405 = vmul.f32 %v3172, %v5344
      %v5406 = vmul.f32 %v3173, %v5349
      %v5407 = vmul.f32 %v3174, %v5354
      %v5408 = vmul.f32 %v3175, %v5359
      %v5409 = vmul.f32 %v3176, %v5364
      %v5410 = vmul.f32 %v3177, %v5369
      %v5411 = vmul.f32 %v3178, %v5374
      %v5412 = vmul.f32 %v3179, %v5379
      %v5413 = vmul.f32 %v3180, %v5384
      %v5414 = vmul.f32 %v3181, %v5389
      %v5415 = vmul.f32 %v3182, %v5394
      %v5416 = vmul.f32 %v5399, 0.0
      %v5417 = vmul.f32 %v3184, %v5324
      %v5418 = vmul.f32 %v3185, %v5329
      %v5419 = vmul.f32 %v3186, %v5334
      %v5420 = vmul.f32 %v3187, %v5339
      %v5421 = vmul.f32 %v3188, %v5344
      %v5422 = vmul.f32 %v3189, %v5349
      %v5423 = vmul.f32 %v3190, %v5354
      %v5424 = vmul.f32 %v3191, %v5359
      %v5425 = vmul.f32 %v3192, %v5364
      %v5426 = vmul.f32 %v3193, %v5369
      %v5427 = vmul.f32 %v3194, %v5374
      %v5428 = vmul.f32 %v3195, %v5379
      %v5429 = vmul.f32 %v3196, %v5384
      %v5430 = vmul.f32 %v3197, %v5389
      %v5431 = vmul.f32 %v3198, %v5394
      %5432 = vrot.lane.b32.xlu0 %v3806, 32
      %v5433 = vpop.permute.xlu0 %5432
      %5434 = vrot.lane.b32.xlu0 %v3807, 32
      %v5435 = vpop.permute.xlu0 %5434
      %5436 = vrot.lane.b32.xlu0 %v3808, 32
      %v5437 = vpop.permute.xlu0 %5436
      %5438 = vrot.lane.b32.xlu0 %v3809, 32
      %v5439 = vpop.permute.xlu0 %5438
      %5440 = vrot.lane.b32.xlu0 %v3810, 32
      %v5441 = vpop.permute.xlu0 %5440
      %5442 = vrot.lane.b32.xlu0 %v3811, 32
      %v5443 = vpop.permute.xlu0 %5442
      %5444 = vrot.lane.b32.xlu0 %v3812, 32
      %v5445 = vpop.permute.xlu0 %5444
      %5446 = vrot.lane.b32.xlu0 %v3813, 32
      %v5447 = vpop.permute.xlu0 %5446
      %5448 = vrot.lane.b32.xlu0 %v3814, 32
      %v5449 = vpop.permute.xlu0 %5448
      %5450 = vrot.lane.b32.xlu0 %v3815, 32
      %v5451 = vpop.permute.xlu0 %5450
      %5452 = vrot.lane.b32.xlu0 %v3816, 32
      %v5453 = vpop.permute.xlu0 %5452
      %5454 = vrot.lane.b32.xlu0 %v3817, 32
      %v5455 = vpop.permute.xlu0 %5454
      %5456 = vrot.lane.b32.xlu0 %v3818, 32
      %v5457 = vpop.permute.xlu0 %5456
      %5458 = vrot.lane.b32.xlu0 %v3819, 32
      %v5459 = vpop.permute.xlu0 %5458
      %5460 = vrot.lane.b32.xlu0 %v3820, 32
      %v5461 = vpop.permute.xlu0 %5460
      %5462 = vrot.lane.b32.xlu0 %v3821, 32
      %v5463 = vpop.permute.xlu0 %5462
      %5480 = vrot.lane.b32.xlu0 %v3822, 64
      %v5481 = vpop.permute.xlu0 %5480
      %5482 = vrot.lane.b32.xlu0 %v3823, 64
      %v5483 = vpop.permute.xlu0 %5482
      %5484 = vrot.lane.b32.xlu0 %v3824, 64
      %v5485 = vpop.permute.xlu0 %5484
      %5486 = vrot.lane.b32.xlu0 %v3825, 64
      %v5487 = vpop.permute.xlu0 %5486
      %5488 = vrot.lane.b32.xlu0 %v3826, 64
      %v5489 = vpop.permute.xlu0 %5488
      %5490 = vrot.lane.b32.xlu0 %v3827, 64
      %v5491 = vpop.permute.xlu0 %5490
      %5492 = vrot.lane.b32.xlu0 %v3828, 64
      %v5493 = vpop.permute.xlu0 %5492
      %5494 = vrot.lane.b32.xlu0 %v3829, 64
      %v5495 = vpop.permute.xlu0 %5494
      %5496 = vrot.lane.b32.xlu0 %v3830, 64
      %v5497 = vpop.permute.xlu0 %5496
      %5498 = vrot.lane.b32.xlu0 %v3831, 64
      %v5499 = vpop.permute.xlu0 %5498
      %5500 = vrot.lane.b32.xlu0 %v3832, 64
      %v5501 = vpop.permute.xlu0 %5500
      %5502 = vrot.lane.b32.xlu0 %v3833, 64
      %v5503 = vpop.permute.xlu0 %5502
      %5504 = vrot.lane.b32.xlu0 %v3834, 64
      %v5505 = vpop.permute.xlu0 %5504
      %5506 = vrot.lane.b32.xlu0 %v3835, 64
      %v5507 = vpop.permute.xlu0 %5506
      %5508 = vrot.lane.b32.xlu0 %v3836, 64
      %v5509 = vpop.permute.xlu0 %5508
      %5510 = vrot.lane.b32.xlu0 %v3837, 64
      %v5511 = vpop.permute.xlu0 %5510
      %5528 = vrot.lane.b32.xlu0 %v3842, 96
      %v5529 = vpop.permute.xlu0 %5528
      %5530 = vrot.lane.b32.xlu0 %v3843, 96
      %v5531 = vpop.permute.xlu0 %5530
      %5532 = vrot.lane.b32.xlu0 %v3844, 96
      %v5533 = vpop.permute.xlu0 %5532
      %5534 = vrot.lane.b32.xlu0 %v3845, 96
      %v5535 = vpop.permute.xlu0 %5534
      %5536 = vrot.lane.b32.xlu0 %v3846, 96
      %v5537 = vpop.permute.xlu0 %5536
      %5538 = vrot.lane.b32.xlu0 %v3847, 96
      %v5539 = vpop.permute.xlu0 %5538
      %5540 = vrot.lane.b32.xlu0 %v3848, 96
      %v5541 = vpop.permute.xlu0 %5540
      %5542 = vrot.lane.b32.xlu0 %v3849, 96
      %v5543 = vpop.permute.xlu0 %5542
      %5544 = vrot.lane.b32.xlu0 %v3850, 96
      %v5545 = vpop.permute.xlu0 %5544
      %5546 = vrot.lane.b32.xlu0 %v3851, 96
      %v5547 = vpop.permute.xlu0 %5546
      %5548 = vrot.lane.b32.xlu0 %v3852, 96
      %v5549 = vpop.permute.xlu0 %5548
      %5550 = vrot.lane.b32.xlu0 %v3853, 96
      %v5551 = vpop.permute.xlu0 %5550
      %5552 = vrot.lane.b32.xlu0 %v3854, 96
      %v5553 = vpop.permute.xlu0 %5552
      %5554 = vrot.lane.b32.xlu0 %v3855, 96
      %v5555 = vpop.permute.xlu0 %5554
      %5556 = vrot.lane.b32.xlu0 %v3856, 96
      %v5557 = vpop.permute.xlu0 %5556
      %5558 = vrot.lane.b32.xlu0 %v3857, 96
      %v5559 = vpop.permute.xlu0 %5558
      %5576 = vrot.lane.b32.xlu0 %v3874, 32
      %v5577 = vpop.permute.xlu0 %5576
      %5578 = vrot.lane.b32.xlu0 %v3875, 32
      %v5579 = vpop.permute.xlu0 %5578
      %5580 = vrot.lane.b32.xlu0 %v3876, 32
      %v5581 = vpop.permute.xlu0 %5580
      %5582 = vrot.lane.b32.xlu0 %v3877, 32
      %v5583 = vpop.permute.xlu0 %5582
      %5584 = vrot.lane.b32.xlu0 %v3878, 32
      %v5585 = vpop.permute.xlu0 %5584
      %5586 = vrot.lane.b32.xlu0 %v3879, 32
      %v5587 = vpop.permute.xlu0 %5586
      %5588 = vrot.lane.b32.xlu0 %v3880, 32
      %v5589 = vpop.permute.xlu0 %5588
      %5590 = vrot.lane.b32.xlu0 %v3881, 32
      %v5591 = vpop.permute.xlu0 %5590
      %5592 = vrot.lane.b32.xlu0 %v3882, 32
      %v5593 = vpop.permute.xlu0 %5592
      %5594 = vrot.lane.b32.xlu0 %v3883, 32
      %v5595 = vpop.permute.xlu0 %5594
      %5596 = vrot.lane.b32.xlu0 %v3884, 32
      %v5597 = vpop.permute.xlu0 %5596
      %5598 = vrot.lane.b32.xlu0 %v3885, 32
      %v5599 = vpop.permute.xlu0 %5598
      %5600 = vrot.lane.b32.xlu0 %v3886, 32
      %v5601 = vpop.permute.xlu0 %5600
      %5602 = vrot.lane.b32.xlu0 %v3887, 32
      %v5603 = vpop.permute.xlu0 %5602
      %5604 = vrot.lane.b32.xlu0 %v3888, 32
      %v5605 = vpop.permute.xlu0 %5604
      %5606 = vrot.lane.b32.xlu0 %v3889, 32
      %v5607 = vpop.permute.xlu0 %5606
      %5640 = vrot.lane.b32.xlu0 %v5288, 64
      %v5641 = vpop.permute.xlu0 %5640
      %5642 = vrot.lane.b32.xlu0 %v5289, 64
      %v5643 = vpop.permute.xlu0 %5642
      %5644 = vrot.lane.b32.xlu0 %v5290, 64
      %v5645 = vpop.permute.xlu0 %5644
      %5646 = vrot.lane.b32.xlu0 %v5291, 64
      %v5647 = vpop.permute.xlu0 %5646
      %5648 = vrot.lane.b32.xlu0 %v5292, 64
      %v5649 = vpop.permute.xlu0 %5648
      %5650 = vrot.lane.b32.xlu0 %v5293, 64
      %v5651 = vpop.permute.xlu0 %5650
      %5652 = vrot.lane.b32.xlu0 %v5294, 64
      %v5653 = vpop.permute.xlu0 %5652
      %5654 = vrot.lane.b32.xlu0 %v5295, 64
      %v5655 = vpop.permute.xlu0 %5654
      %5656 = vrot.lane.b32.xlu0 %v5296, 64
      %v5657 = vpop.permute.xlu0 %5656
      %5658 = vrot.lane.b32.xlu0 %v5297, 64
      %v5659 = vpop.permute.xlu0 %5658
      %5660 = vrot.lane.b32.xlu0 %v5298, 64
      %v5661 = vpop.permute.xlu0 %5660
      %5662 = vrot.lane.b32.xlu0 %v5299, 64
      %v5663 = vpop.permute.xlu0 %5662
      %5664 = vrot.lane.b32.xlu0 %v5300, 64
      %v5665 = vpop.permute.xlu0 %5664
      %5666 = vrot.lane.b32.xlu0 %v5301, 64
      %v5667 = vpop.permute.xlu0 %5666
      %5668 = vrot.lane.b32.xlu0 %v5302, 64
      %v5669 = vpop.permute.xlu0 %5668
      %5670 = vrot.lane.b32.xlu0 %v5303, 64
      %v5671 = vpop.permute.xlu0 %5670
      %5704 = vrot.lane.b32.xlu0 %v5401, 96
      %v5705 = vpop.permute.xlu0 %5704
      %5706 = vrot.lane.b32.xlu0 %v5402, 96
      %v5707 = vpop.permute.xlu0 %5706
      %5708 = vrot.lane.b32.xlu0 %v5403, 96
      %v5709 = vpop.permute.xlu0 %5708
      %5710 = vrot.lane.b32.xlu0 %v5404, 96
      %v5711 = vpop.permute.xlu0 %5710
      %5712 = vrot.lane.b32.xlu0 %v5405, 96
      %v5713 = vpop.permute.xlu0 %5712
      %5714 = vrot.lane.b32.xlu0 %v5406, 96
      %v5715 = vpop.permute.xlu0 %5714
      %5716 = vrot.lane.b32.xlu0 %v5407, 96
      %v5717 = vpop.permute.xlu0 %5716
      %5718 = vrot.lane.b32.xlu0 %v5408, 96
      %v5719 = vpop.permute.xlu0 %5718
      %5720 = vrot.lane.b32.xlu0 %v5409, 96
      %v5721 = vpop.permute.xlu0 %5720
      %5722 = vrot.lane.b32.xlu0 %v5410, 96
      %v5723 = vpop.permute.xlu0 %5722
      %5724 = vrot.lane.b32.xlu0 %v5411, 96
      %v5725 = vpop.permute.xlu0 %5724
      %5726 = vrot.lane.b32.xlu0 %v5412, 96
      %v5727 = vpop.permute.xlu0 %5726
      %5728 = vrot.lane.b32.xlu0 %v5413, 96
      %v5729 = vpop.permute.xlu0 %5728
      %5730 = vrot.lane.b32.xlu0 %v5414, 96
      %v5731 = vpop.permute.xlu0 %5730
      %5732 = vrot.lane.b32.xlu0 %v5415, 96
      %v5733 = vpop.permute.xlu0 %5732
      %5734 = vrot.lane.b32.xlu0 %v5416, 96
      %v5735 = vpop.permute.xlu0 %5734
      %v5752 = vsel %vm1462, %v3693, %v5433
      %v5753 = vsel %vm1462, %v3694, %v5435
      %v5754 = vsel %vm1462, %v3695, %v5437
      %v5755 = vsel %vm1462, %v3696, %v5439
      %v5756 = vsel %vm1462, %v3697, %v5441
      %v5757 = vsel %vm1462, %v3698, %v5443
      %v5758 = vsel %vm1462, %v3699, %v5445
      %v5759 = vsel %vm1462, %v3700, %v5447
      %v5760 = vsel %vm1462, %v3701, %v5449
      %v5761 = vsel %vm1462, %v3702, %v5451
      %v5762 = vsel %vm1462, %v3703, %v5453
      %v5763 = vsel %vm1462, %v3704, %v5455
      %v5764 = vsel %vm1462, %v3705, %v5457
      %v5765 = vsel %vm1462, %v3706, %v5459
      %v5766 = vsel %vm1462, %v3707, %v5461
      %v5767 = vsel %vm1462, %v3708, %v5463
      %v5768 = vsel %vm4289, %v5752, %v5481
      %v5769 = vsel %vm4289, %v5753, %v5483
      %v5770 = vsel %vm4289, %v5754, %v5485
      %v5771 = vsel %vm4289, %v5755, %v5487
      %v5772 = vsel %vm4289, %v5756, %v5489
      %v5773 = vsel %vm4289, %v5757, %v5491
      %v5774 = vsel %vm4289, %v5758, %v5493
      %v5775 = vsel %vm4289, %v5759, %v5495
      %v5776 = vsel %vm4289, %v5760, %v5497
      %v5777 = vsel %vm4289, %v5761, %v5499
      %v5778 = vsel %vm4289, %v5762, %v5501
      %v5779 = vsel %vm4289, %v5763, %v5503
      %v5780 = vsel %vm4289, %v5764, %v5505
      %v5781 = vsel %vm4289, %v5765, %v5507
      %v5782 = vsel %vm4289, %v5766, %v5509
      %v5783 = vsel %vm4289, %v5767, %v5511
      %v5784 = vsel %vm4306, %v5768, %v5529
      %v5785 = vsel %vm4306, %v5769, %v5531
      %v5786 = vsel %vm4306, %v5770, %v5533
      %v5787 = vsel %vm4306, %v5771, %v5535
      %v5788 = vsel %vm4306, %v5772, %v5537
      %v5789 = vsel %vm4306, %v5773, %v5539
      %v5790 = vsel %vm4306, %v5774, %v5541
      %v5791 = vsel %vm4306, %v5775, %v5543
      %v5792 = vsel %vm4306, %v5776, %v5545
      %v5793 = vsel %vm4306, %v5777, %v5547
      %v5794 = vsel %vm4306, %v5778, %v5549
      %v5795 = vsel %vm4306, %v5779, %v5551
      %v5796 = vsel %vm4306, %v5780, %v5553
      %v5797 = vsel %vm4306, %v5781, %v5555
      %v5798 = vsel %vm4306, %v5782, %v5557
      %v5799 = vsel %vm4306, %v5783, %v5559
      %v5800 = vsel %vm1462, %v3858, %v5577
      %v5801 = vsel %vm1462, %v3859, %v5579
      %v5802 = vsel %vm1462, %v3860, %v5581
      %v5803 = vsel %vm1462, %v3861, %v5583
      %v5804 = vsel %vm1462, %v3862, %v5585
      %v5805 = vsel %vm1462, %v3863, %v5587
      %v5806 = vsel %vm1462, %v3864, %v5589
      %v5807 = vsel %vm1462, %v3865, %v5591
      %v5808 = vsel %vm1462, %v3866, %v5593
      %v5809 = vsel %vm1462, %v3867, %v5595
      %v5810 = vsel %vm1462, %v3868, %v5597
      %v5811 = vsel %vm1462, %v3869, %v5599
      %v5812 = vsel %vm1462, %v3870, %v5601
      %v5813 = vsel %vm1462, %v3871, %v5603
      %v5814 = vsel %vm1462, %v3872, %v5605
      %v5815 = vsel %vm1462, %v3873, %v5607
      %v5816 = vsel %vm4289, %v5800, %v5641
      %v5817 = vsel %vm4289, %v5801, %v5643
      %v5818 = vsel %vm4289, %v5802, %v5645
      %v5819 = vsel %vm4289, %v5803, %v5647
      %v5820 = vsel %vm4289, %v5804, %v5649
      %v5821 = vsel %vm4289, %v5805, %v5651
      %v5822 = vsel %vm4289, %v5806, %v5653
      %v5823 = vsel %vm4289, %v5807, %v5655
      %v5824 = vsel %vm4289, %v5808, %v5657
      %v5825 = vsel %vm4289, %v5809, %v5659
      %v5826 = vsel %vm4289, %v5810, %v5661
      %v5827 = vsel %vm4289, %v5811, %v5663
      %v5828 = vsel %vm4289, %v5812, %v5665
      %v5829 = vsel %vm4289, %v5813, %v5667
      %v5830 = vsel %vm4289, %v5814, %v5669
      %v5831 = vsel %vm4289, %v5815, %v5671
      %v5832 = vsel %vm4306, %v5816, %v5705
      %v5833 = vsel %vm4306, %v5817, %v5707
      %v5834 = vsel %vm4306, %v5818, %v5709
      %v5835 = vsel %vm4306, %v5819, %v5711
      %v5836 = vsel %vm4306, %v5820, %v5713
      %v5837 = vsel %vm4306, %v5821, %v5715
      %v5838 = vsel %vm4306, %v5822, %v5717
      %v5839 = vsel %vm4306, %v5823, %v5719
      %v5840 = vsel %vm4306, %v5824, %v5721
      %v5841 = vsel %vm4306, %v5825, %v5723
      %v5842 = vsel %vm4306, %v5826, %v5725
      %v5843 = vsel %vm4306, %v5827, %v5727
      %v5844 = vsel %vm4306, %v5828, %v5729
      %v5845 = vsel %vm4306, %v5829, %v5731
      %v5846 = vsel %vm4306, %v5830, %v5733
      %v5847 = vsel %vm4306, %v5831, %v5735
      %s5848 = scalar_lea.vmem %s5, 1024
      %v5849 = vld [vmem:[%s5848] sm:$0xff]
      %v5850 = vld [vmem:[%s5848 + $0x8] sm:$0xff]
      %v5851 = vld [vmem:[%s5848 + $0x10] sm:$0xff]
      %v5852 = vld [vmem:[%s5848 + $0x18] sm:$0xff]
      %v5853 = vld [vmem:[%s5848 + $0x20] sm:$0xff]
      %v5854 = vld [vmem:[%s5848 + $0x28] sm:$0xff]
      %v5855 = vld [vmem:[%s5848 + $0x30] sm:$0xff]
      %v5856 = vld [vmem:[%s5848 + $0x38] sm:$0xff]
      %v5857 = vld [vmem:[%s5848 + $0x40] sm:$0xff]
      %v5858 = vld [vmem:[%s5848 + $0x48] sm:$0xff]
      %v5859 = vld [vmem:[%s5848 + $0x50] sm:$0xff]
      %v5860 = vld [vmem:[%s5848 + $0x58] sm:$0xff]
      %v5861 = vld [vmem:[%s5848 + $0x60] sm:$0xff]
      %v5862 = vld [vmem:[%s5848 + $0x68] sm:$0xff]
      %v5863 = vld [vmem:[%s5848 + $0x70] sm:$0xff]
      %v5864 = vld [vmem:[%s5848 + $0x78] sm:$0xff]
      %5866 = vset.pattern.permute.xlu0 0
      %5867 = vperm.xlu0 %5866, %v5849
      %v5868 = vpop.permute.xlu0 %5867
      %5871 = vset.pattern.permute.xlu0 0
      %5872 = vperm.xlu0 %5871, %v5850
      %v5873 = vpop.permute.xlu0 %5872
      %5876 = vset.pattern.permute.xlu0 0
      %5877 = vperm.xlu0 %5876, %v5851
      %v5878 = vpop.permute.xlu0 %5877
      %5881 = vset.pattern.permute.xlu0 0
      %5882 = vperm.xlu0 %5881, %v5852
      %v5883 = vpop.permute.xlu0 %5882
      %5886 = vset.pattern.permute.xlu0 0
      %5887 = vperm.xlu0 %5886, %v5853
      %v5888 = vpop.permute.xlu0 %5887
      %5891 = vset.pattern.permute.xlu0 0
      %5892 = vperm.xlu0 %5891, %v5854
      %v5893 = vpop.permute.xlu0 %5892
      %5896 = vset.pattern.permute.xlu0 0
      %5897 = vperm.xlu0 %5896, %v5855
      %v5898 = vpop.permute.xlu0 %5897
      %5901 = vset.pattern.permute.xlu0 0
      %5902 = vperm.xlu0 %5901, %v5856
      %v5903 = vpop.permute.xlu0 %5902
      %5906 = vset.pattern.permute.xlu0 0
      %5907 = vperm.xlu0 %5906, %v5857
      %v5908 = vpop.permute.xlu0 %5907
      %5911 = vset.pattern.permute.xlu0 0
      %5912 = vperm.xlu0 %5911, %v5858
      %v5913 = vpop.permute.xlu0 %5912
      %5916 = vset.pattern.permute.xlu0 0
      %5917 = vperm.xlu0 %5916, %v5859
      %v5918 = vpop.permute.xlu0 %5917
      %5921 = vset.pattern.permute.xlu0 0
      %5922 = vperm.xlu0 %5921, %v5860
      %v5923 = vpop.permute.xlu0 %5922
      %5926 = vset.pattern.permute.xlu0 0
      %5927 = vperm.xlu0 %5926, %v5861
      %v5928 = vpop.permute.xlu0 %5927
      %5931 = vset.pattern.permute.xlu0 0
      %5932 = vperm.xlu0 %5931, %v5862
      %v5933 = vpop.permute.xlu0 %5932
      %5936 = vset.pattern.permute.xlu0 0
      %5937 = vperm.xlu0 %5936, %v5863
      %v5938 = vpop.permute.xlu0 %5937
      %5941 = vset.pattern.permute.xlu0 0
      %5942 = vperm.xlu0 %5941, %v5864
      %v5943 = vpop.permute.xlu0 %5942
      %v5945 = vmul.f32 %v4586, %v5868
      %v5946 = vmul.f32 %v4588, %v5873
      %v5947 = vmul.f32 %v4590, %v5878
      %v5948 = vmul.f32 %v4592, %v5883
      %v5949 = vmul.f32 %v4594, %v5888
      %v5950 = vmul.f32 %v4596, %v5893
      %v5951 = vmul.f32 %v4598, %v5898
      %v5952 = vmul.f32 %v4600, %v5903
      %v5953 = vmul.f32 %v4602, %v5908
      %v5954 = vmul.f32 %v4604, %v5913
      %v5955 = vmul.f32 %v4606, %v5918
      %v5956 = vmul.f32 %v4608, %v5923
      %v5957 = vmul.f32 %v4610, %v5928
      %v5958 = vmul.f32 %v4612, %v5933
      %v5959 = vmul.f32 %v4629, %v5938
      %v5960 = vmul.f32 %v5943, 0.0
      %5961 = vrot.lane.b32.xlu0 %v4710, 64
      %v5962 = vpop.permute.xlu0 %5961
      %5963 = vrot.lane.b32.xlu0 %v4711, 64
      %v5964 = vpop.permute.xlu0 %5963
      %5965 = vrot.lane.b32.xlu0 %v4712, 64
      %v5966 = vpop.permute.xlu0 %5965
      %5967 = vrot.lane.b32.xlu0 %v4713, 64
      %v5968 = vpop.permute.xlu0 %5967
      %5969 = vrot.lane.b32.xlu0 %v4714, 64
      %v5970 = vpop.permute.xlu0 %5969
      %5971 = vrot.lane.b32.xlu0 %v4715, 64
      %v5972 = vpop.permute.xlu0 %5971
      %5973 = vrot.lane.b32.xlu0 %v4716, 64
      %v5974 = vpop.permute.xlu0 %5973
      %5975 = vrot.lane.b32.xlu0 %v4717, 64
      %v5976 = vpop.permute.xlu0 %5975
      %5977 = vrot.lane.b32.xlu0 %v4718, 64
      %v5978 = vpop.permute.xlu0 %5977
      %5979 = vrot.lane.b32.xlu0 %v4719, 64
      %v5980 = vpop.permute.xlu0 %5979
      %5981 = vrot.lane.b32.xlu0 %v4720, 64
      %v5982 = vpop.permute.xlu0 %5981
      %5983 = vrot.lane.b32.xlu0 %v4721, 64
      %v5984 = vpop.permute.xlu0 %5983
      %5985 = vrot.lane.b32.xlu0 %v4722, 64
      %v5986 = vpop.permute.xlu0 %5985
      %5987 = vrot.lane.b32.xlu0 %v4723, 64
      %v5988 = vpop.permute.xlu0 %5987
      %5989 = vrot.lane.b32.xlu0 %v4724, 64
      %v5990 = vpop.permute.xlu0 %5989
      %5991 = vrot.lane.b32.xlu0 %v4725, 64
      %v5992 = vpop.permute.xlu0 %5991
      %6025 = vrot.lane.b32.xlu0 %v4728, 32
      %v6026 = vpop.permute.xlu0 %6025
      %6027 = vrot.lane.b32.xlu0 %v4729, 32
      %v6028 = vpop.permute.xlu0 %6027
      %6029 = vrot.lane.b32.xlu0 %v4730, 32
      %v6030 = vpop.permute.xlu0 %6029
      %6031 = vrot.lane.b32.xlu0 %v4731, 32
      %v6032 = vpop.permute.xlu0 %6031
      %6033 = vrot.lane.b32.xlu0 %v4732, 32
      %v6034 = vpop.permute.xlu0 %6033
      %6035 = vrot.lane.b32.xlu0 %v4733, 32
      %v6036 = vpop.permute.xlu0 %6035
      %6037 = vrot.lane.b32.xlu0 %v4734, 32
      %v6038 = vpop.permute.xlu0 %6037
      %6039 = vrot.lane.b32.xlu0 %v4735, 32
      %v6040 = vpop.permute.xlu0 %6039
      %6041 = vrot.lane.b32.xlu0 %v4736, 32
      %v6042 = vpop.permute.xlu0 %6041
      %6043 = vrot.lane.b32.xlu0 %v4737, 32
      %v6044 = vpop.permute.xlu0 %6043
      %6045 = vrot.lane.b32.xlu0 %v4738, 32
      %v6046 = vpop.permute.xlu0 %6045
      %6047 = vrot.lane.b32.xlu0 %v4739, 32
      %v6048 = vpop.permute.xlu0 %6047
      %6049 = vrot.lane.b32.xlu0 %v4740, 32
      %v6050 = vpop.permute.xlu0 %6049
      %6051 = vrot.lane.b32.xlu0 %v4741, 32
      %v6052 = vpop.permute.xlu0 %6051
      %6053 = vrot.lane.b32.xlu0 %v4742, 32
      %v6054 = vpop.permute.xlu0 %6053
      %6055 = vrot.lane.b32.xlu0 %v4743, 32
      %v6056 = vpop.permute.xlu0 %6055
      %6073 = vrot.lane.b32.xlu0 %v5401, 64
      %v6074 = vpop.permute.xlu0 %6073
      %6075 = vrot.lane.b32.xlu0 %v5402, 64
      %v6076 = vpop.permute.xlu0 %6075
      %6077 = vrot.lane.b32.xlu0 %v5403, 64
      %v6078 = vpop.permute.xlu0 %6077
      %6079 = vrot.lane.b32.xlu0 %v5404, 64
      %v6080 = vpop.permute.xlu0 %6079
      %6081 = vrot.lane.b32.xlu0 %v5405, 64
      %v6082 = vpop.permute.xlu0 %6081
      %6083 = vrot.lane.b32.xlu0 %v5406, 64
      %v6084 = vpop.permute.xlu0 %6083
      %6085 = vrot.lane.b32.xlu0 %v5407, 64
      %v6086 = vpop.permute.xlu0 %6085
      %6087 = vrot.lane.b32.xlu0 %v5408, 64
      %v6088 = vpop.permute.xlu0 %6087
      %6089 = vrot.lane.b32.xlu0 %v5409, 64
      %v6090 = vpop.permute.xlu0 %6089
      %6091 = vrot.lane.b32.xlu0 %v5410, 64
      %v6092 = vpop.permute.xlu0 %6091
      %6093 = vrot.lane.b32.xlu0 %v5411, 64
      %v6094 = vpop.permute.xlu0 %6093
      %6095 = vrot.lane.b32.xlu0 %v5412, 64
      %v6096 = vpop.permute.xlu0 %6095
      %6097 = vrot.lane.b32.xlu0 %v5413, 64
      %v6098 = vpop.permute.xlu0 %6097
      %6099 = vrot.lane.b32.xlu0 %v5414, 64
      %v6100 = vpop.permute.xlu0 %6099
      %6101 = vrot.lane.b32.xlu0 %v5415, 64
      %v6102 = vpop.permute.xlu0 %6101
      %6103 = vrot.lane.b32.xlu0 %v5416, 64
      %v6104 = vpop.permute.xlu0 %6103
      %6136 = vrot.lane.b32.xlu0 %v5417, 96
      %v6137 = vpop.permute.xlu0 %6136
      %6138 = vrot.lane.b32.xlu0 %v5418, 96
      %v6139 = vpop.permute.xlu0 %6138
      %6140 = vrot.lane.b32.xlu0 %v5419, 96
      %v6141 = vpop.permute.xlu0 %6140
      %6142 = vrot.lane.b32.xlu0 %v5420, 96
      %v6143 = vpop.permute.xlu0 %6142
      %6144 = vrot.lane.b32.xlu0 %v5421, 96
      %v6145 = vpop.permute.xlu0 %6144
      %6146 = vrot.lane.b32.xlu0 %v5422, 96
      %v6147 = vpop.permute.xlu0 %6146
      %6148 = vrot.lane.b32.xlu0 %v5423, 96
      %v6149 = vpop.permute.xlu0 %6148
      %6150 = vrot.lane.b32.xlu0 %v5424, 96
      %v6151 = vpop.permute.xlu0 %6150
      %6152 = vrot.lane.b32.xlu0 %v5425, 96
      %v6153 = vpop.permute.xlu0 %6152
      %6154 = vrot.lane.b32.xlu0 %v5426, 96
      %v6155 = vpop.permute.xlu0 %6154
      %6156 = vrot.lane.b32.xlu0 %v5427, 96
      %v6157 = vpop.permute.xlu0 %6156
      %6158 = vrot.lane.b32.xlu0 %v5428, 96
      %v6159 = vpop.permute.xlu0 %6158
      %6160 = vrot.lane.b32.xlu0 %v5429, 96
      %v6161 = vpop.permute.xlu0 %6160
      %6162 = vrot.lane.b32.xlu0 %v5430, 96
      %v6163 = vpop.permute.xlu0 %6162
      %6164 = vrot.lane.b32.xlu0 %v5431, 96
      %v6165 = vpop.permute.xlu0 %6164
      %v6181 = vsel %vm4289, %v4323, %v5962
      %v6182 = vsel %vm4289, %v4324, %v5964
      %v6183 = vsel %vm4289, %v4325, %v5966
      %v6184 = vsel %vm4289, %v4326, %v5968
      %v6185 = vsel %vm4289, %v4327, %v5970
      %v6186 = vsel %vm4289, %v4328, %v5972
      %v6187 = vsel %vm4289, %v4329, %v5974
      %v6188 = vsel %vm4289, %v4330, %v5976
      %v6189 = vsel %vm4289, %v4331, %v5978
      %v6190 = vsel %vm4289, %v4332, %v5980
      %v6191 = vsel %vm4289, %v4333, %v5982
      %v6192 = vsel %vm4289, %v4334, %v5984
      %v6193 = vsel %vm4289, %v4335, %v5986
      %v6194 = vsel %vm4289, %v4336, %v5988
      %v6195 = vsel %vm4289, %v4337, %v5990
      %v6196 = vsel %vm4289, %v4338, %v5992
      %v6197 = vsel %vm4306, %v6181, %v4226
      %v6198 = vsel %vm4306, %v6182, %v4228
      %v6199 = vsel %vm4306, %v6183, %v4230
      %v6200 = vsel %vm4306, %v6184, %v4232
      %v6201 = vsel %vm4306, %v6185, %v4234
      %v6202 = vsel %vm4306, %v6186, %v4236
      %v6203 = vsel %vm4306, %v6187, %v4238
      %v6204 = vsel %vm4306, %v6188, %v4240
      %v6205 = vsel %vm4306, %v6189, %v4242
      %v6206 = vsel %vm4306, %v6190, %v4244
      %v6207 = vsel %vm4306, %v6191, %v4246
      %v6208 = vsel %vm4306, %v6192, %v4248
      %v6209 = vsel %vm4306, %v6193, %v4250
      %v6210 = vsel %vm4306, %v6194, %v4252
      %v6211 = vsel %vm4306, %v6195, %v4254
      %v6212 = vsel %vm4306, %v6196, %v4256
      %v6213 = vsel %vm1462, %v3874, %v6026
      %v6214 = vsel %vm1462, %v3875, %v6028
      %v6215 = vsel %vm1462, %v3876, %v6030
      %v6216 = vsel %vm1462, %v3877, %v6032
      %v6217 = vsel %vm1462, %v3878, %v6034
      %v6218 = vsel %vm1462, %v3879, %v6036
      %v6219 = vsel %vm1462, %v3880, %v6038
      %v6220 = vsel %vm1462, %v3881, %v6040
      %v6221 = vsel %vm1462, %v3882, %v6042
      %v6222 = vsel %vm1462, %v3883, %v6044
      %v6223 = vsel %vm1462, %v3884, %v6046
      %v6224 = vsel %vm1462, %v3885, %v6048
      %v6225 = vsel %vm1462, %v3886, %v6050
      %v6226 = vsel %vm1462, %v3887, %v6052
      %v6227 = vsel %vm1462, %v3888, %v6054
      %v6228 = vsel %vm1462, %v3889, %v6056
      %v6229 = vsel %vm4289, %v6213, %v6074
      %v6230 = vsel %vm4289, %v6214, %v6076
      %v6231 = vsel %vm4289, %v6215, %v6078
      %v6232 = vsel %vm4289, %v6216, %v6080
      %v6233 = vsel %vm4289, %v6217, %v6082
      %v6234 = vsel %vm4289, %v6218, %v6084
      %v6235 = vsel %vm4289, %v6219, %v6086
      %v6236 = vsel %vm4289, %v6220, %v6088
      %v6237 = vsel %vm4289, %v6221, %v6090
      %v6238 = vsel %vm4289, %v6222, %v6092
      %v6239 = vsel %vm4289, %v6223, %v6094
      %v6240 = vsel %vm4289, %v6224, %v6096
      %v6241 = vsel %vm4289, %v6225, %v6098
      %v6242 = vsel %vm4289, %v6226, %v6100
      %v6243 = vsel %vm4289, %v6227, %v6102
      %v6244 = vsel %vm4289, %v6228, %v6104
      %v6245 = vsel %vm4306, %v6229, %v6137
      %v6246 = vsel %vm4306, %v6230, %v6139
      %v6247 = vsel %vm4306, %v6231, %v6141
      %v6248 = vsel %vm4306, %v6232, %v6143
      %v6249 = vsel %vm4306, %v6233, %v6145
      %v6250 = vsel %vm4306, %v6234, %v6147
      %v6251 = vsel %vm4306, %v6235, %v6149
      %v6252 = vsel %vm4306, %v6236, %v6151
      %v6253 = vsel %vm4306, %v6237, %v6153
      %v6254 = vsel %vm4306, %v6238, %v6155
      %v6255 = vsel %vm4306, %v6239, %v6157
      %v6256 = vsel %vm4306, %v6240, %v6159
      %v6257 = vsel %vm4306, %v6241, %v6161
      %v6258 = vsel %vm4306, %v6242, %v6163
      %v6259 = vsel %vm4306, %v6243, %v6165
      %v6260 = vsel %vm4306, %v6244, %v5735
      %v6261 = vpack.c.bf16 %v4308, %v4307
      %v6262 = vpack.c.bf16 %v4356, %v4355
      %v6263 = vpack.c.bf16 %v3875, %v3874
      %v6264 = vpack.c.bf16 %v4310, %v4309
      %v6265 = vpack.c.bf16 %v4358, %v4357
      %v6266 = vpack.c.bf16 %v3877, %v3876
      %v6267 = vpack.c.bf16 %v4312, %v4311
      %v6268 = vpack.c.bf16 %v4360, %v4359
      %v6269 = vpack.c.bf16 %v3879, %v3878
      %v6270 = vpack.c.bf16 %v4314, %v4313
      %v6271 = vpack.c.bf16 %v4362, %v4361
      %v6272 = vpack.c.bf16 %v3881, %v3880
      %v6273 = vpack.c.bf16 %v4316, %v4315
      %v6274 = vpack.c.bf16 %v4364, %v4363
      %v6275 = vpack.c.bf16 %v3883, %v3882
      %v6276 = vpack.c.bf16 %v4318, %v4317
      %v6277 = vpack.c.bf16 %v4366, %v4365
      %v6278 = vpack.c.bf16 %v3885, %v3884
      %v6279 = vpack.c.bf16 %v4320, %v4319
      %v6280 = vpack.c.bf16 %v4368, %v4367
      %v6281 = vpack.c.bf16 %v3887, %v3886
      %v6282 = vpack.c.bf16 %v4322, %v4321
      %v6283 = vpack.c.bf16 %v4370, %v4369
      %v6284 = vpack.c.bf16 %v3889, %v3888
      %v6285 = vpack.c.bf16 %v5126, %v5125
      %v6286 = vpack.c.bf16 %v5174, %v5173
      %v6287 = vpack.c.bf16 %v4729, %v4728
      %v6288 = vpack.c.bf16 %v5128, %v5127
      %v6289 = vpack.c.bf16 %v5176, %v5175
      %v6290 = vpack.c.bf16 %v4731, %v4730
      %v6291 = vpack.c.bf16 %v5130, %v5129
      %v6292 = vpack.c.bf16 %v5178, %v5177
      %v6293 = vpack.c.bf16 %v4733, %v4732
      %v6294 = vpack.c.bf16 %v5132, %v5131
      %v6295 = vpack.c.bf16 %v5180, %v5179
      %v6296 = vpack.c.bf16 %v4735, %v4734
      %v6297 = vpack.c.bf16 %v5134, %v5133
      %v6298 = vpack.c.bf16 %v5182, %v5181
      %v6299 = vpack.c.bf16 %v4737, %v4736
      %v6300 = vpack.c.bf16 %v5136, %v5135
      %v6301 = vpack.c.bf16 %v5184, %v5183
      %v6302 = vpack.c.bf16 %v4739, %v4738
      %v6303 = vpack.c.bf16 %v5138, %v5137
      %v6304 = vpack.c.bf16 %v5186, %v5185
      %v6305 = vpack.c.bf16 %v4741, %v4740
      %v6306 = vpack.c.bf16 %v5140, %v5139
      %v6307 = vpack.c.bf16 %v5188, %v5187
      %v6308 = vpack.c.bf16 %v4743, %v4742
      %v6309 = vpack.c.bf16 %v5785, %v5784
      %v6310 = vpack.c.bf16 %v5833, %v5832
      %v6311 = vpack.c.bf16 %v5418, %v5417
      %v6312 = vpack.c.bf16 %v5787, %v5786
      %v6313 = vpack.c.bf16 %v5835, %v5834
      %v6314 = vpack.c.bf16 %v5420, %v5419
      %v6315 = vpack.c.bf16 %v5789, %v5788
      %v6316 = vpack.c.bf16 %v5837, %v5836
      %v6317 = vpack.c.bf16 %v5422, %v5421
      %v6318 = vpack.c.bf16 %v5791, %v5790
      %v6319 = vpack.c.bf16 %v5839, %v5838
      %v6320 = vpack.c.bf16 %v5424, %v5423
      %v6321 = vpack.c.bf16 %v5793, %v5792
      %v6322 = vpack.c.bf16 %v5841, %v5840
      %v6323 = vpack.c.bf16 %v5426, %v5425
      %v6324 = vpack.c.bf16 %v5795, %v5794
      %v6325 = vpack.c.bf16 %v5843, %v5842
      %v6326 = vpack.c.bf16 %v5428, %v5427
      %v6327 = vpack.c.bf16 %v5797, %v5796
      %v6328 = vpack.c.bf16 %v5845, %v5844
      %v6329 = vpack.c.bf16 %v5430, %v5429
      %v6330 = vpack.c.bf16 %v5799, %v5798
      %v6331 = vpack.c.bf16 %v5847, %v5846
      %v6332 = vpack.c.bf16 %v5416, %v5431
      %v6333 = vpack.c.bf16 %v6198, %v6197
      %v6334 = vpack.c.bf16 %v6246, %v6245
      %v6335 = vpack.c.bf16 %v5946, %v5945
      %v6336 = vpack.c.bf16 %v6200, %v6199
      %v6337 = vpack.c.bf16 %v6248, %v6247
      %v6338 = vpack.c.bf16 %v5948, %v5947
      %v6339 = vpack.c.bf16 %v6202, %v6201
      %v6340 = vpack.c.bf16 %v6250, %v6249
      %v6341 = vpack.c.bf16 %v5950, %v5949
      %v6342 = vpack.c.bf16 %v6204, %v6203
      %v6343 = vpack.c.bf16 %v6252, %v6251
      %v6344 = vpack.c.bf16 %v5952, %v5951
      %v6345 = vpack.c.bf16 %v6206, %v6205
      %v6346 = vpack.c.bf16 %v6254, %v6253
      %v6347 = vpack.c.bf16 %v5954, %v5953
      %v6348 = vpack.c.bf16 %v6208, %v6207
      %v6349 = vpack.c.bf16 %v6256, %v6255
      %v6350 = vpack.c.bf16 %v5956, %v5955
      %v6351 = vpack.c.bf16 %v6210, %v6209
      %v6352 = vpack.c.bf16 %v6258, %v6257
      %v6353 = vpack.c.bf16 %v5958, %v5957
      %v6354 = vpack.c.bf16 %v6212, %v6211
      %v6355 = vpack.c.bf16 %v6260, %v6259
      %v6356 = vpack.c.bf16 %v5960, %v5959
      %v6357 = vld [vmem:[%s3] sm:$0xf]
      %v6358 = vld [vmem:[%s3 + $0x4] sm:$0xf]
      %v6359 = vld [vmem:[%s3 + $0x8] sm:$0xf]
      %v6360 = vld [vmem:[%s3 + $0xc] sm:$0xf]
      %v6361 = vld [vmem:[%s3 + $0x10] sm:$0xf]
      %v6362 = vld [vmem:[%s3 + $0x14] sm:$0xf]
      %v6363 = vld [vmem:[%s3 + $0x18] sm:$0xf]
      %v6364 = vld [vmem:[%s3 + $0x1c] sm:$0xf]
      %v6365 = vld [vmem:[%s3 + $0x20] sm:$0xf]
      %v6366 = vld [vmem:[%s3 + $0x24] sm:$0xf]
      %v6367 = vld [vmem:[%s3 + $0x28] sm:$0xf]
      %v6368 = vld [vmem:[%s3 + $0x2c] sm:$0xf]
      %v6369 = vld [vmem:[%s3 + $0x30] sm:$0xf]
      %v6370 = vld [vmem:[%s3 + $0x34] sm:$0xf]
      %v6371 = vld [vmem:[%s3 + $0x38] sm:$0xf]
      %v6372 = vld [vmem:[%s3 + $0x3c] sm:$0xf]
      %v6373 = vld [vmem:[%s3 + $0x40] sm:$0xf]
      %v6374 = vld [vmem:[%s3 + $0x44] sm:$0xf]
      %v6375 = vld [vmem:[%s3 + $0x48] sm:$0xf]
      %v6376 = vld [vmem:[%s3 + $0x4c] sm:$0xf]
      %v6377 = vld [vmem:[%s3 + $0x50] sm:$0xf]
      %v6378 = vld [vmem:[%s3 + $0x54] sm:$0xf]
      %v6379 = vld [vmem:[%s3 + $0x58] sm:$0xf]
      %v6380 = vld [vmem:[%s3 + $0x5c] sm:$0xf]
      %v6381 = vld [vmem:[%s3 + $0x60] sm:$0xf]
      %v6382 = vld [vmem:[%s3 + $0x64] sm:$0xf]
      %v6383 = vld [vmem:[%s3 + $0x68] sm:$0xf]
      %v6384 = vld [vmem:[%s3 + $0x6c] sm:$0xf]
      %v6385 = vld [vmem:[%s3 + $0x70] sm:$0xf]
      %v6386 = vld [vmem:[%s3 + $0x74] sm:$0xf]
      %v6387 = vld [vmem:[%s3 + $0x78] sm:$0xf]
      %v6388 = vld [vmem:[%s3 + $0x7c] sm:$0xf]
      %v6389 = vld [vmem:[%s3 + $0x80] sm:$0xf]
      %v6390 = vld [vmem:[%s3 + $0x84] sm:$0xf]
      %v6391 = vld [vmem:[%s3 + $0x88] sm:$0xf]
      %v6392 = vld [vmem:[%s3 + $0x8c] sm:$0xf]
      %v6429 = vunpack.c.l.b16 %v6357
      %v6430 = vunpack.c.l.b16 %v6358
      %v6431 = vunpack.c.l.b16 %v6359
      %v6432 = vunpack.c.l.b16 %v6360
      %v6433 = vunpack.c.l.b16 %v6361
      %v6434 = vunpack.c.l.b16 %v6362
      %v6435 = vunpack.c.l.b16 %v6363
      %v6436 = vunpack.c.l.b16 %v6364
      %v6437 = vunpack.c.l.b16 %v6365
      %v6438 = vunpack.c.l.b16 %v6366
      %v6439 = vunpack.c.l.b16 %v6367
      %v6440 = vunpack.c.l.b16 %v6368
      %v6441 = vunpack.c.l.b16 %v6369
      %v6442 = vunpack.c.l.b16 %v6370
      %v6443 = vunpack.c.l.b16 %v6371
      %v6444 = vunpack.c.l.b16 %v6372
      %v6445 = vunpack.c.l.b16 %v6373
      %v6446 = vunpack.c.l.b16 %v6374
      %v6447 = vunpack.c.l.b16 %v6375
      %v6448 = vunpack.c.l.b16 %v6376
      %v6449 = vunpack.c.l.b16 %v6377
      %v6450 = vunpack.c.l.b16 %v6378
      %v6451 = vunpack.c.l.b16 %v6379
      %v6452 = vunpack.c.l.b16 %v6380
      %v6453 = vunpack.c.l.b16 %v6381
      %v6454 = vunpack.c.l.b16 %v6382
      %v6455 = vunpack.c.l.b16 %v6383
      %v6456 = vunpack.c.l.b16 %v6384
      %v6457 = vunpack.c.l.b16 %v6385
      %v6458 = vunpack.c.l.b16 %v6386
      %v6459 = vunpack.c.l.b16 %v6387
      %v6460 = vunpack.c.l.b16 %v6388
      %v6461 = vunpack.c.l.b16 %v6389
      %v6462 = vunpack.c.l.b16 %v6390
      %v6463 = vunpack.c.l.b16 %v6391
      %v6464 = vunpack.c.l.b16 %v6392
      %v6465 = vpack.c.b16 %v6430, %v6429
      %v6466 = vpack.c.b16 %v6432, %v6431
      %v6467 = vpack.c.b16 %v6434, %v6433
      %v6468 = vpack.c.b16 %v6436, %v6435
      %v6469 = vpack.c.b16 %v6438, %v6437
      %v6470 = vpack.c.b16 %v6440, %v6439
      %v6471 = vpack.c.b16 %v6442, %v6441
      %v6472 = vpack.c.b16 %v6444, %v6443
      %v6473 = vpack.c.b16 %v6446, %v6445
      %v6474 = vpack.c.b16 %v6448, %v6447
      %v6475 = vpack.c.b16 %v6450, %v6449
      %v6476 = vpack.c.b16 %v6452, %v6451
      %v6477 = vpack.c.b16 %v6454, %v6453
      %v6478 = vpack.c.b16 %v6456, %v6455
      %v6479 = vpack.c.b16 %v6458, %v6457
      %v6480 = vpack.c.b16 %v6460, %v6459
      %v6481 = vpack.c.b16 %v6462, %v6461
      %v6482 = vpack.c.b16 %v6464, %v6463
      %v6502 = vsel %vm1462, %v6263, 0
      %v6505 = vsel %vm1462, %v6266, 0
      %v6508 = vsel %vm1462, %v6269, 0
      %v6511 = vsel %vm1462, %v6272, 0
      %v6514 = vsel %vm1462, %v6275, 0
      %v6517 = vsel %vm1462, %v6278, 0
      %v6520 = vsel %vm1462, %v6281, 0
      %v6523 = vsel %vm1462, %v6284, 0
      %v6526 = vsel %vm1462, %v6287, 0
      %v6529 = vsel %vm1462, %v6290, 0
      %v6532 = vsel %vm1462, %v6293, 0
      %v6535 = vsel %vm1462, %v6296, 0
      %v6538 = vsel %vm1462, %v6299, 0
      %v6541 = vsel %vm1462, %v6302, 0
      %v6544 = vsel %vm1462, %v6305, 0
      %v6547 = vsel %vm1462, %v6308, 0
      %v6550 = vsel %vm1462, %v6311, 0
      %v6553 = vsel %vm1462, %v6314, 0
      %v6556 = vsel %vm1462, %v6317, 0
      %v6559 = vsel %vm1462, %v6320, 0
      %v6562 = vsel %vm1462, %v6323, 0
      %v6565 = vsel %vm1462, %v6326, 0
      %v6568 = vsel %vm1462, %v6329, 0
      %v6571 = vsel %vm1462, %v6332, 0
      %v6574 = vsel %vm1462, %v6335, 0
      %v6577 = vsel %vm1462, %v6338, 0
      %v6580 = vsel %vm1462, %v6341, 0
      %v6583 = vsel %vm1462, %v6344, 0
      %v6586 = vsel %vm1462, %v6347, 0
      %v6589 = vsel %vm1462, %v6350, 0
      %v6592 = vsel %vm1462, %v6353, 0
      %v6595 = vsel %vm1462, %v6356, 0
      %6597 = vmatprep.subr.bf16.mxu0 0
      %6598 = vmatpush1.bf16.msra.mxu0 %v6465
      %6599 = vmatprep.subr.bf16.mxu0 0
      %6600 = vmatpush1.bf16.msra.mxu0 %v6466
      %6601 = vmatprep.subr.bf16.mxu0 0
      %6602 = vmatpush1.bf16.msra.mxu0 %v6467
      %6603 = vmatprep.subr.bf16.mxu0 0
      %6604 = vmatpush1.bf16.msra.mxu0 %v6468
      %6605 = vmatprep.subr.bf16.mxu0 0
      %6606 = vmatpush1.bf16.msra.mxu0 %v6469
      %6607 = vmatprep.subr.bf16.mxu0 0
      %6608 = vmatpush1.bf16.msra.mxu0 %v6470
      %6609 = vmatprep.subr.bf16.mxu0 0
      %6610 = vmatpush1.bf16.msra.mxu0 %v6471
      %6611 = vmatprep.subr.bf16.mxu0 0
      %6612 = vmatpush1.bf16.msra.mxu0 %v6472
      %6613 = vmatprep.subr.bf16.mxu0 0
      %6614 = vmatpush1.bf16.msra.mxu0 %v6473
      %6615 = vmatprep.subr.bf16.mxu0 0
      %6616 = vmatpush1.bf16.msra.mxu0 %v6474
      %6617 = vmatprep.subr.bf16.mxu0 0
      %6618 = vmatpush1.bf16.msra.mxu0 %v6475
      %6619 = vmatprep.subr.bf16.mxu0 0
      %6620 = vmatpush1.bf16.msra.mxu0 %v6476
      %6621 = vmatprep.subr.bf16.mxu0 0
      %6622 = vmatpush1.bf16.msra.mxu0 %v6477
      %6623 = vmatprep.subr.bf16.mxu0 0
      %6624 = vmatpush1.bf16.msra.mxu0 %v6478
      %6625 = vmatprep.subr.bf16.mxu0 0
      %6626 = vmatpush1.bf16.msra.mxu0 %v6479
      %6627 = vmatprep.subr.bf16.mxu0 0
      %6628 = vmatpush1.bf16.msra.mxu0 %v6480
      %6629 = vmatprep.mubr.bf16.mxu0 %v6262
      %6630 = vmatmul.mubr.bf16.gmra.mrb[0].mxu0 %v6261
      %v6631 = vpop.f32.mrb[0].mxu0
      %v6632 = vadd.f32 0.0, %v6631
      %v6633 = vpop.f32.mrb[0].mxu0
      %v6634 = vpop.f32.mrb[0].mxu0
      %v6635 = vadd.f32 0.0, %v6634
      %v6636 = vpop.f32.mrb[0].mxu0
      %6637 = vmatprep.mubr.bf16.mxu0 %v6265
      %6638 = vmatmul.mubr.bf16.gmra.mrb[0].mxu0 %v6264
      %v6639 = vpop.f32.mrb[0].mxu0
      %v6640 = vadd.f32 0.0, %v6639
      %v6641 = vpop.f32.mrb[0].mxu0
      %v6642 = vpop.f32.mrb[0].mxu0
      %v6643 = vadd.f32 0.0, %v6642
      %v6644 = vpop.f32.mrb[0].mxu0
      %6645 = vmatprep.mubr.bf16.mxu0 %v6268
      %6646 = vmatmul.mubr.bf16.gmra.mrb[0].mxu0 %v6267
      %v6647 = vpop.f32.mrb[0].mxu0
      %v6648 = vadd.f32 0.0, %v6647
      %v6649 = vpop.f32.mrb[0].mxu0
      %v6650 = vpop.f32.mrb[0].mxu0
      %v6651 = vadd.f32 0.0, %v6650
      %v6652 = vpop.f32.mrb[0].mxu0
      %6653 = vmatprep.mubr.bf16.mxu0 %v6271
      %6654 = vmatmul.mubr.bf16.gmra.mrb[0].mxu0 %v6270
      %v6655 = vpop.f32.mrb[0].mxu0
      %v6656 = vadd.f32 0.0, %v6655
      %v6657 = vpop.f32.mrb[0].mxu0
      %v6658 = vpop.f32.mrb[0].mxu0
      %v6659 = vadd.f32 0.0, %v6658
      %v6660 = vpop.f32.mrb[0].mxu0
      %6661 = vmatprep.mubr.bf16.mxu0 %v6274
      %6662 = vmatmul.mubr.bf16.gmra.mrb[0].mxu0 %v6273
      %v6663 = vpop.f32.mrb[0].mxu0
      %v6664 = vadd.f32 0.0, %v6663
      %v6665 = vpop.f32.mrb[0].mxu0
      %v6666 = vpop.f32.mrb[0].mxu0
      %v6667 = vadd.f32 0.0, %v6666
      %v6668 = vpop.f32.mrb[0].mxu0
      %6669 = vmatprep.mubr.bf16.mxu0 %v6277
      %6670 = vmatmul.mubr.bf16.gmra.mrb[0].mxu0 %v6276
      %v6671 = vpop.f32.mrb[0].mxu0
      %v6672 = vadd.f32 0.0, %v6671
      %v6673 = vpop.f32.mrb[0].mxu0
      %v6674 = vpop.f32.mrb[0].mxu0
      %v6675 = vadd.f32 0.0, %v6674
      %v6676 = vpop.f32.mrb[0].mxu0
      %6677 = vmatprep.mubr.bf16.mxu0 %v6280
      %6678 = vmatmul.mubr.bf16.gmra.mrb[0].mxu0 %v6279
      %v6679 = vpop.f32.mrb[0].mxu0
      %v6680 = vadd.f32 0.0, %v6679
      %v6681 = vpop.f32.mrb[0].mxu0
      %v6682 = vpop.f32.mrb[0].mxu0
      %v6683 = vadd.f32 0.0, %v6682
      %v6684 = vpop.f32.mrb[0].mxu0
      %6685 = vmatprep.mubr.bf16.mxu0 %v6283
      %6686 = vmatmul.mubr.bf16.gmra.mrb[0].mxu0 %v6282
      %v6687 = vpop.f32.mrb[0].mxu0
      %v6688 = vadd.f32 0.0, %v6687
      %v6689 = vpop.f32.mrb[0].mxu0
      %v6690 = vpop.f32.mrb[0].mxu0
      %v6691 = vadd.f32 0.0, %v6690
      %v6692 = vpop.f32.mrb[0].mxu0
      %6693 = vmatprep.mubr.bf16.mxu0 %v6286
      %6694 = vmatmul.mubr.bf16.gmra.mrb[0].mxu0 %v6285
      %v6695 = vpop.f32.mrb[0].mxu0
      %v6696 = vadd.f32 0.0, %v6695
      %v6697 = vpop.f32.mrb[0].mxu0
      %v6698 = vpop.f32.mrb[0].mxu0
      %v6699 = vadd.f32 0.0, %v6698
      %v6700 = vpop.f32.mrb[0].mxu0
      %6701 = vmatprep.mubr.bf16.mxu0 %v6289
      %6702 = vmatmul.mubr.bf16.gmra.mrb[0].mxu0 %v6288
      %v6703 = vpop.f32.mrb[0].mxu0
      %v6704 = vadd.f32 0.0, %v6703
      %v6705 = vpop.f32.mrb[0].mxu0
      %v6706 = vpop.f32.mrb[0].mxu0
      %v6707 = vadd.f32 0.0, %v6706
      %v6708 = vpop.f32.mrb[0].mxu0
      %6709 = vmatprep.mubr.bf16.mxu0 %v6292
      %6710 = vmatmul.mubr.bf16.gmra.mrb[0].mxu0 %v6291
      %v6711 = vpop.f32.mrb[0].mxu0
      %v6712 = vadd.f32 0.0, %v6711
      %v6713 = vpop.f32.mrb[0].mxu0
      %v6714 = vpop.f32.mrb[0].mxu0
      %v6715 = vadd.f32 0.0, %v6714
      %v6716 = vpop.f32.mrb[0].mxu0
      %6717 = vmatprep.mubr.bf16.mxu0 %v6295
      %6718 = vmatmul.mubr.bf16.gmra.mrb[0].mxu0 %v6294
      %v6719 = vpop.f32.mrb[0].mxu0
      %v6720 = vadd.f32 0.0, %v6719
      %v6721 = vpop.f32.mrb[0].mxu0
      %v6722 = vpop.f32.mrb[0].mxu0
      %v6723 = vadd.f32 0.0, %v6722
      %v6724 = vpop.f32.mrb[0].mxu0
      %6725 = vmatprep.mubr.bf16.mxu0 %v6298
      %6726 = vmatmul.mubr.bf16.gmra.mrb[0].mxu0 %v6297
      %v6727 = vpop.f32.mrb[0].mxu0
      %v6728 = vadd.f32 0.0, %v6727
      %v6729 = vpop.f32.mrb[0].mxu0
      %v6730 = vpop.f32.mrb[0].mxu0
      %v6731 = vadd.f32 0.0, %v6730
      %v6732 = vpop.f32.mrb[0].mxu0
      %6733 = vmatprep.mubr.bf16.mxu0 %v6301
      %6734 = vmatmul.mubr.bf16.gmra.mrb[0].mxu0 %v6300
      %v6735 = vpop.f32.mrb[0].mxu0
      %v6736 = vadd.f32 0.0, %v6735
      %v6737 = vpop.f32.mrb[0].mxu0
      %v6738 = vpop.f32.mrb[0].mxu0
      %v6739 = vadd.f32 0.0, %v6738
      %v6740 = vpop.f32.mrb[0].mxu0
      %6741 = vmatprep.mubr.bf16.mxu0 %v6304
      %6742 = vmatmul.mubr.bf16.gmra.mrb[0].mxu0 %v6303
      %v6743 = vpop.f32.mrb[0].mxu0
      %v6744 = vadd.f32 0.0, %v6743
      %v6745 = vpop.f32.mrb[0].mxu0
      %v6746 = vpop.f32.mrb[0].mxu0
      %v6747 = vadd.f32 0.0, %v6746
      %v6748 = vpop.f32.mrb[0].mxu0
      %6749 = vmatprep.mubr.bf16.mxu0 %v6307
      %6750 = vmatmul.mubr.bf16.gmra.mrb[0].mxu0 %v6306
      %v6751 = vpop.f32.mrb[0].mxu0
      %v6752 = vadd.f32 0.0, %v6751
      %v6753 = vpop.f32.mrb[0].mxu0
      %v6754 = vpop.f32.mrb[0].mxu0
      %v6755 = vadd.f32 0.0, %v6754
      %v6756 = vpop.f32.mrb[0].mxu0
      %6757 = vmatprep.mubr.bf16.mxu0 %v6310
      %6758 = vmatmul.mubr.bf16.gmra.mrb[0].mxu0 %v6309
      %v6759 = vpop.f32.mrb[0].mxu0
      %v6760 = vadd.f32 0.0, %v6759
      %v6761 = vpop.f32.mrb[0].mxu0
      %v6762 = vpop.f32.mrb[0].mxu0
      %v6763 = vadd.f32 0.0, %v6762
      %v6764 = vpop.f32.mrb[0].mxu0
      %6765 = vmatprep.mubr.bf16.mxu0 %v6313
      %6766 = vmatmul.mubr.bf16.gmra.mrb[0].mxu0 %v6312
      %v6767 = vpop.f32.mrb[0].mxu0
      %v6768 = vadd.f32 0.0, %v6767
      %v6769 = vpop.f32.mrb[0].mxu0
      %v6770 = vpop.f32.mrb[0].mxu0
      %v6771 = vadd.f32 0.0, %v6770
      %v6772 = vpop.f32.mrb[0].mxu0
      %6773 = vmatprep.mubr.bf16.mxu0 %v6316
      %6774 = vmatmul.mubr.bf16.gmra.mrb[0].mxu0 %v6315
      %v6775 = vpop.f32.mrb[0].mxu0
      %v6776 = vadd.f32 0.0, %v6775
      %v6777 = vpop.f32.mrb[0].mxu0
      %v6778 = vpop.f32.mrb[0].mxu0
      %v6779 = vadd.f32 0.0, %v6778
      %v6780 = vpop.f32.mrb[0].mxu0
      %6781 = vmatprep.mubr.bf16.mxu0 %v6319
      %6782 = vmatmul.mubr.bf16.gmra.mrb[0].mxu0 %v6318
      %v6783 = vpop.f32.mrb[0].mxu0
      %v6784 = vadd.f32 0.0, %v6783
      %v6785 = vpop.f32.mrb[0].mxu0
      %v6786 = vpop.f32.mrb[0].mxu0
      %v6787 = vadd.f32 0.0, %v6786
      %v6788 = vpop.f32.mrb[0].mxu0
      %6789 = vmatprep.mubr.bf16.mxu0 %v6322
      %6790 = vmatmul.mubr.bf16.gmra.mrb[0].mxu0 %v6321
      %v6791 = vpop.f32.mrb[0].mxu0
      %v6792 = vadd.f32 0.0, %v6791
      %v6793 = vpop.f32.mrb[0].mxu0
      %v6794 = vpop.f32.mrb[0].mxu0
      %v6795 = vadd.f32 0.0, %v6794
      %v6796 = vpop.f32.mrb[0].mxu0
      %6797 = vmatprep.mubr.bf16.mxu0 %v6325
      %6798 = vmatmul.mubr.bf16.gmra.mrb[0].mxu0 %v6324
      %v6799 = vpop.f32.mrb[0].mxu0
      %v6800 = vadd.f32 0.0, %v6799
      %v6801 = vpop.f32.mrb[0].mxu0
      %v6802 = vpop.f32.mrb[0].mxu0
      %v6803 = vadd.f32 0.0, %v6802
      %v6804 = vpop.f32.mrb[0].mxu0
      %6805 = vmatprep.mubr.bf16.mxu0 %v6328
      %6806 = vmatmul.mubr.bf16.gmra.mrb[0].mxu0 %v6327
      %v6807 = vpop.f32.mrb[0].mxu0
      %v6808 = vadd.f32 0.0, %v6807
      %v6809 = vpop.f32.mrb[0].mxu0
      %v6810 = vpop.f32.mrb[0].mxu0
      %v6811 = vadd.f32 0.0, %v6810
      %v6812 = vpop.f32.mrb[0].mxu0
      %6813 = vmatprep.mubr.bf16.mxu0 %v6331
      %6814 = vmatmul.mubr.bf16.gmra.mrb[0].mxu0 %v6330
      %v6815 = vpop.f32.mrb[0].mxu0
      %v6816 = vadd.f32 0.0, %v6815
      %v6817 = vpop.f32.mrb[0].mxu0
      %v6818 = vpop.f32.mrb[0].mxu0
      %v6819 = vadd.f32 0.0, %v6818
      %v6820 = vpop.f32.mrb[0].mxu0
      %6821 = vmatprep.mubr.bf16.mxu0 %v6334
      %6822 = vmatmul.mubr.bf16.gmra.mrb[0].mxu0 %v6333
      %v6823 = vpop.f32.mrb[0].mxu0
      %v6824 = vadd.f32 0.0, %v6823
      %v6825 = vpop.f32.mrb[0].mxu0
      %v6826 = vpop.f32.mrb[0].mxu0
      %v6827 = vadd.f32 0.0, %v6826
      %v6828 = vpop.f32.mrb[0].mxu0
      %6829 = vmatprep.mubr.bf16.mxu0 %v6337
      %6830 = vmatmul.mubr.bf16.gmra.mrb[0].mxu0 %v6336
      %v6831 = vpop.f32.mrb[0].mxu0
      %v6832 = vadd.f32 0.0, %v6831
      %v6833 = vpop.f32.mrb[0].mxu0
      %v6834 = vpop.f32.mrb[0].mxu0
      %v6835 = vadd.f32 0.0, %v6834
      %v6836 = vpop.f32.mrb[0].mxu0
      %6837 = vmatprep.mubr.bf16.mxu0 %v6340
      %6838 = vmatmul.mubr.bf16.gmra.mrb[0].mxu0 %v6339
      %v6839 = vpop.f32.mrb[0].mxu0
      %v6840 = vadd.f32 0.0, %v6839
      %v6841 = vpop.f32.mrb[0].mxu0
      %v6842 = vpop.f32.mrb[0].mxu0
      %v6843 = vadd.f32 0.0, %v6842
      %v6844 = vpop.f32.mrb[0].mxu0
      %6845 = vmatprep.mubr.bf16.mxu0 %v6343
      %6846 = vmatmul.mubr.bf16.gmra.mrb[0].mxu0 %v6342
      %v6847 = vpop.f32.mrb[0].mxu0
      %v6848 = vadd.f32 0.0, %v6847
      %v6849 = vpop.f32.mrb[0].mxu0
      %v6850 = vpop.f32.mrb[0].mxu0
      %v6851 = vadd.f32 0.0, %v6850
      %v6852 = vpop.f32.mrb[0].mxu0
      %6853 = vmatprep.mubr.bf16.mxu0 %v6346
      %6854 = vmatmul.mubr.bf16.gmra.mrb[0].mxu0 %v6345
      %v6855 = vpop.f32.mrb[0].mxu0
      %v6856 = vadd.f32 0.0, %v6855
      %v6857 = vpop.f32.mrb[0].mxu0
      %v6858 = vpop.f32.mrb[0].mxu0
      %v6859 = vadd.f32 0.0, %v6858
      %v6860 = vpop.f32.mrb[0].mxu0
      %6861 = vmatprep.mubr.bf16.mxu0 %v6349
      %6862 = vmatmul.mubr.bf16.gmra.mrb[0].mxu0 %v6348
      %v6863 = vpop.f32.mrb[0].mxu0
      %v6864 = vadd.f32 0.0, %v6863
      %v6865 = vpop.f32.mrb[0].mxu0
      %v6866 = vpop.f32.mrb[0].mxu0
      %v6867 = vadd.f32 0.0, %v6866
      %v6868 = vpop.f32.mrb[0].mxu0
      %6869 = vmatprep.mubr.bf16.mxu0 %v6352
      %6870 = vmatmul.mubr.bf16.gmra.mrb[0].mxu0 %v6351
      %v6871 = vpop.f32.mrb[0].mxu0
      %v6872 = vadd.f32 0.0, %v6871
      %v6873 = vpop.f32.mrb[0].mxu0
      %v6874 = vpop.f32.mrb[0].mxu0
      %v6875 = vadd.f32 0.0, %v6874
      %v6876 = vpop.f32.mrb[0].mxu0
      %6877 = vmatprep.mubr.bf16.mxu0 %v6355
      %6878 = vmatmul.mubr.bf16.gmra.mrb[0].mxu0 %v6354
      %v6879 = vpop.f32.mrb[0].mxu0
      %v6880 = vadd.f32 0.0, %v6879
      %v6881 = vpop.f32.mrb[0].mxu0
      %v6882 = vpop.f32.mrb[0].mxu0
      %v6883 = vadd.f32 0.0, %v6882
      %v6884 = vpop.f32.mrb[0].mxu0
      %6885 = vdwg.mxu0
      %6886 = vmatprep.subr.bf16.mxu0 0
      %6887 = vmatpush1.bf16.msra.mxu0 %v6481
      %6888 = vmatprep.subr.bf16.mxu0 0
      %6889 = vmatpush1.bf16.msra.mxu0 %v6482
      %6890 = vmatprep.subr.bf16.mxu0 0
      %6891 = vmatpush1.bf16.msra.mxu0 0
      %6892 = vmatprep.subr.bf16.mxu0 0
      %6893 = vmatpush1.bf16.msra.mxu0 0
      %6894 = vmatprep.subr.bf16.mxu0 0
      %6895 = vmatpush1.bf16.msra.mxu0 0
      %6896 = vmatprep.subr.bf16.mxu0 0
      %6897 = vmatpush1.bf16.msra.mxu0 0
      %6898 = vmatprep.subr.bf16.mxu0 0
      %6899 = vmatpush1.bf16.msra.mxu0 0
      %6900 = vmatprep.subr.bf16.mxu0 0
      %6901 = vmatpush1.bf16.msra.mxu0 0
      %6902 = vmatprep.subr.bf16.mxu0 0
      %6903 = vmatpush1.bf16.msra.mxu0 0
      %6904 = vmatprep.subr.bf16.mxu0 0
      %6905 = vmatpush1.bf16.msra.mxu0 0
      %6906 = vmatprep.subr.bf16.mxu0 0
      %6907 = vmatpush1.bf16.msra.mxu0 0
      %6908 = vmatprep.subr.bf16.mxu0 0
      %6909 = vmatpush1.bf16.msra.mxu0 0
      %6910 = vmatprep.subr.bf16.mxu0 0
      %6911 = vmatpush1.bf16.msra.mxu0 0
      %6912 = vmatprep.subr.bf16.mxu0 0
      %6913 = vmatpush1.bf16.msra.mxu0 0
      %6914 = vmatprep.subr.bf16.mxu0 0
      %6915 = vmatpush1.bf16.msra.mxu0 0
      %6916 = vmatprep.subr.bf16.mxu0 0
      %6917 = vmatpush1.bf16.msra.mxu0 0
      %6918 = vmatprep.mubr.bf16.mxu0 0
      %6919 = vmatmul.mubr.bf16.gmra.mrb[0].mxu0 %v6502
      %v6920 = vpop.f32.mrb[0].mxu0
      %v6921 = vadd.f32 %v6632, %v6920
      %v6922 = vpop.f32.mrb[0].mxu0
      %v6923 = vpop.f32.mrb[0].mxu0
      %v6924 = vadd.f32 %v6635, %v6923
      %v6925 = vpop.f32.mrb[0].mxu0
      %6926 = vmatprep.mubr.bf16.mxu0 0
      %6927 = vmatmul.mubr.bf16.gmra.mrb[0].mxu0 %v6505
      %v6928 = vpop.f32.mrb[0].mxu0
      %v6929 = vadd.f32 %v6640, %v6928
      %v6930 = vpop.f32.mrb[0].mxu0
      %v6931 = vpop.f32.mrb[0].mxu0
      %v6932 = vadd.f32 %v6643, %v6931
      %v6933 = vpop.f32.mrb[0].mxu0
      %6934 = vmatprep.mubr.bf16.mxu0 0
      %6935 = vmatmul.mubr.bf16.gmra.mrb[0].mxu0 %v6508
      %v6936 = vpop.f32.mrb[0].mxu0
      %v6937 = vadd.f32 %v6648, %v6936
      %v6938 = vpop.f32.mrb[0].mxu0
      %v6939 = vpop.f32.mrb[0].mxu0
      %v6940 = vadd.f32 %v6651, %v6939
      %v6941 = vpop.f32.mrb[0].mxu0
      %6942 = vmatprep.mubr.bf16.mxu0 0
      %6943 = vmatmul.mubr.bf16.gmra.mrb[0].mxu0 %v6511
      %v6944 = vpop.f32.mrb[0].mxu0
      %v6945 = vadd.f32 %v6656, %v6944
      %v6946 = vpop.f32.mrb[0].mxu0
      %v6947 = vpop.f32.mrb[0].mxu0
      %v6948 = vadd.f32 %v6659, %v6947
      %v6949 = vpop.f32.mrb[0].mxu0
      %6950 = vmatprep.mubr.bf16.mxu0 0
      %6951 = vmatmul.mubr.bf16.gmra.mrb[0].mxu0 %v6514
      %v6952 = vpop.f32.mrb[0].mxu0
      %v6953 = vadd.f32 %v6664, %v6952
      %v6954 = vpop.f32.mrb[0].mxu0
      %v6955 = vpop.f32.mrb[0].mxu0
      %v6956 = vadd.f32 %v6667, %v6955
      %v6957 = vpop.f32.mrb[0].mxu0
      %6958 = vmatprep.mubr.bf16.mxu0 0
      %6959 = vmatmul.mubr.bf16.gmra.mrb[0].mxu0 %v6517
      %v6960 = vpop.f32.mrb[0].mxu0
      %v6961 = vadd.f32 %v6672, %v6960
      %v6962 = vpop.f32.mrb[0].mxu0
      %v6963 = vpop.f32.mrb[0].mxu0
      %v6964 = vadd.f32 %v6675, %v6963
      %v6965 = vpop.f32.mrb[0].mxu0
      %6966 = vmatprep.mubr.bf16.mxu0 0
      %6967 = vmatmul.mubr.bf16.gmra.mrb[0].mxu0 %v6520
      %v6968 = vpop.f32.mrb[0].mxu0
      %v6969 = vadd.f32 %v6680, %v6968
      %v6970 = vpop.f32.mrb[0].mxu0
      %v6971 = vpop.f32.mrb[0].mxu0
      %v6972 = vadd.f32 %v6683, %v6971
      %v6973 = vpop.f32.mrb[0].mxu0
      %6974 = vmatprep.mubr.bf16.mxu0 0
      %6975 = vmatmul.mubr.bf16.gmra.mrb[0].mxu0 %v6523
      %v6976 = vpop.f32.mrb[0].mxu0
      %v6977 = vadd.f32 %v6688, %v6976
      %v6978 = vpop.f32.mrb[0].mxu0
      %v6979 = vpop.f32.mrb[0].mxu0
      %v6980 = vadd.f32 %v6691, %v6979
      %v6981 = vpop.f32.mrb[0].mxu0
      %6982 = vmatprep.mubr.bf16.mxu0 0
      %6983 = vmatmul.mubr.bf16.gmra.mrb[0].mxu0 %v6526
      %v6984 = vpop.f32.mrb[0].mxu0
      %v6985 = vadd.f32 %v6696, %v6984
      %v6986 = vpop.f32.mrb[0].mxu0
      %v6987 = vpop.f32.mrb[0].mxu0
      %v6988 = vadd.f32 %v6699, %v6987
      %v6989 = vpop.f32.mrb[0].mxu0
      %6990 = vmatprep.mubr.bf16.mxu0 0
      %6991 = vmatmul.mubr.bf16.gmra.mrb[0].mxu0 %v6529
      %v6992 = vpop.f32.mrb[0].mxu0
      %v6993 = vadd.f32 %v6704, %v6992
      %v6994 = vpop.f32.mrb[0].mxu0
      %v6995 = vpop.f32.mrb[0].mxu0
      %v6996 = vadd.f32 %v6707, %v6995
      %v6997 = vpop.f32.mrb[0].mxu0
      %6998 = vmatprep.mubr.bf16.mxu0 0
      %6999 = vmatmul.mubr.bf16.gmra.mrb[0].mxu0 %v6532
      %v7000 = vpop.f32.mrb[0].mxu0
      %v7001 = vadd.f32 %v6712, %v7000
      %v7002 = vpop.f32.mrb[0].mxu0
      %v7003 = vpop.f32.mrb[0].mxu0
      %v7004 = vadd.f32 %v6715, %v7003
      %v7005 = vpop.f32.mrb[0].mxu0
      %7006 = vmatprep.mubr.bf16.mxu0 0
      %7007 = vmatmul.mubr.bf16.gmra.mrb[0].mxu0 %v6535
      %v7008 = vpop.f32.mrb[0].mxu0
      %v7009 = vadd.f32 %v6720, %v7008
      %v7010 = vpop.f32.mrb[0].mxu0
      %v7011 = vpop.f32.mrb[0].mxu0
      %v7012 = vadd.f32 %v6723, %v7011
      %v7013 = vpop.f32.mrb[0].mxu0
      %7014 = vmatprep.mubr.bf16.mxu0 0
      %7015 = vmatmul.mubr.bf16.gmra.mrb[0].mxu0 %v6538
      %v7016 = vpop.f32.mrb[0].mxu0
      %v7017 = vadd.f32 %v6728, %v7016
      %v7018 = vpop.f32.mrb[0].mxu0
      %v7019 = vpop.f32.mrb[0].mxu0
      %v7020 = vadd.f32 %v6731, %v7019
      %v7021 = vpop.f32.mrb[0].mxu0
      %7022 = vmatprep.mubr.bf16.mxu0 0
      %7023 = vmatmul.mubr.bf16.gmra.mrb[0].mxu0 %v6541
      %v7024 = vpop.f32.mrb[0].mxu0
      %v7025 = vadd.f32 %v6736, %v7024
      %v7026 = vpop.f32.mrb[0].mxu0
      %v7027 = vpop.f32.mrb[0].mxu0
      %v7028 = vadd.f32 %v6739, %v7027
      %v7029 = vpop.f32.mrb[0].mxu0
      %7030 = vmatprep.mubr.bf16.mxu0 0
      %7031 = vmatmul.mubr.bf16.gmra.mrb[0].mxu0 %v6544
      %v7032 = vpop.f32.mrb[0].mxu0
      %v7033 = vadd.f32 %v6744, %v7032
      %v7034 = vpop.f32.mrb[0].mxu0
      %v7035 = vpop.f32.mrb[0].mxu0
      %v7036 = vadd.f32 %v6747, %v7035
      %v7037 = vpop.f32.mrb[0].mxu0
      %7038 = vmatprep.mubr.bf16.mxu0 0
      %7039 = vmatmul.mubr.bf16.gmra.mrb[0].mxu0 %v6547
      %v7040 = vpop.f32.mrb[0].mxu0
      %v7041 = vadd.f32 %v6752, %v7040
      %v7042 = vpop.f32.mrb[0].mxu0
      %v7043 = vpop.f32.mrb[0].mxu0
      %v7044 = vadd.f32 %v6755, %v7043
      %v7045 = vpop.f32.mrb[0].mxu0
      %7046 = vmatprep.mubr.bf16.mxu0 0
      %7047 = vmatmul.mubr.bf16.gmra.mrb[0].mxu0 %v6550
      %v7048 = vpop.f32.mrb[0].mxu0
      %v7049 = vadd.f32 %v6760, %v7048
      %v7050 = vpop.f32.mrb[0].mxu0
      %v7051 = vpop.f32.mrb[0].mxu0
      %v7052 = vadd.f32 %v6763, %v7051
      %v7053 = vpop.f32.mrb[0].mxu0
      %7054 = vmatprep.mubr.bf16.mxu0 0
      %7055 = vmatmul.mubr.bf16.gmra.mrb[0].mxu0 %v6553
      %v7056 = vpop.f32.mrb[0].mxu0
      %v7057 = vadd.f32 %v6768, %v7056
      %v7058 = vpop.f32.mrb[0].mxu0
      %v7059 = vpop.f32.mrb[0].mxu0
      %v7060 = vadd.f32 %v6771, %v7059
      %v7061 = vpop.f32.mrb[0].mxu0
      %7062 = vmatprep.mubr.bf16.mxu0 0
      %7063 = vmatmul.mubr.bf16.gmra.mrb[0].mxu0 %v6556
      %v7064 = vpop.f32.mrb[0].mxu0
      %v7065 = vadd.f32 %v6776, %v7064
      %v7066 = vpop.f32.mrb[0].mxu0
      %v7067 = vpop.f32.mrb[0].mxu0
      %v7068 = vadd.f32 %v6779, %v7067
      %v7069 = vpop.f32.mrb[0].mxu0
      %7070 = vmatprep.mubr.bf16.mxu0 0
      %7071 = vmatmul.mubr.bf16.gmra.mrb[0].mxu0 %v6559
      %v7072 = vpop.f32.mrb[0].mxu0
      %v7073 = vadd.f32 %v6784, %v7072
      %v7074 = vpop.f32.mrb[0].mxu0
      %v7075 = vpop.f32.mrb[0].mxu0
      %v7076 = vadd.f32 %v6787, %v7075
      %v7077 = vpop.f32.mrb[0].mxu0
      %7078 = vmatprep.mubr.bf16.mxu0 0
      %7079 = vmatmul.mubr.bf16.gmra.mrb[0].mxu0 %v6562
      %v7080 = vpop.f32.mrb[0].mxu0
      %v7081 = vadd.f32 %v6792, %v7080
      %v7082 = vpop.f32.mrb[0].mxu0
      %v7083 = vpop.f32.mrb[0].mxu0
      %v7084 = vadd.f32 %v6795, %v7083
      %v7085 = vpop.f32.mrb[0].mxu0
      %7086 = vmatprep.mubr.bf16.mxu0 0
      %7087 = vmatmul.mubr.bf16.gmra.mrb[0].mxu0 %v6565
      %v7088 = vpop.f32.mrb[0].mxu0
      %v7089 = vadd.f32 %v6800, %v7088
      %v7090 = vpop.f32.mrb[0].mxu0
      %v7091 = vpop.f32.mrb[0].mxu0
      %v7092 = vadd.f32 %v6803, %v7091
      %v7093 = vpop.f32.mrb[0].mxu0
      %7094 = vmatprep.mubr.bf16.mxu0 0
      %7095 = vmatmul.mubr.bf16.gmra.mrb[0].mxu0 %v6568
      %v7096 = vpop.f32.mrb[0].mxu0
      %v7097 = vadd.f32 %v6808, %v7096
      %v7098 = vpop.f32.mrb[0].mxu0
      %v7099 = vpop.f32.mrb[0].mxu0
      %v7100 = vadd.f32 %v6811, %v7099
      %v7101 = vpop.f32.mrb[0].mxu0
      %7102 = vmatprep.mubr.bf16.mxu0 0
      %7103 = vmatmul.mubr.bf16.gmra.mrb[0].mxu0 %v6571
      %v7104 = vpop.f32.mrb[0].mxu0
      %v7105 = vadd.f32 %v6816, %v7104
      %v7106 = vpop.f32.mrb[0].mxu0
      %v7107 = vpop.f32.mrb[0].mxu0
      %v7108 = vadd.f32 %v6819, %v7107
      %v7109 = vpop.f32.mrb[0].mxu0
      %7110 = vmatprep.mubr.bf16.mxu0 0
      %7111 = vmatmul.mubr.bf16.gmra.mrb[0].mxu0 %v6574
      %v7112 = vpop.f32.mrb[0].mxu0
      %v7113 = vadd.f32 %v6824, %v7112
      %v7114 = vpop.f32.mrb[0].mxu0
      %v7115 = vpop.f32.mrb[0].mxu0
      %v7116 = vadd.f32 %v6827, %v7115
      %v7117 = vpop.f32.mrb[0].mxu0
      %7118 = vmatprep.mubr.bf16.mxu0 0
      %7119 = vmatmul.mubr.bf16.gmra.mrb[0].mxu0 %v6577
      %v7120 = vpop.f32.mrb[0].mxu0
      %v7121 = vadd.f32 %v6832, %v7120
      %v7122 = vpop.f32.mrb[0].mxu0
      %v7123 = vpop.f32.mrb[0].mxu0
      %v7124 = vadd.f32 %v6835, %v7123
      %v7125 = vpop.f32.mrb[0].mxu0
      %7126 = vmatprep.mubr.bf16.mxu0 0
      %7127 = vmatmul.mubr.bf16.gmra.mrb[0].mxu0 %v6580
      %v7128 = vpop.f32.mrb[0].mxu0
      %v7129 = vadd.f32 %v6840, %v7128
      %v7130 = vpop.f32.mrb[0].mxu0
      %v7131 = vpop.f32.mrb[0].mxu0
      %v7132 = vadd.f32 %v6843, %v7131
      %v7133 = vpop.f32.mrb[0].mxu0
      %7134 = vmatprep.mubr.bf16.mxu0 0
      %7135 = vmatmul.mubr.bf16.gmra.mrb[0].mxu0 %v6583
      %v7136 = vpop.f32.mrb[0].mxu0
      %v7137 = vadd.f32 %v6848, %v7136
      %v7138 = vpop.f32.mrb[0].mxu0
      %v7139 = vpop.f32.mrb[0].mxu0
      %v7140 = vadd.f32 %v6851, %v7139
      %v7141 = vpop.f32.mrb[0].mxu0
      %7142 = vmatprep.mubr.bf16.mxu0 0
      %7143 = vmatmul.mubr.bf16.gmra.mrb[0].mxu0 %v6586
      %v7144 = vpop.f32.mrb[0].mxu0
      %v7145 = vadd.f32 %v6856, %v7144
      %v7146 = vpop.f32.mrb[0].mxu0
      %v7147 = vpop.f32.mrb[0].mxu0
      %v7148 = vadd.f32 %v6859, %v7147
      %v7149 = vpop.f32.mrb[0].mxu0
      %7150 = vmatprep.mubr.bf16.mxu0 0
      %7151 = vmatmul.mubr.bf16.gmra.mrb[0].mxu0 %v6589
      %v7152 = vpop.f32.mrb[0].mxu0
      %v7153 = vadd.f32 %v6864, %v7152
      %v7154 = vpop.f32.mrb[0].mxu0
      %v7155 = vpop.f32.mrb[0].mxu0
      %v7156 = vadd.f32 %v6867, %v7155
      %v7157 = vpop.f32.mrb[0].mxu0
      %7158 = vmatprep.mubr.bf16.mxu0 0
      %7159 = vmatmul.mubr.bf16.gmra.mrb[0].mxu0 %v6592
      %v7160 = vpop.f32.mrb[0].mxu0
      %v7161 = vadd.f32 %v6872, %v7160
      %v7162 = vpop.f32.mrb[0].mxu0
      %v7163 = vpop.f32.mrb[0].mxu0
      %v7164 = vadd.f32 %v6875, %v7163
      %v7165 = vpop.f32.mrb[0].mxu0
      %7166 = vmatprep.mubr.bf16.mxu0 0
      %7167 = vmatmul.mubr.bf16.gmra.mrb[0].mxu0 %v6595
      %v7168 = vpop.f32.mrb[0].mxu0
      %v7169 = vadd.f32 %v6880, %v7168
      %v7170 = vpop.f32.mrb[0].mxu0
      %v7171 = vpop.f32.mrb[0].mxu0
      %v7172 = vadd.f32 %v6883, %v7171
      %v7173 = vpop.f32.mrb[0].mxu0
      %7174 = vdwg.mxu0
      %v7175 = vmax.f32 %v6921, %v6985
      %v7176 = vmax.f32 %v6924, %v6988
      %v7177 = vmax.f32 %v6929, %v6993
      %v7178 = vmax.f32 %v6932, %v6996
      %v7179 = vmax.f32 %v6937, %v7001
      %v7180 = vmax.f32 %v6940, %v7004
      %v7181 = vmax.f32 %v6945, %v7009
      %v7182 = vmax.f32 %v6948, %v7012
      %v7183 = vmax.f32 %v6953, %v7017
      %v7184 = vmax.f32 %v6956, %v7020
      %v7185 = vmax.f32 %v6961, %v7025
      %v7186 = vmax.f32 %v6964, %v7028
      %v7187 = vmax.f32 %v6969, %v7033
      %v7188 = vmax.f32 %v6972, %v7036
      %v7189 = vmax.f32 %v6977, %v7041
      %v7190 = vmax.f32 %v6980, %v7044
      %v7191 = vmax.f32 %v7049, %v7113
      %v7192 = vmax.f32 %v7052, %v7116
      %v7193 = vmax.f32 %v7057, %v7121
      %v7194 = vmax.f32 %v7060, %v7124
      %v7195 = vmax.f32 %v7065, %v7129
      %v7196 = vmax.f32 %v7068, %v7132
      %v7197 = vmax.f32 %v7073, %v7137
      %v7198 = vmax.f32 %v7076, %v7140
      %v7199 = vmax.f32 %v7081, %v7145
      %v7200 = vmax.f32 %v7084, %v7148
      %v7201 = vmax.f32 %v7089, %v7153
      %v7202 = vmax.f32 %v7092, %v7156
      %v7203 = vmax.f32 %v7097, %v7161
      %v7204 = vmax.f32 %v7100, %v7164
      %v7205 = vmax.f32 %v7105, %v7169
      %v7206 = vmax.f32 %v7108, %v7172
      %v7207 = vmax.f32 %v7175, %v7191
      %v7208 = vmax.f32 %v7176, %v7192
      %v7209 = vmax.f32 %v7177, %v7193
      %v7210 = vmax.f32 %v7178, %v7194
      %v7211 = vmax.f32 %v7179, %v7195
      %v7212 = vmax.f32 %v7180, %v7196
      %v7213 = vmax.f32 %v7181, %v7197
      %v7214 = vmax.f32 %v7182, %v7198
      %v7215 = vmax.f32 %v7183, %v7199
      %v7216 = vmax.f32 %v7184, %v7200
      %v7217 = vmax.f32 %v7185, %v7201
      %v7218 = vmax.f32 %v7186, %v7202
      %v7219 = vmax.f32 %v7187, %v7203
      %v7220 = vmax.f32 %v7188, %v7204
      %v7221 = vmax.f32 %v7189, %v7205
      %v7222 = vmax.f32 %v7190, %v7206
      %v7223 = vld [vmem:[%s4] sm:$0x1]
      %v7225 = vlaneseq
      %v7226 = vshrl.u32 %v7225, 7
      %v7227 = vsub.s32 0, %v7226
      %v7228 = vrot.slane %v7223, %v7227
      %v7230 = vadd.f32 %v7207, %v7228
      %v7231 = vadd.f32 %v7208, %v7228
      %v7232 = vadd.f32 %v7209, %v7228
      %v7233 = vadd.f32 %v7210, %v7228
      %v7234 = vadd.f32 %v7211, %v7228
      %v7235 = vadd.f32 %v7212, %v7228
      %v7236 = vadd.f32 %v7213, %v7228
      %v7237 = vadd.f32 %v7214, %v7228
      %v7238 = vadd.f32 %v7215, %v7228
      %v7239 = vadd.f32 %v7216, %v7228
      %v7240 = vadd.f32 %v7217, %v7228
      %v7241 = vadd.f32 %v7218, %v7228
      %v7242 = vadd.f32 %v7219, %v7228
      %v7243 = vadd.f32 %v7220, %v7228
      %v7244 = vadd.f32 %v7221, %v7228
      %v7245 = vadd.f32 %v7222, %v7228
      %v7246 = vmax.f32 %v7230, 0.0
      %v7247 = vmax.f32 %v7231, 0.0
      %v7248 = vmax.f32 %v7232, 0.0
      %v7249 = vmax.f32 %v7233, 0.0
      %v7250 = vmax.f32 %v7234, 0.0
      %v7251 = vmax.f32 %v7235, 0.0
      %v7252 = vmax.f32 %v7236, 0.0
      %v7253 = vmax.f32 %v7237, 0.0
      %v7254 = vmax.f32 %v7238, 0.0
      %v7255 = vmax.f32 %v7239, 0.0
      %v7256 = vmax.f32 %v7240, 0.0
      %v7257 = vmax.f32 %v7241, 0.0
      %v7258 = vmax.f32 %v7242, 0.0
      %v7259 = vmax.f32 %v7243, 0.0
      %v7260 = vmax.f32 %v7244, 0.0
      %v7261 = vmax.f32 %v7245, 0.0
      %v7262 = vld [vmem:[%s12] sm:$0xff]
      %v7263 = vld [vmem:[%s12 + $0x8] sm:$0xff]
      %v7264 = vld [vmem:[%s12 + $0x10] sm:$0xff]
      %v7265 = vld [vmem:[%s12 + $0x18] sm:$0xff]
      %v7266 = vld [vmem:[%s12 + $0x20] sm:$0xff]
      %v7267 = vld [vmem:[%s12 + $0x28] sm:$0xff]
      %v7268 = vld [vmem:[%s12 + $0x30] sm:$0xff]
      %v7269 = vld [vmem:[%s12 + $0x38] sm:$0xff]
      %v7270 = vld [vmem:[%s12 + $0x40] sm:$0xff]
      %v7271 = vld [vmem:[%s12 + $0x48] sm:$0xff]
      %v7272 = vld [vmem:[%s12 + $0x50] sm:$0xff]
      %v7273 = vld [vmem:[%s12 + $0x58] sm:$0xff]
      %v7274 = vld [vmem:[%s12 + $0x60] sm:$0xff]
      %v7275 = vld [vmem:[%s12 + $0x68] sm:$0xff]
      %v7276 = vld [vmem:[%s12 + $0x70] sm:$0xff]
      %v7277 = vld [vmem:[%s12 + $0x78] sm:$0xff]
      %7278 = vmatprep.subr.mxu0 0.0
      %7279 = vmatpush1.msra.mxu0 %v7246
      %7280 = vmatprep.subr.mxu0 0.0
      %7281 = vmatpush1.msra.mxu0 %v7247
      %7282 = vmatprep.subr.mxu0 0.0
      %7283 = vmatpush1.msra.mxu0 %v7248
      %7284 = vmatprep.subr.mxu0 0.0
      %7285 = vmatpush1.msra.mxu0 %v7249
      %7286 = vmatprep.subr.mxu0 0.0
      %7287 = vmatpush1.msra.mxu0 %v7250
      %7288 = vmatprep.subr.mxu0 0.0
      %7289 = vmatpush1.msra.mxu0 %v7251
      %7290 = vmatprep.subr.mxu0 0.0
      %7291 = vmatpush1.msra.mxu0 %v7252
      %7292 = vmatprep.subr.mxu0 0.0
      %7293 = vmatpush1.msra.mxu0 %v7253
      %7294 = vmatprep.subr.mxu0 0.0
      %7295 = vmatpush1.msra.mxu0 %v7254
      %7296 = vmatprep.subr.mxu0 0.0
      %7297 = vmatpush1.msra.mxu0 %v7255
      %7298 = vmatprep.subr.mxu0 0.0
      %7299 = vmatpush1.msra.mxu0 %v7256
      %7300 = vmatprep.subr.mxu0 0.0
      %7301 = vmatpush1.msra.mxu0 %v7257
      %7302 = vmatprep.subr.mxu0 0.0
      %7303 = vmatpush1.msra.mxu0 %v7258
      %7304 = vmatprep.subr.mxu0 0.0
      %7305 = vmatpush1.msra.mxu0 %v7259
      %7306 = vmatprep.subr.mxu0 0.0
      %7307 = vmatpush1.msra.mxu0 %v7260
      %7308 = vmatprep.subr.mxu0 0.0
      %7309 = vmatpush1.msra.mxu0 %v7261
      %7310 = vmatprep.subr.mxu0 0.0
      %7311 = vmatpush1.msra.mxu0 0.0
      %7312 = vmatprep.subr.mxu0 0.0
      %7313 = vmatpush1.msra.mxu0 0.0
      %7314 = vmatprep.subr.mxu0 0.0
      %7315 = vmatpush1.msra.mxu0 0.0
      %7316 = vmatprep.subr.mxu0 0.0
      %7317 = vmatpush1.msra.mxu0 0.0
      %7318 = vmatprep.subr.mxu0 0.0
      %7319 = vmatpush1.msra.mxu0 0.0
      %7320 = vmatprep.subr.mxu0 0.0
      %7321 = vmatpush1.msra.mxu0 0.0
      %7322 = vmatprep.subr.mxu0 0.0
      %7323 = vmatpush1.msra.mxu0 0.0
      %7324 = vmatprep.subr.mxu0 0.0
      %7325 = vmatpush1.msra.mxu0 0.0
      %7326 = vmatprep.subr.mxu0 0.0
      %7327 = vmatpush1.msra.mxu0 0.0
      %7328 = vmatprep.subr.mxu0 0.0
      %7329 = vmatpush1.msra.mxu0 0.0
      %7330 = vmatprep.subr.mxu0 0.0
      %7331 = vmatpush1.msra.mxu0 0.0
      %7332 = vmatprep.subr.mxu0 0.0
      %7333 = vmatpush1.msra.mxu0 0.0
      %7334 = vmatprep.subr.mxu0 0.0
      %7335 = vmatpush1.msra.mxu0 0.0
      %7336 = vmatprep.subr.mxu0 0.0
      %7337 = vmatpush1.msra.mxu0 0.0
      %7338 = vmatprep.subr.mxu0 0.0
      %7339 = vmatpush1.msra.mxu0 0.0
      %7340 = vmatprep.subr.mxu0 0.0
      %7341 = vmatpush1.msra.mxu0 0.0
      %7342 = vmatprep.mubr.f32.mxu0 0.0
      %7343 = vmatmul.mubr.f32.gmra.mrb[0].mxu0 %v7262
      %v7344 = vpop.f32.mrb[0].mxu0
      %v7345 = vadd.f32 0.0, %v7344
      %v7346 = vpop.f32.mrb[0].mxu0
      %7347 = vmatprep.mubr.f32.mxu0 0.0
      %7348 = vmatmul.mubr.f32.gmra.mrb[0].mxu0 %v7263
      %v7349 = vpop.f32.mrb[0].mxu0
      %v7350 = vadd.f32 0.0, %v7349
      %v7351 = vpop.f32.mrb[0].mxu0
      %7352 = vmatprep.mubr.f32.mxu0 0.0
      %7353 = vmatmul.mubr.f32.gmra.mrb[0].mxu0 %v7264
      %v7354 = vpop.f32.mrb[0].mxu0
      %v7355 = vadd.f32 0.0, %v7354
      %v7356 = vpop.f32.mrb[0].mxu0
      %7357 = vmatprep.mubr.f32.mxu0 0.0
      %7358 = vmatmul.mubr.f32.gmra.mrb[0].mxu0 %v7265
      %v7359 = vpop.f32.mrb[0].mxu0
      %v7360 = vadd.f32 0.0, %v7359
      %v7361 = vpop.f32.mrb[0].mxu0
      %7362 = vmatprep.mubr.f32.mxu0 0.0
      %7363 = vmatmul.mubr.f32.gmra.mrb[0].mxu0 %v7266
      %v7364 = vpop.f32.mrb[0].mxu0
      %v7365 = vadd.f32 0.0, %v7364
      %v7366 = vpop.f32.mrb[0].mxu0
      %7367 = vmatprep.mubr.f32.mxu0 0.0
      %7368 = vmatmul.mubr.f32.gmra.mrb[0].mxu0 %v7267
      %v7369 = vpop.f32.mrb[0].mxu0
      %v7370 = vadd.f32 0.0, %v7369
      %v7371 = vpop.f32.mrb[0].mxu0
      %7372 = vmatprep.mubr.f32.mxu0 0.0
      %7373 = vmatmul.mubr.f32.gmra.mrb[0].mxu0 %v7268
      %v7374 = vpop.f32.mrb[0].mxu0
      %v7375 = vadd.f32 0.0, %v7374
      %v7376 = vpop.f32.mrb[0].mxu0
      %7377 = vmatprep.mubr.f32.mxu0 0.0
      %7378 = vmatmul.mubr.f32.gmra.mrb[0].mxu0 %v7269
      %v7379 = vpop.f32.mrb[0].mxu0
      %v7380 = vadd.f32 0.0, %v7379
      %v7381 = vpop.f32.mrb[0].mxu0
      %7382 = vmatprep.mubr.f32.mxu0 0.0
      %7383 = vmatmul.mubr.f32.gmra.mrb[0].mxu0 %v7270
      %v7384 = vpop.f32.mrb[0].mxu0
      %v7385 = vadd.f32 0.0, %v7384
      %v7386 = vpop.f32.mrb[0].mxu0
      %7387 = vmatprep.mubr.f32.mxu0 0.0
      %7388 = vmatmul.mubr.f32.gmra.mrb[0].mxu0 %v7271
      %v7389 = vpop.f32.mrb[0].mxu0
      %v7390 = vadd.f32 0.0, %v7389
      %v7391 = vpop.f32.mrb[0].mxu0
      %7392 = vmatprep.mubr.f32.mxu0 0.0
      %7393 = vmatmul.mubr.f32.gmra.mrb[0].mxu0 %v7272
      %v7394 = vpop.f32.mrb[0].mxu0
      %v7395 = vadd.f32 0.0, %v7394
      %v7396 = vpop.f32.mrb[0].mxu0
      %7397 = vmatprep.mubr.f32.mxu0 0.0
      %7398 = vmatmul.mubr.f32.gmra.mrb[0].mxu0 %v7273
      %v7399 = vpop.f32.mrb[0].mxu0
      %v7400 = vadd.f32 0.0, %v7399
      %v7401 = vpop.f32.mrb[0].mxu0
      %7402 = vmatprep.mubr.f32.mxu0 0.0
      %7403 = vmatmul.mubr.f32.gmra.mrb[0].mxu0 %v7274
      %v7404 = vpop.f32.mrb[0].mxu0
      %v7405 = vadd.f32 0.0, %v7404
      %v7406 = vpop.f32.mrb[0].mxu0
      %7407 = vmatprep.mubr.f32.mxu0 0.0
      %7408 = vmatmul.mubr.f32.gmra.mrb[0].mxu0 %v7275
      %v7409 = vpop.f32.mrb[0].mxu0
      %v7410 = vadd.f32 0.0, %v7409
      %v7411 = vpop.f32.mrb[0].mxu0
      %7412 = vmatprep.mubr.f32.mxu0 0.0
      %7413 = vmatmul.mubr.f32.gmra.mrb[0].mxu0 %v7276
      %v7414 = vpop.f32.mrb[0].mxu0
      %v7415 = vadd.f32 0.0, %v7414
      %v7416 = vpop.f32.mrb[0].mxu0
      %7417 = vmatprep.mubr.f32.mxu0 0.0
      %7418 = vmatmul.mubr.f32.gmra.mrb[0].mxu0 %v7277
      %v7419 = vpop.f32.mrb[0].mxu0
      %v7420 = vadd.f32 0.0, %v7419
      %v7421 = vpop.f32.mrb[0].mxu0
      %7422 = vdwg.mxu0
      %v7423 = vld [vmem:[%s8] sm:$0xff]
      %v7424 = vld [vmem:[%s8 + $0x8] sm:$0xff]
      %v7425 = vld [vmem:[%s8 + $0x10] sm:$0xff]
      %v7426 = vld [vmem:[%s8 + $0x18] sm:$0xff]
      %vm7431 = vcmask 1044480
      %v7432 = vrot.slane %v7405, 3
      %v7433 = vrot.slane %v7410, 3
      %v7434 = vsel %vm7431, %v7432, %v7433
      %v7435 = vrot.slane %v7415, 3
      %v7436 = vsel %vm7431, %v7433, %v7435
      %v7437 = vrot.slane %v7420, 3
      %v7438 = vsel %vm7431, %v7435, %v7437
      %v7443 = vsel %vm7431, 0.0, %v7432
      %7445 = vset.pattern.permute.xlu0 0
      %7446 = vperm.xlu0 %7445, %v7423
      %v7447 = vpop.permute.xlu0 %7446
      %7450 = vset.pattern.permute.xlu0 0
      %7451 = vperm.xlu0 %7450, %v7424
      %v7452 = vpop.permute.xlu0 %7451
      %7455 = vset.pattern.permute.xlu0 0
      %7456 = vperm.xlu0 %7455, %v7425
      %v7457 = vpop.permute.xlu0 %7456
      %7460 = vset.pattern.permute.xlu0 0
      %7461 = vperm.xlu0 %7460, %v7426
      %v7462 = vpop.permute.xlu0 %7461
      %v7464 = vmul.f32 %v7443, %v7447
      %v7465 = vmul.f32 %v7434, %v7452
      %v7466 = vmul.f32 %v7436, %v7457
      %v7467 = vmul.f32 %v7438, %v7462
      %s7468 = scalar_lea.vmem %s8, 32
      %v7469 = vld [vmem:[%s7468] sm:$0xff]
      %v7470 = vld [vmem:[%s7468 + $0x8] sm:$0xff]
      %v7471 = vld [vmem:[%s7468 + $0x10] sm:$0xff]
      %v7472 = vld [vmem:[%s7468 + $0x18] sm:$0xff]
      %vm7477 = vcmask 1043456
      %v7478 = vrot.slane %v7385, 4
      %v7479 = vrot.slane %v7390, 4
      %v7480 = vsel %vm7477, %v7478, %v7479
      %v7481 = vrot.slane %v7395, 4
      %v7482 = vsel %vm7477, %v7479, %v7481
      %v7483 = vrot.slane %v7400, 4
      %v7484 = vsel %vm7477, %v7481, %v7483
      %v7489 = vsel %vm7477, 0.0, %v7478
      %7491 = vset.pattern.permute.xlu0 0
      %7492 = vperm.xlu0 %7491, %v7469
      %v7493 = vpop.permute.xlu0 %7492
      %7496 = vset.pattern.permute.xlu0 0
      %7497 = vperm.xlu0 %7496, %v7470
      %v7498 = vpop.permute.xlu0 %7497
      %7501 = vset.pattern.permute.xlu0 0
      %7502 = vperm.xlu0 %7501, %v7471
      %v7503 = vpop.permute.xlu0 %7502
      %7506 = vset.pattern.permute.xlu0 0
      %7507 = vperm.xlu0 %7506, %v7472
      %v7508 = vpop.permute.xlu0 %7507
      %v7510 = vmul.f32 %v7489, %v7493
      %v7511 = vmul.f32 %v7480, %v7498
      %v7512 = vmul.f32 %v7482, %v7503
      %v7513 = vmul.f32 %v7484, %v7508
      %v7514 = vrot.slane %v7405, 4
      %v7515 = vrot.slane %v7410, 4
      %v7516 = vsel %vm7477, %v7514, %v7515
      %v7517 = vrot.slane %v7415, 4
      %v7518 = vsel %vm7477, %v7515, %v7517
      %v7519 = vrot.slane %v7420, 4
      %v7520 = vsel %vm7477, %v7517, %v7519
      %v7525 = vsel %vm7477, 0.0, %v7514
      %v7526 = vmul.f32 %v7525, %v7493
      %v7527 = vmul.f32 %v7516, %v7498
      %v7528 = vmul.f32 %v7518, %v7503
      %v7529 = vmul.f32 %v7520, %v7508
      %s7530 = scalar_lea.vmem %s8, 96
      %v7531 = vld [vmem:[%s7530] sm:$0xff]
      %v7532 = vld [vmem:[%s7530 + $0x8] sm:$0xff]
      %v7533 = vld [vmem:[%s7530 + $0x10] sm:$0xff]
      %v7534 = vld [vmem:[%s7530 + $0x18] sm:$0xff]
      %v7539 = vrot.slane %v7365, 7
      %v7540 = vrot.slane %v7370, 7
      %v7541 = vsel %vm3262, %v7539, %v7540
      %v7542 = vrot.slane %v7375, 7
      %v7543 = vsel %vm3262, %v7540, %v7542
      %v7544 = vrot.slane %v7380, 7
      %v7545 = vsel %vm3262, %v7542, %v7544
      %v7550 = vsel %vm3262, 0.0, %v7539
      %7552 = vset.pattern.permute.xlu0 0
      %7553 = vperm.xlu0 %7552, %v7531
      %v7554 = vpop.permute.xlu0 %7553
      %7557 = vset.pattern.permute.xlu0 0
      %7558 = vperm.xlu0 %7557, %v7532
      %v7559 = vpop.permute.xlu0 %7558
      %7562 = vset.pattern.permute.xlu0 0
      %7563 = vperm.xlu0 %7562, %v7533
      %v7564 = vpop.permute.xlu0 %7563
      %7567 = vset.pattern.permute.xlu0 0
      %7568 = vperm.xlu0 %7567, %v7534
      %v7569 = vpop.permute.xlu0 %7568
      %v7571 = vmul.f32 %v7550, %v7554
      %v7572 = vmul.f32 %v7541, %v7559
      %v7573 = vmul.f32 %v7543, %v7564
      %v7574 = vmul.f32 %v7545, %v7569
      %s7575 = scalar_lea.vmem %s8, 128
      %v7576 = vld [vmem:[%s7575] sm:$0xff]
      %v7577 = vld [vmem:[%s7575 + $0x8] sm:$0xff]
      %v7578 = vld [vmem:[%s7575 + $0x10] sm:$0xff]
      %v7579 = vld [vmem:[%s7575 + $0x18] sm:$0xff]
      %7581 = vset.pattern.permute.xlu0 0
      %7582 = vperm.xlu0 %7581, %v7576
      %v7583 = vpop.permute.xlu0 %7582
      %7586 = vset.pattern.permute.xlu0 0
      %7587 = vperm.xlu0 %7586, %v7577
      %v7588 = vpop.permute.xlu0 %7587
      %7591 = vset.pattern.permute.xlu0 0
      %7592 = vperm.xlu0 %7591, %v7578
      %v7593 = vpop.permute.xlu0 %7592
      %7596 = vset.pattern.permute.xlu0 0
      %7597 = vperm.xlu0 %7596, %v7579
      %v7598 = vpop.permute.xlu0 %7597
      %v7600 = vmul.f32 %v7345, %v7583
      %v7601 = vmul.f32 %v7350, %v7588
      %v7602 = vmul.f32 %v7355, %v7593
      %v7603 = vmul.f32 %v7360, %v7598
      %v7604 = vmul.f32 %v7365, %v7583
      %v7605 = vmul.f32 %v7370, %v7588
      %v7606 = vmul.f32 %v7375, %v7593
      %v7607 = vmul.f32 %v7380, %v7598
      %v7608 = vrot.slane %v7405, 7
      %v7609 = vrot.slane %v7410, 7
      %v7610 = vsel %vm3262, %v7608, %v7609
      %v7611 = vrot.slane %v7415, 7
      %v7612 = vsel %vm3262, %v7609, %v7611
      %v7613 = vrot.slane %v7420, 7
      %v7614 = vsel %vm3262, %v7611, %v7613
      %v7619 = vsel %vm3262, 0.0, %v7608
      %v7620 = vmul.f32 %v7619, %v7554
      %v7621 = vmul.f32 %v7610, %v7559
      %v7622 = vmul.f32 %v7612, %v7564
      %v7623 = vmul.f32 %v7614, %v7569
      %v7624 = vmul.f32 %v7385, %v7583
      %v7625 = vmul.f32 %v7390, %v7588
      %v7626 = vmul.f32 %v7395, %v7593
      %v7627 = vmul.f32 %v7400, %v7598
      %v7628 = vmul.f32 %v7405, %v7583
      %v7629 = vmul.f32 %v7410, %v7588
      %v7630 = vmul.f32 %v7415, %v7593
      %v7631 = vmul.f32 %v7420, %v7598
      %7636 = vrot.lane.b32.xlu0 %v7510, 32
      %v7637 = vpop.permute.xlu0 %7636
      %7638 = vrot.lane.b32.xlu0 %v7511, 32
      %v7639 = vpop.permute.xlu0 %7638
      %7640 = vrot.lane.b32.xlu0 %v7512, 32
      %v7641 = vpop.permute.xlu0 %7640
      %7642 = vrot.lane.b32.xlu0 %v7513, 32
      %v7643 = vpop.permute.xlu0 %7642
      %7652 = vrot.lane.b32.xlu0 %v7526, 64
      %v7653 = vpop.permute.xlu0 %7652
      %7654 = vrot.lane.b32.xlu0 %v7527, 64
      %v7655 = vpop.permute.xlu0 %7654
      %7656 = vrot.lane.b32.xlu0 %v7528, 64
      %v7657 = vpop.permute.xlu0 %7656
      %7658 = vrot.lane.b32.xlu0 %v7529, 64
      %v7659 = vpop.permute.xlu0 %7658
      %7668 = vrot.lane.b32.xlu0 %v7571, 96
      %v7669 = vpop.permute.xlu0 %7668
      %7670 = vrot.lane.b32.xlu0 %v7572, 96
      %v7671 = vpop.permute.xlu0 %7670
      %7672 = vrot.lane.b32.xlu0 %v7573, 96
      %v7673 = vpop.permute.xlu0 %7672
      %7674 = vrot.lane.b32.xlu0 %v7574, 96
      %v7675 = vpop.permute.xlu0 %7674
      %7684 = vrot.lane.b32.xlu0 %v7604, 32
      %v7685 = vpop.permute.xlu0 %7684
      %7686 = vrot.lane.b32.xlu0 %v7605, 32
      %v7687 = vpop.permute.xlu0 %7686
      %7688 = vrot.lane.b32.xlu0 %v7606, 32
      %v7689 = vpop.permute.xlu0 %7688
      %7690 = vrot.lane.b32.xlu0 %v7607, 32
      %v7691 = vpop.permute.xlu0 %7690
      %7700 = vrot.lane.b32.xlu0 %v7620, 64
      %v7701 = vpop.permute.xlu0 %7700
      %7702 = vrot.lane.b32.xlu0 %v7621, 64
      %v7703 = vpop.permute.xlu0 %7702
      %7704 = vrot.lane.b32.xlu0 %v7622, 64
      %v7705 = vpop.permute.xlu0 %7704
      %7706 = vrot.lane.b32.xlu0 %v7623, 64
      %v7707 = vpop.permute.xlu0 %7706
      %7716 = vrot.lane.b32.xlu0 %v7624, 96
      %v7717 = vpop.permute.xlu0 %7716
      %7718 = vrot.lane.b32.xlu0 %v7625, 96
      %v7719 = vpop.permute.xlu0 %7718
      %7720 = vrot.lane.b32.xlu0 %v7626, 96
      %v7721 = vpop.permute.xlu0 %7720
      %7722 = vrot.lane.b32.xlu0 %v7627, 96
      %v7723 = vpop.permute.xlu0 %7722
      %v7728 = vsel %vm1462, %v7464, %v7637
      %v7729 = vsel %vm1462, %v7465, %v7639
      %v7730 = vsel %vm1462, %v7466, %v7641
      %v7731 = vsel %vm1462, %v7467, %v7643
      %v7732 = vsel %vm4289, %v7728, %v7653
      %v7733 = vsel %vm4289, %v7729, %v7655
      %v7734 = vsel %vm4289, %v7730, %v7657
      %v7735 = vsel %vm4289, %v7731, %v7659
      %v7736 = vsel %vm4306, %v7732, %v7669
      %v7737 = vsel %vm4306, %v7733, %v7671
      %v7738 = vsel %vm4306, %v7734, %v7673
      %v7739 = vsel %vm4306, %v7735, %v7675
      %v7740 = vsel %vm1462, %v7600, %v7685
      %v7741 = vsel %vm1462, %v7601, %v7687
      %v7742 = vsel %vm1462, %v7602, %v7689
      %v7743 = vsel %vm1462, %v7603, %v7691
      %v7744 = vsel %vm4289, %v7740, %v7701
      %v7745 = vsel %vm4289, %v7741, %v7703
      %v7746 = vsel %vm4289, %v7742, %v7705
      %v7747 = vsel %vm4289, %v7743, %v7707
      %v7748 = vsel %vm4306, %v7744, %v7717
      %v7749 = vsel %vm4306, %v7745, %v7719
      %v7750 = vsel %vm4306, %v7746, %v7721
      %v7751 = vsel %vm4306, %v7747, %v7723
      %s7752 = scalar_lea.vmem %s8, 64
      %v7753 = vld [vmem:[%s7752] sm:$0xff]
      %v7754 = vld [vmem:[%s7752 + $0x8] sm:$0xff]
      %v7755 = vld [vmem:[%s7752 + $0x10] sm:$0xff]
      %v7756 = vld [vmem:[%s7752 + $0x18] sm:$0xff]
      %vm7757 = vcmask 1042432
      %v7758 = vrot.slane %v7385, 5
      %v7759 = vrot.slane %v7390, 5
      %v7760 = vsel %vm7757, %v7758, %v7759
      %v7761 = vrot.slane %v7395, 5
      %v7762 = vsel %vm7757, %v7759, %v7761
      %v7763 = vrot.slane %v7400, 5
      %v7764 = vsel %vm7757, %v7761, %v7763
      %v7769 = vsel %vm7757, 0.0, %v7758
      %7771 = vset.pattern.permute.xlu0 0
      %7772 = vperm.xlu0 %7771, %v7753
      %v7773 = vpop.permute.xlu0 %7772
      %7776 = vset.pattern.permute.xlu0 0
      %7777 = vperm.xlu0 %7776, %v7754
      %v7778 = vpop.permute.xlu0 %7777
      %7781 = vset.pattern.permute.xlu0 0
      %7782 = vperm.xlu0 %7781, %v7755
      %v7783 = vpop.permute.xlu0 %7782
      %7786 = vset.pattern.permute.xlu0 0
      %7787 = vperm.xlu0 %7786, %v7756
      %v7788 = vpop.permute.xlu0 %7787
      %v7790 = vmul.f32 %v7769, %v7773
      %v7791 = vmul.f32 %v7760, %v7778
      %v7792 = vmul.f32 %v7762, %v7783
      %v7793 = vmul.f32 %v7764, %v7788
      %s7794 = scalar_lea.vmem %s8, 160
      %v7795 = vld [vmem:[%s7794] sm:$0xff]
      %v7796 = vld [vmem:[%s7794 + $0x8] sm:$0xff]
      %v7797 = vld [vmem:[%s7794 + $0x10] sm:$0xff]
      %v7798 = vld [vmem:[%s7794 + $0x18] sm:$0xff]
      %v7803 = vrot.slane %v7345, 1
      %v7804 = vrot.slane %v7350, 1
      %v7805 = vsel %vm4404, %v7803, %v7804
      %v7806 = vrot.slane %v7355, 1
      %v7807 = vsel %vm4404, %v7804, %v7806
      %v7808 = vrot.slane %v7360, 1
      %v7809 = vsel %vm4404, %v7806, %v7808
      %v7814 = vsel %vm4404, %v7808, 0.0
      %7816 = vset.pattern.permute.xlu0 0
      %7817 = vperm.xlu0 %7816, %v7795
      %v7818 = vpop.permute.xlu0 %7817
      %7821 = vset.pattern.permute.xlu0 0
      %7822 = vperm.xlu0 %7821, %v7796
      %v7823 = vpop.permute.xlu0 %7822
      %7826 = vset.pattern.permute.xlu0 0
      %7827 = vperm.xlu0 %7826, %v7797
      %v7828 = vpop.permute.xlu0 %7827
      %7831 = vset.pattern.permute.xlu0 0
      %7832 = vperm.xlu0 %7831, %v7798
      %v7833 = vpop.permute.xlu0 %7832
      %v7835 = vmul.f32 %v7805, %v7818
      %v7836 = vmul.f32 %v7807, %v7823
      %v7837 = vmul.f32 %v7809, %v7828
      %v7838 = vmul.f32 %v7814, %v7833
      %v7839 = vrot.slane %v7385, 1
      %v7840 = vrot.slane %v7390, 1
      %v7841 = vsel %vm4404, %v7839, %v7840
      %v7842 = vrot.slane %v7395, 1
      %v7843 = vsel %vm4404, %v7840, %v7842
      %v7844 = vrot.slane %v7400, 1
      %v7845 = vsel %vm4404, %v7842, %v7844
      %v7850 = vsel %vm4404, %v7844, 0.0
      %v7851 = vmul.f32 %v7841, %v7818
      %v7852 = vmul.f32 %v7843, %v7823
      %v7853 = vmul.f32 %v7845, %v7828
      %v7854 = vmul.f32 %v7850, %v7833
      %7855 = vrot.lane.b32.xlu0 %v7526, 32
      %v7856 = vpop.permute.xlu0 %7855
      %7857 = vrot.lane.b32.xlu0 %v7527, 32
      %v7858 = vpop.permute.xlu0 %7857
      %7859 = vrot.lane.b32.xlu0 %v7528, 32
      %v7860 = vpop.permute.xlu0 %7859
      %7861 = vrot.lane.b32.xlu0 %v7529, 32
      %v7862 = vpop.permute.xlu0 %7861
      %7871 = vrot.lane.b32.xlu0 %v7790, 64
      %v7872 = vpop.permute.xlu0 %7871
      %7873 = vrot.lane.b32.xlu0 %v7791, 64
      %v7874 = vpop.permute.xlu0 %7873
      %7875 = vrot.lane.b32.xlu0 %v7792, 64
      %v7876 = vpop.permute.xlu0 %7875
      %7877 = vrot.lane.b32.xlu0 %v7793, 64
      %v7878 = vpop.permute.xlu0 %7877
      %7887 = vrot.lane.b32.xlu0 %v7600, 96
      %v7888 = vpop.permute.xlu0 %7887
      %7889 = vrot.lane.b32.xlu0 %v7601, 96
      %v7890 = vpop.permute.xlu0 %7889
      %7891 = vrot.lane.b32.xlu0 %v7602, 96
      %v7892 = vpop.permute.xlu0 %7891
      %7893 = vrot.lane.b32.xlu0 %v7603, 96
      %v7894 = vpop.permute.xlu0 %7893
      %7903 = vrot.lane.b32.xlu0 %v7835, 32
      %v7904 = vpop.permute.xlu0 %7903
      %7905 = vrot.lane.b32.xlu0 %v7836, 32
      %v7906 = vpop.permute.xlu0 %7905
      %7907 = vrot.lane.b32.xlu0 %v7837, 32
      %v7908 = vpop.permute.xlu0 %7907
      %7909 = vrot.lane.b32.xlu0 %v7838, 32
      %v7910 = vpop.permute.xlu0 %7909
      %7915 = vrot.lane.b32.xlu0 %v7624, 64
      %v7916 = vpop.permute.xlu0 %7915
      %7917 = vrot.lane.b32.xlu0 %v7625, 64
      %v7918 = vpop.permute.xlu0 %7917
      %7919 = vrot.lane.b32.xlu0 %v7626, 64
      %v7920 = vpop.permute.xlu0 %7919
      %7921 = vrot.lane.b32.xlu0 %v7627, 64
      %v7922 = vpop.permute.xlu0 %7921
      %7931 = vrot.lane.b32.xlu0 %v7628, 96
      %v7932 = vpop.permute.xlu0 %7931
      %7933 = vrot.lane.b32.xlu0 %v7629, 96
      %v7934 = vpop.permute.xlu0 %7933
      %7935 = vrot.lane.b32.xlu0 %v7630, 96
      %v7936 = vpop.permute.xlu0 %7935
      %7937 = vrot.lane.b32.xlu0 %v7631, 96
      %v7938 = vpop.permute.xlu0 %7937
      %v7943 = vsel %vm1462, %v7510, %v7856
      %v7944 = vsel %vm1462, %v7511, %v7858
      %v7945 = vsel %vm1462, %v7512, %v7860
      %v7946 = vsel %vm1462, %v7513, %v7862
      %v7947 = vsel %vm4289, %v7943, %v7872
      %v7948 = vsel %vm4289, %v7944, %v7874
      %v7949 = vsel %vm4289, %v7945, %v7876
      %v7950 = vsel %vm4289, %v7946, %v7878
      %v7951 = vsel %vm4306, %v7947, %v7888
      %v7952 = vsel %vm4306, %v7948, %v7890
      %v7953 = vsel %vm4306, %v7949, %v7892
      %v7954 = vsel %vm4306, %v7950, %v7894
      %v7955 = vsel %vm1462, %v7604, %v7904
      %v7956 = vsel %vm1462, %v7605, %v7906
      %v7957 = vsel %vm1462, %v7606, %v7908
      %v7958 = vsel %vm1462, %v7607, %v7910
      %v7959 = vsel %vm4289, %v7955, %v7916
      %v7960 = vsel %vm4289, %v7956, %v7918
      %v7961 = vsel %vm4289, %v7957, %v7920
      %v7962 = vsel %vm4289, %v7958, %v7922
      %v7963 = vsel %vm4306, %v7959, %v7932
      %v7964 = vsel %vm4306, %v7960, %v7934
      %v7965 = vsel %vm4306, %v7961, %v7936
      %v7966 = vsel %vm4306, %v7962, %v7938
      %s7967 = scalar_lea.vmem %s8, 192
      %v7968 = vld [vmem:[%s7967] sm:$0xff]
      %v7969 = vld [vmem:[%s7967 + $0x8] sm:$0xff]
      %v7970 = vld [vmem:[%s7967 + $0x10] sm:$0xff]
      %v7971 = vld [vmem:[%s7967 + $0x18] sm:$0xff]
      %v7972 = vrot.slane %v7365, 3
      %v7973 = vrot.slane %v7370, 3
      %v7974 = vsel %vm7431, %v7972, %v7973
      %v7975 = vrot.slane %v7375, 3
      %v7976 = vsel %vm7431, %v7973, %v7975
      %v7977 = vrot.slane %v7380, 3
      %v7978 = vsel %vm7431, %v7975, %v7977
      %v7983 = vsel %vm7431, %v7977, 0.0
      %7985 = vset.pattern.permute.xlu0 0
      %7986 = vperm.xlu0 %7985, %v7968
      %v7987 = vpop.permute.xlu0 %7986
      %7990 = vset.pattern.permute.xlu0 0
      %7991 = vperm.xlu0 %7990, %v7969
      %v7992 = vpop.permute.xlu0 %7991
      %7995 = vset.pattern.permute.xlu0 0
      %7996 = vperm.xlu0 %7995, %v7970
      %v7997 = vpop.permute.xlu0 %7996
      %8000 = vset.pattern.permute.xlu0 0
      %8001 = vperm.xlu0 %8000, %v7971
      %v8002 = vpop.permute.xlu0 %8001
      %v8004 = vmul.f32 %v7974, %v7987
      %v8005 = vmul.f32 %v7976, %v7992
      %v8006 = vmul.f32 %v7978, %v7997
      %v8007 = vmul.f32 %v7983, %v8002
      %s8008 = scalar_lea.vmem %s8, 224
      %v8009 = vld [vmem:[%s8008] sm:$0xff]
      %v8010 = vld [vmem:[%s8008 + $0x8] sm:$0xff]
      %v8011 = vld [vmem:[%s8008 + $0x10] sm:$0xff]
      %v8012 = vld [vmem:[%s8008 + $0x18] sm:$0xff]
      %v8013 = vrot.slane %v7345, 4
      %v8014 = vrot.slane %v7350, 4
      %v8015 = vsel %vm7477, %v8013, %v8014
      %v8016 = vrot.slane %v7355, 4
      %v8017 = vsel %vm7477, %v8014, %v8016
      %v8018 = vrot.slane %v7360, 4
      %v8019 = vsel %vm7477, %v8016, %v8018
      %v8024 = vsel %vm7477, %v8018, 0.0
      %8026 = vset.pattern.permute.xlu0 0
      %8027 = vperm.xlu0 %8026, %v8009
      %v8028 = vpop.permute.xlu0 %8027
      %8031 = vset.pattern.permute.xlu0 0
      %8032 = vperm.xlu0 %8031, %v8010
      %v8033 = vpop.permute.xlu0 %8032
      %8036 = vset.pattern.permute.xlu0 0
      %8037 = vperm.xlu0 %8036, %v8011
      %v8038 = vpop.permute.xlu0 %8037
      %8041 = vset.pattern.permute.xlu0 0
      %8042 = vperm.xlu0 %8041, %v8012
      %v8043 = vpop.permute.xlu0 %8042
      %v8045 = vmul.f32 %v8015, %v8028
      %v8046 = vmul.f32 %v8017, %v8033
      %v8047 = vmul.f32 %v8019, %v8038
      %v8048 = vmul.f32 %v8024, %v8043
      %v8049 = vrot.slane %v7365, 4
      %v8050 = vrot.slane %v7370, 4
      %v8051 = vsel %vm7477, %v8049, %v8050
      %v8052 = vrot.slane %v7375, 4
      %v8053 = vsel %vm7477, %v8050, %v8052
      %v8054 = vrot.slane %v7380, 4
      %v8055 = vsel %vm7477, %v8052, %v8054
      %v8060 = vsel %vm7477, %v8054, 0.0
      %v8061 = vmul.f32 %v8051, %v8028
      %v8062 = vmul.f32 %v8053, %v8033
      %v8063 = vmul.f32 %v8055, %v8038
      %v8064 = vmul.f32 %v8060, %v8043
      %8065 = vrot.lane.b32.xlu0 %v7600, 32
      %v8066 = vpop.permute.xlu0 %8065
      %8067 = vrot.lane.b32.xlu0 %v7601, 32
      %v8068 = vpop.permute.xlu0 %8067
      %8069 = vrot.lane.b32.xlu0 %v7602, 32
      %v8070 = vpop.permute.xlu0 %8069
      %8071 = vrot.lane.b32.xlu0 %v7603, 32
      %v8072 = vpop.permute.xlu0 %8071
      %8077 = vrot.lane.b32.xlu0 %v7604, 64
      %v8078 = vpop.permute.xlu0 %8077
      %8079 = vrot.lane.b32.xlu0 %v7605, 64
      %v8080 = vpop.permute.xlu0 %8079
      %8081 = vrot.lane.b32.xlu0 %v7606, 64
      %v8082 = vpop.permute.xlu0 %8081
      %8083 = vrot.lane.b32.xlu0 %v7607, 64
      %v8084 = vpop.permute.xlu0 %8083
      %8089 = vrot.lane.b32.xlu0 %v7620, 96
      %v8090 = vpop.permute.xlu0 %8089
      %8091 = vrot.lane.b32.xlu0 %v7621, 96
      %v8092 = vpop.permute.xlu0 %8091
      %8093 = vrot.lane.b32.xlu0 %v7622, 96
      %v8094 = vpop.permute.xlu0 %8093
      %8095 = vrot.lane.b32.xlu0 %v7623, 96
      %v8096 = vpop.permute.xlu0 %8095
      %8101 = vrot.lane.b32.xlu0 %v7628, 32
      %v8102 = vpop.permute.xlu0 %8101
      %8103 = vrot.lane.b32.xlu0 %v7629, 32
      %v8104 = vpop.permute.xlu0 %8103
      %8105 = vrot.lane.b32.xlu0 %v7630, 32
      %v8106 = vpop.permute.xlu0 %8105
      %8107 = vrot.lane.b32.xlu0 %v7631, 32
      %v8108 = vpop.permute.xlu0 %8107
      %8117 = vrot.lane.b32.xlu0 %v8004, 64
      %v8118 = vpop.permute.xlu0 %8117
      %8119 = vrot.lane.b32.xlu0 %v8005, 64
      %v8120 = vpop.permute.xlu0 %8119
      %8121 = vrot.lane.b32.xlu0 %v8006, 64
      %v8122 = vpop.permute.xlu0 %8121
      %8123 = vrot.lane.b32.xlu0 %v8007, 64
      %v8124 = vpop.permute.xlu0 %8123
      %8133 = vrot.lane.b32.xlu0 %v8045, 96
      %v8134 = vpop.permute.xlu0 %8133
      %8135 = vrot.lane.b32.xlu0 %v8046, 96
      %v8136 = vpop.permute.xlu0 %8135
      %8137 = vrot.lane.b32.xlu0 %v8047, 96
      %v8138 = vpop.permute.xlu0 %8137
      %8139 = vrot.lane.b32.xlu0 %v8048, 96
      %v8140 = vpop.permute.xlu0 %8139
      %v8145 = vsel %vm1462, %v7571, %v8066
      %v8146 = vsel %vm1462, %v7572, %v8068
      %v8147 = vsel %vm1462, %v7573, %v8070
      %v8148 = vsel %vm1462, %v7574, %v8072
      %v8149 = vsel %vm4289, %v8145, %v8078
      %v8150 = vsel %vm4289, %v8146, %v8080
      %v8151 = vsel %vm4289, %v8147, %v8082
      %v8152 = vsel %vm4289, %v8148, %v8084
      %v8153 = vsel %vm4306, %v8149, %v8090
      %v8154 = vsel %vm4306, %v8150, %v8092
      %v8155 = vsel %vm4306, %v8151, %v8094
      %v8156 = vsel %vm4306, %v8152, %v8096
      %v8157 = vsel %vm1462, %v7624, %v8102
      %v8158 = vsel %vm1462, %v7625, %v8104
      %v8159 = vsel %vm1462, %v7626, %v8106
      %v8160 = vsel %vm1462, %v7627, %v8108
      %v8161 = vsel %vm4289, %v8157, %v8118
      %v8162 = vsel %vm4289, %v8158, %v8120
      %v8163 = vsel %vm4289, %v8159, %v8122
      %v8164 = vsel %vm4289, %v8160, %v8124
      %v8165 = vsel %vm4306, %v8161, %v8134
      %v8166 = vsel %vm4306, %v8162, %v8136
      %v8167 = vsel %vm4306, %v8163, %v8138
      %v8168 = vsel %vm4306, %v8164, %v8140
      %s8169 = scalar_lea.vmem %s8, 256
      %v8170 = vld [vmem:[%s8169] sm:$0xff]
      %v8171 = vld [vmem:[%s8169 + $0x8] sm:$0xff]
      %v8172 = vld [vmem:[%s8169 + $0x10] sm:$0xff]
      %v8173 = vld [vmem:[%s8169 + $0x18] sm:$0xff]
      %v8174 = vrot.slane %v7345, 5
      %v8175 = vrot.slane %v7350, 5
      %v8176 = vsel %vm7757, %v8174, %v8175
      %v8177 = vrot.slane %v7355, 5
      %v8178 = vsel %vm7757, %v8175, %v8177
      %v8179 = vrot.slane %v7360, 5
      %v8180 = vsel %vm7757, %v8177, %v8179
      %v8185 = vsel %vm7757, %v8179, 0.0
      %8187 = vset.pattern.permute.xlu0 0
      %8188 = vperm.xlu0 %8187, %v8170
      %v8189 = vpop.permute.xlu0 %8188
      %8192 = vset.pattern.permute.xlu0 0
      %8193 = vperm.xlu0 %8192, %v8171
      %v8194 = vpop.permute.xlu0 %8193
      %8197 = vset.pattern.permute.xlu0 0
      %8198 = vperm.xlu0 %8197, %v8172
      %v8199 = vpop.permute.xlu0 %8198
      %8202 = vset.pattern.permute.xlu0 0
      %8203 = vperm.xlu0 %8202, %v8173
      %v8204 = vpop.permute.xlu0 %8203
      %v8206 = vmul.f32 %v8176, %v8189
      %v8207 = vmul.f32 %v8178, %v8194
      %v8208 = vmul.f32 %v8180, %v8199
      %v8209 = vmul.f32 %v8185, %v8204
      %8210 = vrot.lane.b32.xlu0 %v7835, 64
      %v8211 = vpop.permute.xlu0 %8210
      %8212 = vrot.lane.b32.xlu0 %v7836, 64
      %v8213 = vpop.permute.xlu0 %8212
      %8214 = vrot.lane.b32.xlu0 %v7837, 64
      %v8215 = vpop.permute.xlu0 %8214
      %8216 = vrot.lane.b32.xlu0 %v7838, 64
      %v8217 = vpop.permute.xlu0 %8216
      %8226 = vrot.lane.b32.xlu0 %v7851, 32
      %v8227 = vpop.permute.xlu0 %8226
      %8228 = vrot.lane.b32.xlu0 %v7852, 32
      %v8229 = vpop.permute.xlu0 %8228
      %8230 = vrot.lane.b32.xlu0 %v7853, 32
      %v8231 = vpop.permute.xlu0 %8230
      %8232 = vrot.lane.b32.xlu0 %v7854, 32
      %v8233 = vpop.permute.xlu0 %8232
      %8238 = vrot.lane.b32.xlu0 %v8045, 64
      %v8239 = vpop.permute.xlu0 %8238
      %8240 = vrot.lane.b32.xlu0 %v8046, 64
      %v8241 = vpop.permute.xlu0 %8240
      %8242 = vrot.lane.b32.xlu0 %v8047, 64
      %v8243 = vpop.permute.xlu0 %8242
      %8244 = vrot.lane.b32.xlu0 %v8048, 64
      %v8245 = vpop.permute.xlu0 %8244
      %8254 = vrot.lane.b32.xlu0 %v8061, 96
      %v8255 = vpop.permute.xlu0 %8254
      %8256 = vrot.lane.b32.xlu0 %v8062, 96
      %v8257 = vpop.permute.xlu0 %8256
      %8258 = vrot.lane.b32.xlu0 %v8063, 96
      %v8259 = vpop.permute.xlu0 %8258
      %8260 = vrot.lane.b32.xlu0 %v8064, 96
      %v8261 = vpop.permute.xlu0 %8260
      %v8266 = vsel %vm4289, %v7740, %v8211
      %v8267 = vsel %vm4289, %v7741, %v8213
      %v8268 = vsel %vm4289, %v7742, %v8215
      %v8269 = vsel %vm4289, %v7743, %v8217
      %v8270 = vsel %vm4306, %v8266, %v7717
      %v8271 = vsel %vm4306, %v8267, %v7719
      %v8272 = vsel %vm4306, %v8268, %v7721
      %v8273 = vsel %vm4306, %v8269, %v7723
      %v8274 = vsel %vm1462, %v7628, %v8227
      %v8275 = vsel %vm1462, %v7629, %v8229
      %v8276 = vsel %vm1462, %v7630, %v8231
      %v8277 = vsel %vm1462, %v7631, %v8233
      %v8278 = vsel %vm4289, %v8274, %v8239
      %v8279 = vsel %vm4289, %v8275, %v8241
      %v8280 = vsel %vm4289, %v8276, %v8243
      %v8281 = vsel %vm4289, %v8277, %v8245
      %v8282 = vsel %vm4306, %v8278, %v8255
      %v8283 = vsel %vm4306, %v8279, %v8257
      %v8284 = vsel %vm4306, %v8280, %v8259
      %v8285 = vsel %vm4306, %v8281, %v8261
      %v8286 = vpack.c.bf16 %v7737, %v7736
      %v8287 = vpack.c.bf16 %v7749, %v7748
      %v8288 = vpack.c.bf16 %v7629, %v7628
      %v8289 = vpack.c.bf16 %v7739, %v7738
      %v8290 = vpack.c.bf16 %v7751, %v7750
      %v8291 = vpack.c.bf16 %v7631, %v7630
      %v8292 = vpack.c.bf16 %v7952, %v7951
      %v8293 = vpack.c.bf16 %v7964, %v7963
      %v8294 = vpack.c.bf16 %v7852, %v7851
      %v8295 = vpack.c.bf16 %v7954, %v7953
      %v8296 = vpack.c.bf16 %v7966, %v7965
      %v8297 = vpack.c.bf16 %v7854, %v7853
      %v8298 = vpack.c.bf16 %v8154, %v8153
      %v8299 = vpack.c.bf16 %v8166, %v8165
      %v8300 = vpack.c.bf16 %v8062, %v8061
      %v8301 = vpack.c.bf16 %v8156, %v8155
      %v8302 = vpack.c.bf16 %v8168, %v8167
      %v8303 = vpack.c.bf16 %v8064, %v8063
      %v8304 = vpack.c.bf16 %v8271, %v8270
      %v8305 = vpack.c.bf16 %v8283, %v8282
      %v8306 = vpack.c.bf16 %v8207, %v8206
      %v8307 = vpack.c.bf16 %v8273, %v8272
      %v8308 = vpack.c.bf16 %v8285, %v8284
      %v8309 = vpack.c.bf16 %v8209, %v8208
      %v8310 = vld [vmem:[%s6] sm:$0xf]
      %v8311 = vld [vmem:[%s6 + $0x4] sm:$0xf]
      %v8312 = vld [vmem:[%s6 + $0x8] sm:$0xf]
      %v8313 = vld [vmem:[%s6 + $0xc] sm:$0xf]
      %v8314 = vld [vmem:[%s6 + $0x10] sm:$0xf]
      %v8315 = vld [vmem:[%s6 + $0x14] sm:$0xf]
      %v8316 = vld [vmem:[%s6 + $0x18] sm:$0xf]
      %v8317 = vld [vmem:[%s6 + $0x1c] sm:$0xf]
      %v8318 = vld [vmem:[%s6 + $0x20] sm:$0xf]
      %v8319 = vld [vmem:[%s6 + $0x24] sm:$0xf]
      %v8320 = vld [vmem:[%s6 + $0x28] sm:$0xf]
      %v8321 = vld [vmem:[%s6 + $0x2c] sm:$0xf]
      %v8322 = vld [vmem:[%s6 + $0x30] sm:$0xf]
      %v8323 = vld [vmem:[%s6 + $0x34] sm:$0xf]
      %v8324 = vld [vmem:[%s6 + $0x38] sm:$0xf]
      %v8325 = vld [vmem:[%s6 + $0x3c] sm:$0xf]
      %v8326 = vld [vmem:[%s6 + $0x40] sm:$0xf]
      %v8327 = vld [vmem:[%s6 + $0x44] sm:$0xf]
      %v8328 = vld [vmem:[%s6 + $0x48] sm:$0xf]
      %v8329 = vld [vmem:[%s6 + $0x4c] sm:$0xf]
      %v8330 = vld [vmem:[%s6 + $0x50] sm:$0xf]
      %v8331 = vld [vmem:[%s6 + $0x54] sm:$0xf]
      %v8332 = vld [vmem:[%s6 + $0x58] sm:$0xf]
      %v8333 = vld [vmem:[%s6 + $0x5c] sm:$0xf]
      %v8334 = vld [vmem:[%s6 + $0x60] sm:$0xf]
      %v8335 = vld [vmem:[%s6 + $0x64] sm:$0xf]
      %v8336 = vld [vmem:[%s6 + $0x68] sm:$0xf]
      %v8337 = vld [vmem:[%s6 + $0x6c] sm:$0xf]
      %v8338 = vld [vmem:[%s6 + $0x70] sm:$0xf]
      %v8339 = vld [vmem:[%s6 + $0x74] sm:$0xf]
      %v8340 = vld [vmem:[%s6 + $0x78] sm:$0xf]
      %v8341 = vld [vmem:[%s6 + $0x7c] sm:$0xf]
      %v8342 = vld [vmem:[%s6 + $0x80] sm:$0xf]
      %v8343 = vld [vmem:[%s6 + $0x84] sm:$0xf]
      %v8344 = vld [vmem:[%s6 + $0x88] sm:$0xf]
      %v8345 = vld [vmem:[%s6 + $0x8c] sm:$0xf]
      %v8382 = vunpack.c.l.b16 %v8310
      %v8383 = vunpack.c.l.b16 %v8311
      %v8384 = vunpack.c.l.b16 %v8312
      %v8385 = vunpack.c.l.b16 %v8313
      %v8386 = vunpack.c.l.b16 %v8314
      %v8387 = vunpack.c.l.b16 %v8315
      %v8388 = vunpack.c.l.b16 %v8316
      %v8389 = vunpack.c.l.b16 %v8317
      %v8390 = vunpack.c.l.b16 %v8318
      %v8391 = vunpack.c.l.b16 %v8319
      %v8392 = vunpack.c.l.b16 %v8320
      %v8393 = vunpack.c.l.b16 %v8321
      %v8394 = vunpack.c.l.b16 %v8322
      %v8395 = vunpack.c.l.b16 %v8323
      %v8396 = vunpack.c.l.b16 %v8324
      %v8397 = vunpack.c.l.b16 %v8325
      %v8398 = vunpack.c.l.b16 %v8326
      %v8399 = vunpack.c.l.b16 %v8327
      %v8400 = vunpack.c.l.b16 %v8328
      %v8401 = vunpack.c.l.b16 %v8329
      %v8402 = vunpack.c.l.b16 %v8330
      %v8403 = vunpack.c.l.b16 %v8331
      %v8404 = vunpack.c.l.b16 %v8332
      %v8405 = vunpack.c.l.b16 %v8333
      %v8406 = vunpack.c.l.b16 %v8334
      %v8407 = vunpack.c.l.b16 %v8335
      %v8408 = vunpack.c.l.b16 %v8336
      %v8409 = vunpack.c.l.b16 %v8337
      %v8410 = vunpack.c.l.b16 %v8338
      %v8411 = vunpack.c.l.b16 %v8339
      %v8412 = vunpack.c.l.b16 %v8340
      %v8413 = vunpack.c.l.b16 %v8341
      %v8414 = vunpack.c.l.b16 %v8342
      %v8415 = vunpack.c.l.b16 %v8343
      %v8416 = vunpack.c.l.b16 %v8344
      %v8417 = vunpack.c.l.b16 %v8345
      %v8418 = vpack.c.b16 %v8383, %v8382
      %v8419 = vpack.c.b16 %v8385, %v8384
      %v8420 = vpack.c.b16 %v8387, %v8386
      %v8421 = vpack.c.b16 %v8389, %v8388
      %v8422 = vpack.c.b16 %v8391, %v8390
      %v8423 = vpack.c.b16 %v8393, %v8392
      %v8424 = vpack.c.b16 %v8395, %v8394
      %v8425 = vpack.c.b16 %v8397, %v8396
      %v8426 = vpack.c.b16 %v8399, %v8398
      %v8427 = vpack.c.b16 %v8401, %v8400
      %v8428 = vpack.c.b16 %v8403, %v8402
      %v8429 = vpack.c.b16 %v8405, %v8404
      %v8430 = vpack.c.b16 %v8407, %v8406
      %v8431 = vpack.c.b16 %v8409, %v8408
      %v8432 = vpack.c.b16 %v8411, %v8410
      %v8433 = vpack.c.b16 %v8413, %v8412
      %v8434 = vpack.c.b16 %v8415, %v8414
      %v8435 = vpack.c.b16 %v8417, %v8416
      %v8455 = vsel %vm1462, %v8288, 0
      %v8458 = vsel %vm1462, %v8291, 0
      %v8461 = vsel %vm1462, %v8294, 0
      %v8464 = vsel %vm1462, %v8297, 0
      %v8467 = vsel %vm1462, %v8300, 0
      %v8470 = vsel %vm1462, %v8303, 0
      %v8473 = vsel %vm1462, %v8306, 0
      %v8476 = vsel %vm1462, %v8309, 0
      %8478 = vmatprep.subr.bf16.mxu0 0
      %8479 = vmatpush1.bf16.msra.mxu0 %v8418
      %8480 = vmatprep.subr.bf16.mxu0 0
      %8481 = vmatpush1.bf16.msra.mxu0 %v8419
      %8482 = vmatprep.subr.bf16.mxu0 0
      %8483 = vmatpush1.bf16.msra.mxu0 %v8420
      %8484 = vmatprep.subr.bf16.mxu0 0
      %8485 = vmatpush1.bf16.msra.mxu0 %v8421
      %8486 = vmatprep.subr.bf16.mxu0 0
      %8487 = vmatpush1.bf16.msra.mxu0 %v8422
      %8488 = vmatprep.subr.bf16.mxu0 0
      %8489 = vmatpush1.bf16.msra.mxu0 %v8423
      %8490 = vmatprep.subr.bf16.mxu0 0
      %8491 = vmatpush1.bf16.msra.mxu0 %v8424
      %8492 = vmatprep.subr.bf16.mxu0 0
      %8493 = vmatpush1.bf16.msra.mxu0 %v8425
      %8494 = vmatprep.subr.bf16.mxu0 0
      %8495 = vmatpush1.bf16.msra.mxu0 %v8426
      %8496 = vmatprep.subr.bf16.mxu0 0
      %8497 = vmatpush1.bf16.msra.mxu0 %v8427
      %8498 = vmatprep.subr.bf16.mxu0 0
      %8499 = vmatpush1.bf16.msra.mxu0 %v8428
      %8500 = vmatprep.subr.bf16.mxu0 0
      %8501 = vmatpush1.bf16.msra.mxu0 %v8429
      %8502 = vmatprep.subr.bf16.mxu0 0
      %8503 = vmatpush1.bf16.msra.mxu0 %v8430
      %8504 = vmatprep.subr.bf16.mxu0 0
      %8505 = vmatpush1.bf16.msra.mxu0 %v8431
      %8506 = vmatprep.subr.bf16.mxu0 0
      %8507 = vmatpush1.bf16.msra.mxu0 %v8432
      %8508 = vmatprep.subr.bf16.mxu0 0
      %8509 = vmatpush1.bf16.msra.mxu0 %v8433
      %8510 = vmatprep.mubr.bf16.mxu0 %v8287
      %8511 = vmatmul.mubr.bf16.gmra.mrb[0].mxu0 %v8286
      %v8512 = vpop.f32.mrb[0].mxu0
      %v8513 = vadd.f32 0.0, %v8512
      %v8514 = vpop.f32.mrb[0].mxu0
      %v8515 = vpop.f32.mrb[0].mxu0
      %v8516 = vadd.f32 0.0, %v8515
      %v8517 = vpop.f32.mrb[0].mxu0
      %8518 = vmatprep.mubr.bf16.mxu0 %v8290
      %8519 = vmatmul.mubr.bf16.gmra.mrb[0].mxu0 %v8289
      %v8520 = vpop.f32.mrb[0].mxu0
      %v8521 = vadd.f32 0.0, %v8520
      %v8522 = vpop.f32.mrb[0].mxu0
      %v8523 = vpop.f32.mrb[0].mxu0
      %v8524 = vadd.f32 0.0, %v8523
      %v8525 = vpop.f32.mrb[0].mxu0
      %8526 = vmatprep.mubr.bf16.mxu0 %v8293
      %8527 = vmatmul.mubr.bf16.gmra.mrb[0].mxu0 %v8292
      %v8528 = vpop.f32.mrb[0].mxu0
      %v8529 = vadd.f32 0.0, %v8528
      %v8530 = vpop.f32.mrb[0].mxu0
      %v8531 = vpop.f32.mrb[0].mxu0
      %v8532 = vadd.f32 0.0, %v8531
      %v8533 = vpop.f32.mrb[0].mxu0
      %8534 = vmatprep.mubr.bf16.mxu0 %v8296
      %8535 = vmatmul.mubr.bf16.gmra.mrb[0].mxu0 %v8295
      %v8536 = vpop.f32.mrb[0].mxu0
      %v8537 = vadd.f32 0.0, %v8536
      %v8538 = vpop.f32.mrb[0].mxu0
      %v8539 = vpop.f32.mrb[0].mxu0
      %v8540 = vadd.f32 0.0, %v8539
      %v8541 = vpop.f32.mrb[0].mxu0
      %8542 = vmatprep.mubr.bf16.mxu0 %v8299
      %8543 = vmatmul.mubr.bf16.gmra.mrb[0].mxu0 %v8298
      %v8544 = vpop.f32.mrb[0].mxu0
      %v8545 = vadd.f32 0.0, %v8544
      %v8546 = vpop.f32.mrb[0].mxu0
      %v8547 = vpop.f32.mrb[0].mxu0
      %v8548 = vadd.f32 0.0, %v8547
      %v8549 = vpop.f32.mrb[0].mxu0
      %8550 = vmatprep.mubr.bf16.mxu0 %v8302
      %8551 = vmatmul.mubr.bf16.gmra.mrb[0].mxu0 %v8301
      %v8552 = vpop.f32.mrb[0].mxu0
      %v8553 = vadd.f32 0.0, %v8552
      %v8554 = vpop.f32.mrb[0].mxu0
      %v8555 = vpop.f32.mrb[0].mxu0
      %v8556 = vadd.f32 0.0, %v8555
      %v8557 = vpop.f32.mrb[0].mxu0
      %8558 = vmatprep.mubr.bf16.mxu0 %v8305
      %8559 = vmatmul.mubr.bf16.gmra.mrb[0].mxu0 %v8304
      %v8560 = vpop.f32.mrb[0].mxu0
      %v8561 = vadd.f32 0.0, %v8560
      %v8562 = vpop.f32.mrb[0].mxu0
      %v8563 = vpop.f32.mrb[0].mxu0
      %v8564 = vadd.f32 0.0, %v8563
      %v8565 = vpop.f32.mrb[0].mxu0
      %8566 = vmatprep.mubr.bf16.mxu0 %v8308
      %8567 = vmatmul.mubr.bf16.gmra.mrb[0].mxu0 %v8307
      %v8568 = vpop.f32.mrb[0].mxu0
      %v8569 = vadd.f32 0.0, %v8568
      %v8570 = vpop.f32.mrb[0].mxu0
      %v8571 = vpop.f32.mrb[0].mxu0
      %v8572 = vadd.f32 0.0, %v8571
      %v8573 = vpop.f32.mrb[0].mxu0
      %8574 = vdwg.mxu0
      %8575 = vmatprep.subr.bf16.mxu0 0
      %8576 = vmatpush1.bf16.msra.mxu0 %v8434
      %8577 = vmatprep.subr.bf16.mxu0 0
      %8578 = vmatpush1.bf16.msra.mxu0 %v8435
      %8579 = vmatprep.subr.bf16.mxu0 0
      %8580 = vmatpush1.bf16.msra.mxu0 0
      %8581 = vmatprep.subr.bf16.mxu0 0
      %8582 = vmatpush1.bf16.msra.mxu0 0
      %8583 = vmatprep.subr.bf16.mxu0 0
      %8584 = vmatpush1.bf16.msra.mxu0 0
      %8585 = vmatprep.subr.bf16.mxu0 0
      %8586 = vmatpush1.bf16.msra.mxu0 0
      %8587 = vmatprep.subr.bf16.mxu0 0
      %8588 = vmatpush1.bf16.msra.mxu0 0
      %8589 = vmatprep.subr.bf16.mxu0 0
      %8590 = vmatpush1.bf16.msra.mxu0 0
      %8591 = vmatprep.subr.bf16.mxu0 0
      %8592 = vmatpush1.bf16.msra.mxu0 0
      %8593 = vmatprep.subr.bf16.mxu0 0
      %8594 = vmatpush1.bf16.msra.mxu0 0
      %8595 = vmatprep.subr.bf16.mxu0 0
      %8596 = vmatpush1.bf16.msra.mxu0 0
      %8597 = vmatprep.subr.bf16.mxu0 0
      %8598 = vmatpush1.bf16.msra.mxu0 0
      %8599 = vmatprep.subr.bf16.mxu0 0
      %8600 = vmatpush1.bf16.msra.mxu0 0
      %8601 = vmatprep.subr.bf16.mxu0 0
      %8602 = vmatpush1.bf16.msra.mxu0 0
      %8603 = vmatprep.subr.bf16.mxu0 0
      %8604 = vmatpush1.bf16.msra.mxu0 0
      %8605 = vmatprep.subr.bf16.mxu0 0
      %8606 = vmatpush1.bf16.msra.mxu0 0
      %8607 = vmatprep.mubr.bf16.mxu0 0
      %8608 = vmatmul.mubr.bf16.gmra.mrb[0].mxu0 %v8455
      %v8609 = vpop.f32.mrb[0].mxu0
      %v8610 = vadd.f32 %v8513, %v8609
      %v8611 = vpop.f32.mrb[0].mxu0
      %v8612 = vpop.f32.mrb[0].mxu0
      %v8613 = vadd.f32 %v8516, %v8612
      %v8614 = vpop.f32.mrb[0].mxu0
      %8615 = vmatprep.mubr.bf16.mxu0 0
      %8616 = vmatmul.mubr.bf16.gmra.mrb[0].mxu0 %v8458
      %v8617 = vpop.f32.mrb[0].mxu0
      %v8618 = vadd.f32 %v8521, %v8617
      %v8619 = vpop.f32.mrb[0].mxu0
      %v8620 = vpop.f32.mrb[0].mxu0
      %v8621 = vadd.f32 %v8524, %v8620
      %v8622 = vpop.f32.mrb[0].mxu0
      %8623 = vmatprep.mubr.bf16.mxu0 0
      %8624 = vmatmul.mubr.bf16.gmra.mrb[0].mxu0 %v8461
      %v8625 = vpop.f32.mrb[0].mxu0
      %v8626 = vadd.f32 %v8529, %v8625
      %v8627 = vpop.f32.mrb[0].mxu0
      %v8628 = vpop.f32.mrb[0].mxu0
      %v8629 = vadd.f32 %v8532, %v8628
      %v8630 = vpop.f32.mrb[0].mxu0
      %8631 = vmatprep.mubr.bf16.mxu0 0
      %8632 = vmatmul.mubr.bf16.gmra.mrb[0].mxu0 %v8464
      %v8633 = vpop.f32.mrb[0].mxu0
      %v8634 = vadd.f32 %v8537, %v8633
      %v8635 = vpop.f32.mrb[0].mxu0
      %v8636 = vpop.f32.mrb[0].mxu0
      %v8637 = vadd.f32 %v8540, %v8636
      %v8638 = vpop.f32.mrb[0].mxu0
      %8639 = vmatprep.mubr.bf16.mxu0 0
      %8640 = vmatmul.mubr.bf16.gmra.mrb[0].mxu0 %v8467
      %v8641 = vpop.f32.mrb[0].mxu0
      %v8642 = vadd.f32 %v8545, %v8641
      %v8643 = vpop.f32.mrb[0].mxu0
      %v8644 = vpop.f32.mrb[0].mxu0
      %v8645 = vadd.f32 %v8548, %v8644
      %v8646 = vpop.f32.mrb[0].mxu0
      %8647 = vmatprep.mubr.bf16.mxu0 0
      %8648 = vmatmul.mubr.bf16.gmra.mrb[0].mxu0 %v8470
      %v8649 = vpop.f32.mrb[0].mxu0
      %v8650 = vadd.f32 %v8553, %v8649
      %v8651 = vpop.f32.mrb[0].mxu0
      %v8652 = vpop.f32.mrb[0].mxu0
      %v8653 = vadd.f32 %v8556, %v8652
      %v8654 = vpop.f32.mrb[0].mxu0
      %8655 = vmatprep.mubr.bf16.mxu0 0
      %8656 = vmatmul.mubr.bf16.gmra.mrb[0].mxu0 %v8473
      %v8657 = vpop.f32.mrb[0].mxu0
      %v8658 = vadd.f32 %v8561, %v8657
      %v8659 = vpop.f32.mrb[0].mxu0
      %v8660 = vpop.f32.mrb[0].mxu0
      %v8661 = vadd.f32 %v8564, %v8660
      %v8662 = vpop.f32.mrb[0].mxu0
      %8663 = vmatprep.mubr.bf16.mxu0 0
      %8664 = vmatmul.mubr.bf16.gmra.mrb[0].mxu0 %v8476
      %v8665 = vpop.f32.mrb[0].mxu0
      %v8666 = vadd.f32 %v8569, %v8665
      %v8667 = vpop.f32.mrb[0].mxu0
      %v8668 = vpop.f32.mrb[0].mxu0
      %v8669 = vadd.f32 %v8572, %v8668
      %v8670 = vpop.f32.mrb[0].mxu0
      %8671 = vdwg.mxu0
      %v8672 = vmax.f32 %v8610, %v8626
      %v8673 = vmax.f32 %v8613, %v8629
      %v8674 = vmax.f32 %v8618, %v8634
      %v8675 = vmax.f32 %v8621, %v8637
      %v8676 = vmax.f32 %v8642, %v8658
      %v8677 = vmax.f32 %v8645, %v8661
      %v8678 = vmax.f32 %v8650, %v8666
      %v8679 = vmax.f32 %v8653, %v8669
      %v8680 = vmax.f32 %v8672, %v8676
      %v8681 = vmax.f32 %v8673, %v8677
      %v8682 = vmax.f32 %v8674, %v8678
      %v8683 = vmax.f32 %v8675, %v8679
      %v8684 = vld [vmem:[%s7] sm:$0x1]
      %v8686 = vlaneseq
      %v8687 = vshrl.u32 %v8686, 7
      %v8688 = vsub.s32 0, %v8687
      %v8689 = vrot.slane %v8684, %v8688
      %v8691 = vadd.f32 %v8680, %v8689
      %v8692 = vadd.f32 %v8681, %v8689
      %v8693 = vadd.f32 %v8682, %v8689
      %v8694 = vadd.f32 %v8683, %v8689
      %v8695 = vmax.f32 %v8691, 0.0
      %v8696 = vmax.f32 %v8692, 0.0
      %v8697 = vmax.f32 %v8693, 0.0
      %v8698 = vmax.f32 %v8694, 0.0
      %v8699 = vld [vmem:[%s13] sm:$0xff]
      %v8700 = vld [vmem:[%s13 + $0x8] sm:$0xff]
      %v8701 = vld [vmem:[%s13 + $0x10] sm:$0xff]
      %v8702 = vld [vmem:[%s13 + $0x18] sm:$0xff]
      %v8704 = vsel %vm1462, %v8699, 0
      %v8707 = vsel %vm1462, %v8700, 0
      %v8710 = vsel %vm1462, %v8701, 0
      %v8713 = vsel %vm1462, %v8702, 0
      %8715 = vmatprep.subr.mxu0 0.0
      %8716 = vmatpush1.msra.mxu0 %v8695
      %8717 = vmatprep.subr.mxu0 0.0
      %8718 = vmatpush1.msra.mxu0 %v8696
      %8719 = vmatprep.subr.mxu0 0.0
      %8720 = vmatpush1.msra.mxu0 %v8697
      %8721 = vmatprep.subr.mxu0 0.0
      %8722 = vmatpush1.msra.mxu0 %v8698
      %8723 = vmatprep.subr.mxu0 0.0
      %8724 = vmatpush1.msra.mxu0 0.0
      %8725 = vmatprep.subr.mxu0 0.0
      %8726 = vmatpush1.msra.mxu0 0.0
      %8727 = vmatprep.subr.mxu0 0.0
      %8728 = vmatpush1.msra.mxu0 0.0
      %8729 = vmatprep.subr.mxu0 0.0
      %8730 = vmatpush1.msra.mxu0 0.0
      %8731 = vmatprep.subr.mxu0 0.0
      %8732 = vmatpush1.msra.mxu0 0.0
      %8733 = vmatprep.subr.mxu0 0.0
      %8734 = vmatpush1.msra.mxu0 0.0
      %8735 = vmatprep.subr.mxu0 0.0
      %8736 = vmatpush1.msra.mxu0 0.0
      %8737 = vmatprep.subr.mxu0 0.0
      %8738 = vmatpush1.msra.mxu0 0.0
      %8739 = vmatprep.subr.mxu0 0.0
      %8740 = vmatpush1.msra.mxu0 0.0
      %8741 = vmatprep.subr.mxu0 0.0
      %8742 = vmatpush1.msra.mxu0 0.0
      %8743 = vmatprep.subr.mxu0 0.0
      %8744 = vmatpush1.msra.mxu0 0.0
      %8745 = vmatprep.subr.mxu0 0.0
      %8746 = vmatpush1.msra.mxu0 0.0
      %8747 = vmatprep.subr.mxu0 0.0
      %8748 = vmatpush1.msra.mxu0 0.0
      %8749 = vmatprep.subr.mxu0 0.0
      %8750 = vmatpush1.msra.mxu0 0.0
      %8751 = vmatprep.subr.mxu0 0.0
      %8752 = vmatpush1.msra.mxu0 0.0
      %8753 = vmatprep.subr.mxu0 0.0
      %8754 = vmatpush1.msra.mxu0 0.0
      %8755 = vmatprep.subr.mxu0 0.0
      %8756 = vmatpush1.msra.mxu0 0.0
      %8757 = vmatprep.subr.mxu0 0.0
      %8758 = vmatpush1.msra.mxu0 0.0
      %8759 = vmatprep.subr.mxu0 0.0
      %8760 = vmatpush1.msra.mxu0 0.0
      %8761 = vmatprep.subr.mxu0 0.0
      %8762 = vmatpush1.msra.mxu0 0.0
      %8763 = vmatprep.subr.mxu0 0.0
      %8764 = vmatpush1.msra.mxu0 0.0
      %8765 = vmatprep.subr.mxu0 0.0
      %8766 = vmatpush1.msra.mxu0 0.0
      %8767 = vmatprep.subr.mxu0 0.0
      %8768 = vmatpush1.msra.mxu0 0.0
      %8769 = vmatprep.subr.mxu0 0.0
      %8770 = vmatpush1.msra.mxu0 0.0
      %8771 = vmatprep.subr.mxu0 0.0
      %8772 = vmatpush1.msra.mxu0 0.0
      %8773 = vmatprep.subr.mxu0 0.0
      %8774 = vmatpush1.msra.mxu0 0.0
      %8775 = vmatprep.subr.mxu0 0.0
      %8776 = vmatpush1.msra.mxu0 0.0
      %8777 = vmatprep.subr.mxu0 0.0
      %8778 = vmatpush1.msra.mxu0 0.0
      %8779 = vmatprep.mubr.f32.mxu0 0.0
      %8780 = vmatmul.mubr.f32.gmra.mrb[0].mxu0 %v8704
      %v8781 = vpop.f32.mrb[0].mxu0
      %v8782 = vadd.f32 0.0, %v8781
      %v8783 = vpop.f32.mrb[0].mxu0
      %8784 = vmatprep.mubr.f32.mxu0 0.0
      %8785 = vmatmul.mubr.f32.gmra.mrb[0].mxu0 %v8707
      %v8786 = vpop.f32.mrb[0].mxu0
      %v8787 = vadd.f32 0.0, %v8786
      %v8788 = vpop.f32.mrb[0].mxu0
      %8789 = vmatprep.mubr.f32.mxu0 0.0
      %8790 = vmatmul.mubr.f32.gmra.mrb[0].mxu0 %v8710
      %v8791 = vpop.f32.mrb[0].mxu0
      %v8792 = vadd.f32 0.0, %v8791
      %v8793 = vpop.f32.mrb[0].mxu0
      %8794 = vmatprep.mubr.f32.mxu0 0.0
      %8795 = vmatmul.mubr.f32.gmra.mrb[0].mxu0 %v8713
      %v8796 = vpop.f32.mrb[0].mxu0
      %v8797 = vadd.f32 0.0, %v8796
      %v8798 = vpop.f32.mrb[0].mxu0
      %8799 = vdwg.mxu0
      %v8800 = vld [vmem:[%s11] sm:$0xff]
      %v8802 = vrot.slane %v8797, 5
      %v8804 = vsel %vm7757, 0.0, %v8802
      %8806 = vset.pattern.permute.xlu0 0
      %8807 = vperm.xlu0 %8806, %v8800
      %v8808 = vpop.permute.xlu0 %8807
      %v8810 = vmul.f32 %v8804, %v8808
      %s8811 = scalar_lea.vmem %s11, 8
      %v8812 = vld [vmem:[%s8811] sm:$0xff]
      %v8814 = vrot.slane %v8792, 6
      %vm8816 = vcmask 1041408
      %v8817 = vsel %vm8816, 0.0, %v8814
      %8819 = vset.pattern.permute.xlu0 0
      %8820 = vperm.xlu0 %8819, %v8812
      %v8821 = vpop.permute.xlu0 %8820
      %v8823 = vmul.f32 %v8817, %v8821
      %v8824 = vrot.slane %v8797, 6
      %v8826 = vsel %vm8816, 0.0, %v8824
      %v8827 = vmul.f32 %v8826, %v8821
      %s8828 = scalar_lea.vmem %s11, 24
      %v8829 = vld [vmem:[%s8828] sm:$0xff]
      %v8831 = vrot.slane %v8787, 7
      %v8833 = vsel %vm3262, 0.0, %v8831
      %8835 = vset.pattern.permute.xlu0 0
      %8836 = vperm.xlu0 %8835, %v8829
      %v8837 = vpop.permute.xlu0 %8836
      %v8839 = vmul.f32 %v8833, %v8837
      %s8840 = scalar_lea.vmem %s11, 32
      %v8841 = vld [vmem:[%s8840] sm:$0xff]
      %8843 = vset.pattern.permute.xlu0 0
      %8844 = vperm.xlu0 %8843, %v8841
      %v8845 = vpop.permute.xlu0 %8844
      %v8847 = vmul.f32 %v8782, %v8845
      %v8848 = vmul.f32 %v8787, %v8845
      %v8849 = vrot.slane %v8797, 7
      %v8851 = vsel %vm3262, 0.0, %v8849
      %v8852 = vmul.f32 %v8851, %v8837
      %v8853 = vmul.f32 %v8792, %v8845
      %v8854 = vmul.f32 %v8797, %v8845
      %8856 = vrot.lane.b32.xlu0 %v8823, 32
      %v8857 = vpop.permute.xlu0 %8856
      %8860 = vrot.lane.b32.xlu0 %v8827, 64
      %v8861 = vpop.permute.xlu0 %8860
      %8864 = vrot.lane.b32.xlu0 %v8839, 96
      %v8865 = vpop.permute.xlu0 %8864
      %8868 = vrot.lane.b32.xlu0 %v8848, 32
      %v8869 = vpop.permute.xlu0 %8868
      %8872 = vrot.lane.b32.xlu0 %v8852, 64
      %v8873 = vpop.permute.xlu0 %8872
      %8876 = vrot.lane.b32.xlu0 %v8853, 96
      %v8877 = vpop.permute.xlu0 %8876
      %v8879 = vsel %vm1462, %v8810, %v8857
      %v8880 = vsel %vm4289, %v8879, %v8861
      %v8881 = vsel %vm4306, %v8880, %v8865
      %v8882 = vsel %vm1462, %v8847, %v8869
      %v8883 = vsel %vm4289, %v8882, %v8873
      %v8884 = vsel %vm4306, %v8883, %v8877
      %s8885 = scalar_lea.vmem %s11, 16
      %v8886 = vld [vmem:[%s8885] sm:$0xff]
      %v8887 = vrot.slane %v8792, 7
      %v8889 = vsel %vm3262, 0.0, %v8887
      %8891 = vset.pattern.permute.xlu0 0
      %8892 = vperm.xlu0 %8891, %v8886
      %v8893 = vpop.permute.xlu0 %8892
      %v8895 = vmul.f32 %v8889, %v8893
      %s8896 = scalar_lea.vmem %s11, 40
      %v8897 = vld [vmem:[%s8896] sm:$0xff]
      %v8899 = vrot.slane %v8782, 1
      %v8901 = vsel %vm4404, %v8899, 0.0
      %8903 = vset.pattern.permute.xlu0 0
      %8904 = vperm.xlu0 %8903, %v8897
      %v8905 = vpop.permute.xlu0 %8904
      %v8907 = vmul.f32 %v8901, %v8905
      %v8908 = vrot.slane %v8792, 1
      %v8910 = vsel %vm4404, %v8908, 0.0
      %v8911 = vmul.f32 %v8910, %v8905
      %8912 = vrot.lane.b32.xlu0 %v8827, 32
      %v8913 = vpop.permute.xlu0 %8912
      %8916 = vrot.lane.b32.xlu0 %v8895, 64
      %v8917 = vpop.permute.xlu0 %8916
      %8920 = vrot.lane.b32.xlu0 %v8847, 96
      %v8921 = vpop.permute.xlu0 %8920
      %8924 = vrot.lane.b32.xlu0 %v8907, 32
      %v8925 = vpop.permute.xlu0 %8924
      %8927 = vrot.lane.b32.xlu0 %v8853, 64
      %v8928 = vpop.permute.xlu0 %8927
      %8931 = vrot.lane.b32.xlu0 %v8854, 96
      %v8932 = vpop.permute.xlu0 %8931
      %v8934 = vsel %vm1462, %v8823, %v8913
      %v8935 = vsel %vm4289, %v8934, %v8917
      %v8936 = vsel %vm4306, %v8935, %v8921
      %v8937 = vsel %vm1462, %v8848, %v8925
      %v8938 = vsel %vm4289, %v8937, %v8928
      %v8939 = vsel %vm4306, %v8938, %v8932
      %s8940 = scalar_lea.vmem %s11, 48
      %v8941 = vld [vmem:[%s8940] sm:$0xff]
      %v8942 = vrot.slane %v8787, 1
      %v8944 = vsel %vm4404, %v8942, 0.0
      %8946 = vset.pattern.permute.xlu0 0
      %8947 = vperm.xlu0 %8946, %v8941
      %v8948 = vpop.permute.xlu0 %8947
      %v8950 = vmul.f32 %v8944, %v8948
      %s8951 = scalar_lea.vmem %s11, 56
      %v8952 = vld [vmem:[%s8951] sm:$0xff]
      %v8953 = vrot.slane %v8782, 2
      %vm8955 = vcmask 1045504
      %v8956 = vsel %vm8955, %v8953, 0.0
      %8958 = vset.pattern.permute.xlu0 0
      %8959 = vperm.xlu0 %8958, %v8952
      %v8960 = vpop.permute.xlu0 %8959
      %v8962 = vmul.f32 %v8956, %v8960
      %v8963 = vrot.slane %v8787, 2
      %v8965 = vsel %vm8955, %v8963, 0.0
      %v8966 = vmul.f32 %v8965, %v8960
      %8967 = vrot.lane.b32.xlu0 %v8847, 32
      %v8968 = vpop.permute.xlu0 %8967
      %8970 = vrot.lane.b32.xlu0 %v8848, 64
      %v8971 = vpop.permute.xlu0 %8970
      %8973 = vrot.lane.b32.xlu0 %v8852, 96
      %v8974 = vpop.permute.xlu0 %8973
      %8976 = vrot.lane.b32.xlu0 %v8854, 32
      %v8977 = vpop.permute.xlu0 %8976
      %8980 = vrot.lane.b32.xlu0 %v8950, 64
      %v8981 = vpop.permute.xlu0 %8980
      %8984 = vrot.lane.b32.xlu0 %v8962, 96
      %v8985 = vpop.permute.xlu0 %8984
      %v8987 = vsel %vm1462, %v8839, %v8968
      %v8988 = vsel %vm4289, %v8987, %v8971
      %v8989 = vsel %vm4306, %v8988, %v8974
      %v8990 = vsel %vm1462, %v8853, %v8977
      %v8991 = vsel %vm4289, %v8990, %v8981
      %v8992 = vsel %vm4306, %v8991, %v8985
      %s8993 = scalar_lea.vmem %s11, 64
      %v8994 = vld [vmem:[%s8993] sm:$0xff]
      %v8995 = vrot.slane %v8782, 3
      %v8997 = vsel %vm7431, %v8995, 0.0
      %8999 = vset.pattern.permute.xlu0 0
      %9000 = vperm.xlu0 %8999, %v8994
      %v9001 = vpop.permute.xlu0 %9000
      %v9003 = vmul.f32 %v8997, %v9001
      %9004 = vrot.lane.b32.xlu0 %v8907, 64
      %v9005 = vpop.permute.xlu0 %9004
      %9008 = vrot.lane.b32.xlu0 %v8911, 32
      %v9009 = vpop.permute.xlu0 %9008
      %9011 = vrot.lane.b32.xlu0 %v8962, 64
      %v9012 = vpop.permute.xlu0 %9011
      %9015 = vrot.lane.b32.xlu0 %v8966, 96
      %v9016 = vpop.permute.xlu0 %9015
      %v9018 = vsel %vm4289, %v8882, %v9005
      %v9019 = vsel %vm4306, %v9018, %v8877
      %v9020 = vsel %vm1462, %v8854, %v9009
      %v9021 = vsel %vm4289, %v9020, %v9012
      %v9022 = vsel %vm4306, %v9021, %v9016
      %v9023 = vpack.c.bf16 %v8936, %v8881
      %v9024 = vpack.c.bf16 %v8939, %v8884
      %v9025 = vpack.c.bf16 %v8911, %v8854
      %v9026 = vpack.c.bf16 %v9019, %v8989
      %v9027 = vpack.c.bf16 %v9022, %v8992
      %v9028 = vpack.c.bf16 %v9003, %v8966
      %v9029 = vld [vmem:[%s9] sm:$0xf]
      %v9030 = vld [vmem:[%s9 + $0x4] sm:$0xf]
      %v9031 = vld [vmem:[%s9 + $0x8] sm:$0xf]
      %v9032 = vld [vmem:[%s9 + $0xc] sm:$0xf]
      %v9033 = vld [vmem:[%s9 + $0x10] sm:$0xf]
      %v9034 = vld [vmem:[%s9 + $0x14] sm:$0xf]
      %v9035 = vld [vmem:[%s9 + $0x18] sm:$0xf]
      %v9036 = vld [vmem:[%s9 + $0x1c] sm:$0xf]
      %v9037 = vld [vmem:[%s9 + $0x20] sm:$0xf]
      %v9038 = vld [vmem:[%s9 + $0x24] sm:$0xf]
      %v9039 = vld [vmem:[%s9 + $0x28] sm:$0xf]
      %v9040 = vld [vmem:[%s9 + $0x2c] sm:$0xf]
      %v9041 = vld [vmem:[%s9 + $0x30] sm:$0xf]
      %v9042 = vld [vmem:[%s9 + $0x34] sm:$0xf]
      %v9043 = vld [vmem:[%s9 + $0x38] sm:$0xf]
      %v9044 = vld [vmem:[%s9 + $0x3c] sm:$0xf]
      %v9045 = vld [vmem:[%s9 + $0x40] sm:$0xf]
      %v9046 = vld [vmem:[%s9 + $0x44] sm:$0xf]
      %v9047 = vld [vmem:[%s9 + $0x48] sm:$0xf]
      %v9048 = vld [vmem:[%s9 + $0x4c] sm:$0xf]
      %v9049 = vld [vmem:[%s9 + $0x50] sm:$0xf]
      %v9050 = vld [vmem:[%s9 + $0x54] sm:$0xf]
      %v9051 = vld [vmem:[%s9 + $0x58] sm:$0xf]
      %v9052 = vld [vmem:[%s9 + $0x5c] sm:$0xf]
      %v9053 = vld [vmem:[%s9 + $0x60] sm:$0xf]
      %v9054 = vld [vmem:[%s9 + $0x64] sm:$0xf]
      %v9055 = vld [vmem:[%s9 + $0x68] sm:$0xf]
      %v9056 = vld [vmem:[%s9 + $0x6c] sm:$0xf]
      %v9057 = vld [vmem:[%s9 + $0x70] sm:$0xf]
      %v9058 = vld [vmem:[%s9 + $0x74] sm:$0xf]
      %v9059 = vld [vmem:[%s9 + $0x78] sm:$0xf]
      %v9060 = vld [vmem:[%s9 + $0x7c] sm:$0xf]
      %v9061 = vld [vmem:[%s9 + $0x80] sm:$0xf]
      %v9062 = vld [vmem:[%s9 + $0x84] sm:$0xf]
      %v9063 = vld [vmem:[%s9 + $0x88] sm:$0xf]
      %v9064 = vld [vmem:[%s9 + $0x8c] sm:$0xf]
      %v9101 = vunpack.c.l.b16 %v9029
      %v9102 = vunpack.c.l.b16 %v9030
      %v9103 = vunpack.c.l.b16 %v9031
      %v9104 = vunpack.c.l.b16 %v9032
      %v9105 = vunpack.c.l.b16 %v9033
      %v9106 = vunpack.c.l.b16 %v9034
      %v9107 = vunpack.c.l.b16 %v9035
      %v9108 = vunpack.c.l.b16 %v9036
      %v9109 = vunpack.c.l.b16 %v9037
      %v9110 = vunpack.c.l.b16 %v9038
      %v9111 = vunpack.c.l.b16 %v9039
      %v9112 = vunpack.c.l.b16 %v9040
      %v9113 = vunpack.c.l.b16 %v9041
      %v9114 = vunpack.c.l.b16 %v9042
      %v9115 = vunpack.c.l.b16 %v9043
      %v9116 = vunpack.c.l.b16 %v9044
      %v9117 = vunpack.c.l.b16 %v9045
      %v9118 = vunpack.c.l.b16 %v9046
      %v9119 = vunpack.c.l.b16 %v9047
      %v9120 = vunpack.c.l.b16 %v9048
      %v9121 = vunpack.c.l.b16 %v9049
      %v9122 = vunpack.c.l.b16 %v9050
      %v9123 = vunpack.c.l.b16 %v9051
      %v9124 = vunpack.c.l.b16 %v9052
      %v9125 = vunpack.c.l.b16 %v9053
      %v9126 = vunpack.c.l.b16 %v9054
      %v9127 = vunpack.c.l.b16 %v9055
      %v9128 = vunpack.c.l.b16 %v9056
      %v9129 = vunpack.c.l.b16 %v9057
      %v9130 = vunpack.c.l.b16 %v9058
      %v9131 = vunpack.c.l.b16 %v9059
      %v9132 = vunpack.c.l.b16 %v9060
      %v9133 = vunpack.c.l.b16 %v9061
      %v9134 = vunpack.c.l.b16 %v9062
      %v9135 = vunpack.c.l.b16 %v9063
      %v9136 = vunpack.c.l.b16 %v9064
      %v9137 = vpack.c.b16 %v9102, %v9101
      %v9138 = vpack.c.b16 %v9104, %v9103
      %v9139 = vpack.c.b16 %v9106, %v9105
      %v9140 = vpack.c.b16 %v9108, %v9107
      %v9141 = vpack.c.b16 %v9110, %v9109
      %v9142 = vpack.c.b16 %v9112, %v9111
      %v9143 = vpack.c.b16 %v9114, %v9113
      %v9144 = vpack.c.b16 %v9116, %v9115
      %v9145 = vpack.c.b16 %v9118, %v9117
      %v9146 = vpack.c.b16 %v9120, %v9119
      %v9147 = vpack.c.b16 %v9122, %v9121
      %v9148 = vpack.c.b16 %v9124, %v9123
      %v9149 = vpack.c.b16 %v9126, %v9125
      %v9150 = vpack.c.b16 %v9128, %v9127
      %v9151 = vpack.c.b16 %v9130, %v9129
      %v9152 = vpack.c.b16 %v9132, %v9131
      %v9153 = vpack.c.b16 %v9134, %v9133
      %v9154 = vpack.c.b16 %v9136, %v9135
      %v9174 = vsel %vm1462, %v9025, 0
      %v9177 = vsel %vm1462, %v9028, 0
      %9179 = vmatprep.subr.bf16.mxu0 0
      %9180 = vmatpush1.bf16.msra.mxu0 %v9137
      %9181 = vmatprep.subr.bf16.mxu0 0
      %9182 = vmatpush1.bf16.msra.mxu0 %v9138
      %9183 = vmatprep.subr.bf16.mxu0 0
      %9184 = vmatpush1.bf16.msra.mxu0 %v9139
      %9185 = vmatprep.subr.bf16.mxu0 0
      %9186 = vmatpush1.bf16.msra.mxu0 %v9140
      %9187 = vmatprep.subr.bf16.mxu0 0
      %9188 = vmatpush1.bf16.msra.mxu0 %v9141
      %9189 = vmatprep.subr.bf16.mxu0 0
      %9190 = vmatpush1.bf16.msra.mxu0 %v9142
      %9191 = vmatprep.subr.bf16.mxu0 0
      %9192 = vmatpush1.bf16.msra.mxu0 %v9143
      %9193 = vmatprep.subr.bf16.mxu0 0
      %9194 = vmatpush1.bf16.msra.mxu0 %v9144
      %9195 = vmatprep.subr.bf16.mxu0 0
      %9196 = vmatpush1.bf16.msra.mxu0 %v9145
      %9197 = vmatprep.subr.bf16.mxu0 0
      %9198 = vmatpush1.bf16.msra.mxu0 %v9146
      %9199 = vmatprep.subr.bf16.mxu0 0
      %9200 = vmatpush1.bf16.msra.mxu0 %v9147
      %9201 = vmatprep.subr.bf16.mxu0 0
      %9202 = vmatpush1.bf16.msra.mxu0 %v9148
      %9203 = vmatprep.subr.bf16.mxu0 0
      %9204 = vmatpush1.bf16.msra.mxu0 %v9149
      %9205 = vmatprep.subr.bf16.mxu0 0
      %9206 = vmatpush1.bf16.msra.mxu0 %v9150
      %9207 = vmatprep.subr.bf16.mxu0 0
      %9208 = vmatpush1.bf16.msra.mxu0 %v9151
      %9209 = vmatprep.subr.bf16.mxu0 0
      %9210 = vmatpush1.bf16.msra.mxu0 %v9152
      %9211 = vmatprep.mubr.bf16.mxu0 %v9024
      %9212 = vmatmul.mubr.bf16.gmra.mrb[0].mxu0 %v9023
      %v9213 = vpop.f32.mrb[0].mxu0
      %v9214 = vadd.f32 0.0, %v9213
      %v9215 = vpop.f32.mrb[0].mxu0
      %v9216 = vpop.f32.mrb[0].mxu0
      %v9217 = vadd.f32 0.0, %v9216
      %v9218 = vpop.f32.mrb[0].mxu0
      %9219 = vmatprep.mubr.bf16.mxu0 %v9027
      %9220 = vmatmul.mubr.bf16.gmra.mrb[0].mxu0 %v9026
      %v9221 = vpop.f32.mrb[0].mxu0
      %v9222 = vadd.f32 0.0, %v9221
      %v9223 = vpop.f32.mrb[0].mxu0
      %v9224 = vpop.f32.mrb[0].mxu0
      %v9225 = vadd.f32 0.0, %v9224
      %v9226 = vpop.f32.mrb[0].mxu0
      %9227 = vdwg.mxu0
      %9228 = vmatprep.subr.bf16.mxu0 0
      %9229 = vmatpush1.bf16.msra.mxu0 %v9153
      %9230 = vmatprep.subr.bf16.mxu0 0
      %9231 = vmatpush1.bf16.msra.mxu0 %v9154
      %9232 = vmatprep.subr.bf16.mxu0 0
      %9233 = vmatpush1.bf16.msra.mxu0 0
      %9234 = vmatprep.subr.bf16.mxu0 0
      %9235 = vmatpush1.bf16.msra.mxu0 0
      %9236 = vmatprep.subr.bf16.mxu0 0
      %9237 = vmatpush1.bf16.msra.mxu0 0
      %9238 = vmatprep.subr.bf16.mxu0 0
      %9239 = vmatpush1.bf16.msra.mxu0 0
      %9240 = vmatprep.subr.bf16.mxu0 0
      %9241 = vmatpush1.bf16.msra.mxu0 0
      %9242 = vmatprep.subr.bf16.mxu0 0
      %9243 = vmatpush1.bf16.msra.mxu0 0
      %9244 = vmatprep.subr.bf16.mxu0 0
      %9245 = vmatpush1.bf16.msra.mxu0 0
      %9246 = vmatprep.subr.bf16.mxu0 0
      %9247 = vmatpush1.bf16.msra.mxu0 0
      %9248 = vmatprep.subr.bf16.mxu0 0
      %9249 = vmatpush1.bf16.msra.mxu0 0
      %9250 = vmatprep.subr.bf16.mxu0 0
      %9251 = vmatpush1.bf16.msra.mxu0 0
      %9252 = vmatprep.subr.bf16.mxu0 0
      %9253 = vmatpush1.bf16.msra.mxu0 0
      %9254 = vmatprep.subr.bf16.mxu0 0
      %9255 = vmatpush1.bf16.msra.mxu0 0
      %9256 = vmatprep.subr.bf16.mxu0 0
      %9257 = vmatpush1.bf16.msra.mxu0 0
      %9258 = vmatprep.subr.bf16.mxu0 0
      %9259 = vmatpush1.bf16.msra.mxu0 0
      %9260 = vmatprep.mubr.bf16.mxu0 0
      %9261 = vmatmul.mubr.bf16.gmra.mrb[0].mxu0 %v9174
      %v9262 = vpop.f32.mrb[0].mxu0
      %v9263 = vadd.f32 %v9214, %v9262
      %v9264 = vpop.f32.mrb[0].mxu0
      %v9265 = vpop.f32.mrb[0].mxu0
      %v9266 = vadd.f32 %v9217, %v9265
      %v9267 = vpop.f32.mrb[0].mxu0
      %9268 = vmatprep.mubr.bf16.mxu0 0
      %9269 = vmatmul.mubr.bf16.gmra.mrb[0].mxu0 %v9177
      %v9270 = vpop.f32.mrb[0].mxu0
      %v9271 = vadd.f32 %v9222, %v9270
      %v9272 = vpop.f32.mrb[0].mxu0
      %v9273 = vpop.f32.mrb[0].mxu0
      %v9274 = vadd.f32 %v9225, %v9273
      %v9275 = vpop.f32.mrb[0].mxu0
      %9276 = vdwg.mxu0
      %v9277 = vmax.f32 %v9263, %v9266
      %v9278 = vmax.f32 %v9271, %v9274
      %v9279 = vmax.f32 %v9277, %v9278
      %v9280 = vld [vmem:[%s10] sm:$0x1]
      %v9282 = vlaneseq
      %v9283 = vshrl.u32 %v9282, 7
      %v9284 = vsub.s32 0, %v9283
      %v9285 = vrot.slane %v9280, %v9284
      %v9287 = vadd.f32 %v9279, %v9285
      %v9288 = vmax.f32 %v9287, 0.0
      %v9289 = vld [vmem:[%s14] sm:$0x3]
      %vm9290 = vcmask 64512
      %v9292 = vsel %vm9290, %v9289, 0
      %9294 = vmatprep.subr.mxu0 0.0
      %9295 = vmatpush1.msra.mxu0 %v9288
      %9296 = vmatprep.subr.mxu0 0.0
      %9297 = vmatpush1.msra.mxu0 0.0
      %9298 = vmatprep.subr.mxu0 0.0
      %9299 = vmatpush1.msra.mxu0 0.0
      %9300 = vmatprep.subr.mxu0 0.0
      %9301 = vmatpush1.msra.mxu0 0.0
      %9302 = vmatprep.subr.mxu0 0.0
      %9303 = vmatpush1.msra.mxu0 0.0
      %9304 = vmatprep.subr.mxu0 0.0
      %9305 = vmatpush1.msra.mxu0 0.0
      %9306 = vmatprep.subr.mxu0 0.0
      %9307 = vmatpush1.msra.mxu0 0.0
      %9308 = vmatprep.subr.mxu0 0.0
      %9309 = vmatpush1.msra.mxu0 0.0
      %9310 = vmatprep.subr.mxu0 0.0
      %9311 = vmatpush1.msra.mxu0 0.0
      %9312 = vmatprep.subr.mxu0 0.0
      %9313 = vmatpush1.msra.mxu0 0.0
      %9314 = vmatprep.subr.mxu0 0.0
      %9315 = vmatpush1.msra.mxu0 0.0
      %9316 = vmatprep.subr.mxu0 0.0
      %9317 = vmatpush1.msra.mxu0 0.0
      %9318 = vmatprep.subr.mxu0 0.0
      %9319 = vmatpush1.msra.mxu0 0.0
      %9320 = vmatprep.subr.mxu0 0.0
      %9321 = vmatpush1.msra.mxu0 0.0
      %9322 = vmatprep.subr.mxu0 0.0
      %9323 = vmatpush1.msra.mxu0 0.0
      %9324 = vmatprep.subr.mxu0 0.0
      %9325 = vmatpush1.msra.mxu0 0.0
      %9326 = vmatprep.subr.mxu0 0.0
      %9327 = vmatpush1.msra.mxu0 0.0
      %9328 = vmatprep.subr.mxu0 0.0
      %9329 = vmatpush1.msra.mxu0 0.0
      %9330 = vmatprep.subr.mxu0 0.0
      %9331 = vmatpush1.msra.mxu0 0.0
      %9332 = vmatprep.subr.mxu0 0.0
      %9333 = vmatpush1.msra.mxu0 0.0
      %9334 = vmatprep.subr.mxu0 0.0
      %9335 = vmatpush1.msra.mxu0 0.0
      %9336 = vmatprep.subr.mxu0 0.0
      %9337 = vmatpush1.msra.mxu0 0.0
      %9338 = vmatprep.subr.mxu0 0.0
      %9339 = vmatpush1.msra.mxu0 0.0
      %9340 = vmatprep.subr.mxu0 0.0
      %9341 = vmatpush1.msra.mxu0 0.0
      %9342 = vmatprep.subr.mxu0 0.0
      %9343 = vmatpush1.msra.mxu0 0.0
      %9344 = vmatprep.subr.mxu0 0.0
      %9345 = vmatpush1.msra.mxu0 0.0
      %9346 = vmatprep.subr.mxu0 0.0
      %9347 = vmatpush1.msra.mxu0 0.0
      %9348 = vmatprep.subr.mxu0 0.0
      %9349 = vmatpush1.msra.mxu0 0.0
      %9350 = vmatprep.subr.mxu0 0.0
      %9351 = vmatpush1.msra.mxu0 0.0
      %9352 = vmatprep.subr.mxu0 0.0
      %9353 = vmatpush1.msra.mxu0 0.0
      %9354 = vmatprep.subr.mxu0 0.0
      %9355 = vmatpush1.msra.mxu0 0.0
      %9356 = vmatprep.subr.mxu0 0.0
      %9357 = vmatpush1.msra.mxu0 0.0
      %9358 = vmatprep.mubr.f32.mxu0 0.0
      %9359 = vmatmul.mubr.f32.gmra.mrb[0].mxu0 %v9292
      %v9360 = vpop.f32.mrb[0].mxu0
      %v9361 = vadd.f32 0.0, %v9360
      %v9362 = vpop.f32.mrb[0].mxu0
      %9363 = vdwg.mxu0
      %v9364 = vld [vmem:[%s15] sm:$0xff]
      %v9365 = vld [vmem:[%s15 + $0x8] sm:$0xff]
      %v9366 = vld [vmem:[%s15 + $0x10] sm:$0xff]
      %v9367 = vld [vmem:[%s15 + $0x18] sm:$0xff]
      %v9368 = vld [vmem:[%s16] sm:$0x1]
      %v9370 = vlaneseq
      %v9371 = vshrl.u32 %v9370, 7
      %v9372 = vsub.s32 0, %v9371
      %v9373 = vrot.slane %v9368, %v9372
      %v9376 = vsel %vm1462, %v9361, 0
      %9378 = vmatprep.subr.mxu0 0.0
      %9379 = vmatpush1.msra.mxu0 %v9364
      %9380 = vmatprep.subr.mxu0 0.0
      %9381 = vmatpush1.msra.mxu0 %v9365
      %9382 = vmatprep.subr.mxu0 0.0
      %9383 = vmatpush1.msra.mxu0 %v9366
      %9384 = vmatprep.subr.mxu0 0.0
      %9385 = vmatpush1.msra.mxu0 %v9367
      %9386 = vmatprep.subr.mxu0 0.0
      %9387 = vmatpush1.msra.mxu0 0.0
      %9388 = vmatprep.subr.mxu0 0.0
      %9389 = vmatpush1.msra.mxu0 0.0
      %9390 = vmatprep.subr.mxu0 0.0
      %9391 = vmatpush1.msra.mxu0 0.0
      %9392 = vmatprep.subr.mxu0 0.0
      %9393 = vmatpush1.msra.mxu0 0.0
      %9394 = vmatprep.subr.mxu0 0.0
      %9395 = vmatpush1.msra.mxu0 0.0
      %9396 = vmatprep.subr.mxu0 0.0
      %9397 = vmatpush1.msra.mxu0 0.0
      %9398 = vmatprep.subr.mxu0 0.0
      %9399 = vmatpush1.msra.mxu0 0.0
      %9400 = vmatprep.subr.mxu0 0.0
      %9401 = vmatpush1.msra.mxu0 0.0
      %9402 = vmatprep.subr.mxu0 0.0
      %9403 = vmatpush1.msra.mxu0 0.0
      %9404 = vmatprep.subr.mxu0 0.0
      %9405 = vmatpush1.msra.mxu0 0.0
      %9406 = vmatprep.subr.mxu0 0.0
      %9407 = vmatpush1.msra.mxu0 0.0
      %9408 = vmatprep.subr.mxu0 0.0
      %9409 = vmatpush1.msra.mxu0 0.0
      %9410 = vmatprep.subr.mxu0 0.0
      %9411 = vmatpush1.msra.mxu0 0.0
      %9412 = vmatprep.subr.mxu0 0.0
      %9413 = vmatpush1.msra.mxu0 0.0
      %9414 = vmatprep.subr.mxu0 0.0
      %9415 = vmatpush1.msra.mxu0 0.0
      %9416 = vmatprep.subr.mxu0 0.0
      %9417 = vmatpush1.msra.mxu0 0.0
      %9418 = vmatprep.subr.mxu0 0.0
      %9419 = vmatpush1.msra.mxu0 0.0
      %9420 = vmatprep.subr.mxu0 0.0
      %9421 = vmatpush1.msra.mxu0 0.0
      %9422 = vmatprep.subr.mxu0 0.0
      %9423 = vmatpush1.msra.mxu0 0.0
      %9424 = vmatprep.subr.mxu0 0.0
      %9425 = vmatpush1.msra.mxu0 0.0
      %9426 = vmatprep.subr.mxu0 0.0
      %9427 = vmatpush1.msra.mxu0 0.0
      %9428 = vmatprep.subr.mxu0 0.0
      %9429 = vmatpush1.msra.mxu0 0.0
      %9430 = vmatprep.subr.mxu0 0.0
      %9431 = vmatpush1.msra.mxu0 0.0
      %9432 = vmatprep.subr.mxu0 0.0
      %9433 = vmatpush1.msra.mxu0 0.0
      %9434 = vmatprep.subr.mxu0 0.0
      %9435 = vmatpush1.msra.mxu0 0.0
      %9436 = vmatprep.subr.mxu0 0.0
      %9437 = vmatpush1.msra.mxu0 0.0
      %9438 = vmatprep.subr.mxu0 0.0
      %9439 = vmatpush1.msra.mxu0 0.0
      %9440 = vmatprep.subr.mxu0 0.0
      %9441 = vmatpush1.msra.mxu0 0.0
      %9442 = vmatprep.mubr.f32.mxu0 0.0
      %9443 = vmatmul.mubr.f32.gmra.mrb[0].mxu0 %v9376
      %v9444 = vpop.f32.mrb[0].mxu0
      %v9445 = vadd.f32 %v9373, %v9444
      %v9446 = vpop.f32.mrb[0].mxu0
      %9447 = vdwg.mxu0
      %vm9448 = vcmask 9216
      %9449 = vst.msk [vmem:[%s548] sm:$0x3] %vm9448, %v9445
      %p9450 = scmp.lt.s32.totalorder %s28, 1
      %s9451 = scalar_select %p9450, %s28, 1
      %s9452 = smul.addr %s9451, 2
      %s9453 = scalar_lea.vmem %s17, %s9452
      // Predicated region
      $region89: #{yearbook_forward.1} parent=87 // pred_check
        %p9454 = pneg %p408
      $region90: #{yearbook_forward.1} parent=87 // pred_check_branch
        %9456 = sbr.rel (%p9454) target = $region92
      $region91: #{yearbook_forward.1} parent=87 // pred_region
        _
      $region92: #{yearbook_forward.1} parent=87 // pred_fallthru
        _
    $region88: #{yearbook_forward.1} parent=5 // pred_fallthru
      _
    %p9457 = scmp.le.s32.totalorder 2, %s23
    // Predicated region
    $region93: #{yearbook_forward.1} parent=5 // pred_check
      %p9458 = pneg %p9457
    $region94: #{yearbook_forward.1} parent=5 // pred_check_branch
      %9460 = sbr.rel (%p9458) target = $region96
    $region95: #{yearbook_forward.1} parent=5 // pred_region
      %s9461 = ssub.s32 %s23, 2
      // Predicated region
      $region97: #{yearbook_forward.1} parent=95 // pred_check
        %p9462 = pneg %p414
      $region98: #{yearbook_forward.1} parent=95 // pred_check_branch
        %9464 = sbr.rel (%p9462) target = $region100
      $region99: #{yearbook_forward.1} parent=95 // pred_region
        %p9465 = scmp.lt.s32.totalorder %s29, 1
        %s9466 = scalar_select %p9465, %s29, 1
        %s9467 = smul.addr %s9466, 2
        %s9468 = scalar_lea.vmem %s17, %s9467
      $region100: #{yearbook_forward.1} parent=95 // pred_fallthru
        _
    $region96: #{yearbook_forward.1} parent=5 // pred_fallthru
      _
  $region6: #{yearbook_forward.1} parent=0 // loop_footer
    %s27 = sadd.s32 1, %s23
  $region7: #{yearbook_forward.1} parent=0 // loop_footer_branch
    %22 = sbr.rel target = $region3
  $region8: #{yearbook_forward.1} parent=0 // loop_exit
    _

</llo_original>
